<compile_context>
chip_gen: v6e
topology: v6e:2x2x1
jax: 0.10.0
libtpu: 0.0.40
codegen_flags: <defaults>
</compile_context>

<pallas_src>
import functools
import math

import jax
import jax.numpy as jnp
from jax import lax
from jax.experimental import pallas as pl
from jax.experimental.pallas import tpu as pltpu

T_STEPS = 50          # simulation length used by _encode(o, 50)
H1 = 50               # fc1 output features
N_OUT = 2             # fc2 output features (number of actions)

# SLAYER params['neuron'] / params['simulation'] (synthetic but typical values)
THETA = 10.0          # spiking threshold
TAU_SR = 10.0         # SRM (psp) kernel time constant
TAU_REF = 1.0         # refractory kernel time constant
SCALE_REF = 2.0       # refractory kernel scale
TS = 1.0              # simulation time step

# SRM psp kernel      k(d) =               (d*Ts/tauSr ) * exp(1 - d*Ts/tauSr )  = PSP_AMP * d * RHO_PSP**d
# refractory kernel   r(d) = -scaleRef*th* (d*Ts/tauRef) * exp(1 - d*Ts/tauRef)  = REF_AMP * d * RHO_REF**d
# Both are realized exactly by the 2-state recurrence (h, g) inside the scan below.
RHO_PSP = math.exp(-TS / TAU_SR)
PSP_AMP = (TS / TAU_SR) * math.e
RHO_REF = math.exp(-TS / TAU_REF)
REF_AMP = (-SCALE_REF * THETA) * (TS / TAU_REF) * math.e
SPIKE_AMP = 1.0 / TS  # SLAYER spike amplitude


def _spike_scan(z_ref, spk_ref, *, bb, t_steps, theta, rho_psp, psp_amp,
                rho_ref, ref_amp, spike_amp):
    """SLAYER spike(psp(z)) with refractory feedback as two 2-state linear recurrences.

    z_ref:   (T*bb, C) synaptic current (fc output), row = t*bb + b.
    spk_ref: (T*bb, C) spike-train output ref, or None to skip storing the train.
    Returns the per-sample, per-channel spike count, shape (bb, C).

    Exactness: with k(d) = A*d*rho^d (zero at d=0),
      g_t = sum_{s<t} (t-s) rho^{t-s} x_s  is maintained by  g <- rho*(g + h), h <- rho*h + x_t,
    so A*g_t equals the causal Toeplitz convolution used by slayer.psp / the refractory term.
    """
    c = z_ref.shape[-1]
    zeros = jnp.zeros((bb, c), jnp.float32)

    def body(t, carry):
        hp, gp, hr, gr, cnt = carry
        gp = rho_psp * (gp + hp)              # psp contribution at step t (inputs at s < t)
        gr = rho_ref * (gr + hr)              # refractory contribution (own spikes at s < t)
        m = psp_amp * gp + ref_amp * gr       # membrane at step t
        s = jnp.where(m >= theta, spike_amp, 0.0).astype(jnp.float32)
        row = pl.ds(t * bb, bb)               # dense (bb, C) tile, sublane-aligned for bb%8==0
        if spk_ref is not None:
            spk_ref[row, :] = s.astype(spk_ref.dtype)
        hp = rho_psp * hp + z_ref[row, :]     # input at t only affects steps > t
        hr = rho_ref * hr + s                 # spike at t only affects steps > t
        return hp, gp, hr, gr, cnt + s

    carry = lax.fori_loop(0, t_steps, body, (zeros, zeros, zeros, zeros, zeros),
                          unroll=True)
    return carry[4]


def _snn_policy_kernel(x_ref, w1_ref, w2_ref, out_ref, z1_ref, spk1_ref, z2_ref,
                       *, bb, t_steps, theta, rho_psp, psp_amp, rho_ref, ref_amp,
                       spike_amp):
    """One batch block: fc1 -> psp/spike scan -> fc2 -> psp/spike scan -> spike counts."""
    scan = functools.partial(
        _spike_scan, bb=bb, t_steps=t_steps, theta=theta, rho_psp=rho_psp,
        psp_amp=psp_amp, rho_ref=rho_ref, ref_amp=ref_amp, spike_amp=spike_amp)

    # ---- layer 1: one wide bf16 MXU matmul over all (t, b) rows of the block ----
    z1_ref[...] = jnp.dot(x_ref[...], w1_ref[...],
                          preferred_element_type=jnp.float32)      # (T*bb, H1)
    scan(z1_ref, spk1_ref)                                          # spike train -> spk1

    # ---- layer 2: fc2 over the whole layer-1 spike train, then psp/spike scan ----
    z2_ref[...] = jnp.dot(spk1_ref[...], w2_ref[...],
                          preferred_element_type=jnp.float32)      # (T*bb, N_OUT)
    cnt = scan(z2_ref, None)                                        # (bb, N_OUT) spike counts

    # num_spikes = torch.sum(sl2, time); accumulated in the scan carry above.
    out_ref[...] = cnt


def _pick_batch_block(batch):
    """Largest 'nice' block: multiple of 8, grid >= 2, small VMEM footprint."""
    for bb in (32, 24, 16, 8):
        if batch % bb == 0 and batch // bb >= 2:
            return bb
    return batch  # grid = 1 fallback (block == full array, so (8,128) rule is satisfied)


def snn_num_spikes(spikes, w1t, w2t, *, batch_block=None):
    """Pallas call: (B, T, N_in) spike trains -> (B, N_OUT) spike counts (logits)."""
    B, T, n_in = spikes.shape
    bb = _pick_batch_block(B) if batch_block is None else batch_block
    assert B % bb == 0, "batch_block must divide the batch size"
    grid = B // bb
    if grid > 1:
        assert bb % 8 == 0, "batch_block must be a multiple of 8 when grid > 1"

    # Time-major within each batch block: x_blk[g, t*bb + b, :] = spikes[g*bb + b, t, :].
    x_blk = (spikes.reshape(grid, bb, T, n_in)
                   .transpose(0, 2, 1, 3)
                   .reshape(grid, T * bb, n_in)
                   .astype(jnp.bfloat16))            # 0/1 values are exact in bf16
    w1b = w1t.astype(jnp.bfloat16)
    w2f = w2t.astype(jnp.float32)

    kernel = functools.partial(
        _snn_policy_kernel, bb=bb, t_steps=T, theta=THETA, rho_psp=RHO_PSP,
        psp_amp=PSP_AMP, rho_ref=RHO_REF, ref_amp=REF_AMP, spike_amp=SPIKE_AMP)

    out = pl.pallas_call(
        kernel,
        out_shape=jax.ShapeDtypeStruct((B, N_OUT), jnp.float32),
        grid_spec=pltpu.PrefetchScalarGridSpec(
            num_scalar_prefetch=0,
            grid=(grid,),
            in_specs=[
                pl.BlockSpec((None, T * bb, n_in), lambda g: (g, 0, 0)),  # bf16 spike block
                pl.BlockSpec((n_in, H1), lambda g: (0, 0)),               # fc1 weight (bf16)
                pl.BlockSpec((H1, N_OUT), lambda g: (0, 0)),              # fc2 weight
            ],
            out_specs=pl.BlockSpec((bb, N_OUT), lambda g: (g, 0)),
            scratch_shapes=[
                pltpu.VMEM((T * bb, H1), jnp.float32),      # z1: fc1 output
                pltpu.VMEM((T * bb, H1), jnp.float32),      # spk1: layer-1 spike train
                pltpu.VMEM((T * bb, N_OUT), jnp.float32),   # z2: fc2 output
            ],
        ),
        compiler_params=pltpu.CompilerParams(
            dimension_semantics=("parallel",),   # batch blocks independent (2 TCs on v7x)
            vmem_limit_bytes=32 * 1024 * 1024),
    )(x_blk, w1b, w2f)
    return out


# ------------------------- plain-JAX glue -------------------------

def image_encoder(o, t_steps, key):
    """Rate (Poisson) spike encoding of one observation o: (3, H, W) in [0, 1]."""
    # TODO(synk): snnrl's ImageEncoder implementation is not given here; Poisson rate
    #             coding over `t_steps` steps is used as the spike encoder.
    p = jnp.clip(o, 0.0, 1.0)
    u = jax.random.uniform(key, (t_steps,) + o.shape)
    return (u < p[None]).astype(jnp.float32).reshape(t_steps, -1)       # (T, 3*H*W)


def snn_categorical_policy_forward(images, params, key, action=None):
    """Mirror of SNNCategoricalPolicy.forward -> (pi, logp, logp_pi)."""
    w1t, w2t = params
    B = images.shape[0]
    keys = jax.random.split(key, B + 1)
    spikes = jax.vmap(lambda o, k: image_encoder(o, T_STEPS, k))(images, keys[:B])

    logits = snn_num_spikes(spikes, w1t, w2t)                           # (B, 2) num_spikes

    # Categorical(logits=num_spikes): sample + log_prob (tiny, done in plain JAX)
    pi = jax.random.categorical(keys[-1], logits, axis=-1)
    log_probs = jax.nn.log_softmax(logits, axis=-1)
    logp_pi = jnp.squeeze(jnp.take_along_axis(log_probs, pi[:, None], axis=-1), -1)
    if action is not None:
        logp = jnp.squeeze(jnp.take_along_axis(log_probs, action[:, None], axis=-1), -1)
    else:
        logp = None
    return pi, logp, logp_pi


if __name__ == "__main__":
    key = jax.random.PRNGKey(0)
    k_img, k_w1, k_w2, k_fwd = jax.random.split(key, 4)

    B, H, W = 16, 16, 16                  # small batch; bb=8 -> grid=2 ("parallel" axis)
    n_in = 3 * H * W                      # input_size[0] * input_size[1] * 3

    images = jax.random.uniform(k_img, (B, 3, H, W), dtype=jnp.float32)

    # SLAYER dense init: Conv3d-style uniform init scaled by weightScale=10, no bias.
    lim1 = float(10.0 / (n_in ** 0.5))
    lim2 = float(10.0 / (H1 ** 0.5))
    w1t = jax.random.uniform(k_w1, (n_in, H1), minval=-lim1, maxval=lim1, dtype=jnp.float32)
    w2t = jax.random.uniform(k_w2, (H1, N_OUT), minval=-lim2, maxval=lim2, dtype=jnp.float32)

    pi, logp, logp_pi = snn_categorical_policy_forward(
        images, (w1t, w2t), k_fwd, action=None)

    jax.block_until_ready((pi, logp_pi))
    print("KERNEL_OK")
</pallas_src>

<mosaic_0001>
module attributes {stable_mosaic.version = 11 : i64} {
  func.func @_snn_policy_kernel(%arg0: i32, %arg1: memref<1x400x768xbf16, #tpu.memory_space<vmem>>, %arg2: memref<768x50xbf16, #tpu.memory_space<vmem>>, %arg3: memref<50x2xf32, #tpu.memory_space<vmem>>, %arg4: memref<8x2xf32, #tpu.memory_space<vmem>>, %arg5: memref<400x50xf32, #tpu.memory_space<vmem>>, %arg6: memref<400x50xf32, #tpu.memory_space<vmem>>, %arg7: memref<400x2xf32, #tpu.memory_space<vmem>>) attributes {dimension_semantics = [#tpu.dimension_semantics<parallel>], iteration_bounds = array<i64: 2>, scalar_prefetch = 0 : i64, scratch_operands = 3 : i64, tpu.core_type = #tpu.core_type<tc>, window_params = [{transform_indices = @transform_0, window_bounds = array<i64: 1, 400, 768>}, {pipeline_mode = #tpu.pipeline_mode<synchronous>, transform_indices = @transform_1, window_bounds = array<i64: 768, 50>}, {pipeline_mode = #tpu.pipeline_mode<synchronous>, transform_indices = @transform_2, window_bounds = array<i64: 50, 2>}, {transform_indices = @transform_3, window_bounds = array<i64: 8, 2>}]} {
    %c0 = arith.constant 0 : index
    %c0_0 = arith.constant 0 : index
    %c0_1 = arith.constant 0 : index
    %0 = vector.load %arg1[%c0, %c0_0, %c0_1] : memref<1x400x768xbf16, #tpu.memory_space<vmem>>, vector<1x400x768xbf16>
    %1 = vector.shape_cast %0 : vector<1x400x768xbf16> to vector<400x768xbf16>
    %c0_2 = arith.constant 0 : index
    %c0_3 = arith.constant 0 : index
    %2 = vector.load %arg2[%c0_2, %c0_3] : memref<768x50xbf16, #tpu.memory_space<vmem>>, vector<768x50xbf16>
    %cst = arith.constant dense<0.000000e+00> : vector<400x50xf32>
    %3 = tpu.matmul %1, %2, %cst {dimension_numbers = #tpu.dot_dimension_numbers<[1], [0], [0], [1], [0, 0, 1, 1], [], []>} : vector<400x768xbf16>, vector<768x50xbf16>, vector<400x50xf32> -> vector<400x50xf32>
    %c0_4 = arith.constant 0 : index
    %c0_5 = arith.constant 0 : index
    %4 = vector.load %arg5[%c0_4, %c0_5] : memref<400x50xf32, #tpu.memory_space<vmem>>, vector<400x50xf32>
    tpu.vector_store %arg5[%c0_4, %c0_5], %3 {strides = array<i32>} : memref<400x50xf32, #tpu.memory_space<vmem>>, vector<400x50xf32>,
    %cst_6 = arith.constant 0.000000e+00 : f32
    %5 = vector.broadcast %cst_6 : f32 to vector<8x50xf32>
    %c0_i32 = arith.constant 0 : i32
    %6 = arith.addf %5, %5 : vector<8x50xf32>
    %cst_7 = arith.constant 0.904837429 : f32
    %7 = vector.broadcast %cst_7 : f32 to vector<8x50xf32>
    %8 = arith.mulf %7, %6 : vector<8x50xf32>
    %9 = arith.addf %5, %5 : vector<8x50xf32>
    %cst_8 = arith.constant 0.36787945 : f32
    %10 = vector.broadcast %cst_8 : f32 to vector<8x50xf32>
    %11 = arith.mulf %10, %9 : vector<8x50xf32>
    %cst_9 = arith.constant 0.271828175 : f32
    %12 = vector.broadcast %cst_9 : f32 to vector<8x50xf32>
    %13 = arith.mulf %12, %8 : vector<8x50xf32>
    %cst_10 = arith.constant -54.3656349 : f32
    %14 = vector.broadcast %cst_10 : f32 to vector<8x50xf32>
    %15 = arith.mulf %14, %11 : vector<8x50xf32>
    %16 = arith.addf %13, %15 : vector<8x50xf32>
    %cst_11 = arith.constant 1.000000e+01 : f32
    %17 = vector.broadcast %cst_11 : f32 to vector<8x50xf32>
    %18 = arith.cmpf oge, %16, %17 : vector<8x50xf32>
    %cst_12 = arith.constant 1.000000e+00 : f32
    %cst_13 = arith.constant 0.000000e+00 : f32
    %19 = vector.broadcast %cst_12 : f32 to vector<8x50xf32>
    %20 = vector.broadcast %cst_13 : f32 to vector<8x50xf32>
    %21 = arith.select %18, %19, %20 : vector<8x50xi1>, vector<8x50xf32>
    %c8_i32 = arith.constant 8 : i32
    %22 = arith.muli %c0_i32, %c8_i32 : i32
    %23 = arith.index_cast %22 : i32 to index
    %c0_14 = arith.constant 0 : index
    %24 = vector.load %arg6[%23, %c0_14] : memref<400x50xf32, #tpu.memory_space<vmem>>, vector<8x50xf32>
    tpu.vector_store %arg6[%23, %c0_14], %21 {strides = array<i32>} : memref<400x50xf32, #tpu.memory_space<vmem>>, vector<8x50xf32>,
    %cst_15 = arith.constant 0.904837429 : f32
    %25 = vector.broadcast %cst_15 : f32 to vector<8x50xf32>
    %26 = arith.mulf %25, %5 : vector<8x50xf32>
    %27 = arith.index_cast %22 : i32 to index
    %c0_16 = arith.constant 0 : index
    %28 = vector.load %arg5[%27, %c0_16] : memref<400x50xf32, #tpu.memory_space<vmem>>, vector<8x50xf32>
    %29 = arith.addf %26, %28 : vector<8x50xf32>
    %cst_17 = arith.constant 0.36787945 : f32
    %30 = vector.broadcast %cst_17 : f32 to vector<8x50xf32>
    %31 = arith.mulf %30, %5 : vector<8x50xf32>
    %32 = arith.addf %31, %21 : vector<8x50xf32>
    %c1_i32 = arith.constant 1 : i32
    %33 = arith.addf %8, %29 : vector<8x50xf32>
    %cst_18 = arith.constant 0.904837429 : f32
    %34 = vector.broadcast %cst_18 : f32 to vector<8x50xf32>
    %35 = arith.mulf %34, %33 : vector<8x50xf32>
    %36 = arith.addf %11, %32 : vector<8x50xf32>
    %cst_19 = arith.constant 0.36787945 : f32
    %37 = vector.broadcast %cst_19 : f32 to vector<8x50xf32>
    %38 = arith.mulf %37, %36 : vector<8x50xf32>
    %cst_20 = arith.constant 0.271828175 : f32
    %39 = vector.broadcast %cst_20 : f32 to vector<8x50xf32>
    %40 = arith.mulf %39, %35 : vector<8x50xf32>
    %cst_21 = arith.constant -54.3656349 : f32
    %41 = vector.broadcast %cst_21 : f32 to vector<8x50xf32>
    %42 = arith.mulf %41, %38 : vector<8x50xf32>
    %43 = arith.addf %40, %42 : vector<8x50xf32>
    %cst_22 = arith.constant 1.000000e+01 : f32
    %44 = vector.broadcast %cst_22 : f32 to vector<8x50xf32>
    %45 = arith.cmpf oge, %43, %44 : vector<8x50xf32>
    %cst_23 = arith.constant 1.000000e+00 : f32
    %cst_24 = arith.constant 0.000000e+00 : f32
    %46 = vector.broadcast %cst_23 : f32 to vector<8x50xf32>
    %47 = vector.broadcast %cst_24 : f32 to vector<8x50xf32>
    %48 = arith.select %45, %46, %47 : vector<8x50xi1>, vector<8x50xf32>
    %c8_i32_25 = arith.constant 8 : i32
    %49 = arith.muli %c1_i32, %c8_i32_25 : i32
    %50 = arith.index_cast %49 : i32 to index
    %c0_26 = arith.constant 0 : index
    %51 = vector.load %arg6[%50, %c0_26] : memref<400x50xf32, #tpu.memory_space<vmem>>, vector<8x50xf32>
    tpu.vector_store %arg6[%50, %c0_26], %48 {strides = array<i32>} : memref<400x50xf32, #tpu.memory_space<vmem>>, vector<8x50xf32>,
    %cst_27 = arith.constant 0.904837429 : f32
    %52 = vector.broadcast %cst_27 : f32 to vector<8x50xf32>
    %53 = arith.mulf %52, %29 : vector<8x50xf32>
    %54 = arith.index_cast %49 : i32 to index
    %c0_28 = arith.constant 0 : index
    %55 = vector.load %arg5[%54, %c0_28] : memref<400x50xf32, #tpu.memory_space<vmem>>, vector<8x50xf32>
    %56 = arith.addf %53, %55 : vector<8x50xf32>
    %cst_29 = arith.constant 0.36787945 : f32
    %57 = vector.broadcast %cst_29 : f32 to vector<8x50xf32>
    %58 = arith.mulf %57, %32 : vector<8x50xf32>
    %59 = arith.addf %58, %48 : vector<8x50xf32>
    %c2_i32 = arith.constant 2 : i32
    %60 = arith.addf %35, %56 : vector<8x50xf32>
    %cst_30 = arith.constant 0.904837429 : f32
    %61 = vector.broadcast %cst_30 : f32 to vector<8x50xf32>
    %62 = arith.mulf %61, %60 : vector<8x50xf32>
    %63 = arith.addf %38, %59 : vector<8x50xf32>
    %cst_31 = arith.constant 0.36787945 : f32
    %64 = vector.broadcast %cst_31 : f32 to vector<8x50xf32>
    %65 = arith.mulf %64, %63 : vector<8x50xf32>
    %cst_32 = arith.constant 0.271828175 : f32
    %66 = vector.broadcast %cst_32 : f32 to vector<8x50xf32>
    %67 = arith.mulf %66, %62 : vector<8x50xf32>
    %cst_33 = arith.constant -54.3656349 : f32
    %68 = vector.broadcast %cst_33 : f32 to vector<8x50xf32>
    %69 = arith.mulf %68, %65 : vector<8x50xf32>
    %70 = arith.addf %67, %69 : vector<8x50xf32>
    %cst_34 = arith.constant 1.000000e+01 : f32
    %71 = vector.broadcast %cst_34 : f32 to vector<8x50xf32>
    %72 = arith.cmpf oge, %70, %71 : vector<8x50xf32>
    %cst_35 = arith.constant 1.000000e+00 : f32
    %cst_36 = arith.constant 0.000000e+00 : f32
    %73 = vector.broadcast %cst_35 : f32 to vector<8x50xf32>
    %74 = vector.broadcast %cst_36 : f32 to vector<8x50xf32>
    %75 = arith.select %72, %73, %74 : vector<8x50xi1>, vector<8x50xf32>
    %c8_i32_37 = arith.constant 8 : i32
    %76 = arith.muli %c2_i32, %c8_i32_37 : i32
    %77 = arith.index_cast %76 : i32 to index
    %c0_38 = arith.constant 0 : index
    %78 = vector.load %arg6[%77, %c0_38] : memref<400x50xf32, #tpu.memory_space<vmem>>, vector<8x50xf32>
    tpu.vector_store %arg6[%77, %c0_38], %75 {strides = array<i32>} : memref<400x50xf32, #tpu.memory_space<vmem>>, vector<8x50xf32>,
    %cst_39 = arith.constant 0.904837429 : f32
    %79 = vector.broadcast %cst_39 : f32 to vector<8x50xf32>
    %80 = arith.mulf %79, %56 : vector<8x50xf32>
    %81 = arith.index_cast %76 : i32 to index
    %c0_40 = arith.constant 0 : index
    %82 = vector.load %arg5[%81, %c0_40] : memref<400x50xf32, #tpu.memory_space<vmem>>, vector<8x50xf32>
    %83 = arith.addf %80, %82 : vector<8x50xf32>
    %cst_41 = arith.constant 0.36787945 : f32
    %84 = vector.broadcast %cst_41 : f32 to vector<8x50xf32>
    %85 = arith.mulf %84, %59 : vector<8x50xf32>
    %86 = arith.addf %85, %75 : vector<8x50xf32>
    %c3_i32 = arith.constant 3 : i32
    %87 = arith.addf %62, %83 : vector<8x50xf32>
    %cst_42 = arith.constant 0.904837429 : f32
    %88 = vector.broadcast %cst_42 : f32 to vector<8x50xf32>
    %89 = arith.mulf %88, %87 : vector<8x50xf32>
    %90 = arith.addf %65, %86 : vector<8x50xf32>
    %cst_43 = arith.constant 0.36787945 : f32
    %91 = vector.broadcast %cst_43 : f32 to vector<8x50xf32>
    %92 = arith.mulf %91, %90 : vector<8x50xf32>
    %cst_44 = arith.constant 0.271828175 : f32
    %93 = vector.broadcast %cst_44 : f32 to vector<8x50xf32>
    %94 = arith.mulf %93, %89 : vector<8x50xf32>
    %cst_45 = arith.constant -54.3656349 : f32
    %95 = vector.broadcast %cst_45 : f32 to vector<8x50xf32>
    %96 = arith.mulf %95, %92 : vector<8x50xf32>
    %97 = arith.addf %94, %96 : vector<8x50xf32>
    %cst_46 = arith.constant 1.000000e+01 : f32
    %98 = vector.broadcast %cst_46 : f32 to vector<8x50xf32>
    %99 = arith.cmpf oge, %97, %98 : vector<8x50xf32>
    %cst_47 = arith.constant 1.000000e+00 : f32
    %cst_48 = arith.constant 0.000000e+00 : f32
    %100 = vector.broadcast %cst_47 : f32 to vector<8x50xf32>
    %101 = vector.broadcast %cst_48 : f32 to vector<8x50xf32>
    %102 = arith.select %99, %100, %101 : vector<8x50xi1>, vector<8x50xf32>
    %c8_i32_49 = arith.constant 8 : i32
    %103 = arith.muli %c3_i32, %c8_i32_49 : i32
    %104 = arith.index_cast %103 : i32 to index
    %c0_50 = arith.constant 0 : index
    %105 = vector.load %arg6[%104, %c0_50] : memref<400x50xf32, #tpu.memory_space<vmem>>, vector<8x50xf32>
    tpu.vector_store %arg6[%104, %c0_50], %102 {strides = array<i32>} : memref<400x50xf32, #tpu.memory_space<vmem>>, vector<8x50xf32>,
    %cst_51 = arith.constant 0.904837429 : f32
    %106 = vector.broadcast %cst_51 : f32 to vector<8x50xf32>
    %107 = arith.mulf %106, %83 : vector<8x50xf32>
    %108 = arith.index_cast %103 : i32 to index
    %c0_52 = arith.constant 0 : index
    %109 = vector.load %arg5[%108, %c0_52] : memref<400x50xf32, #tpu.memory_space<vmem>>, vector<8x50xf32>
    %110 = arith.addf %107, %109 : vector<8x50xf32>
    %cst_53 = arith.constant 0.36787945 : f32
    %111 = vector.broadcast %cst_53 : f32 to vector<8x50xf32>
    %112 = arith.mulf %111, %86 : vector<8x50xf32>
    %113 = arith.addf %112, %102 : vector<8x50xf32>
    %c4_i32 = arith.constant 4 : i32
    %114 = arith.addf %89, %110 : vector<8x50xf32>
    %cst_54 = arith.constant 0.904837429 : f32
    %115 = vector.broadcast %cst_54 : f32 to vector<8x50xf32>
    %116 = arith.mulf %115, %114 : vector<8x50xf32>
    %117 = arith.addf %92, %113 : vector<8x50xf32>
    %cst_55 = arith.constant 0.36787945 : f32
    %118 = vector.broadcast %cst_55 : f32 to vector<8x50xf32>
    %119 = arith.mulf %118, %117 : vector<8x50xf32>
    %cst_56 = arith.constant 0.271828175 : f32
    %120 = vector.broadcast %cst_56 : f32 to vector<8x50xf32>
    %121 = arith.mulf %120, %116 : vector<8x50xf32>
    %cst_57 = arith.constant -54.3656349 : f32
    %122 = vector.broadcast %cst_57 : f32 to vector<8x50xf32>
    %123 = arith.mulf %122, %119 : vector<8x50xf32>
    %124 = arith.addf %121, %123 : vector<8x50xf32>
    %cst_58 = arith.constant 1.000000e+01 : f32
    %125 = vector.broadcast %cst_58 : f32 to vector<8x50xf32>
    %126 = arith.cmpf oge, %124, %125 : vector<8x50xf32>
    %cst_59 = arith.constant 1.000000e+00 : f32
    %cst_60 = arith.constant 0.000000e+00 : f32
    %127 = vector.broadcast %cst_59 : f32 to vector<8x50xf32>
    %128 = vector.broadcast %cst_60 : f32 to vector<8x50xf32>
    %129 = arith.select %126, %127, %128 : vector<8x50xi1>, vector<8x50xf32>
    %c8_i32_61 = arith.constant 8 : i32
    %130 = arith.muli %c4_i32, %c8_i32_61 : i32
    %131 = arith.index_cast %130 : i32 to index
    %c0_62 = arith.constant 0 : index
    %132 = vector.load %arg6[%131, %c0_62] : memref<400x50xf32, #tpu.memory_space<vmem>>, vector<8x50xf32>
    tpu.vector_store %arg6[%131, %c0_62], %129 {strides = array<i32>} : memref<400x50xf32, #tpu.memory_space<vmem>>, vector<8x50xf32>,
    %cst_63 = arith.constant 0.904837429 : f32
    %133 = vector.broadcast %cst_63 : f32 to vector<8x50xf32>
    %134 = arith.mulf %133, %110 : vector<8x50xf32>
    %135 = arith.index_cast %130 : i32 to index
    %c0_64 = arith.constant 0 : index
    %136 = vector.load %arg5[%135, %c0_64] : memref<400x50xf32, #tpu.memory_space<vmem>>, vector<8x50xf32>
    %137 = arith.addf %134, %136 : vector<8x50xf32>
    %cst_65 = arith.constant 0.36787945 : f32
    %138 = vector.broadcast %cst_65 : f32 to vector<8x50xf32>
    %139 = arith.mulf %138, %113 : vector<8x50xf32>
    %140 = arith.addf %139, %129 : vector<8x50xf32>
    %c5_i32 = arith.constant 5 : i32
    %141 = arith.addf %116, %137 : vector<8x50xf32>
    %cst_66 = arith.constant 0.904837429 : f32
    %142 = vector.broadcast %cst_66 : f32 to vector<8x50xf32>
    %143 = arith.mulf %142, %141 : vector<8x50xf32>
    %144 = arith.addf %119, %140 : vector<8x50xf32>
    %cst_67 = arith.constant 0.36787945 : f32
    %145 = vector.broadcast %cst_67 : f32 to vector<8x50xf32>
    %146 = arith.mulf %145, %144 : vector<8x50xf32>
    %cst_68 = arith.constant 0.271828175 : f32
    %147 = vector.broadcast %cst_68 : f32 to vector<8x50xf32>
    %148 = arith.mulf %147, %143 : vector<8x50xf32>
    %cst_69 = arith.constant -54.3656349 : f32
    %149 = vector.broadcast %cst_69 : f32 to vector<8x50xf32>
    %150 = arith.mulf %149, %146 : vector<8x50xf32>
    %151 = arith.addf %148, %150 : vector<8x50xf32>
    %cst_70 = arith.constant 1.000000e+01 : f32
    %152 = vector.broadcast %cst_70 : f32 to vector<8x50xf32>
    %153 = arith.cmpf oge, %151, %152 : vector<8x50xf32>
    %cst_71 = arith.constant 1.000000e+00 : f32
    %cst_72 = arith.constant 0.000000e+00 : f32
    %154 = vector.broadcast %cst_71 : f32 to vector<8x50xf32>
    %155 = vector.broadcast %cst_72 : f32 to vector<8x50xf32>
    %156 = arith.select %153, %154, %155 : vector<8x50xi1>, vector<8x50xf32>
    %c8_i32_73 = arith.constant 8 : i32
    %157 = arith.muli %c5_i32, %c8_i32_73 : i32
    %158 = arith.index_cast %157 : i32 to index
    %c0_74 = arith.constant 0 : index
    %159 = vector.load %arg6[%158, %c0_74] : memref<400x50xf32, #tpu.memory_space<vmem>>, vector<8x50xf32>
    tpu.vector_store %arg6[%158, %c0_74], %156 {strides = array<i32>} : memref<400x50xf32, #tpu.memory_space<vmem>>, vector<8x50xf32>,
    %cst_75 = arith.constant 0.904837429 : f32
    %160 = vector.broadcast %cst_75 : f32 to vector<8x50xf32>
    %161 = arith.mulf %160, %137 : vector<8x50xf32>
    %162 = arith.index_cast %157 : i32 to index
    %c0_76 = arith.constant 0 : index
    %163 = vector.load %arg5[%162, %c0_76] : memref<400x50xf32, #tpu.memory_space<vmem>>, vector<8x50xf32>
    %164 = arith.addf %161, %163 : vector<8x50xf32>
    %cst_77 = arith.constant 0.36787945 : f32
    %165 = vector.broadcast %cst_77 : f32 to vector<8x50xf32>
    %166 = arith.mulf %165, %140 : vector<8x50xf32>
    %167 = arith.addf %166, %156 : vector<8x50xf32>
    %c6_i32 = arith.constant 6 : i32
    %168 = arith.addf %143, %164 : vector<8x50xf32>
    %cst_78 = arith.constant 0.904837429 : f32
    %169 = vector.broadcast %cst_78 : f32 to vector<8x50xf32>
    %170 = arith.mulf %169, %168 : vector<8x50xf32>
    %171 = arith.addf %146, %167 : vector<8x50xf32>
    %cst_79 = arith.constant 0.36787945 : f32
    %172 = vector.broadcast %cst_79 : f32 to vector<8x50xf32>
    %173 = arith.mulf %172, %171 : vector<8x50xf32>
    %cst_80 = arith.constant 0.271828175 : f32
    %174 = vector.broadcast %cst_80 : f32 to vector<8x50xf32>
    %175 = arith.mulf %174, %170 : vector<8x50xf32>
    %cst_81 = arith.constant -54.3656349 : f32
    %176 = vector.broadcast %cst_81 : f32 to vector<8x50xf32>
    %177 = arith.mulf %176, %173 : vector<8x50xf32>
    %178 = arith.addf %175, %177 : vector<8x50xf32>
    %cst_82 = arith.constant 1.000000e+01 : f32
    %179 = vector.broadcast %cst_82 : f32 to vector<8x50xf32>
    %180 = arith.cmpf oge, %178, %179 : vector<8x50xf32>
    %cst_83 = arith.constant 1.000000e+00 : f32
    %cst_84 = arith.constant 0.000000e+00 : f32
    %181 = vector.broadcast %cst_83 : f32 to vector<8x50xf32>
    %182 = vector.broadcast %cst_84 : f32 to vector<8x50xf32>
    %183 = arith.select %180, %181, %182 : vector<8x50xi1>, vector<8x50xf32>
    %c8_i32_85 = arith.constant 8 : i32
    %184 = arith.muli %c6_i32, %c8_i32_85 : i32
    %185 = arith.index_cast %184 : i32 to index
    %c0_86 = arith.constant 0 : index
    %186 = vector.load %arg6[%185, %c0_86] : memref<400x50xf32, #tpu.memory_space<vmem>>, vector<8x50xf32>
    tpu.vector_store %arg6[%185, %c0_86], %183 {strides = array<i32>} : memref<400x50xf32, #tpu.memory_space<vmem>>, vector<8x50xf32>,
    %cst_87 = arith.constant 0.904837429 : f32
    %187 = vector.broadcast %cst_87 : f32 to vector<8x50xf32>
    %188 = arith.mulf %187, %164 : vector<8x50xf32>
    %189 = arith.index_cast %184 : i32 to index
    %c0_88 = arith.constant 0 : index
    %190 = vector.load %arg5[%189, %c0_88] : memref<400x50xf32, #tpu.memory_space<vmem>>, vector<8x50xf32>
    %191 = arith.addf %188, %190 : vector<8x50xf32>
    %cst_89 = arith.constant 0.36787945 : f32
    %192 = vector.broadcast %cst_89 : f32 to vector<8x50xf32>
    %193 = arith.mulf %192, %167 : vector<8x50xf32>
    %194 = arith.addf %193, %183 : vector<8x50xf32>
    %c7_i32 = arith.constant 7 : i32
    %195 = arith.addf %170, %191 : vector<8x50xf32>
    %cst_90 = arith.constant 0.904837429 : f32
    %196 = vector.broadcast %cst_90 : f32 to vector<8x50xf32>
    %197 = arith.mulf %196, %195 : vector<8x50xf32>
    %198 = arith.addf %173, %194 : vector<8x50xf32>
    %cst_91 = arith.constant 0.36787945 : f32
    %199 = vector.broadcast %cst_91 : f32 to vector<8x50xf32>
    %200 = arith.mulf %199, %198 : vector<8x50xf32>
    %cst_92 = arith.constant 0.271828175 : f32
    %201 = vector.broadcast %cst_92 : f32 to vector<8x50xf32>
    %202 = arith.mulf %201, %197 : vector<8x50xf32>
    %cst_93 = arith.constant -54.3656349 : f32
    %203 = vector.broadcast %cst_93 : f32 to vector<8x50xf32>
    %204 = arith.mulf %203, %200 : vector<8x50xf32>
    %205 = arith.addf %202, %204 : vector<8x50xf32>
    %cst_94 = arith.constant 1.000000e+01 : f32
    %206 = vector.broadcast %cst_94 : f32 to vector<8x50xf32>
    %207 = arith.cmpf oge, %205, %206 : vector<8x50xf32>
    %cst_95 = arith.constant 1.000000e+00 : f32
    %cst_96 = arith.constant 0.000000e+00 : f32
    %208 = vector.broadcast %cst_95 : f32 to vector<8x50xf32>
    %209 = vector.broadcast %cst_96 : f32 to vector<8x50xf32>
    %210 = arith.select %207, %208, %209 : vector<8x50xi1>, vector<8x50xf32>
    %c8_i32_97 = arith.constant 8 : i32
    %211 = arith.muli %c7_i32, %c8_i32_97 : i32
    %212 = arith.index_cast %211 : i32 to index
    %c0_98 = arith.constant 0 : index
    %213 = vector.load %arg6[%212, %c0_98] : memref<400x50xf32, #tpu.memory_space<vmem>>, vector<8x50xf32>
    tpu.vector_store %arg6[%212, %c0_98], %210 {strides = array<i32>} : memref<400x50xf32, #tpu.memory_space<vmem>>, vector<8x50xf32>,
    %cst_99 = arith.constant 0.904837429 : f32
    %214 = vector.broadcast %cst_99 : f32 to vector<8x50xf32>
    %215 = arith.mulf %214, %191 : vector<8x50xf32>
    %216 = arith.index_cast %211 : i32 to index
    %c0_100 = arith.constant 0 : index
    %217 = vector.load %arg5[%216, %c0_100] : memref<400x50xf32, #tpu.memory_space<vmem>>, vector<8x50xf32>
    %218 = arith.addf %215, %217 : vector<8x50xf32>
    %cst_101 = arith.constant 0.36787945 : f32
    %219 = vector.broadcast %cst_101 : f32 to vector<8x50xf32>
    %220 = arith.mulf %219, %194 : vector<8x50xf32>
    %221 = arith.addf %220, %210 : vector<8x50xf32>
    %c8_i32_102 = arith.constant 8 : i32
    %222 = arith.addf %197, %218 : vector<8x50xf32>
    %cst_103 = arith.constant 0.904837429 : f32
    %223 = vector.broadcast %cst_103 : f32 to vector<8x50xf32>
    %224 = arith.mulf %223, %222 : vector<8x50xf32>
    %225 = arith.addf %200, %221 : vector<8x50xf32>
    %cst_104 = arith.constant 0.36787945 : f32
    %226 = vector.broadcast %cst_104 : f32 to vector<8x50xf32>
    %227 = arith.mulf %226, %225 : vector<8x50xf32>
    %cst_105 = arith.constant 0.271828175 : f32
    %228 = vector.broadcast %cst_105 : f32 to vector<8x50xf32>
    %229 = arith.mulf %228, %224 : vector<8x50xf32>
    %cst_106 = arith.constant -54.3656349 : f32
    %230 = vector.broadcast %cst_106 : f32 to vector<8x50xf32>
    %231 = arith.mulf %230, %227 : vector<8x50xf32>
    %232 = arith.addf %229, %231 : vector<8x50xf32>
    %cst_107 = arith.constant 1.000000e+01 : f32
    %233 = vector.broadcast %cst_107 : f32 to vector<8x50xf32>
    %234 = arith.cmpf oge, %232, %233 : vector<8x50xf32>
    %cst_108 = arith.constant 1.000000e+00 : f32
    %cst_109 = arith.constant 0.000000e+00 : f32
    %235 = vector.broadcast %cst_108 : f32 to vector<8x50xf32>
    %236 = vector.broadcast %cst_109 : f32 to vector<8x50xf32>
    %237 = arith.select %234, %235, %236 : vector<8x50xi1>, vector<8x50xf32>
    %c8_i32_110 = arith.constant 8 : i32
    %238 = arith.muli %c8_i32_102, %c8_i32_110 : i32
    %239 = arith.index_cast %238 : i32 to index
    %c0_111 = arith.constant 0 : index
    %240 = vector.load %arg6[%239, %c0_111] : memref<400x50xf32, #tpu.memory_space<vmem>>, vector<8x50xf32>
    tpu.vector_store %arg6[%239, %c0_111], %237 {strides = array<i32>} : memref<400x50xf32, #tpu.memory_space<vmem>>, vector<8x50xf32>,
    %cst_112 = arith.constant 0.904837429 : f32
    %241 = vector.broadcast %cst_112 : f32 to vector<8x50xf32>
    %242 = arith.mulf %241, %218 : vector<8x50xf32>
    %243 = arith.index_cast %238 : i32 to index
    %c0_113 = arith.constant 0 : index
    %244 = vector.load %arg5[%243, %c0_113] : memref<400x50xf32, #tpu.memory_space<vmem>>, vector<8x50xf32>
    %245 = arith.addf %242, %244 : vector<8x50xf32>
    %cst_114 = arith.constant 0.36787945 : f32
    %246 = vector.broadcast %cst_114 : f32 to vector<8x50xf32>
    %247 = arith.mulf %246, %221 : vector<8x50xf32>
    %248 = arith.addf %247, %237 : vector<8x50xf32>
    %c9_i32 = arith.constant 9 : i32
    %249 = arith.addf %224, %245 : vector<8x50xf32>
    %cst_115 = arith.constant 0.904837429 : f32
    %250 = vector.broadcast %cst_115 : f32 to vector<8x50xf32>
    %251 = arith.mulf %250, %249 : vector<8x50xf32>
    %252 = arith.addf %227, %248 : vector<8x50xf32>
    %cst_116 = arith.constant 0.36787945 : f32
    %253 = vector.broadcast %cst_116 : f32 to vector<8x50xf32>
    %254 = arith.mulf %253, %252 : vector<8x50xf32>
    %cst_117 = arith.constant 0.271828175 : f32
    %255 = vector.broadcast %cst_117 : f32 to vector<8x50xf32>
    %256 = arith.mulf %255, %251 : vector<8x50xf32>
    %cst_118 = arith.constant -54.3656349 : f32
    %257 = vector.broadcast %cst_118 : f32 to vector<8x50xf32>
    %258 = arith.mulf %257, %254 : vector<8x50xf32>
    %259 = arith.addf %256, %258 : vector<8x50xf32>
    %cst_119 = arith.constant 1.000000e+01 : f32
    %260 = vector.broadcast %cst_119 : f32 to vector<8x50xf32>
    %261 = arith.cmpf oge, %259, %260 : vector<8x50xf32>
    %cst_120 = arith.constant 1.000000e+00 : f32
    %cst_121 = arith.constant 0.000000e+00 : f32
    %262 = vector.broadcast %cst_120 : f32 to vector<8x50xf32>
    %263 = vector.broadcast %cst_121 : f32 to vector<8x50xf32>
    %264 = arith.select %261, %262, %263 : vector<8x50xi1>, vector<8x50xf32>
    %c8_i32_122 = arith.constant 8 : i32
    %265 = arith.muli %c9_i32, %c8_i32_122 : i32
    %266 = arith.index_cast %265 : i32 to index
    %c0_123 = arith.constant 0 : index
    %267 = vector.load %arg6[%266, %c0_123] : memref<400x50xf32, #tpu.memory_space<vmem>>, vector<8x50xf32>
    tpu.vector_store %arg6[%266, %c0_123], %264 {strides = array<i32>} : memref<400x50xf32, #tpu.memory_space<vmem>>, vector<8x50xf32>,
    %cst_124 = arith.constant 0.904837429 : f32
    %268 = vector.broadcast %cst_124 : f32 to vector<8x50xf32>
    %269 = arith.mulf %268, %245 : vector<8x50xf32>
    %270 = arith.index_cast %265 : i32 to index
    %c0_125 = arith.constant 0 : index
    %271 = vector.load %arg5[%270, %c0_125] : memref<400x50xf32, #tpu.memory_space<vmem>>, vector<8x50xf32>
    %272 = arith.addf %269, %271 : vector<8x50xf32>
    %cst_126 = arith.constant 0.36787945 : f32
    %273 = vector.broadcast %cst_126 : f32 to vector<8x50xf32>
    %274 = arith.mulf %273, %248 : vector<8x50xf32>
    %275 = arith.addf %274, %264 : vector<8x50xf32>
    %c10_i32 = arith.constant 10 : i32
    %276 = arith.addf %251, %272 : vector<8x50xf32>
    %cst_127 = arith.constant 0.904837429 : f32
    %277 = vector.broadcast %cst_127 : f32 to vector<8x50xf32>
    %278 = arith.mulf %277, %276 : vector<8x50xf32>
    %279 = arith.addf %254, %275 : vector<8x50xf32>
    %cst_128 = arith.constant 0.36787945 : f32
    %280 = vector.broadcast %cst_128 : f32 to vector<8x50xf32>
    %281 = arith.mulf %280, %279 : vector<8x50xf32>
    %cst_129 = arith.constant 0.271828175 : f32
    %282 = vector.broadcast %cst_129 : f32 to vector<8x50xf32>
    %283 = arith.mulf %282, %278 : vector<8x50xf32>
    %cst_130 = arith.constant -54.3656349 : f32
    %284 = vector.broadcast %cst_130 : f32 to vector<8x50xf32>
    %285 = arith.mulf %284, %281 : vector<8x50xf32>
    %286 = arith.addf %283, %285 : vector<8x50xf32>
    %cst_131 = arith.constant 1.000000e+01 : f32
    %287 = vector.broadcast %cst_131 : f32 to vector<8x50xf32>
    %288 = arith.cmpf oge, %286, %287 : vector<8x50xf32>
    %cst_132 = arith.constant 1.000000e+00 : f32
    %cst_133 = arith.constant 0.000000e+00 : f32
    %289 = vector.broadcast %cst_132 : f32 to vector<8x50xf32>
    %290 = vector.broadcast %cst_133 : f32 to vector<8x50xf32>
    %291 = arith.select %288, %289, %290 : vector<8x50xi1>, vector<8x50xf32>
    %c8_i32_134 = arith.constant 8 : i32
    %292 = arith.muli %c10_i32, %c8_i32_134 : i32
    %293 = arith.index_cast %292 : i32 to index
    %c0_135 = arith.constant 0 : index
    %294 = vector.load %arg6[%293, %c0_135] : memref<400x50xf32, #tpu.memory_space<vmem>>, vector<8x50xf32>
    tpu.vector_store %arg6[%293, %c0_135], %291 {strides = array<i32>} : memref<400x50xf32, #tpu.memory_space<vmem>>, vector<8x50xf32>,
    %cst_136 = arith.constant 0.904837429 : f32
    %295 = vector.broadcast %cst_136 : f32 to vector<8x50xf32>
    %296 = arith.mulf %295, %272 : vector<8x50xf32>
    %297 = arith.index_cast %292 : i32 to index
    %c0_137 = arith.constant 0 : index
    %298 = vector.load %arg5[%297, %c0_137] : memref<400x50xf32, #tpu.memory_space<vmem>>, vector<8x50xf32>
    %299 = arith.addf %296, %298 : vector<8x50xf32>
    %cst_138 = arith.constant 0.36787945 : f32
    %300 = vector.broadcast %cst_138 : f32 to vector<8x50xf32>
    %301 = arith.mulf %300, %275 : vector<8x50xf32>
    %302 = arith.addf %301, %291 : vector<8x50xf32>
    %c11_i32 = arith.constant 11 : i32
    %303 = arith.addf %278, %299 : vector<8x50xf32>
    %cst_139 = arith.constant 0.904837429 : f32
    %304 = vector.broadcast %cst_139 : f32 to vector<8x50xf32>
    %305 = arith.mulf %304, %303 : vector<8x50xf32>
    %306 = arith.addf %281, %302 : vector<8x50xf32>
    %cst_140 = arith.constant 0.36787945 : f32
    %307 = vector.broadcast %cst_140 : f32 to vector<8x50xf32>
    %308 = arith.mulf %307, %306 : vector<8x50xf32>
    %cst_141 = arith.constant 0.271828175 : f32
    %309 = vector.broadcast %cst_141 : f32 to vector<8x50xf32>
    %310 = arith.mulf %309, %305 : vector<8x50xf32>
    %cst_142 = arith.constant -54.3656349 : f32
    %311 = vector.broadcast %cst_142 : f32 to vector<8x50xf32>
    %312 = arith.mulf %311, %308 : vector<8x50xf32>
    %313 = arith.addf %310, %312 : vector<8x50xf32>
    %cst_143 = arith.constant 1.000000e+01 : f32
    %314 = vector.broadcast %cst_143 : f32 to vector<8x50xf32>
    %315 = arith.cmpf oge, %313, %314 : vector<8x50xf32>
    %cst_144 = arith.constant 1.000000e+00 : f32
    %cst_145 = arith.constant 0.000000e+00 : f32
    %316 = vector.broadcast %cst_144 : f32 to vector<8x50xf32>
    %317 = vector.broadcast %cst_145 : f32 to vector<8x50xf32>
    %318 = arith.select %315, %316, %317 : vector<8x50xi1>, vector<8x50xf32>
    %c8_i32_146 = arith.constant 8 : i32
    %319 = arith.muli %c11_i32, %c8_i32_146 : i32
    %320 = arith.index_cast %319 : i32 to index
    %c0_147 = arith.constant 0 : index
    %321 = vector.load %arg6[%320, %c0_147] : memref<400x50xf32, #tpu.memory_space<vmem>>, vector<8x50xf32>
    tpu.vector_store %arg6[%320, %c0_147], %318 {strides = array<i32>} : memref<400x50xf32, #tpu.memory_space<vmem>>, vector<8x50xf32>,
    %cst_148 = arith.constant 0.904837429 : f32
    %322 = vector.broadcast %cst_148 : f32 to vector<8x50xf32>
    %323 = arith.mulf %322, %299 : vector<8x50xf32>
    %324 = arith.index_cast %319 : i32 to index
    %c0_149 = arith.constant 0 : index
    %325 = vector.load %arg5[%324, %c0_149] : memref<400x50xf32, #tpu.memory_space<vmem>>, vector<8x50xf32>
    %326 = arith.addf %323, %325 : vector<8x50xf32>
    %cst_150 = arith.constant 0.36787945 : f32
    %327 = vector.broadcast %cst_150 : f32 to vector<8x50xf32>
    %328 = arith.mulf %327, %302 : vector<8x50xf32>
    %329 = arith.addf %328, %318 : vector<8x50xf32>
    %c12_i32 = arith.constant 12 : i32
    %330 = arith.addf %305, %326 : vector<8x50xf32>
    %cst_151 = arith.constant 0.904837429 : f32
    %331 = vector.broadcast %cst_151 : f32 to vector<8x50xf32>
    %332 = arith.mulf %331, %330 : vector<8x50xf32>
    %333 = arith.addf %308, %329 : vector<8x50xf32>
    %cst_152 = arith.constant 0.36787945 : f32
    %334 = vector.broadcast %cst_152 : f32 to vector<8x50xf32>
    %335 = arith.mulf %334, %333 : vector<8x50xf32>
    %cst_153 = arith.constant 0.271828175 : f32
    %336 = vector.broadcast %cst_153 : f32 to vector<8x50xf32>
    %337 = arith.mulf %336, %332 : vector<8x50xf32>
    %cst_154 = arith.constant -54.3656349 : f32
    %338 = vector.broadcast %cst_154 : f32 to vector<8x50xf32>
    %339 = arith.mulf %338, %335 : vector<8x50xf32>
    %340 = arith.addf %337, %339 : vector<8x50xf32>
    %cst_155 = arith.constant 1.000000e+01 : f32
    %341 = vector.broadcast %cst_155 : f32 to vector<8x50xf32>
    %342 = arith.cmpf oge, %340, %341 : vector<8x50xf32>
    %cst_156 = arith.constant 1.000000e+00 : f32
    %cst_157 = arith.constant 0.000000e+00 : f32
    %343 = vector.broadcast %cst_156 : f32 to vector<8x50xf32>
    %344 = vector.broadcast %cst_157 : f32 to vector<8x50xf32>
    %345 = arith.select %342, %343, %344 : vector<8x50xi1>, vector<8x50xf32>
    %c8_i32_158 = arith.constant 8 : i32
    %346 = arith.muli %c12_i32, %c8_i32_158 : i32
    %347 = arith.index_cast %346 : i32 to index
    %c0_159 = arith.constant 0 : index
    %348 = vector.load %arg6[%347, %c0_159] : memref<400x50xf32, #tpu.memory_space<vmem>>, vector<8x50xf32>
    tpu.vector_store %arg6[%347, %c0_159], %345 {strides = array<i32>} : memref<400x50xf32, #tpu.memory_space<vmem>>, vector<8x50xf32>,
    %cst_160 = arith.constant 0.904837429 : f32
    %349 = vector.broadcast %cst_160 : f32 to vector<8x50xf32>
    %350 = arith.mulf %349, %326 : vector<8x50xf32>
    %351 = arith.index_cast %346 : i32 to index
    %c0_161 = arith.constant 0 : index
    %352 = vector.load %arg5[%351, %c0_161] : memref<400x50xf32, #tpu.memory_space<vmem>>, vector<8x50xf32>
    %353 = arith.addf %350, %352 : vector<8x50xf32>
    %cst_162 = arith.constant 0.36787945 : f32
    %354 = vector.broadcast %cst_162 : f32 to vector<8x50xf32>
    %355 = arith.mulf %354, %329 : vector<8x50xf32>
    %356 = arith.addf %355, %345 : vector<8x50xf32>
    %c13_i32 = arith.constant 13 : i32
    %357 = arith.addf %332, %353 : vector<8x50xf32>
    %cst_163 = arith.constant 0.904837429 : f32
    %358 = vector.broadcast %cst_163 : f32 to vector<8x50xf32>
    %359 = arith.mulf %358, %357 : vector<8x50xf32>
    %360 = arith.addf %335, %356 : vector<8x50xf32>
    %cst_164 = arith.constant 0.36787945 : f32
    %361 = vector.broadcast %cst_164 : f32 to vector<8x50xf32>
    %362 = arith.mulf %361, %360 : vector<8x50xf32>
    %cst_165 = arith.constant 0.271828175 : f32
    %363 = vector.broadcast %cst_165 : f32 to vector<8x50xf32>
    %364 = arith.mulf %363, %359 : vector<8x50xf32>
    %cst_166 = arith.constant -54.3656349 : f32
    %365 = vector.broadcast %cst_166 : f32 to vector<8x50xf32>
    %366 = arith.mulf %365, %362 : vector<8x50xf32>
    %367 = arith.addf %364, %366 : vector<8x50xf32>
    %cst_167 = arith.constant 1.000000e+01 : f32
    %368 = vector.broadcast %cst_167 : f32 to vector<8x50xf32>
    %369 = arith.cmpf oge, %367, %368 : vector<8x50xf32>
    %cst_168 = arith.constant 1.000000e+00 : f32
    %cst_169 = arith.constant 0.000000e+00 : f32
    %370 = vector.broadcast %cst_168 : f32 to vector<8x50xf32>
    %371 = vector.broadcast %cst_169 : f32 to vector<8x50xf32>
    %372 = arith.select %369, %370, %371 : vector<8x50xi1>, vector<8x50xf32>
    %c8_i32_170 = arith.constant 8 : i32
    %373 = arith.muli %c13_i32, %c8_i32_170 : i32
    %374 = arith.index_cast %373 : i32 to index
    %c0_171 = arith.constant 0 : index
    %375 = vector.load %arg6[%374, %c0_171] : memref<400x50xf32, #tpu.memory_space<vmem>>, vector<8x50xf32>
    tpu.vector_store %arg6[%374, %c0_171], %372 {strides = array<i32>} : memref<400x50xf32, #tpu.memory_space<vmem>>, vector<8x50xf32>,
    %cst_172 = arith.constant 0.904837429 : f32
    %376 = vector.broadcast %cst_172 : f32 to vector<8x50xf32>
    %377 = arith.mulf %376, %353 : vector<8x50xf32>
    %378 = arith.index_cast %373 : i32 to index
    %c0_173 = arith.constant 0 : index
    %379 = vector.load %arg5[%378, %c0_173] : memref<400x50xf32, #tpu.memory_space<vmem>>, vector<8x50xf32>
    %380 = arith.addf %377, %379 : vector<8x50xf32>
    %cst_174 = arith.constant 0.36787945 : f32
    %381 = vector.broadcast %cst_174 : f32 to vector<8x50xf32>
    %382 = arith.mulf %381, %356 : vector<8x50xf32>
    %383 = arith.addf %382, %372 : vector<8x50xf32>
    %c14_i32 = arith.constant 14 : i32
    %384 = arith.addf %359, %380 : vector<8x50xf32>
    %cst_175 = arith.constant 0.904837429 : f32
    %385 = vector.broadcast %cst_175 : f32 to vector<8x50xf32>
    %386 = arith.mulf %385, %384 : vector<8x50xf32>
    %387 = arith.addf %362, %383 : vector<8x50xf32>
    %cst_176 = arith.constant 0.36787945 : f32
    %388 = vector.broadcast %cst_176 : f32 to vector<8x50xf32>
    %389 = arith.mulf %388, %387 : vector<8x50xf32>
    %cst_177 = arith.constant 0.271828175 : f32
    %390 = vector.broadcast %cst_177 : f32 to vector<8x50xf32>
    %391 = arith.mulf %390, %386 : vector<8x50xf32>
    %cst_178 = arith.constant -54.3656349 : f32
    %392 = vector.broadcast %cst_178 : f32 to vector<8x50xf32>
    %393 = arith.mulf %392, %389 : vector<8x50xf32>
    %394 = arith.addf %391, %393 : vector<8x50xf32>
    %cst_179 = arith.constant 1.000000e+01 : f32
    %395 = vector.broadcast %cst_179 : f32 to vector<8x50xf32>
    %396 = arith.cmpf oge, %394, %395 : vector<8x50xf32>
    %cst_180 = arith.constant 1.000000e+00 : f32
    %cst_181 = arith.constant 0.000000e+00 : f32
    %397 = vector.broadcast %cst_180 : f32 to vector<8x50xf32>
    %398 = vector.broadcast %cst_181 : f32 to vector<8x50xf32>
    %399 = arith.select %396, %397, %398 : vector<8x50xi1>, vector<8x50xf32>
    %c8_i32_182 = arith.constant 8 : i32
    %400 = arith.muli %c14_i32, %c8_i32_182 : i32
    %401 = arith.index_cast %400 : i32 to index
    %c0_183 = arith.constant 0 : index
    %402 = vector.load %arg6[%401, %c0_183] : memref<400x50xf32, #tpu.memory_space<vmem>>, vector<8x50xf32>
    tpu.vector_store %arg6[%401, %c0_183], %399 {strides = array<i32>} : memref<400x50xf32, #tpu.memory_space<vmem>>, vector<8x50xf32>,
    %cst_184 = arith.constant 0.904837429 : f32
    %403 = vector.broadcast %cst_184 : f32 to vector<8x50xf32>
    %404 = arith.mulf %403, %380 : vector<8x50xf32>
    %405 = arith.index_cast %400 : i32 to index
    %c0_185 = arith.constant 0 : index
    %406 = vector.load %arg5[%405, %c0_185] : memref<400x50xf32, #tpu.memory_space<vmem>>, vector<8x50xf32>
    %407 = arith.addf %404, %406 : vector<8x50xf32>
    %cst_186 = arith.constant 0.36787945 : f32
    %408 = vector.broadcast %cst_186 : f32 to vector<8x50xf32>
    %409 = arith.mulf %408, %383 : vector<8x50xf32>
    %410 = arith.addf %409, %399 : vector<8x50xf32>
    %c15_i32 = arith.constant 15 : i32
    %411 = arith.addf %386, %407 : vector<8x50xf32>
    %cst_187 = arith.constant 0.904837429 : f32
    %412 = vector.broadcast %cst_187 : f32 to vector<8x50xf32>
    %413 = arith.mulf %412, %411 : vector<8x50xf32>
    %414 = arith.addf %389, %410 : vector<8x50xf32>
    %cst_188 = arith.constant 0.36787945 : f32
    %415 = vector.broadcast %cst_188 : f32 to vector<8x50xf32>
    %416 = arith.mulf %415, %414 : vector<8x50xf32>
    %cst_189 = arith.constant 0.271828175 : f32
    %417 = vector.broadcast %cst_189 : f32 to vector<8x50xf32>
    %418 = arith.mulf %417, %413 : vector<8x50xf32>
    %cst_190 = arith.constant -54.3656349 : f32
    %419 = vector.broadcast %cst_190 : f32 to vector<8x50xf32>
    %420 = arith.mulf %419, %416 : vector<8x50xf32>
    %421 = arith.addf %418, %420 : vector<8x50xf32>
    %cst_191 = arith.constant 1.000000e+01 : f32
    %422 = vector.broadcast %cst_191 : f32 to vector<8x50xf32>
    %423 = arith.cmpf oge, %421, %422 : vector<8x50xf32>
    %cst_192 = arith.constant 1.000000e+00 : f32
    %cst_193 = arith.constant 0.000000e+00 : f32
    %424 = vector.broadcast %cst_192 : f32 to vector<8x50xf32>
    %425 = vector.broadcast %cst_193 : f32 to vector<8x50xf32>
    %426 = arith.select %423, %424, %425 : vector<8x50xi1>, vector<8x50xf32>
    %c8_i32_194 = arith.constant 8 : i32
    %427 = arith.muli %c15_i32, %c8_i32_194 : i32
    %428 = arith.index_cast %427 : i32 to index
    %c0_195 = arith.constant 0 : index
    %429 = vector.load %arg6[%428, %c0_195] : memref<400x50xf32, #tpu.memory_space<vmem>>, vector<8x50xf32>
    tpu.vector_store %arg6[%428, %c0_195], %426 {strides = array<i32>} : memref<400x50xf32, #tpu.memory_space<vmem>>, vector<8x50xf32>,
    %cst_196 = arith.constant 0.904837429 : f32
    %430 = vector.broadcast %cst_196 : f32 to vector<8x50xf32>
    %431 = arith.mulf %430, %407 : vector<8x50xf32>
    %432 = arith.index_cast %427 : i32 to index
    %c0_197 = arith.constant 0 : index
    %433 = vector.load %arg5[%432, %c0_197] : memref<400x50xf32, #tpu.memory_space<vmem>>, vector<8x50xf32>
    %434 = arith.addf %431, %433 : vector<8x50xf32>
    %cst_198 = arith.constant 0.36787945 : f32
    %435 = vector.broadcast %cst_198 : f32 to vector<8x50xf32>
    %436 = arith.mulf %435, %410 : vector<8x50xf32>
    %437 = arith.addf %436, %426 : vector<8x50xf32>
    %c16_i32 = arith.constant 16 : i32
    %438 = arith.addf %413, %434 : vector<8x50xf32>
    %cst_199 = arith.constant 0.904837429 : f32
    %439 = vector.broadcast %cst_199 : f32 to vector<8x50xf32>
    %440 = arith.mulf %439, %438 : vector<8x50xf32>
    %441 = arith.addf %416, %437 : vector<8x50xf32>
    %cst_200 = arith.constant 0.36787945 : f32
    %442 = vector.broadcast %cst_200 : f32 to vector<8x50xf32>
    %443 = arith.mulf %442, %441 : vector<8x50xf32>
    %cst_201 = arith.constant 0.271828175 : f32
    %444 = vector.broadcast %cst_201 : f32 to vector<8x50xf32>
    %445 = arith.mulf %444, %440 : vector<8x50xf32>
    %cst_202 = arith.constant -54.3656349 : f32
    %446 = vector.broadcast %cst_202 : f32 to vector<8x50xf32>
    %447 = arith.mulf %446, %443 : vector<8x50xf32>
    %448 = arith.addf %445, %447 : vector<8x50xf32>
    %cst_203 = arith.constant 1.000000e+01 : f32
    %449 = vector.broadcast %cst_203 : f32 to vector<8x50xf32>
    %450 = arith.cmpf oge, %448, %449 : vector<8x50xf32>
    %cst_204 = arith.constant 1.000000e+00 : f32
    %cst_205 = arith.constant 0.000000e+00 : f32
    %451 = vector.broadcast %cst_204 : f32 to vector<8x50xf32>
    %452 = vector.broadcast %cst_205 : f32 to vector<8x50xf32>
    %453 = arith.select %450, %451, %452 : vector<8x50xi1>, vector<8x50xf32>
    %c8_i32_206 = arith.constant 8 : i32
    %454 = arith.muli %c16_i32, %c8_i32_206 : i32
    %455 = arith.index_cast %454 : i32 to index
    %c0_207 = arith.constant 0 : index
    %456 = vector.load %arg6[%455, %c0_207] : memref<400x50xf32, #tpu.memory_space<vmem>>, vector<8x50xf32>
    tpu.vector_store %arg6[%455, %c0_207], %453 {strides = array<i32>} : memref<400x50xf32, #tpu.memory_space<vmem>>, vector<8x50xf32>,
    %cst_208 = arith.constant 0.904837429 : f32
    %457 = vector.broadcast %cst_208 : f32 to vector<8x50xf32>
    %458 = arith.mulf %457, %434 : vector<8x50xf32>
    %459 = arith.index_cast %454 : i32 to index
    %c0_209 = arith.constant 0 : index
    %460 = vector.load %arg5[%459, %c0_209] : memref<400x50xf32, #tpu.memory_space<vmem>>, vector<8x50xf32>
    %461 = arith.addf %458, %460 : vector<8x50xf32>
    %cst_210 = arith.constant 0.36787945 : f32
    %462 = vector.broadcast %cst_210 : f32 to vector<8x50xf32>
    %463 = arith.mulf %462, %437 : vector<8x50xf32>
    %464 = arith.addf %463, %453 : vector<8x50xf32>
    %c17_i32 = arith.constant 17 : i32
    %465 = arith.addf %440, %461 : vector<8x50xf32>
    %cst_211 = arith.constant 0.904837429 : f32
    %466 = vector.broadcast %cst_211 : f32 to vector<8x50xf32>
    %467 = arith.mulf %466, %465 : vector<8x50xf32>
    %468 = arith.addf %443, %464 : vector<8x50xf32>
    %cst_212 = arith.constant 0.36787945 : f32
    %469 = vector.broadcast %cst_212 : f32 to vector<8x50xf32>
    %470 = arith.mulf %469, %468 : vector<8x50xf32>
    %cst_213 = arith.constant 0.271828175 : f32
    %471 = vector.broadcast %cst_213 : f32 to vector<8x50xf32>
    %472 = arith.mulf %471, %467 : vector<8x50xf32>
    %cst_214 = arith.constant -54.3656349 : f32
    %473 = vector.broadcast %cst_214 : f32 to vector<8x50xf32>
    %474 = arith.mulf %473, %470 : vector<8x50xf32>
    %475 = arith.addf %472, %474 : vector<8x50xf32>
    %cst_215 = arith.constant 1.000000e+01 : f32
    %476 = vector.broadcast %cst_215 : f32 to vector<8x50xf32>
    %477 = arith.cmpf oge, %475, %476 : vector<8x50xf32>
    %cst_216 = arith.constant 1.000000e+00 : f32
    %cst_217 = arith.constant 0.000000e+00 : f32
    %478 = vector.broadcast %cst_216 : f32 to vector<8x50xf32>
    %479 = vector.broadcast %cst_217 : f32 to vector<8x50xf32>
    %480 = arith.select %477, %478, %479 : vector<8x50xi1>, vector<8x50xf32>
    %c8_i32_218 = arith.constant 8 : i32
    %481 = arith.muli %c17_i32, %c8_i32_218 : i32
    %482 = arith.index_cast %481 : i32 to index
    %c0_219 = arith.constant 0 : index
    %483 = vector.load %arg6[%482, %c0_219] : memref<400x50xf32, #tpu.memory_space<vmem>>, vector<8x50xf32>
    tpu.vector_store %arg6[%482, %c0_219], %480 {strides = array<i32>} : memref<400x50xf32, #tpu.memory_space<vmem>>, vector<8x50xf32>,
    %cst_220 = arith.constant 0.904837429 : f32
    %484 = vector.broadcast %cst_220 : f32 to vector<8x50xf32>
    %485 = arith.mulf %484, %461 : vector<8x50xf32>
    %486 = arith.index_cast %481 : i32 to index
    %c0_221 = arith.constant 0 : index
    %487 = vector.load %arg5[%486, %c0_221] : memref<400x50xf32, #tpu.memory_space<vmem>>, vector<8x50xf32>
    %488 = arith.addf %485, %487 : vector<8x50xf32>
    %cst_222 = arith.constant 0.36787945 : f32
    %489 = vector.broadcast %cst_222 : f32 to vector<8x50xf32>
    %490 = arith.mulf %489, %464 : vector<8x50xf32>
    %491 = arith.addf %490, %480 : vector<8x50xf32>
    %c18_i32 = arith.constant 18 : i32
    %492 = arith.addf %467, %488 : vector<8x50xf32>
    %cst_223 = arith.constant 0.904837429 : f32
    %493 = vector.broadcast %cst_223 : f32 to vector<8x50xf32>
    %494 = arith.mulf %493, %492 : vector<8x50xf32>
    %495 = arith.addf %470, %491 : vector<8x50xf32>
    %cst_224 = arith.constant 0.36787945 : f32
    %496 = vector.broadcast %cst_224 : f32 to vector<8x50xf32>
    %497 = arith.mulf %496, %495 : vector<8x50xf32>
    %cst_225 = arith.constant 0.271828175 : f32
    %498 = vector.broadcast %cst_225 : f32 to vector<8x50xf32>
    %499 = arith.mulf %498, %494 : vector<8x50xf32>
    %cst_226 = arith.constant -54.3656349 : f32
    %500 = vector.broadcast %cst_226 : f32 to vector<8x50xf32>
    %501 = arith.mulf %500, %497 : vector<8x50xf32>
    %502 = arith.addf %499, %501 : vector<8x50xf32>
    %cst_227 = arith.constant 1.000000e+01 : f32
    %503 = vector.broadcast %cst_227 : f32 to vector<8x50xf32>
    %504 = arith.cmpf oge, %502, %503 : vector<8x50xf32>
    %cst_228 = arith.constant 1.000000e+00 : f32
    %cst_229 = arith.constant 0.000000e+00 : f32
    %505 = vector.broadcast %cst_228 : f32 to vector<8x50xf32>
    %506 = vector.broadcast %cst_229 : f32 to vector<8x50xf32>
    %507 = arith.select %504, %505, %506 : vector<8x50xi1>, vector<8x50xf32>
    %c8_i32_230 = arith.constant 8 : i32
    %508 = arith.muli %c18_i32, %c8_i32_230 : i32
    %509 = arith.index_cast %508 : i32 to index
    %c0_231 = arith.constant 0 : index
    %510 = vector.load %arg6[%509, %c0_231] : memref<400x50xf32, #tpu.memory_space<vmem>>, vector<8x50xf32>
    tpu.vector_store %arg6[%509, %c0_231], %507 {strides = array<i32>} : memref<400x50xf32, #tpu.memory_space<vmem>>, vector<8x50xf32>,
    %cst_232 = arith.constant 0.904837429 : f32
    %511 = vector.broadcast %cst_232 : f32 to vector<8x50xf32>
    %512 = arith.mulf %511, %488 : vector<8x50xf32>
    %513 = arith.index_cast %508 : i32 to index
    %c0_233 = arith.constant 0 : index
    %514 = vector.load %arg5[%513, %c0_233] : memref<400x50xf32, #tpu.memory_space<vmem>>, vector<8x50xf32>
    %515 = arith.addf %512, %514 : vector<8x50xf32>
    %cst_234 = arith.constant 0.36787945 : f32
    %516 = vector.broadcast %cst_234 : f32 to vector<8x50xf32>
    %517 = arith.mulf %516, %491 : vector<8x50xf32>
    %518 = arith.addf %517, %507 : vector<8x50xf32>
    %c19_i32 = arith.constant 19 : i32
    %519 = arith.addf %494, %515 : vector<8x50xf32>
    %cst_235 = arith.constant 0.904837429 : f32
    %520 = vector.broadcast %cst_235 : f32 to vector<8x50xf32>
    %521 = arith.mulf %520, %519 : vector<8x50xf32>
    %522 = arith.addf %497, %518 : vector<8x50xf32>
    %cst_236 = arith.constant 0.36787945 : f32
    %523 = vector.broadcast %cst_236 : f32 to vector<8x50xf32>
    %524 = arith.mulf %523, %522 : vector<8x50xf32>
    %cst_237 = arith.constant 0.271828175 : f32
    %525 = vector.broadcast %cst_237 : f32 to vector<8x50xf32>
    %526 = arith.mulf %525, %521 : vector<8x50xf32>
    %cst_238 = arith.constant -54.3656349 : f32
    %527 = vector.broadcast %cst_238 : f32 to vector<8x50xf32>
    %528 = arith.mulf %527, %524 : vector<8x50xf32>
    %529 = arith.addf %526, %528 : vector<8x50xf32>
    %cst_239 = arith.constant 1.000000e+01 : f32
    %530 = vector.broadcast %cst_239 : f32 to vector<8x50xf32>
    %531 = arith.cmpf oge, %529, %530 : vector<8x50xf32>
    %cst_240 = arith.constant 1.000000e+00 : f32
    %cst_241 = arith.constant 0.000000e+00 : f32
    %532 = vector.broadcast %cst_240 : f32 to vector<8x50xf32>
    %533 = vector.broadcast %cst_241 : f32 to vector<8x50xf32>
    %534 = arith.select %531, %532, %533 : vector<8x50xi1>, vector<8x50xf32>
    %c8_i32_242 = arith.constant 8 : i32
    %535 = arith.muli %c19_i32, %c8_i32_242 : i32
    %536 = arith.index_cast %535 : i32 to index
    %c0_243 = arith.constant 0 : index
    %537 = vector.load %arg6[%536, %c0_243] : memref<400x50xf32, #tpu.memory_space<vmem>>, vector<8x50xf32>
    tpu.vector_store %arg6[%536, %c0_243], %534 {strides = array<i32>} : memref<400x50xf32, #tpu.memory_space<vmem>>, vector<8x50xf32>,
    %cst_244 = arith.constant 0.904837429 : f32
    %538 = vector.broadcast %cst_244 : f32 to vector<8x50xf32>
    %539 = arith.mulf %538, %515 : vector<8x50xf32>
    %540 = arith.index_cast %535 : i32 to index
    %c0_245 = arith.constant 0 : index
    %541 = vector.load %arg5[%540, %c0_245] : memref<400x50xf32, #tpu.memory_space<vmem>>, vector<8x50xf32>
    %542 = arith.addf %539, %541 : vector<8x50xf32>
    %cst_246 = arith.constant 0.36787945 : f32
    %543 = vector.broadcast %cst_246 : f32 to vector<8x50xf32>
    %544 = arith.mulf %543, %518 : vector<8x50xf32>
    %545 = arith.addf %544, %534 : vector<8x50xf32>
    %c20_i32 = arith.constant 20 : i32
    %546 = arith.addf %521, %542 : vector<8x50xf32>
    %cst_247 = arith.constant 0.904837429 : f32
    %547 = vector.broadcast %cst_247 : f32 to vector<8x50xf32>
    %548 = arith.mulf %547, %546 : vector<8x50xf32>
    %549 = arith.addf %524, %545 : vector<8x50xf32>
    %cst_248 = arith.constant 0.36787945 : f32
    %550 = vector.broadcast %cst_248 : f32 to vector<8x50xf32>
    %551 = arith.mulf %550, %549 : vector<8x50xf32>
    %cst_249 = arith.constant 0.271828175 : f32
    %552 = vector.broadcast %cst_249 : f32 to vector<8x50xf32>
    %553 = arith.mulf %552, %548 : vector<8x50xf32>
    %cst_250 = arith.constant -54.3656349 : f32
    %554 = vector.broadcast %cst_250 : f32 to vector<8x50xf32>
    %555 = arith.mulf %554, %551 : vector<8x50xf32>
    %556 = arith.addf %553, %555 : vector<8x50xf32>
    %cst_251 = arith.constant 1.000000e+01 : f32
    %557 = vector.broadcast %cst_251 : f32 to vector<8x50xf32>
    %558 = arith.cmpf oge, %556, %557 : vector<8x50xf32>
    %cst_252 = arith.constant 1.000000e+00 : f32
    %cst_253 = arith.constant 0.000000e+00 : f32
    %559 = vector.broadcast %cst_252 : f32 to vector<8x50xf32>
    %560 = vector.broadcast %cst_253 : f32 to vector<8x50xf32>
    %561 = arith.select %558, %559, %560 : vector<8x50xi1>, vector<8x50xf32>
    %c8_i32_254 = arith.constant 8 : i32
    %562 = arith.muli %c20_i32, %c8_i32_254 : i32
    %563 = arith.index_cast %562 : i32 to index
    %c0_255 = arith.constant 0 : index
    %564 = vector.load %arg6[%563, %c0_255] : memref<400x50xf32, #tpu.memory_space<vmem>>, vector<8x50xf32>
    tpu.vector_store %arg6[%563, %c0_255], %561 {strides = array<i32>} : memref<400x50xf32, #tpu.memory_space<vmem>>, vector<8x50xf32>,
    %cst_256 = arith.constant 0.904837429 : f32
    %565 = vector.broadcast %cst_256 : f32 to vector<8x50xf32>
    %566 = arith.mulf %565, %542 : vector<8x50xf32>
    %567 = arith.index_cast %562 : i32 to index
    %c0_257 = arith.constant 0 : index
    %568 = vector.load %arg5[%567, %c0_257] : memref<400x50xf32, #tpu.memory_space<vmem>>, vector<8x50xf32>
    %569 = arith.addf %566, %568 : vector<8x50xf32>
    %cst_258 = arith.constant 0.36787945 : f32
    %570 = vector.broadcast %cst_258 : f32 to vector<8x50xf32>
    %571 = arith.mulf %570, %545 : vector<8x50xf32>
    %572 = arith.addf %571, %561 : vector<8x50xf32>
    %c21_i32 = arith.constant 21 : i32
    %573 = arith.addf %548, %569 : vector<8x50xf32>
    %cst_259 = arith.constant 0.904837429 : f32
    %574 = vector.broadcast %cst_259 : f32 to vector<8x50xf32>
    %575 = arith.mulf %574, %573 : vector<8x50xf32>
    %576 = arith.addf %551, %572 : vector<8x50xf32>
    %cst_260 = arith.constant 0.36787945 : f32
    %577 = vector.broadcast %cst_260 : f32 to vector<8x50xf32>
    %578 = arith.mulf %577, %576 : vector<8x50xf32>
    %cst_261 = arith.constant 0.271828175 : f32
    %579 = vector.broadcast %cst_261 : f32 to vector<8x50xf32>
    %580 = arith.mulf %579, %575 : vector<8x50xf32>
    %cst_262 = arith.constant -54.3656349 : f32
    %581 = vector.broadcast %cst_262 : f32 to vector<8x50xf32>
    %582 = arith.mulf %581, %578 : vector<8x50xf32>
    %583 = arith.addf %580, %582 : vector<8x50xf32>
    %cst_263 = arith.constant 1.000000e+01 : f32
    %584 = vector.broadcast %cst_263 : f32 to vector<8x50xf32>
    %585 = arith.cmpf oge, %583, %584 : vector<8x50xf32>
    %cst_264 = arith.constant 1.000000e+00 : f32
    %cst_265 = arith.constant 0.000000e+00 : f32
    %586 = vector.broadcast %cst_264 : f32 to vector<8x50xf32>
    %587 = vector.broadcast %cst_265 : f32 to vector<8x50xf32>
    %588 = arith.select %585, %586, %587 : vector<8x50xi1>, vector<8x50xf32>
    %c8_i32_266 = arith.constant 8 : i32
    %589 = arith.muli %c21_i32, %c8_i32_266 : i32
    %590 = arith.index_cast %589 : i32 to index
    %c0_267 = arith.constant 0 : index
    %591 = vector.load %arg6[%590, %c0_267] : memref<400x50xf32, #tpu.memory_space<vmem>>, vector<8x50xf32>
    tpu.vector_store %arg6[%590, %c0_267], %588 {strides = array<i32>} : memref<400x50xf32, #tpu.memory_space<vmem>>, vector<8x50xf32>,
    %cst_268 = arith.constant 0.904837429 : f32
    %592 = vector.broadcast %cst_268 : f32 to vector<8x50xf32>
    %593 = arith.mulf %592, %569 : vector<8x50xf32>
    %594 = arith.index_cast %589 : i32 to index
    %c0_269 = arith.constant 0 : index
    %595 = vector.load %arg5[%594, %c0_269] : memref<400x50xf32, #tpu.memory_space<vmem>>, vector<8x50xf32>
    %596 = arith.addf %593, %595 : vector<8x50xf32>
    %cst_270 = arith.constant 0.36787945 : f32
    %597 = vector.broadcast %cst_270 : f32 to vector<8x50xf32>
    %598 = arith.mulf %597, %572 : vector<8x50xf32>
    %599 = arith.addf %598, %588 : vector<8x50xf32>
    %c22_i32 = arith.constant 22 : i32
    %600 = arith.addf %575, %596 : vector<8x50xf32>
    %cst_271 = arith.constant 0.904837429 : f32
    %601 = vector.broadcast %cst_271 : f32 to vector<8x50xf32>
    %602 = arith.mulf %601, %600 : vector<8x50xf32>
    %603 = arith.addf %578, %599 : vector<8x50xf32>
    %cst_272 = arith.constant 0.36787945 : f32
    %604 = vector.broadcast %cst_272 : f32 to vector<8x50xf32>
    %605 = arith.mulf %604, %603 : vector<8x50xf32>
    %cst_273 = arith.constant 0.271828175 : f32
    %606 = vector.broadcast %cst_273 : f32 to vector<8x50xf32>
    %607 = arith.mulf %606, %602 : vector<8x50xf32>
    %cst_274 = arith.constant -54.3656349 : f32
    %608 = vector.broadcast %cst_274 : f32 to vector<8x50xf32>
    %609 = arith.mulf %608, %605 : vector<8x50xf32>
    %610 = arith.addf %607, %609 : vector<8x50xf32>
    %cst_275 = arith.constant 1.000000e+01 : f32
    %611 = vector.broadcast %cst_275 : f32 to vector<8x50xf32>
    %612 = arith.cmpf oge, %610, %611 : vector<8x50xf32>
    %cst_276 = arith.constant 1.000000e+00 : f32
    %cst_277 = arith.constant 0.000000e+00 : f32
    %613 = vector.broadcast %cst_276 : f32 to vector<8x50xf32>
    %614 = vector.broadcast %cst_277 : f32 to vector<8x50xf32>
    %615 = arith.select %612, %613, %614 : vector<8x50xi1>, vector<8x50xf32>
    %c8_i32_278 = arith.constant 8 : i32
    %616 = arith.muli %c22_i32, %c8_i32_278 : i32
    %617 = arith.index_cast %616 : i32 to index
    %c0_279 = arith.constant 0 : index
    %618 = vector.load %arg6[%617, %c0_279] : memref<400x50xf32, #tpu.memory_space<vmem>>, vector<8x50xf32>
    tpu.vector_store %arg6[%617, %c0_279], %615 {strides = array<i32>} : memref<400x50xf32, #tpu.memory_space<vmem>>, vector<8x50xf32>,
    %cst_280 = arith.constant 0.904837429 : f32
    %619 = vector.broadcast %cst_280 : f32 to vector<8x50xf32>
    %620 = arith.mulf %619, %596 : vector<8x50xf32>
    %621 = arith.index_cast %616 : i32 to index
    %c0_281 = arith.constant 0 : index
    %622 = vector.load %arg5[%621, %c0_281] : memref<400x50xf32, #tpu.memory_space<vmem>>, vector<8x50xf32>
    %623 = arith.addf %620, %622 : vector<8x50xf32>
    %cst_282 = arith.constant 0.36787945 : f32
    %624 = vector.broadcast %cst_282 : f32 to vector<8x50xf32>
    %625 = arith.mulf %624, %599 : vector<8x50xf32>
    %626 = arith.addf %625, %615 : vector<8x50xf32>
    %c23_i32 = arith.constant 23 : i32
    %627 = arith.addf %602, %623 : vector<8x50xf32>
    %cst_283 = arith.constant 0.904837429 : f32
    %628 = vector.broadcast %cst_283 : f32 to vector<8x50xf32>
    %629 = arith.mulf %628, %627 : vector<8x50xf32>
    %630 = arith.addf %605, %626 : vector<8x50xf32>
    %cst_284 = arith.constant 0.36787945 : f32
    %631 = vector.broadcast %cst_284 : f32 to vector<8x50xf32>
    %632 = arith.mulf %631, %630 : vector<8x50xf32>
    %cst_285 = arith.constant 0.271828175 : f32
    %633 = vector.broadcast %cst_285 : f32 to vector<8x50xf32>
    %634 = arith.mulf %633, %629 : vector<8x50xf32>
    %cst_286 = arith.constant -54.3656349 : f32
    %635 = vector.broadcast %cst_286 : f32 to vector<8x50xf32>
    %636 = arith.mulf %635, %632 : vector<8x50xf32>
    %637 = arith.addf %634, %636 : vector<8x50xf32>
    %cst_287 = arith.constant 1.000000e+01 : f32
    %638 = vector.broadcast %cst_287 : f32 to vector<8x50xf32>
    %639 = arith.cmpf oge, %637, %638 : vector<8x50xf32>
    %cst_288 = arith.constant 1.000000e+00 : f32
    %cst_289 = arith.constant 0.000000e+00 : f32
    %640 = vector.broadcast %cst_288 : f32 to vector<8x50xf32>
    %641 = vector.broadcast %cst_289 : f32 to vector<8x50xf32>
    %642 = arith.select %639, %640, %641 : vector<8x50xi1>, vector<8x50xf32>
    %c8_i32_290 = arith.constant 8 : i32
    %643 = arith.muli %c23_i32, %c8_i32_290 : i32
    %644 = arith.index_cast %643 : i32 to index
    %c0_291 = arith.constant 0 : index
    %645 = vector.load %arg6[%644, %c0_291] : memref<400x50xf32, #tpu.memory_space<vmem>>, vector<8x50xf32>
    tpu.vector_store %arg6[%644, %c0_291], %642 {strides = array<i32>} : memref<400x50xf32, #tpu.memory_space<vmem>>, vector<8x50xf32>,
    %cst_292 = arith.constant 0.904837429 : f32
    %646 = vector.broadcast %cst_292 : f32 to vector<8x50xf32>
    %647 = arith.mulf %646, %623 : vector<8x50xf32>
    %648 = arith.index_cast %643 : i32 to index
    %c0_293 = arith.constant 0 : index
    %649 = vector.load %arg5[%648, %c0_293] : memref<400x50xf32, #tpu.memory_space<vmem>>, vector<8x50xf32>
    %650 = arith.addf %647, %649 : vector<8x50xf32>
    %cst_294 = arith.constant 0.36787945 : f32
    %651 = vector.broadcast %cst_294 : f32 to vector<8x50xf32>
    %652 = arith.mulf %651, %626 : vector<8x50xf32>
    %653 = arith.addf %652, %642 : vector<8x50xf32>
    %c24_i32 = arith.constant 24 : i32
    %654 = arith.addf %629, %650 : vector<8x50xf32>
    %cst_295 = arith.constant 0.904837429 : f32
    %655 = vector.broadcast %cst_295 : f32 to vector<8x50xf32>
    %656 = arith.mulf %655, %654 : vector<8x50xf32>
    %657 = arith.addf %632, %653 : vector<8x50xf32>
    %cst_296 = arith.constant 0.36787945 : f32
    %658 = vector.broadcast %cst_296 : f32 to vector<8x50xf32>
    %659 = arith.mulf %658, %657 : vector<8x50xf32>
    %cst_297 = arith.constant 0.271828175 : f32
    %660 = vector.broadcast %cst_297 : f32 to vector<8x50xf32>
    %661 = arith.mulf %660, %656 : vector<8x50xf32>
    %cst_298 = arith.constant -54.3656349 : f32
    %662 = vector.broadcast %cst_298 : f32 to vector<8x50xf32>
    %663 = arith.mulf %662, %659 : vector<8x50xf32>
    %664 = arith.addf %661, %663 : vector<8x50xf32>
    %cst_299 = arith.constant 1.000000e+01 : f32
    %665 = vector.broadcast %cst_299 : f32 to vector<8x50xf32>
    %666 = arith.cmpf oge, %664, %665 : vector<8x50xf32>
    %cst_300 = arith.constant 1.000000e+00 : f32
    %cst_301 = arith.constant 0.000000e+00 : f32
    %667 = vector.broadcast %cst_300 : f32 to vector<8x50xf32>
    %668 = vector.broadcast %cst_301 : f32 to vector<8x50xf32>
    %669 = arith.select %666, %667, %668 : vector<8x50xi1>, vector<8x50xf32>
    %c8_i32_302 = arith.constant 8 : i32
    %670 = arith.muli %c24_i32, %c8_i32_302 : i32
    %671 = arith.index_cast %670 : i32 to index
    %c0_303 = arith.constant 0 : index
    %672 = vector.load %arg6[%671, %c0_303] : memref<400x50xf32, #tpu.memory_space<vmem>>, vector<8x50xf32>
    tpu.vector_store %arg6[%671, %c0_303], %669 {strides = array<i32>} : memref<400x50xf32, #tpu.memory_space<vmem>>, vector<8x50xf32>,
    %cst_304 = arith.constant 0.904837429 : f32
    %673 = vector.broadcast %cst_304 : f32 to vector<8x50xf32>
    %674 = arith.mulf %673, %650 : vector<8x50xf32>
    %675 = arith.index_cast %670 : i32 to index
    %c0_305 = arith.constant 0 : index
    %676 = vector.load %arg5[%675, %c0_305] : memref<400x50xf32, #tpu.memory_space<vmem>>, vector<8x50xf32>
    %677 = arith.addf %674, %676 : vector<8x50xf32>
    %cst_306 = arith.constant 0.36787945 : f32
    %678 = vector.broadcast %cst_306 : f32 to vector<8x50xf32>
    %679 = arith.mulf %678, %653 : vector<8x50xf32>
    %680 = arith.addf %679, %669 : vector<8x50xf32>
    %c25_i32 = arith.constant 25 : i32
    %681 = arith.addf %656, %677 : vector<8x50xf32>
    %cst_307 = arith.constant 0.904837429 : f32
    %682 = vector.broadcast %cst_307 : f32 to vector<8x50xf32>
    %683 = arith.mulf %682, %681 : vector<8x50xf32>
    %684 = arith.addf %659, %680 : vector<8x50xf32>
    %cst_308 = arith.constant 0.36787945 : f32
    %685 = vector.broadcast %cst_308 : f32 to vector<8x50xf32>
    %686 = arith.mulf %685, %684 : vector<8x50xf32>
    %cst_309 = arith.constant 0.271828175 : f32
    %687 = vector.broadcast %cst_309 : f32 to vector<8x50xf32>
    %688 = arith.mulf %687, %683 : vector<8x50xf32>
    %cst_310 = arith.constant -54.3656349 : f32
    %689 = vector.broadcast %cst_310 : f32 to vector<8x50xf32>
    %690 = arith.mulf %689, %686 : vector<8x50xf32>
    %691 = arith.addf %688, %690 : vector<8x50xf32>
    %cst_311 = arith.constant 1.000000e+01 : f32
    %692 = vector.broadcast %cst_311 : f32 to vector<8x50xf32>
    %693 = arith.cmpf oge, %691, %692 : vector<8x50xf32>
    %cst_312 = arith.constant 1.000000e+00 : f32
    %cst_313 = arith.constant 0.000000e+00 : f32
    %694 = vector.broadcast %cst_312 : f32 to vector<8x50xf32>
    %695 = vector.broadcast %cst_313 : f32 to vector<8x50xf32>
    %696 = arith.select %693, %694, %695 : vector<8x50xi1>, vector<8x50xf32>
    %c8_i32_314 = arith.constant 8 : i32
    %697 = arith.muli %c25_i32, %c8_i32_314 : i32
    %698 = arith.index_cast %697 : i32 to index
    %c0_315 = arith.constant 0 : index
    %699 = vector.load %arg6[%698, %c0_315] : memref<400x50xf32, #tpu.memory_space<vmem>>, vector<8x50xf32>
    tpu.vector_store %arg6[%698, %c0_315], %696 {strides = array<i32>} : memref<400x50xf32, #tpu.memory_space<vmem>>, vector<8x50xf32>,
    %cst_316 = arith.constant 0.904837429 : f32
    %700 = vector.broadcast %cst_316 : f32 to vector<8x50xf32>
    %701 = arith.mulf %700, %677 : vector<8x50xf32>
    %702 = arith.index_cast %697 : i32 to index
    %c0_317 = arith.constant 0 : index
    %703 = vector.load %arg5[%702, %c0_317] : memref<400x50xf32, #tpu.memory_space<vmem>>, vector<8x50xf32>
    %704 = arith.addf %701, %703 : vector<8x50xf32>
    %cst_318 = arith.constant 0.36787945 : f32
    %705 = vector.broadcast %cst_318 : f32 to vector<8x50xf32>
    %706 = arith.mulf %705, %680 : vector<8x50xf32>
    %707 = arith.addf %706, %696 : vector<8x50xf32>
    %c26_i32 = arith.constant 26 : i32
    %708 = arith.addf %683, %704 : vector<8x50xf32>
    %cst_319 = arith.constant 0.904837429 : f32
    %709 = vector.broadcast %cst_319 : f32 to vector<8x50xf32>
    %710 = arith.mulf %709, %708 : vector<8x50xf32>
    %711 = arith.addf %686, %707 : vector<8x50xf32>
    %cst_320 = arith.constant 0.36787945 : f32
    %712 = vector.broadcast %cst_320 : f32 to vector<8x50xf32>
    %713 = arith.mulf %712, %711 : vector<8x50xf32>
    %cst_321 = arith.constant 0.271828175 : f32
    %714 = vector.broadcast %cst_321 : f32 to vector<8x50xf32>
    %715 = arith.mulf %714, %710 : vector<8x50xf32>
    %cst_322 = arith.constant -54.3656349 : f32
    %716 = vector.broadcast %cst_322 : f32 to vector<8x50xf32>
    %717 = arith.mulf %716, %713 : vector<8x50xf32>
    %718 = arith.addf %715, %717 : vector<8x50xf32>
    %cst_323 = arith.constant 1.000000e+01 : f32
    %719 = vector.broadcast %cst_323 : f32 to vector<8x50xf32>
    %720 = arith.cmpf oge, %718, %719 : vector<8x50xf32>
    %cst_324 = arith.constant 1.000000e+00 : f32
    %cst_325 = arith.constant 0.000000e+00 : f32
    %721 = vector.broadcast %cst_324 : f32 to vector<8x50xf32>
    %722 = vector.broadcast %cst_325 : f32 to vector<8x50xf32>
    %723 = arith.select %720, %721, %722 : vector<8x50xi1>, vector<8x50xf32>
    %c8_i32_326 = arith.constant 8 : i32
    %724 = arith.muli %c26_i32, %c8_i32_326 : i32
    %725 = arith.index_cast %724 : i32 to index
    %c0_327 = arith.constant 0 : index
    %726 = vector.load %arg6[%725, %c0_327] : memref<400x50xf32, #tpu.memory_space<vmem>>, vector<8x50xf32>
    tpu.vector_store %arg6[%725, %c0_327], %723 {strides = array<i32>} : memref<400x50xf32, #tpu.memory_space<vmem>>, vector<8x50xf32>,
    %cst_328 = arith.constant 0.904837429 : f32
    %727 = vector.broadcast %cst_328 : f32 to vector<8x50xf32>
    %728 = arith.mulf %727, %704 : vector<8x50xf32>
    %729 = arith.index_cast %724 : i32 to index
    %c0_329 = arith.constant 0 : index
    %730 = vector.load %arg5[%729, %c0_329] : memref<400x50xf32, #tpu.memory_space<vmem>>, vector<8x50xf32>
    %731 = arith.addf %728, %730 : vector<8x50xf32>
    %cst_330 = arith.constant 0.36787945 : f32
    %732 = vector.broadcast %cst_330 : f32 to vector<8x50xf32>
    %733 = arith.mulf %732, %707 : vector<8x50xf32>
    %734 = arith.addf %733, %723 : vector<8x50xf32>
    %c27_i32 = arith.constant 27 : i32
    %735 = arith.addf %710, %731 : vector<8x50xf32>
    %cst_331 = arith.constant 0.904837429 : f32
    %736 = vector.broadcast %cst_331 : f32 to vector<8x50xf32>
    %737 = arith.mulf %736, %735 : vector<8x50xf32>
    %738 = arith.addf %713, %734 : vector<8x50xf32>
    %cst_332 = arith.constant 0.36787945 : f32
    %739 = vector.broadcast %cst_332 : f32 to vector<8x50xf32>
    %740 = arith.mulf %739, %738 : vector<8x50xf32>
    %cst_333 = arith.constant 0.271828175 : f32
    %741 = vector.broadcast %cst_333 : f32 to vector<8x50xf32>
    %742 = arith.mulf %741, %737 : vector<8x50xf32>
    %cst_334 = arith.constant -54.3656349 : f32
    %743 = vector.broadcast %cst_334 : f32 to vector<8x50xf32>
    %744 = arith.mulf %743, %740 : vector<8x50xf32>
    %745 = arith.addf %742, %744 : vector<8x50xf32>
    %cst_335 = arith.constant 1.000000e+01 : f32
    %746 = vector.broadcast %cst_335 : f32 to vector<8x50xf32>
    %747 = arith.cmpf oge, %745, %746 : vector<8x50xf32>
    %cst_336 = arith.constant 1.000000e+00 : f32
    %cst_337 = arith.constant 0.000000e+00 : f32
    %748 = vector.broadcast %cst_336 : f32 to vector<8x50xf32>
    %749 = vector.broadcast %cst_337 : f32 to vector<8x50xf32>
    %750 = arith.select %747, %748, %749 : vector<8x50xi1>, vector<8x50xf32>
    %c8_i32_338 = arith.constant 8 : i32
    %751 = arith.muli %c27_i32, %c8_i32_338 : i32
    %752 = arith.index_cast %751 : i32 to index
    %c0_339 = arith.constant 0 : index
    %753 = vector.load %arg6[%752, %c0_339] : memref<400x50xf32, #tpu.memory_space<vmem>>, vector<8x50xf32>
    tpu.vector_store %arg6[%752, %c0_339], %750 {strides = array<i32>} : memref<400x50xf32, #tpu.memory_space<vmem>>, vector<8x50xf32>,
    %cst_340 = arith.constant 0.904837429 : f32
    %754 = vector.broadcast %cst_340 : f32 to vector<8x50xf32>
    %755 = arith.mulf %754, %731 : vector<8x50xf32>
    %756 = arith.index_cast %751 : i32 to index
    %c0_341 = arith.constant 0 : index
    %757 = vector.load %arg5[%756, %c0_341] : memref<400x50xf32, #tpu.memory_space<vmem>>, vector<8x50xf32>
    %758 = arith.addf %755, %757 : vector<8x50xf32>
    %cst_342 = arith.constant 0.36787945 : f32
    %759 = vector.broadcast %cst_342 : f32 to vector<8x50xf32>
    %760 = arith.mulf %759, %734 : vector<8x50xf32>
    %761 = arith.addf %760, %750 : vector<8x50xf32>
    %c28_i32 = arith.constant 28 : i32
    %762 = arith.addf %737, %758 : vector<8x50xf32>
    %cst_343 = arith.constant 0.904837429 : f32
    %763 = vector.broadcast %cst_343 : f32 to vector<8x50xf32>
    %764 = arith.mulf %763, %762 : vector<8x50xf32>
    %765 = arith.addf %740, %761 : vector<8x50xf32>
    %cst_344 = arith.constant 0.36787945 : f32
    %766 = vector.broadcast %cst_344 : f32 to vector<8x50xf32>
    %767 = arith.mulf %766, %765 : vector<8x50xf32>
    %cst_345 = arith.constant 0.271828175 : f32
    %768 = vector.broadcast %cst_345 : f32 to vector<8x50xf32>
    %769 = arith.mulf %768, %764 : vector<8x50xf32>
    %cst_346 = arith.constant -54.3656349 : f32
    %770 = vector.broadcast %cst_346 : f32 to vector<8x50xf32>
    %771 = arith.mulf %770, %767 : vector<8x50xf32>
    %772 = arith.addf %769, %771 : vector<8x50xf32>
    %cst_347 = arith.constant 1.000000e+01 : f32
    %773 = vector.broadcast %cst_347 : f32 to vector<8x50xf32>
    %774 = arith.cmpf oge, %772, %773 : vector<8x50xf32>
    %cst_348 = arith.constant 1.000000e+00 : f32
    %cst_349 = arith.constant 0.000000e+00 : f32
    %775 = vector.broadcast %cst_348 : f32 to vector<8x50xf32>
    %776 = vector.broadcast %cst_349 : f32 to vector<8x50xf32>
    %777 = arith.select %774, %775, %776 : vector<8x50xi1>, vector<8x50xf32>
    %c8_i32_350 = arith.constant 8 : i32
    %778 = arith.muli %c28_i32, %c8_i32_350 : i32
    %779 = arith.index_cast %778 : i32 to index
    %c0_351 = arith.constant 0 : index
    %780 = vector.load %arg6[%779, %c0_351] : memref<400x50xf32, #tpu.memory_space<vmem>>, vector<8x50xf32>
    tpu.vector_store %arg6[%779, %c0_351], %777 {strides = array<i32>} : memref<400x50xf32, #tpu.memory_space<vmem>>, vector<8x50xf32>,
    %cst_352 = arith.constant 0.904837429 : f32
    %781 = vector.broadcast %cst_352 : f32 to vector<8x50xf32>
    %782 = arith.mulf %781, %758 : vector<8x50xf32>
    %783 = arith.index_cast %778 : i32 to index
    %c0_353 = arith.constant 0 : index
    %784 = vector.load %arg5[%783, %c0_353] : memref<400x50xf32, #tpu.memory_space<vmem>>, vector<8x50xf32>
    %785 = arith.addf %782, %784 : vector<8x50xf32>
    %cst_354 = arith.constant 0.36787945 : f32
    %786 = vector.broadcast %cst_354 : f32 to vector<8x50xf32>
    %787 = arith.mulf %786, %761 : vector<8x50xf32>
    %788 = arith.addf %787, %777 : vector<8x50xf32>
    %c29_i32 = arith.constant 29 : i32
    %789 = arith.addf %764, %785 : vector<8x50xf32>
    %cst_355 = arith.constant 0.904837429 : f32
    %790 = vector.broadcast %cst_355 : f32 to vector<8x50xf32>
    %791 = arith.mulf %790, %789 : vector<8x50xf32>
    %792 = arith.addf %767, %788 : vector<8x50xf32>
    %cst_356 = arith.constant 0.36787945 : f32
    %793 = vector.broadcast %cst_356 : f32 to vector<8x50xf32>
    %794 = arith.mulf %793, %792 : vector<8x50xf32>
    %cst_357 = arith.constant 0.271828175 : f32
    %795 = vector.broadcast %cst_357 : f32 to vector<8x50xf32>
    %796 = arith.mulf %795, %791 : vector<8x50xf32>
    %cst_358 = arith.constant -54.3656349 : f32
    %797 = vector.broadcast %cst_358 : f32 to vector<8x50xf32>
    %798 = arith.mulf %797, %794 : vector<8x50xf32>
    %799 = arith.addf %796, %798 : vector<8x50xf32>
    %cst_359 = arith.constant 1.000000e+01 : f32
    %800 = vector.broadcast %cst_359 : f32 to vector<8x50xf32>
    %801 = arith.cmpf oge, %799, %800 : vector<8x50xf32>
    %cst_360 = arith.constant 1.000000e+00 : f32
    %cst_361 = arith.constant 0.000000e+00 : f32
    %802 = vector.broadcast %cst_360 : f32 to vector<8x50xf32>
    %803 = vector.broadcast %cst_361 : f32 to vector<8x50xf32>
    %804 = arith.select %801, %802, %803 : vector<8x50xi1>, vector<8x50xf32>
    %c8_i32_362 = arith.constant 8 : i32
    %805 = arith.muli %c29_i32, %c8_i32_362 : i32
    %806 = arith.index_cast %805 : i32 to index
    %c0_363 = arith.constant 0 : index
    %807 = vector.load %arg6[%806, %c0_363] : memref<400x50xf32, #tpu.memory_space<vmem>>, vector<8x50xf32>
    tpu.vector_store %arg6[%806, %c0_363], %804 {strides = array<i32>} : memref<400x50xf32, #tpu.memory_space<vmem>>, vector<8x50xf32>,
    %cst_364 = arith.constant 0.904837429 : f32
    %808 = vector.broadcast %cst_364 : f32 to vector<8x50xf32>
    %809 = arith.mulf %808, %785 : vector<8x50xf32>
    %810 = arith.index_cast %805 : i32 to index
    %c0_365 = arith.constant 0 : index
    %811 = vector.load %arg5[%810, %c0_365] : memref<400x50xf32, #tpu.memory_space<vmem>>, vector<8x50xf32>
    %812 = arith.addf %809, %811 : vector<8x50xf32>
    %cst_366 = arith.constant 0.36787945 : f32
    %813 = vector.broadcast %cst_366 : f32 to vector<8x50xf32>
    %814 = arith.mulf %813, %788 : vector<8x50xf32>
    %815 = arith.addf %814, %804 : vector<8x50xf32>
    %c30_i32 = arith.constant 30 : i32
    %816 = arith.addf %791, %812 : vector<8x50xf32>
    %cst_367 = arith.constant 0.904837429 : f32
    %817 = vector.broadcast %cst_367 : f32 to vector<8x50xf32>
    %818 = arith.mulf %817, %816 : vector<8x50xf32>
    %819 = arith.addf %794, %815 : vector<8x50xf32>
    %cst_368 = arith.constant 0.36787945 : f32
    %820 = vector.broadcast %cst_368 : f32 to vector<8x50xf32>
    %821 = arith.mulf %820, %819 : vector<8x50xf32>
    %cst_369 = arith.constant 0.271828175 : f32
    %822 = vector.broadcast %cst_369 : f32 to vector<8x50xf32>
    %823 = arith.mulf %822, %818 : vector<8x50xf32>
    %cst_370 = arith.constant -54.3656349 : f32
    %824 = vector.broadcast %cst_370 : f32 to vector<8x50xf32>
    %825 = arith.mulf %824, %821 : vector<8x50xf32>
    %826 = arith.addf %823, %825 : vector<8x50xf32>
    %cst_371 = arith.constant 1.000000e+01 : f32
    %827 = vector.broadcast %cst_371 : f32 to vector<8x50xf32>
    %828 = arith.cmpf oge, %826, %827 : vector<8x50xf32>
    %cst_372 = arith.constant 1.000000e+00 : f32
    %cst_373 = arith.constant 0.000000e+00 : f32
    %829 = vector.broadcast %cst_372 : f32 to vector<8x50xf32>
    %830 = vector.broadcast %cst_373 : f32 to vector<8x50xf32>
    %831 = arith.select %828, %829, %830 : vector<8x50xi1>, vector<8x50xf32>
    %c8_i32_374 = arith.constant 8 : i32
    %832 = arith.muli %c30_i32, %c8_i32_374 : i32
    %833 = arith.index_cast %832 : i32 to index
    %c0_375 = arith.constant 0 : index
    %834 = vector.load %arg6[%833, %c0_375] : memref<400x50xf32, #tpu.memory_space<vmem>>, vector<8x50xf32>
    tpu.vector_store %arg6[%833, %c0_375], %831 {strides = array<i32>} : memref<400x50xf32, #tpu.memory_space<vmem>>, vector<8x50xf32>,
    %cst_376 = arith.constant 0.904837429 : f32
    %835 = vector.broadcast %cst_376 : f32 to vector<8x50xf32>
    %836 = arith.mulf %835, %812 : vector<8x50xf32>
    %837 = arith.index_cast %832 : i32 to index
    %c0_377 = arith.constant 0 : index
    %838 = vector.load %arg5[%837, %c0_377] : memref<400x50xf32, #tpu.memory_space<vmem>>, vector<8x50xf32>
    %839 = arith.addf %836, %838 : vector<8x50xf32>
    %cst_378 = arith.constant 0.36787945 : f32
    %840 = vector.broadcast %cst_378 : f32 to vector<8x50xf32>
    %841 = arith.mulf %840, %815 : vector<8x50xf32>
    %842 = arith.addf %841, %831 : vector<8x50xf32>
    %c31_i32 = arith.constant 31 : i32
    %843 = arith.addf %818, %839 : vector<8x50xf32>
    %cst_379 = arith.constant 0.904837429 : f32
    %844 = vector.broadcast %cst_379 : f32 to vector<8x50xf32>
    %845 = arith.mulf %844, %843 : vector<8x50xf32>
    %846 = arith.addf %821, %842 : vector<8x50xf32>
    %cst_380 = arith.constant 0.36787945 : f32
    %847 = vector.broadcast %cst_380 : f32 to vector<8x50xf32>
    %848 = arith.mulf %847, %846 : vector<8x50xf32>
    %cst_381 = arith.constant 0.271828175 : f32
    %849 = vector.broadcast %cst_381 : f32 to vector<8x50xf32>
    %850 = arith.mulf %849, %845 : vector<8x50xf32>
    %cst_382 = arith.constant -54.3656349 : f32
    %851 = vector.broadcast %cst_382 : f32 to vector<8x50xf32>
    %852 = arith.mulf %851, %848 : vector<8x50xf32>
    %853 = arith.addf %850, %852 : vector<8x50xf32>
    %cst_383 = arith.constant 1.000000e+01 : f32
    %854 = vector.broadcast %cst_383 : f32 to vector<8x50xf32>
    %855 = arith.cmpf oge, %853, %854 : vector<8x50xf32>
    %cst_384 = arith.constant 1.000000e+00 : f32
    %cst_385 = arith.constant 0.000000e+00 : f32
    %856 = vector.broadcast %cst_384 : f32 to vector<8x50xf32>
    %857 = vector.broadcast %cst_385 : f32 to vector<8x50xf32>
    %858 = arith.select %855, %856, %857 : vector<8x50xi1>, vector<8x50xf32>
    %c8_i32_386 = arith.constant 8 : i32
    %859 = arith.muli %c31_i32, %c8_i32_386 : i32
    %860 = arith.index_cast %859 : i32 to index
    %c0_387 = arith.constant 0 : index
    %861 = vector.load %arg6[%860, %c0_387] : memref<400x50xf32, #tpu.memory_space<vmem>>, vector<8x50xf32>
    tpu.vector_store %arg6[%860, %c0_387], %858 {strides = array<i32>} : memref<400x50xf32, #tpu.memory_space<vmem>>, vector<8x50xf32>,
    %cst_388 = arith.constant 0.904837429 : f32
    %862 = vector.broadcast %cst_388 : f32 to vector<8x50xf32>
    %863 = arith.mulf %862, %839 : vector<8x50xf32>
    %864 = arith.index_cast %859 : i32 to index
    %c0_389 = arith.constant 0 : index
    %865 = vector.load %arg5[%864, %c0_389] : memref<400x50xf32, #tpu.memory_space<vmem>>, vector<8x50xf32>
    %866 = arith.addf %863, %865 : vector<8x50xf32>
    %cst_390 = arith.constant 0.36787945 : f32
    %867 = vector.broadcast %cst_390 : f32 to vector<8x50xf32>
    %868 = arith.mulf %867, %842 : vector<8x50xf32>
    %869 = arith.addf %868, %858 : vector<8x50xf32>
    %c32_i32 = arith.constant 32 : i32
    %870 = arith.addf %845, %866 : vector<8x50xf32>
    %cst_391 = arith.constant 0.904837429 : f32
    %871 = vector.broadcast %cst_391 : f32 to vector<8x50xf32>
    %872 = arith.mulf %871, %870 : vector<8x50xf32>
    %873 = arith.addf %848, %869 : vector<8x50xf32>
    %cst_392 = arith.constant 0.36787945 : f32
    %874 = vector.broadcast %cst_392 : f32 to vector<8x50xf32>
    %875 = arith.mulf %874, %873 : vector<8x50xf32>
    %cst_393 = arith.constant 0.271828175 : f32
    %876 = vector.broadcast %cst_393 : f32 to vector<8x50xf32>
    %877 = arith.mulf %876, %872 : vector<8x50xf32>
    %cst_394 = arith.constant -54.3656349 : f32
    %878 = vector.broadcast %cst_394 : f32 to vector<8x50xf32>
    %879 = arith.mulf %878, %875 : vector<8x50xf32>
    %880 = arith.addf %877, %879 : vector<8x50xf32>
    %cst_395 = arith.constant 1.000000e+01 : f32
    %881 = vector.broadcast %cst_395 : f32 to vector<8x50xf32>
    %882 = arith.cmpf oge, %880, %881 : vector<8x50xf32>
    %cst_396 = arith.constant 1.000000e+00 : f32
    %cst_397 = arith.constant 0.000000e+00 : f32
    %883 = vector.broadcast %cst_396 : f32 to vector<8x50xf32>
    %884 = vector.broadcast %cst_397 : f32 to vector<8x50xf32>
    %885 = arith.select %882, %883, %884 : vector<8x50xi1>, vector<8x50xf32>
    %c8_i32_398 = arith.constant 8 : i32
    %886 = arith.muli %c32_i32, %c8_i32_398 : i32
    %887 = arith.index_cast %886 : i32 to index
    %c0_399 = arith.constant 0 : index
    %888 = vector.load %arg6[%887, %c0_399] : memref<400x50xf32, #tpu.memory_space<vmem>>, vector<8x50xf32>
    tpu.vector_store %arg6[%887, %c0_399], %885 {strides = array<i32>} : memref<400x50xf32, #tpu.memory_space<vmem>>, vector<8x50xf32>,
    %cst_400 = arith.constant 0.904837429 : f32
    %889 = vector.broadcast %cst_400 : f32 to vector<8x50xf32>
    %890 = arith.mulf %889, %866 : vector<8x50xf32>
    %891 = arith.index_cast %886 : i32 to index
    %c0_401 = arith.constant 0 : index
    %892 = vector.load %arg5[%891, %c0_401] : memref<400x50xf32, #tpu.memory_space<vmem>>, vector<8x50xf32>
    %893 = arith.addf %890, %892 : vector<8x50xf32>
    %cst_402 = arith.constant 0.36787945 : f32
    %894 = vector.broadcast %cst_402 : f32 to vector<8x50xf32>
    %895 = arith.mulf %894, %869 : vector<8x50xf32>
    %896 = arith.addf %895, %885 : vector<8x50xf32>
    %c33_i32 = arith.constant 33 : i32
    %897 = arith.addf %872, %893 : vector<8x50xf32>
    %cst_403 = arith.constant 0.904837429 : f32
    %898 = vector.broadcast %cst_403 : f32 to vector<8x50xf32>
    %899 = arith.mulf %898, %897 : vector<8x50xf32>
    %900 = arith.addf %875, %896 : vector<8x50xf32>
    %cst_404 = arith.constant 0.36787945 : f32
    %901 = vector.broadcast %cst_404 : f32 to vector<8x50xf32>
    %902 = arith.mulf %901, %900 : vector<8x50xf32>
    %cst_405 = arith.constant 0.271828175 : f32
    %903 = vector.broadcast %cst_405 : f32 to vector<8x50xf32>
    %904 = arith.mulf %903, %899 : vector<8x50xf32>
    %cst_406 = arith.constant -54.3656349 : f32
    %905 = vector.broadcast %cst_406 : f32 to vector<8x50xf32>
    %906 = arith.mulf %905, %902 : vector<8x50xf32>
    %907 = arith.addf %904, %906 : vector<8x50xf32>
    %cst_407 = arith.constant 1.000000e+01 : f32
    %908 = vector.broadcast %cst_407 : f32 to vector<8x50xf32>
    %909 = arith.cmpf oge, %907, %908 : vector<8x50xf32>
    %cst_408 = arith.constant 1.000000e+00 : f32
    %cst_409 = arith.constant 0.000000e+00 : f32
    %910 = vector.broadcast %cst_408 : f32 to vector<8x50xf32>
    %911 = vector.broadcast %cst_409 : f32 to vector<8x50xf32>
    %912 = arith.select %909, %910, %911 : vector<8x50xi1>, vector<8x50xf32>
    %c8_i32_410 = arith.constant 8 : i32
    %913 = arith.muli %c33_i32, %c8_i32_410 : i32
    %914 = arith.index_cast %913 : i32 to index
    %c0_411 = arith.constant 0 : index
    %915 = vector.load %arg6[%914, %c0_411] : memref<400x50xf32, #tpu.memory_space<vmem>>, vector<8x50xf32>
    tpu.vector_store %arg6[%914, %c0_411], %912 {strides = array<i32>} : memref<400x50xf32, #tpu.memory_space<vmem>>, vector<8x50xf32>,
    %cst_412 = arith.constant 0.904837429 : f32
    %916 = vector.broadcast %cst_412 : f32 to vector<8x50xf32>
    %917 = arith.mulf %916, %893 : vector<8x50xf32>
    %918 = arith.index_cast %913 : i32 to index
    %c0_413 = arith.constant 0 : index
    %919 = vector.load %arg5[%918, %c0_413] : memref<400x50xf32, #tpu.memory_space<vmem>>, vector<8x50xf32>
    %920 = arith.addf %917, %919 : vector<8x50xf32>
    %cst_414 = arith.constant 0.36787945 : f32
    %921 = vector.broadcast %cst_414 : f32 to vector<8x50xf32>
    %922 = arith.mulf %921, %896 : vector<8x50xf32>
    %923 = arith.addf %922, %912 : vector<8x50xf32>
    %c34_i32 = arith.constant 34 : i32
    %924 = arith.addf %899, %920 : vector<8x50xf32>
    %cst_415 = arith.constant 0.904837429 : f32
    %925 = vector.broadcast %cst_415 : f32 to vector<8x50xf32>
    %926 = arith.mulf %925, %924 : vector<8x50xf32>
    %927 = arith.addf %902, %923 : vector<8x50xf32>
    %cst_416 = arith.constant 0.36787945 : f32
    %928 = vector.broadcast %cst_416 : f32 to vector<8x50xf32>
    %929 = arith.mulf %928, %927 : vector<8x50xf32>
    %cst_417 = arith.constant 0.271828175 : f32
    %930 = vector.broadcast %cst_417 : f32 to vector<8x50xf32>
    %931 = arith.mulf %930, %926 : vector<8x50xf32>
    %cst_418 = arith.constant -54.3656349 : f32
    %932 = vector.broadcast %cst_418 : f32 to vector<8x50xf32>
    %933 = arith.mulf %932, %929 : vector<8x50xf32>
    %934 = arith.addf %931, %933 : vector<8x50xf32>
    %cst_419 = arith.constant 1.000000e+01 : f32
    %935 = vector.broadcast %cst_419 : f32 to vector<8x50xf32>
    %936 = arith.cmpf oge, %934, %935 : vector<8x50xf32>
    %cst_420 = arith.constant 1.000000e+00 : f32
    %cst_421 = arith.constant 0.000000e+00 : f32
    %937 = vector.broadcast %cst_420 : f32 to vector<8x50xf32>
    %938 = vector.broadcast %cst_421 : f32 to vector<8x50xf32>
    %939 = arith.select %936, %937, %938 : vector<8x50xi1>, vector<8x50xf32>
    %c8_i32_422 = arith.constant 8 : i32
    %940 = arith.muli %c34_i32, %c8_i32_422 : i32
    %941 = arith.index_cast %940 : i32 to index
    %c0_423 = arith.constant 0 : index
    %942 = vector.load %arg6[%941, %c0_423] : memref<400x50xf32, #tpu.memory_space<vmem>>, vector<8x50xf32>
    tpu.vector_store %arg6[%941, %c0_423], %939 {strides = array<i32>} : memref<400x50xf32, #tpu.memory_space<vmem>>, vector<8x50xf32>,
    %cst_424 = arith.constant 0.904837429 : f32
    %943 = vector.broadcast %cst_424 : f32 to vector<8x50xf32>
    %944 = arith.mulf %943, %920 : vector<8x50xf32>
    %945 = arith.index_cast %940 : i32 to index
    %c0_425 = arith.constant 0 : index
    %946 = vector.load %arg5[%945, %c0_425] : memref<400x50xf32, #tpu.memory_space<vmem>>, vector<8x50xf32>
    %947 = arith.addf %944, %946 : vector<8x50xf32>
    %cst_426 = arith.constant 0.36787945 : f32
    %948 = vector.broadcast %cst_426 : f32 to vector<8x50xf32>
    %949 = arith.mulf %948, %923 : vector<8x50xf32>
    %950 = arith.addf %949, %939 : vector<8x50xf32>
    %c35_i32 = arith.constant 35 : i32
    %951 = arith.addf %926, %947 : vector<8x50xf32>
    %cst_427 = arith.constant 0.904837429 : f32
    %952 = vector.broadcast %cst_427 : f32 to vector<8x50xf32>
    %953 = arith.mulf %952, %951 : vector<8x50xf32>
    %954 = arith.addf %929, %950 : vector<8x50xf32>
    %cst_428 = arith.constant 0.36787945 : f32
    %955 = vector.broadcast %cst_428 : f32 to vector<8x50xf32>
    %956 = arith.mulf %955, %954 : vector<8x50xf32>
    %cst_429 = arith.constant 0.271828175 : f32
    %957 = vector.broadcast %cst_429 : f32 to vector<8x50xf32>
    %958 = arith.mulf %957, %953 : vector<8x50xf32>
    %cst_430 = arith.constant -54.3656349 : f32
    %959 = vector.broadcast %cst_430 : f32 to vector<8x50xf32>
    %960 = arith.mulf %959, %956 : vector<8x50xf32>
    %961 = arith.addf %958, %960 : vector<8x50xf32>
    %cst_431 = arith.constant 1.000000e+01 : f32
    %962 = vector.broadcast %cst_431 : f32 to vector<8x50xf32>
    %963 = arith.cmpf oge, %961, %962 : vector<8x50xf32>
    %cst_432 = arith.constant 1.000000e+00 : f32
    %cst_433 = arith.constant 0.000000e+00 : f32
    %964 = vector.broadcast %cst_432 : f32 to vector<8x50xf32>
    %965 = vector.broadcast %cst_433 : f32 to vector<8x50xf32>
    %966 = arith.select %963, %964, %965 : vector<8x50xi1>, vector<8x50xf32>
    %c8_i32_434 = arith.constant 8 : i32
    %967 = arith.muli %c35_i32, %c8_i32_434 : i32
    %968 = arith.index_cast %967 : i32 to index
    %c0_435 = arith.constant 0 : index
    %969 = vector.load %arg6[%968, %c0_435] : memref<400x50xf32, #tpu.memory_space<vmem>>, vector<8x50xf32>
    tpu.vector_store %arg6[%968, %c0_435], %966 {strides = array<i32>} : memref<400x50xf32, #tpu.memory_space<vmem>>, vector<8x50xf32>,
    %cst_436 = arith.constant 0.904837429 : f32
    %970 = vector.broadcast %cst_436 : f32 to vector<8x50xf32>
    %971 = arith.mulf %970, %947 : vector<8x50xf32>
    %972 = arith.index_cast %967 : i32 to index
    %c0_437 = arith.constant 0 : index
    %973 = vector.load %arg5[%972, %c0_437] : memref<400x50xf32, #tpu.memory_space<vmem>>, vector<8x50xf32>
    %974 = arith.addf %971, %973 : vector<8x50xf32>
    %cst_438 = arith.constant 0.36787945 : f32
    %975 = vector.broadcast %cst_438 : f32 to vector<8x50xf32>
    %976 = arith.mulf %975, %950 : vector<8x50xf32>
    %977 = arith.addf %976, %966 : vector<8x50xf32>
    %c36_i32 = arith.constant 36 : i32
    %978 = arith.addf %953, %974 : vector<8x50xf32>
    %cst_439 = arith.constant 0.904837429 : f32
    %979 = vector.broadcast %cst_439 : f32 to vector<8x50xf32>
    %980 = arith.mulf %979, %978 : vector<8x50xf32>
    %981 = arith.addf %956, %977 : vector<8x50xf32>
    %cst_440 = arith.constant 0.36787945 : f32
    %982 = vector.broadcast %cst_440 : f32 to vector<8x50xf32>
    %983 = arith.mulf %982, %981 : vector<8x50xf32>
    %cst_441 = arith.constant 0.271828175 : f32
    %984 = vector.broadcast %cst_441 : f32 to vector<8x50xf32>
    %985 = arith.mulf %984, %980 : vector<8x50xf32>
    %cst_442 = arith.constant -54.3656349 : f32
    %986 = vector.broadcast %cst_442 : f32 to vector<8x50xf32>
    %987 = arith.mulf %986, %983 : vector<8x50xf32>
    %988 = arith.addf %985, %987 : vector<8x50xf32>
    %cst_443 = arith.constant 1.000000e+01 : f32
    %989 = vector.broadcast %cst_443 : f32 to vector<8x50xf32>
    %990 = arith.cmpf oge, %988, %989 : vector<8x50xf32>
    %cst_444 = arith.constant 1.000000e+00 : f32
    %cst_445 = arith.constant 0.000000e+00 : f32
    %991 = vector.broadcast %cst_444 : f32 to vector<8x50xf32>
    %992 = vector.broadcast %cst_445 : f32 to vector<8x50xf32>
    %993 = arith.select %990, %991, %992 : vector<8x50xi1>, vector<8x50xf32>
    %c8_i32_446 = arith.constant 8 : i32
    %994 = arith.muli %c36_i32, %c8_i32_446 : i32
    %995 = arith.index_cast %994 : i32 to index
    %c0_447 = arith.constant 0 : index
    %996 = vector.load %arg6[%995, %c0_447] : memref<400x50xf32, #tpu.memory_space<vmem>>, vector<8x50xf32>
    tpu.vector_store %arg6[%995, %c0_447], %993 {strides = array<i32>} : memref<400x50xf32, #tpu.memory_space<vmem>>, vector<8x50xf32>,
    %cst_448 = arith.constant 0.904837429 : f32
    %997 = vector.broadcast %cst_448 : f32 to vector<8x50xf32>
    %998 = arith.mulf %997, %974 : vector<8x50xf32>
    %999 = arith.index_cast %994 : i32 to index
    %c0_449 = arith.constant 0 : index
    %1000 = vector.load %arg5[%999, %c0_449] : memref<400x50xf32, #tpu.memory_space<vmem>>, vector<8x50xf32>
    %1001 = arith.addf %998, %1000 : vector<8x50xf32>
    %cst_450 = arith.constant 0.36787945 : f32
    %1002 = vector.broadcast %cst_450 : f32 to vector<8x50xf32>
    %1003 = arith.mulf %1002, %977 : vector<8x50xf32>
    %1004 = arith.addf %1003, %993 : vector<8x50xf32>
    %c37_i32 = arith.constant 37 : i32
    %1005 = arith.addf %980, %1001 : vector<8x50xf32>
    %cst_451 = arith.constant 0.904837429 : f32
    %1006 = vector.broadcast %cst_451 : f32 to vector<8x50xf32>
    %1007 = arith.mulf %1006, %1005 : vector<8x50xf32>
    %1008 = arith.addf %983, %1004 : vector<8x50xf32>
    %cst_452 = arith.constant 0.36787945 : f32
    %1009 = vector.broadcast %cst_452 : f32 to vector<8x50xf32>
    %1010 = arith.mulf %1009, %1008 : vector<8x50xf32>
    %cst_453 = arith.constant 0.271828175 : f32
    %1011 = vector.broadcast %cst_453 : f32 to vector<8x50xf32>
    %1012 = arith.mulf %1011, %1007 : vector<8x50xf32>
    %cst_454 = arith.constant -54.3656349 : f32
    %1013 = vector.broadcast %cst_454 : f32 to vector<8x50xf32>
    %1014 = arith.mulf %1013, %1010 : vector<8x50xf32>
    %1015 = arith.addf %1012, %1014 : vector<8x50xf32>
    %cst_455 = arith.constant 1.000000e+01 : f32
    %1016 = vector.broadcast %cst_455 : f32 to vector<8x50xf32>
    %1017 = arith.cmpf oge, %1015, %1016 : vector<8x50xf32>
    %cst_456 = arith.constant 1.000000e+00 : f32
    %cst_457 = arith.constant 0.000000e+00 : f32
    %1018 = vector.broadcast %cst_456 : f32 to vector<8x50xf32>
    %1019 = vector.broadcast %cst_457 : f32 to vector<8x50xf32>
    %1020 = arith.select %1017, %1018, %1019 : vector<8x50xi1>, vector<8x50xf32>
    %c8_i32_458 = arith.constant 8 : i32
    %1021 = arith.muli %c37_i32, %c8_i32_458 : i32
    %1022 = arith.index_cast %1021 : i32 to index
    %c0_459 = arith.constant 0 : index
    %1023 = vector.load %arg6[%1022, %c0_459] : memref<400x50xf32, #tpu.memory_space<vmem>>, vector<8x50xf32>
    tpu.vector_store %arg6[%1022, %c0_459], %1020 {strides = array<i32>} : memref<400x50xf32, #tpu.memory_space<vmem>>, vector<8x50xf32>,
    %cst_460 = arith.constant 0.904837429 : f32
    %1024 = vector.broadcast %cst_460 : f32 to vector<8x50xf32>
    %1025 = arith.mulf %1024, %1001 : vector<8x50xf32>
    %1026 = arith.index_cast %1021 : i32 to index
    %c0_461 = arith.constant 0 : index
    %1027 = vector.load %arg5[%1026, %c0_461] : memref<400x50xf32, #tpu.memory_space<vmem>>, vector<8x50xf32>
    %1028 = arith.addf %1025, %1027 : vector<8x50xf32>
    %cst_462 = arith.constant 0.36787945 : f32
    %1029 = vector.broadcast %cst_462 : f32 to vector<8x50xf32>
    %1030 = arith.mulf %1029, %1004 : vector<8x50xf32>
    %1031 = arith.addf %1030, %1020 : vector<8x50xf32>
    %c38_i32 = arith.constant 38 : i32
    %1032 = arith.addf %1007, %1028 : vector<8x50xf32>
    %cst_463 = arith.constant 0.904837429 : f32
    %1033 = vector.broadcast %cst_463 : f32 to vector<8x50xf32>
    %1034 = arith.mulf %1033, %1032 : vector<8x50xf32>
    %1035 = arith.addf %1010, %1031 : vector<8x50xf32>
    %cst_464 = arith.constant 0.36787945 : f32
    %1036 = vector.broadcast %cst_464 : f32 to vector<8x50xf32>
    %1037 = arith.mulf %1036, %1035 : vector<8x50xf32>
    %cst_465 = arith.constant 0.271828175 : f32
    %1038 = vector.broadcast %cst_465 : f32 to vector<8x50xf32>
    %1039 = arith.mulf %1038, %1034 : vector<8x50xf32>
    %cst_466 = arith.constant -54.3656349 : f32
    %1040 = vector.broadcast %cst_466 : f32 to vector<8x50xf32>
    %1041 = arith.mulf %1040, %1037 : vector<8x50xf32>
    %1042 = arith.addf %1039, %1041 : vector<8x50xf32>
    %cst_467 = arith.constant 1.000000e+01 : f32
    %1043 = vector.broadcast %cst_467 : f32 to vector<8x50xf32>
    %1044 = arith.cmpf oge, %1042, %1043 : vector<8x50xf32>
    %cst_468 = arith.constant 1.000000e+00 : f32
    %cst_469 = arith.constant 0.000000e+00 : f32
    %1045 = vector.broadcast %cst_468 : f32 to vector<8x50xf32>
    %1046 = vector.broadcast %cst_469 : f32 to vector<8x50xf32>
    %1047 = arith.select %1044, %1045, %1046 : vector<8x50xi1>, vector<8x50xf32>
    %c8_i32_470 = arith.constant 8 : i32
    %1048 = arith.muli %c38_i32, %c8_i32_470 : i32
    %1049 = arith.index_cast %1048 : i32 to index
    %c0_471 = arith.constant 0 : index
    %1050 = vector.load %arg6[%1049, %c0_471] : memref<400x50xf32, #tpu.memory_space<vmem>>, vector<8x50xf32>
    tpu.vector_store %arg6[%1049, %c0_471], %1047 {strides = array<i32>} : memref<400x50xf32, #tpu.memory_space<vmem>>, vector<8x50xf32>,
    %cst_472 = arith.constant 0.904837429 : f32
    %1051 = vector.broadcast %cst_472 : f32 to vector<8x50xf32>
    %1052 = arith.mulf %1051, %1028 : vector<8x50xf32>
    %1053 = arith.index_cast %1048 : i32 to index
    %c0_473 = arith.constant 0 : index
    %1054 = vector.load %arg5[%1053, %c0_473] : memref<400x50xf32, #tpu.memory_space<vmem>>, vector<8x50xf32>
    %1055 = arith.addf %1052, %1054 : vector<8x50xf32>
    %cst_474 = arith.constant 0.36787945 : f32
    %1056 = vector.broadcast %cst_474 : f32 to vector<8x50xf32>
    %1057 = arith.mulf %1056, %1031 : vector<8x50xf32>
    %1058 = arith.addf %1057, %1047 : vector<8x50xf32>
    %c39_i32 = arith.constant 39 : i32
    %1059 = arith.addf %1034, %1055 : vector<8x50xf32>
    %cst_475 = arith.constant 0.904837429 : f32
    %1060 = vector.broadcast %cst_475 : f32 to vector<8x50xf32>
    %1061 = arith.mulf %1060, %1059 : vector<8x50xf32>
    %1062 = arith.addf %1037, %1058 : vector<8x50xf32>
    %cst_476 = arith.constant 0.36787945 : f32
    %1063 = vector.broadcast %cst_476 : f32 to vector<8x50xf32>
    %1064 = arith.mulf %1063, %1062 : vector<8x50xf32>
    %cst_477 = arith.constant 0.271828175 : f32
    %1065 = vector.broadcast %cst_477 : f32 to vector<8x50xf32>
    %1066 = arith.mulf %1065, %1061 : vector<8x50xf32>
    %cst_478 = arith.constant -54.3656349 : f32
    %1067 = vector.broadcast %cst_478 : f32 to vector<8x50xf32>
    %1068 = arith.mulf %1067, %1064 : vector<8x50xf32>
    %1069 = arith.addf %1066, %1068 : vector<8x50xf32>
    %cst_479 = arith.constant 1.000000e+01 : f32
    %1070 = vector.broadcast %cst_479 : f32 to vector<8x50xf32>
    %1071 = arith.cmpf oge, %1069, %1070 : vector<8x50xf32>
    %cst_480 = arith.constant 1.000000e+00 : f32
    %cst_481 = arith.constant 0.000000e+00 : f32
    %1072 = vector.broadcast %cst_480 : f32 to vector<8x50xf32>
    %1073 = vector.broadcast %cst_481 : f32 to vector<8x50xf32>
    %1074 = arith.select %1071, %1072, %1073 : vector<8x50xi1>, vector<8x50xf32>
    %c8_i32_482 = arith.constant 8 : i32
    %1075 = arith.muli %c39_i32, %c8_i32_482 : i32
    %1076 = arith.index_cast %1075 : i32 to index
    %c0_483 = arith.constant 0 : index
    %1077 = vector.load %arg6[%1076, %c0_483] : memref<400x50xf32, #tpu.memory_space<vmem>>, vector<8x50xf32>
    tpu.vector_store %arg6[%1076, %c0_483], %1074 {strides = array<i32>} : memref<400x50xf32, #tpu.memory_space<vmem>>, vector<8x50xf32>,
    %cst_484 = arith.constant 0.904837429 : f32
    %1078 = vector.broadcast %cst_484 : f32 to vector<8x50xf32>
    %1079 = arith.mulf %1078, %1055 : vector<8x50xf32>
    %1080 = arith.index_cast %1075 : i32 to index
    %c0_485 = arith.constant 0 : index
    %1081 = vector.load %arg5[%1080, %c0_485] : memref<400x50xf32, #tpu.memory_space<vmem>>, vector<8x50xf32>
    %1082 = arith.addf %1079, %1081 : vector<8x50xf32>
    %cst_486 = arith.constant 0.36787945 : f32
    %1083 = vector.broadcast %cst_486 : f32 to vector<8x50xf32>
    %1084 = arith.mulf %1083, %1058 : vector<8x50xf32>
    %1085 = arith.addf %1084, %1074 : vector<8x50xf32>
    %c40_i32 = arith.constant 40 : i32
    %1086 = arith.addf %1061, %1082 : vector<8x50xf32>
    %cst_487 = arith.constant 0.904837429 : f32
    %1087 = vector.broadcast %cst_487 : f32 to vector<8x50xf32>
    %1088 = arith.mulf %1087, %1086 : vector<8x50xf32>
    %1089 = arith.addf %1064, %1085 : vector<8x50xf32>
    %cst_488 = arith.constant 0.36787945 : f32
    %1090 = vector.broadcast %cst_488 : f32 to vector<8x50xf32>
    %1091 = arith.mulf %1090, %1089 : vector<8x50xf32>
    %cst_489 = arith.constant 0.271828175 : f32
    %1092 = vector.broadcast %cst_489 : f32 to vector<8x50xf32>
    %1093 = arith.mulf %1092, %1088 : vector<8x50xf32>
    %cst_490 = arith.constant -54.3656349 : f32
    %1094 = vector.broadcast %cst_490 : f32 to vector<8x50xf32>
    %1095 = arith.mulf %1094, %1091 : vector<8x50xf32>
    %1096 = arith.addf %1093, %1095 : vector<8x50xf32>
    %cst_491 = arith.constant 1.000000e+01 : f32
    %1097 = vector.broadcast %cst_491 : f32 to vector<8x50xf32>
    %1098 = arith.cmpf oge, %1096, %1097 : vector<8x50xf32>
    %cst_492 = arith.constant 1.000000e+00 : f32
    %cst_493 = arith.constant 0.000000e+00 : f32
    %1099 = vector.broadcast %cst_492 : f32 to vector<8x50xf32>
    %1100 = vector.broadcast %cst_493 : f32 to vector<8x50xf32>
    %1101 = arith.select %1098, %1099, %1100 : vector<8x50xi1>, vector<8x50xf32>
    %c8_i32_494 = arith.constant 8 : i32
    %1102 = arith.muli %c40_i32, %c8_i32_494 : i32
    %1103 = arith.index_cast %1102 : i32 to index
    %c0_495 = arith.constant 0 : index
    %1104 = vector.load %arg6[%1103, %c0_495] : memref<400x50xf32, #tpu.memory_space<vmem>>, vector<8x50xf32>
    tpu.vector_store %arg6[%1103, %c0_495], %1101 {strides = array<i32>} : memref<400x50xf32, #tpu.memory_space<vmem>>, vector<8x50xf32>,
    %cst_496 = arith.constant 0.904837429 : f32
    %1105 = vector.broadcast %cst_496 : f32 to vector<8x50xf32>
    %1106 = arith.mulf %1105, %1082 : vector<8x50xf32>
    %1107 = arith.index_cast %1102 : i32 to index
    %c0_497 = arith.constant 0 : index
    %1108 = vector.load %arg5[%1107, %c0_497] : memref<400x50xf32, #tpu.memory_space<vmem>>, vector<8x50xf32>
    %1109 = arith.addf %1106, %1108 : vector<8x50xf32>
    %cst_498 = arith.constant 0.36787945 : f32
    %1110 = vector.broadcast %cst_498 : f32 to vector<8x50xf32>
    %1111 = arith.mulf %1110, %1085 : vector<8x50xf32>
    %1112 = arith.addf %1111, %1101 : vector<8x50xf32>
    %c41_i32 = arith.constant 41 : i32
    %1113 = arith.addf %1088, %1109 : vector<8x50xf32>
    %cst_499 = arith.constant 0.904837429 : f32
    %1114 = vector.broadcast %cst_499 : f32 to vector<8x50xf32>
    %1115 = arith.mulf %1114, %1113 : vector<8x50xf32>
    %1116 = arith.addf %1091, %1112 : vector<8x50xf32>
    %cst_500 = arith.constant 0.36787945 : f32
    %1117 = vector.broadcast %cst_500 : f32 to vector<8x50xf32>
    %1118 = arith.mulf %1117, %1116 : vector<8x50xf32>
    %cst_501 = arith.constant 0.271828175 : f32
    %1119 = vector.broadcast %cst_501 : f32 to vector<8x50xf32>
    %1120 = arith.mulf %1119, %1115 : vector<8x50xf32>
    %cst_502 = arith.constant -54.3656349 : f32
    %1121 = vector.broadcast %cst_502 : f32 to vector<8x50xf32>
    %1122 = arith.mulf %1121, %1118 : vector<8x50xf32>
    %1123 = arith.addf %1120, %1122 : vector<8x50xf32>
    %cst_503 = arith.constant 1.000000e+01 : f32
    %1124 = vector.broadcast %cst_503 : f32 to vector<8x50xf32>
    %1125 = arith.cmpf oge, %1123, %1124 : vector<8x50xf32>
    %cst_504 = arith.constant 1.000000e+00 : f32
    %cst_505 = arith.constant 0.000000e+00 : f32
    %1126 = vector.broadcast %cst_504 : f32 to vector<8x50xf32>
    %1127 = vector.broadcast %cst_505 : f32 to vector<8x50xf32>
    %1128 = arith.select %1125, %1126, %1127 : vector<8x50xi1>, vector<8x50xf32>
    %c8_i32_506 = arith.constant 8 : i32
    %1129 = arith.muli %c41_i32, %c8_i32_506 : i32
    %1130 = arith.index_cast %1129 : i32 to index
    %c0_507 = arith.constant 0 : index
    %1131 = vector.load %arg6[%1130, %c0_507] : memref<400x50xf32, #tpu.memory_space<vmem>>, vector<8x50xf32>
    tpu.vector_store %arg6[%1130, %c0_507], %1128 {strides = array<i32>} : memref<400x50xf32, #tpu.memory_space<vmem>>, vector<8x50xf32>,
    %cst_508 = arith.constant 0.904837429 : f32
    %1132 = vector.broadcast %cst_508 : f32 to vector<8x50xf32>
    %1133 = arith.mulf %1132, %1109 : vector<8x50xf32>
    %1134 = arith.index_cast %1129 : i32 to index
    %c0_509 = arith.constant 0 : index
    %1135 = vector.load %arg5[%1134, %c0_509] : memref<400x50xf32, #tpu.memory_space<vmem>>, vector<8x50xf32>
    %1136 = arith.addf %1133, %1135 : vector<8x50xf32>
    %cst_510 = arith.constant 0.36787945 : f32
    %1137 = vector.broadcast %cst_510 : f32 to vector<8x50xf32>
    %1138 = arith.mulf %1137, %1112 : vector<8x50xf32>
    %1139 = arith.addf %1138, %1128 : vector<8x50xf32>
    %c42_i32 = arith.constant 42 : i32
    %1140 = arith.addf %1115, %1136 : vector<8x50xf32>
    %cst_511 = arith.constant 0.904837429 : f32
    %1141 = vector.broadcast %cst_511 : f32 to vector<8x50xf32>
    %1142 = arith.mulf %1141, %1140 : vector<8x50xf32>
    %1143 = arith.addf %1118, %1139 : vector<8x50xf32>
    %cst_512 = arith.constant 0.36787945 : f32
    %1144 = vector.broadcast %cst_512 : f32 to vector<8x50xf32>
    %1145 = arith.mulf %1144, %1143 : vector<8x50xf32>
    %cst_513 = arith.constant 0.271828175 : f32
    %1146 = vector.broadcast %cst_513 : f32 to vector<8x50xf32>
    %1147 = arith.mulf %1146, %1142 : vector<8x50xf32>
    %cst_514 = arith.constant -54.3656349 : f32
    %1148 = vector.broadcast %cst_514 : f32 to vector<8x50xf32>
    %1149 = arith.mulf %1148, %1145 : vector<8x50xf32>
    %1150 = arith.addf %1147, %1149 : vector<8x50xf32>
    %cst_515 = arith.constant 1.000000e+01 : f32
    %1151 = vector.broadcast %cst_515 : f32 to vector<8x50xf32>
    %1152 = arith.cmpf oge, %1150, %1151 : vector<8x50xf32>
    %cst_516 = arith.constant 1.000000e+00 : f32
    %cst_517 = arith.constant 0.000000e+00 : f32
    %1153 = vector.broadcast %cst_516 : f32 to vector<8x50xf32>
    %1154 = vector.broadcast %cst_517 : f32 to vector<8x50xf32>
    %1155 = arith.select %1152, %1153, %1154 : vector<8x50xi1>, vector<8x50xf32>
    %c8_i32_518 = arith.constant 8 : i32
    %1156 = arith.muli %c42_i32, %c8_i32_518 : i32
    %1157 = arith.index_cast %1156 : i32 to index
    %c0_519 = arith.constant 0 : index
    %1158 = vector.load %arg6[%1157, %c0_519] : memref<400x50xf32, #tpu.memory_space<vmem>>, vector<8x50xf32>
    tpu.vector_store %arg6[%1157, %c0_519], %1155 {strides = array<i32>} : memref<400x50xf32, #tpu.memory_space<vmem>>, vector<8x50xf32>,
    %cst_520 = arith.constant 0.904837429 : f32
    %1159 = vector.broadcast %cst_520 : f32 to vector<8x50xf32>
    %1160 = arith.mulf %1159, %1136 : vector<8x50xf32>
    %1161 = arith.index_cast %1156 : i32 to index
    %c0_521 = arith.constant 0 : index
    %1162 = vector.load %arg5[%1161, %c0_521] : memref<400x50xf32, #tpu.memory_space<vmem>>, vector<8x50xf32>
    %1163 = arith.addf %1160, %1162 : vector<8x50xf32>
    %cst_522 = arith.constant 0.36787945 : f32
    %1164 = vector.broadcast %cst_522 : f32 to vector<8x50xf32>
    %1165 = arith.mulf %1164, %1139 : vector<8x50xf32>
    %1166 = arith.addf %1165, %1155 : vector<8x50xf32>
    %c43_i32 = arith.constant 43 : i32
    %1167 = arith.addf %1142, %1163 : vector<8x50xf32>
    %cst_523 = arith.constant 0.904837429 : f32
    %1168 = vector.broadcast %cst_523 : f32 to vector<8x50xf32>
    %1169 = arith.mulf %1168, %1167 : vector<8x50xf32>
    %1170 = arith.addf %1145, %1166 : vector<8x50xf32>
    %cst_524 = arith.constant 0.36787945 : f32
    %1171 = vector.broadcast %cst_524 : f32 to vector<8x50xf32>
    %1172 = arith.mulf %1171, %1170 : vector<8x50xf32>
    %cst_525 = arith.constant 0.271828175 : f32
    %1173 = vector.broadcast %cst_525 : f32 to vector<8x50xf32>
    %1174 = arith.mulf %1173, %1169 : vector<8x50xf32>
    %cst_526 = arith.constant -54.3656349 : f32
    %1175 = vector.broadcast %cst_526 : f32 to vector<8x50xf32>
    %1176 = arith.mulf %1175, %1172 : vector<8x50xf32>
    %1177 = arith.addf %1174, %1176 : vector<8x50xf32>
    %cst_527 = arith.constant 1.000000e+01 : f32
    %1178 = vector.broadcast %cst_527 : f32 to vector<8x50xf32>
    %1179 = arith.cmpf oge, %1177, %1178 : vector<8x50xf32>
    %cst_528 = arith.constant 1.000000e+00 : f32
    %cst_529 = arith.constant 0.000000e+00 : f32
    %1180 = vector.broadcast %cst_528 : f32 to vector<8x50xf32>
    %1181 = vector.broadcast %cst_529 : f32 to vector<8x50xf32>
    %1182 = arith.select %1179, %1180, %1181 : vector<8x50xi1>, vector<8x50xf32>
    %c8_i32_530 = arith.constant 8 : i32
    %1183 = arith.muli %c43_i32, %c8_i32_530 : i32
    %1184 = arith.index_cast %1183 : i32 to index
    %c0_531 = arith.constant 0 : index
    %1185 = vector.load %arg6[%1184, %c0_531] : memref<400x50xf32, #tpu.memory_space<vmem>>, vector<8x50xf32>
    tpu.vector_store %arg6[%1184, %c0_531], %1182 {strides = array<i32>} : memref<400x50xf32, #tpu.memory_space<vmem>>, vector<8x50xf32>,
    %cst_532 = arith.constant 0.904837429 : f32
    %1186 = vector.broadcast %cst_532 : f32 to vector<8x50xf32>
    %1187 = arith.mulf %1186, %1163 : vector<8x50xf32>
    %1188 = arith.index_cast %1183 : i32 to index
    %c0_533 = arith.constant 0 : index
    %1189 = vector.load %arg5[%1188, %c0_533] : memref<400x50xf32, #tpu.memory_space<vmem>>, vector<8x50xf32>
    %1190 = arith.addf %1187, %1189 : vector<8x50xf32>
    %cst_534 = arith.constant 0.36787945 : f32
    %1191 = vector.broadcast %cst_534 : f32 to vector<8x50xf32>
    %1192 = arith.mulf %1191, %1166 : vector<8x50xf32>
    %1193 = arith.addf %1192, %1182 : vector<8x50xf32>
    %c44_i32 = arith.constant 44 : i32
    %1194 = arith.addf %1169, %1190 : vector<8x50xf32>
    %cst_535 = arith.constant 0.904837429 : f32
    %1195 = vector.broadcast %cst_535 : f32 to vector<8x50xf32>
    %1196 = arith.mulf %1195, %1194 : vector<8x50xf32>
    %1197 = arith.addf %1172, %1193 : vector<8x50xf32>
    %cst_536 = arith.constant 0.36787945 : f32
    %1198 = vector.broadcast %cst_536 : f32 to vector<8x50xf32>
    %1199 = arith.mulf %1198, %1197 : vector<8x50xf32>
    %cst_537 = arith.constant 0.271828175 : f32
    %1200 = vector.broadcast %cst_537 : f32 to vector<8x50xf32>
    %1201 = arith.mulf %1200, %1196 : vector<8x50xf32>
    %cst_538 = arith.constant -54.3656349 : f32
    %1202 = vector.broadcast %cst_538 : f32 to vector<8x50xf32>
    %1203 = arith.mulf %1202, %1199 : vector<8x50xf32>
    %1204 = arith.addf %1201, %1203 : vector<8x50xf32>
    %cst_539 = arith.constant 1.000000e+01 : f32
    %1205 = vector.broadcast %cst_539 : f32 to vector<8x50xf32>
    %1206 = arith.cmpf oge, %1204, %1205 : vector<8x50xf32>
    %cst_540 = arith.constant 1.000000e+00 : f32
    %cst_541 = arith.constant 0.000000e+00 : f32
    %1207 = vector.broadcast %cst_540 : f32 to vector<8x50xf32>
    %1208 = vector.broadcast %cst_541 : f32 to vector<8x50xf32>
    %1209 = arith.select %1206, %1207, %1208 : vector<8x50xi1>, vector<8x50xf32>
    %c8_i32_542 = arith.constant 8 : i32
    %1210 = arith.muli %c44_i32, %c8_i32_542 : i32
    %1211 = arith.index_cast %1210 : i32 to index
    %c0_543 = arith.constant 0 : index
    %1212 = vector.load %arg6[%1211, %c0_543] : memref<400x50xf32, #tpu.memory_space<vmem>>, vector<8x50xf32>
    tpu.vector_store %arg6[%1211, %c0_543], %1209 {strides = array<i32>} : memref<400x50xf32, #tpu.memory_space<vmem>>, vector<8x50xf32>,
    %cst_544 = arith.constant 0.904837429 : f32
    %1213 = vector.broadcast %cst_544 : f32 to vector<8x50xf32>
    %1214 = arith.mulf %1213, %1190 : vector<8x50xf32>
    %1215 = arith.index_cast %1210 : i32 to index
    %c0_545 = arith.constant 0 : index
    %1216 = vector.load %arg5[%1215, %c0_545] : memref<400x50xf32, #tpu.memory_space<vmem>>, vector<8x50xf32>
    %1217 = arith.addf %1214, %1216 : vector<8x50xf32>
    %cst_546 = arith.constant 0.36787945 : f32
    %1218 = vector.broadcast %cst_546 : f32 to vector<8x50xf32>
    %1219 = arith.mulf %1218, %1193 : vector<8x50xf32>
    %1220 = arith.addf %1219, %1209 : vector<8x50xf32>
    %c45_i32 = arith.constant 45 : i32
    %1221 = arith.addf %1196, %1217 : vector<8x50xf32>
    %cst_547 = arith.constant 0.904837429 : f32
    %1222 = vector.broadcast %cst_547 : f32 to vector<8x50xf32>
    %1223 = arith.mulf %1222, %1221 : vector<8x50xf32>
    %1224 = arith.addf %1199, %1220 : vector<8x50xf32>
    %cst_548 = arith.constant 0.36787945 : f32
    %1225 = vector.broadcast %cst_548 : f32 to vector<8x50xf32>
    %1226 = arith.mulf %1225, %1224 : vector<8x50xf32>
    %cst_549 = arith.constant 0.271828175 : f32
    %1227 = vector.broadcast %cst_549 : f32 to vector<8x50xf32>
    %1228 = arith.mulf %1227, %1223 : vector<8x50xf32>
    %cst_550 = arith.constant -54.3656349 : f32
    %1229 = vector.broadcast %cst_550 : f32 to vector<8x50xf32>
    %1230 = arith.mulf %1229, %1226 : vector<8x50xf32>
    %1231 = arith.addf %1228, %1230 : vector<8x50xf32>
    %cst_551 = arith.constant 1.000000e+01 : f32
    %1232 = vector.broadcast %cst_551 : f32 to vector<8x50xf32>
    %1233 = arith.cmpf oge, %1231, %1232 : vector<8x50xf32>
    %cst_552 = arith.constant 1.000000e+00 : f32
    %cst_553 = arith.constant 0.000000e+00 : f32
    %1234 = vector.broadcast %cst_552 : f32 to vector<8x50xf32>
    %1235 = vector.broadcast %cst_553 : f32 to vector<8x50xf32>
    %1236 = arith.select %1233, %1234, %1235 : vector<8x50xi1>, vector<8x50xf32>
    %c8_i32_554 = arith.constant 8 : i32
    %1237 = arith.muli %c45_i32, %c8_i32_554 : i32
    %1238 = arith.index_cast %1237 : i32 to index
    %c0_555 = arith.constant 0 : index
    %1239 = vector.load %arg6[%1238, %c0_555] : memref<400x50xf32, #tpu.memory_space<vmem>>, vector<8x50xf32>
    tpu.vector_store %arg6[%1238, %c0_555], %1236 {strides = array<i32>} : memref<400x50xf32, #tpu.memory_space<vmem>>, vector<8x50xf32>,
    %cst_556 = arith.constant 0.904837429 : f32
    %1240 = vector.broadcast %cst_556 : f32 to vector<8x50xf32>
    %1241 = arith.mulf %1240, %1217 : vector<8x50xf32>
    %1242 = arith.index_cast %1237 : i32 to index
    %c0_557 = arith.constant 0 : index
    %1243 = vector.load %arg5[%1242, %c0_557] : memref<400x50xf32, #tpu.memory_space<vmem>>, vector<8x50xf32>
    %1244 = arith.addf %1241, %1243 : vector<8x50xf32>
    %cst_558 = arith.constant 0.36787945 : f32
    %1245 = vector.broadcast %cst_558 : f32 to vector<8x50xf32>
    %1246 = arith.mulf %1245, %1220 : vector<8x50xf32>
    %1247 = arith.addf %1246, %1236 : vector<8x50xf32>
    %c46_i32 = arith.constant 46 : i32
    %1248 = arith.addf %1223, %1244 : vector<8x50xf32>
    %cst_559 = arith.constant 0.904837429 : f32
    %1249 = vector.broadcast %cst_559 : f32 to vector<8x50xf32>
    %1250 = arith.mulf %1249, %1248 : vector<8x50xf32>
    %1251 = arith.addf %1226, %1247 : vector<8x50xf32>
    %cst_560 = arith.constant 0.36787945 : f32
    %1252 = vector.broadcast %cst_560 : f32 to vector<8x50xf32>
    %1253 = arith.mulf %1252, %1251 : vector<8x50xf32>
    %cst_561 = arith.constant 0.271828175 : f32
    %1254 = vector.broadcast %cst_561 : f32 to vector<8x50xf32>
    %1255 = arith.mulf %1254, %1250 : vector<8x50xf32>
    %cst_562 = arith.constant -54.3656349 : f32
    %1256 = vector.broadcast %cst_562 : f32 to vector<8x50xf32>
    %1257 = arith.mulf %1256, %1253 : vector<8x50xf32>
    %1258 = arith.addf %1255, %1257 : vector<8x50xf32>
    %cst_563 = arith.constant 1.000000e+01 : f32
    %1259 = vector.broadcast %cst_563 : f32 to vector<8x50xf32>
    %1260 = arith.cmpf oge, %1258, %1259 : vector<8x50xf32>
    %cst_564 = arith.constant 1.000000e+00 : f32
    %cst_565 = arith.constant 0.000000e+00 : f32
    %1261 = vector.broadcast %cst_564 : f32 to vector<8x50xf32>
    %1262 = vector.broadcast %cst_565 : f32 to vector<8x50xf32>
    %1263 = arith.select %1260, %1261, %1262 : vector<8x50xi1>, vector<8x50xf32>
    %c8_i32_566 = arith.constant 8 : i32
    %1264 = arith.muli %c46_i32, %c8_i32_566 : i32
    %1265 = arith.index_cast %1264 : i32 to index
    %c0_567 = arith.constant 0 : index
    %1266 = vector.load %arg6[%1265, %c0_567] : memref<400x50xf32, #tpu.memory_space<vmem>>, vector<8x50xf32>
    tpu.vector_store %arg6[%1265, %c0_567], %1263 {strides = array<i32>} : memref<400x50xf32, #tpu.memory_space<vmem>>, vector<8x50xf32>,
    %cst_568 = arith.constant 0.904837429 : f32
    %1267 = vector.broadcast %cst_568 : f32 to vector<8x50xf32>
    %1268 = arith.mulf %1267, %1244 : vector<8x50xf32>
    %1269 = arith.index_cast %1264 : i32 to index
    %c0_569 = arith.constant 0 : index
    %1270 = vector.load %arg5[%1269, %c0_569] : memref<400x50xf32, #tpu.memory_space<vmem>>, vector<8x50xf32>
    %1271 = arith.addf %1268, %1270 : vector<8x50xf32>
    %cst_570 = arith.constant 0.36787945 : f32
    %1272 = vector.broadcast %cst_570 : f32 to vector<8x50xf32>
    %1273 = arith.mulf %1272, %1247 : vector<8x50xf32>
    %1274 = arith.addf %1273, %1263 : vector<8x50xf32>
    %c47_i32 = arith.constant 47 : i32
    %1275 = arith.addf %1250, %1271 : vector<8x50xf32>
    %cst_571 = arith.constant 0.904837429 : f32
    %1276 = vector.broadcast %cst_571 : f32 to vector<8x50xf32>
    %1277 = arith.mulf %1276, %1275 : vector<8x50xf32>
    %1278 = arith.addf %1253, %1274 : vector<8x50xf32>
    %cst_572 = arith.constant 0.36787945 : f32
    %1279 = vector.broadcast %cst_572 : f32 to vector<8x50xf32>
    %1280 = arith.mulf %1279, %1278 : vector<8x50xf32>
    %cst_573 = arith.constant 0.271828175 : f32
    %1281 = vector.broadcast %cst_573 : f32 to vector<8x50xf32>
    %1282 = arith.mulf %1281, %1277 : vector<8x50xf32>
    %cst_574 = arith.constant -54.3656349 : f32
    %1283 = vector.broadcast %cst_574 : f32 to vector<8x50xf32>
    %1284 = arith.mulf %1283, %1280 : vector<8x50xf32>
    %1285 = arith.addf %1282, %1284 : vector<8x50xf32>
    %cst_575 = arith.constant 1.000000e+01 : f32
    %1286 = vector.broadcast %cst_575 : f32 to vector<8x50xf32>
    %1287 = arith.cmpf oge, %1285, %1286 : vector<8x50xf32>
    %cst_576 = arith.constant 1.000000e+00 : f32
    %cst_577 = arith.constant 0.000000e+00 : f32
    %1288 = vector.broadcast %cst_576 : f32 to vector<8x50xf32>
    %1289 = vector.broadcast %cst_577 : f32 to vector<8x50xf32>
    %1290 = arith.select %1287, %1288, %1289 : vector<8x50xi1>, vector<8x50xf32>
    %c8_i32_578 = arith.constant 8 : i32
    %1291 = arith.muli %c47_i32, %c8_i32_578 : i32
    %1292 = arith.index_cast %1291 : i32 to index
    %c0_579 = arith.constant 0 : index
    %1293 = vector.load %arg6[%1292, %c0_579] : memref<400x50xf32, #tpu.memory_space<vmem>>, vector<8x50xf32>
    tpu.vector_store %arg6[%1292, %c0_579], %1290 {strides = array<i32>} : memref<400x50xf32, #tpu.memory_space<vmem>>, vector<8x50xf32>,
    %cst_580 = arith.constant 0.904837429 : f32
    %1294 = vector.broadcast %cst_580 : f32 to vector<8x50xf32>
    %1295 = arith.mulf %1294, %1271 : vector<8x50xf32>
    %1296 = arith.index_cast %1291 : i32 to index
    %c0_581 = arith.constant 0 : index
    %1297 = vector.load %arg5[%1296, %c0_581] : memref<400x50xf32, #tpu.memory_space<vmem>>, vector<8x50xf32>
    %1298 = arith.addf %1295, %1297 : vector<8x50xf32>
    %cst_582 = arith.constant 0.36787945 : f32
    %1299 = vector.broadcast %cst_582 : f32 to vector<8x50xf32>
    %1300 = arith.mulf %1299, %1274 : vector<8x50xf32>
    %1301 = arith.addf %1300, %1290 : vector<8x50xf32>
    %c48_i32 = arith.constant 48 : i32
    %1302 = arith.addf %1277, %1298 : vector<8x50xf32>
    %cst_583 = arith.constant 0.904837429 : f32
    %1303 = vector.broadcast %cst_583 : f32 to vector<8x50xf32>
    %1304 = arith.mulf %1303, %1302 : vector<8x50xf32>
    %1305 = arith.addf %1280, %1301 : vector<8x50xf32>
    %cst_584 = arith.constant 0.36787945 : f32
    %1306 = vector.broadcast %cst_584 : f32 to vector<8x50xf32>
    %1307 = arith.mulf %1306, %1305 : vector<8x50xf32>
    %cst_585 = arith.constant 0.271828175 : f32
    %1308 = vector.broadcast %cst_585 : f32 to vector<8x50xf32>
    %1309 = arith.mulf %1308, %1304 : vector<8x50xf32>
    %cst_586 = arith.constant -54.3656349 : f32
    %1310 = vector.broadcast %cst_586 : f32 to vector<8x50xf32>
    %1311 = arith.mulf %1310, %1307 : vector<8x50xf32>
    %1312 = arith.addf %1309, %1311 : vector<8x50xf32>
    %cst_587 = arith.constant 1.000000e+01 : f32
    %1313 = vector.broadcast %cst_587 : f32 to vector<8x50xf32>
    %1314 = arith.cmpf oge, %1312, %1313 : vector<8x50xf32>
    %cst_588 = arith.constant 1.000000e+00 : f32
    %cst_589 = arith.constant 0.000000e+00 : f32
    %1315 = vector.broadcast %cst_588 : f32 to vector<8x50xf32>
    %1316 = vector.broadcast %cst_589 : f32 to vector<8x50xf32>
    %1317 = arith.select %1314, %1315, %1316 : vector<8x50xi1>, vector<8x50xf32>
    %c8_i32_590 = arith.constant 8 : i32
    %1318 = arith.muli %c48_i32, %c8_i32_590 : i32
    %1319 = arith.index_cast %1318 : i32 to index
    %c0_591 = arith.constant 0 : index
    %1320 = vector.load %arg6[%1319, %c0_591] : memref<400x50xf32, #tpu.memory_space<vmem>>, vector<8x50xf32>
    tpu.vector_store %arg6[%1319, %c0_591], %1317 {strides = array<i32>} : memref<400x50xf32, #tpu.memory_space<vmem>>, vector<8x50xf32>,
    %cst_592 = arith.constant 0.904837429 : f32
    %1321 = vector.broadcast %cst_592 : f32 to vector<8x50xf32>
    %1322 = arith.mulf %1321, %1298 : vector<8x50xf32>
    %1323 = arith.index_cast %1318 : i32 to index
    %c0_593 = arith.constant 0 : index
    %1324 = vector.load %arg5[%1323, %c0_593] : memref<400x50xf32, #tpu.memory_space<vmem>>, vector<8x50xf32>
    %1325 = arith.addf %1322, %1324 : vector<8x50xf32>
    %cst_594 = arith.constant 0.36787945 : f32
    %1326 = vector.broadcast %cst_594 : f32 to vector<8x50xf32>
    %1327 = arith.mulf %1326, %1301 : vector<8x50xf32>
    %1328 = arith.addf %1327, %1317 : vector<8x50xf32>
    %c49_i32 = arith.constant 49 : i32
    %1329 = arith.addf %1304, %1325 : vector<8x50xf32>
    %cst_595 = arith.constant 0.904837429 : f32
    %1330 = vector.broadcast %cst_595 : f32 to vector<8x50xf32>
    %1331 = arith.mulf %1330, %1329 : vector<8x50xf32>
    %1332 = arith.addf %1307, %1328 : vector<8x50xf32>
    %cst_596 = arith.constant 0.36787945 : f32
    %1333 = vector.broadcast %cst_596 : f32 to vector<8x50xf32>
    %1334 = arith.mulf %1333, %1332 : vector<8x50xf32>
    %cst_597 = arith.constant 0.271828175 : f32
    %1335 = vector.broadcast %cst_597 : f32 to vector<8x50xf32>
    %1336 = arith.mulf %1335, %1331 : vector<8x50xf32>
    %cst_598 = arith.constant -54.3656349 : f32
    %1337 = vector.broadcast %cst_598 : f32 to vector<8x50xf32>
    %1338 = arith.mulf %1337, %1334 : vector<8x50xf32>
    %1339 = arith.addf %1336, %1338 : vector<8x50xf32>
    %cst_599 = arith.constant 1.000000e+01 : f32
    %1340 = vector.broadcast %cst_599 : f32 to vector<8x50xf32>
    %1341 = arith.cmpf oge, %1339, %1340 : vector<8x50xf32>
    %cst_600 = arith.constant 1.000000e+00 : f32
    %cst_601 = arith.constant 0.000000e+00 : f32
    %1342 = vector.broadcast %cst_600 : f32 to vector<8x50xf32>
    %1343 = vector.broadcast %cst_601 : f32 to vector<8x50xf32>
    %1344 = arith.select %1341, %1342, %1343 : vector<8x50xi1>, vector<8x50xf32>
    %c8_i32_602 = arith.constant 8 : i32
    %1345 = arith.muli %c49_i32, %c8_i32_602 : i32
    %1346 = arith.index_cast %1345 : i32 to index
    %c0_603 = arith.constant 0 : index
    %1347 = vector.load %arg6[%1346, %c0_603] : memref<400x50xf32, #tpu.memory_space<vmem>>, vector<8x50xf32>
    tpu.vector_store %arg6[%1346, %c0_603], %1344 {strides = array<i32>} : memref<400x50xf32, #tpu.memory_space<vmem>>, vector<8x50xf32>,
    %cst_604 = arith.constant 0.904837429 : f32
    %1348 = vector.broadcast %cst_604 : f32 to vector<8x50xf32>
    %1349 = arith.mulf %1348, %1325 : vector<8x50xf32>
    %1350 = arith.index_cast %1345 : i32 to index
    %c0_605 = arith.constant 0 : index
    %1351 = vector.load %arg5[%1350, %c0_605] : memref<400x50xf32, #tpu.memory_space<vmem>>, vector<8x50xf32>
    %1352 = arith.addf %1349, %1351 : vector<8x50xf32>
    %cst_606 = arith.constant 0.36787945 : f32
    %1353 = vector.broadcast %cst_606 : f32 to vector<8x50xf32>
    %1354 = arith.mulf %1353, %1328 : vector<8x50xf32>
    %1355 = arith.addf %1354, %1344 : vector<8x50xf32>
    %c50_i32 = arith.constant 50 : i32
    %c0_607 = arith.constant 0 : index
    %c0_608 = arith.constant 0 : index
    %1356 = vector.load %arg6[%c0_607, %c0_608] : memref<400x50xf32, #tpu.memory_space<vmem>>, vector<400x50xf32>
    %c0_609 = arith.constant 0 : index
    %c0_610 = arith.constant 0 : index
    %1357 = vector.load %arg3[%c0_609, %c0_610] : memref<50x2xf32, #tpu.memory_space<vmem>>, vector<50x2xf32>
    %cst_611 = arith.constant dense<0.000000e+00> : vector<400x2xf32>
    %1358 = tpu.matmul %1356, %1357, %cst_611 {dimension_numbers = #tpu.dot_dimension_numbers<[1], [0], [0], [1], [0, 0, 1, 1], [], []>} : vector<400x50xf32>, vector<50x2xf32>, vector<400x2xf32> -> vector<400x2xf32>
    %c0_612 = arith.constant 0 : index
    %c0_613 = arith.constant 0 : index
    %1359 = vector.load %arg7[%c0_612, %c0_613] : memref<400x2xf32, #tpu.memory_space<vmem>>, vector<400x2xf32>
    tpu.vector_store %arg7[%c0_612, %c0_613], %1358 {strides = array<i32>} : memref<400x2xf32, #tpu.memory_space<vmem>>, vector<400x2xf32>,
    %cst_614 = arith.constant 0.000000e+00 : f32
    %1360 = vector.broadcast %cst_614 : f32 to vector<8x2xf32>
    %c0_i32_615 = arith.constant 0 : i32
    %1361 = arith.addf %1360, %1360 : vector<8x2xf32>
    %cst_616 = arith.constant 0.904837429 : f32
    %1362 = vector.broadcast %cst_616 : f32 to vector<8x2xf32>
    %1363 = arith.mulf %1362, %1361 : vector<8x2xf32>
    %1364 = arith.addf %1360, %1360 : vector<8x2xf32>
    %cst_617 = arith.constant 0.36787945 : f32
    %1365 = vector.broadcast %cst_617 : f32 to vector<8x2xf32>
    %1366 = arith.mulf %1365, %1364 : vector<8x2xf32>
    %cst_618 = arith.constant 0.271828175 : f32
    %1367 = vector.broadcast %cst_618 : f32 to vector<8x2xf32>
    %1368 = arith.mulf %1367, %1363 : vector<8x2xf32>
    %cst_619 = arith.constant -54.3656349 : f32
    %1369 = vector.broadcast %cst_619 : f32 to vector<8x2xf32>
    %1370 = arith.mulf %1369, %1366 : vector<8x2xf32>
    %1371 = arith.addf %1368, %1370 : vector<8x2xf32>
    %cst_620 = arith.constant 1.000000e+01 : f32
    %1372 = vector.broadcast %cst_620 : f32 to vector<8x2xf32>
    %1373 = arith.cmpf oge, %1371, %1372 : vector<8x2xf32>
    %cst_621 = arith.constant 1.000000e+00 : f32
    %cst_622 = arith.constant 0.000000e+00 : f32
    %1374 = vector.broadcast %cst_621 : f32 to vector<8x2xf32>
    %1375 = vector.broadcast %cst_622 : f32 to vector<8x2xf32>
    %1376 = arith.select %1373, %1374, %1375 : vector<8x2xi1>, vector<8x2xf32>
    %c8_i32_623 = arith.constant 8 : i32
    %1377 = arith.muli %c0_i32_615, %c8_i32_623 : i32
    %cst_624 = arith.constant 0.904837429 : f32
    %1378 = vector.broadcast %cst_624 : f32 to vector<8x2xf32>
    %1379 = arith.mulf %1378, %1360 : vector<8x2xf32>
    %1380 = arith.index_cast %1377 : i32 to index
    %c0_625 = arith.constant 0 : index
    %1381 = vector.load %arg7[%1380, %c0_625] : memref<400x2xf32, #tpu.memory_space<vmem>>, vector<8x2xf32>
    %1382 = arith.addf %1379, %1381 : vector<8x2xf32>
    %cst_626 = arith.constant 0.36787945 : f32
    %1383 = vector.broadcast %cst_626 : f32 to vector<8x2xf32>
    %1384 = arith.mulf %1383, %1360 : vector<8x2xf32>
    %1385 = arith.addf %1384, %1376 : vector<8x2xf32>
    %1386 = arith.addf %1360, %1376 : vector<8x2xf32>
    %c1_i32_627 = arith.constant 1 : i32
    %1387 = arith.addf %1363, %1382 : vector<8x2xf32>
    %cst_628 = arith.constant 0.904837429 : f32
    %1388 = vector.broadcast %cst_628 : f32 to vector<8x2xf32>
    %1389 = arith.mulf %1388, %1387 : vector<8x2xf32>
    %1390 = arith.addf %1366, %1385 : vector<8x2xf32>
    %cst_629 = arith.constant 0.36787945 : f32
    %1391 = vector.broadcast %cst_629 : f32 to vector<8x2xf32>
    %1392 = arith.mulf %1391, %1390 : vector<8x2xf32>
    %cst_630 = arith.constant 0.271828175 : f32
    %1393 = vector.broadcast %cst_630 : f32 to vector<8x2xf32>
    %1394 = arith.mulf %1393, %1389 : vector<8x2xf32>
    %cst_631 = arith.constant -54.3656349 : f32
    %1395 = vector.broadcast %cst_631 : f32 to vector<8x2xf32>
    %1396 = arith.mulf %1395, %1392 : vector<8x2xf32>
    %1397 = arith.addf %1394, %1396 : vector<8x2xf32>
    %cst_632 = arith.constant 1.000000e+01 : f32
    %1398 = vector.broadcast %cst_632 : f32 to vector<8x2xf32>
    %1399 = arith.cmpf oge, %1397, %1398 : vector<8x2xf32>
    %cst_633 = arith.constant 1.000000e+00 : f32
    %cst_634 = arith.constant 0.000000e+00 : f32
    %1400 = vector.broadcast %cst_633 : f32 to vector<8x2xf32>
    %1401 = vector.broadcast %cst_634 : f32 to vector<8x2xf32>
    %1402 = arith.select %1399, %1400, %1401 : vector<8x2xi1>, vector<8x2xf32>
    %c8_i32_635 = arith.constant 8 : i32
    %1403 = arith.muli %c1_i32_627, %c8_i32_635 : i32
    %cst_636 = arith.constant 0.904837429 : f32
    %1404 = vector.broadcast %cst_636 : f32 to vector<8x2xf32>
    %1405 = arith.mulf %1404, %1382 : vector<8x2xf32>
    %1406 = arith.index_cast %1403 : i32 to index
    %c0_637 = arith.constant 0 : index
    %1407 = vector.load %arg7[%1406, %c0_637] : memref<400x2xf32, #tpu.memory_space<vmem>>, vector<8x2xf32>
    %1408 = arith.addf %1405, %1407 : vector<8x2xf32>
    %cst_638 = arith.constant 0.36787945 : f32
    %1409 = vector.broadcast %cst_638 : f32 to vector<8x2xf32>
    %1410 = arith.mulf %1409, %1385 : vector<8x2xf32>
    %1411 = arith.addf %1410, %1402 : vector<8x2xf32>
    %1412 = arith.addf %1386, %1402 : vector<8x2xf32>
    %c2_i32_639 = arith.constant 2 : i32
    %1413 = arith.addf %1389, %1408 : vector<8x2xf32>
    %cst_640 = arith.constant 0.904837429 : f32
    %1414 = vector.broadcast %cst_640 : f32 to vector<8x2xf32>
    %1415 = arith.mulf %1414, %1413 : vector<8x2xf32>
    %1416 = arith.addf %1392, %1411 : vector<8x2xf32>
    %cst_641 = arith.constant 0.36787945 : f32
    %1417 = vector.broadcast %cst_641 : f32 to vector<8x2xf32>
    %1418 = arith.mulf %1417, %1416 : vector<8x2xf32>
    %cst_642 = arith.constant 0.271828175 : f32
    %1419 = vector.broadcast %cst_642 : f32 to vector<8x2xf32>
    %1420 = arith.mulf %1419, %1415 : vector<8x2xf32>
    %cst_643 = arith.constant -54.3656349 : f32
    %1421 = vector.broadcast %cst_643 : f32 to vector<8x2xf32>
    %1422 = arith.mulf %1421, %1418 : vector<8x2xf32>
    %1423 = arith.addf %1420, %1422 : vector<8x2xf32>
    %cst_644 = arith.constant 1.000000e+01 : f32
    %1424 = vector.broadcast %cst_644 : f32 to vector<8x2xf32>
    %1425 = arith.cmpf oge, %1423, %1424 : vector<8x2xf32>
    %cst_645 = arith.constant 1.000000e+00 : f32
    %cst_646 = arith.constant 0.000000e+00 : f32
    %1426 = vector.broadcast %cst_645 : f32 to vector<8x2xf32>
    %1427 = vector.broadcast %cst_646 : f32 to vector<8x2xf32>
    %1428 = arith.select %1425, %1426, %1427 : vector<8x2xi1>, vector<8x2xf32>
    %c8_i32_647 = arith.constant 8 : i32
    %1429 = arith.muli %c2_i32_639, %c8_i32_647 : i32
    %cst_648 = arith.constant 0.904837429 : f32
    %1430 = vector.broadcast %cst_648 : f32 to vector<8x2xf32>
    %1431 = arith.mulf %1430, %1408 : vector<8x2xf32>
    %1432 = arith.index_cast %1429 : i32 to index
    %c0_649 = arith.constant 0 : index
    %1433 = vector.load %arg7[%1432, %c0_649] : memref<400x2xf32, #tpu.memory_space<vmem>>, vector<8x2xf32>
    %1434 = arith.addf %1431, %1433 : vector<8x2xf32>
    %cst_650 = arith.constant 0.36787945 : f32
    %1435 = vector.broadcast %cst_650 : f32 to vector<8x2xf32>
    %1436 = arith.mulf %1435, %1411 : vector<8x2xf32>
    %1437 = arith.addf %1436, %1428 : vector<8x2xf32>
    %1438 = arith.addf %1412, %1428 : vector<8x2xf32>
    %c3_i32_651 = arith.constant 3 : i32
    %1439 = arith.addf %1415, %1434 : vector<8x2xf32>
    %cst_652 = arith.constant 0.904837429 : f32
    %1440 = vector.broadcast %cst_652 : f32 to vector<8x2xf32>
    %1441 = arith.mulf %1440, %1439 : vector<8x2xf32>
    %1442 = arith.addf %1418, %1437 : vector<8x2xf32>
    %cst_653 = arith.constant 0.36787945 : f32
    %1443 = vector.broadcast %cst_653 : f32 to vector<8x2xf32>
    %1444 = arith.mulf %1443, %1442 : vector<8x2xf32>
    %cst_654 = arith.constant 0.271828175 : f32
    %1445 = vector.broadcast %cst_654 : f32 to vector<8x2xf32>
    %1446 = arith.mulf %1445, %1441 : vector<8x2xf32>
    %cst_655 = arith.constant -54.3656349 : f32
    %1447 = vector.broadcast %cst_655 : f32 to vector<8x2xf32>
    %1448 = arith.mulf %1447, %1444 : vector<8x2xf32>
    %1449 = arith.addf %1446, %1448 : vector<8x2xf32>
    %cst_656 = arith.constant 1.000000e+01 : f32
    %1450 = vector.broadcast %cst_656 : f32 to vector<8x2xf32>
    %1451 = arith.cmpf oge, %1449, %1450 : vector<8x2xf32>
    %cst_657 = arith.constant 1.000000e+00 : f32
    %cst_658 = arith.constant 0.000000e+00 : f32
    %1452 = vector.broadcast %cst_657 : f32 to vector<8x2xf32>
    %1453 = vector.broadcast %cst_658 : f32 to vector<8x2xf32>
    %1454 = arith.select %1451, %1452, %1453 : vector<8x2xi1>, vector<8x2xf32>
    %c8_i32_659 = arith.constant 8 : i32
    %1455 = arith.muli %c3_i32_651, %c8_i32_659 : i32
    %cst_660 = arith.constant 0.904837429 : f32
    %1456 = vector.broadcast %cst_660 : f32 to vector<8x2xf32>
    %1457 = arith.mulf %1456, %1434 : vector<8x2xf32>
    %1458 = arith.index_cast %1455 : i32 to index
    %c0_661 = arith.constant 0 : index
    %1459 = vector.load %arg7[%1458, %c0_661] : memref<400x2xf32, #tpu.memory_space<vmem>>, vector<8x2xf32>
    %1460 = arith.addf %1457, %1459 : vector<8x2xf32>
    %cst_662 = arith.constant 0.36787945 : f32
    %1461 = vector.broadcast %cst_662 : f32 to vector<8x2xf32>
    %1462 = arith.mulf %1461, %1437 : vector<8x2xf32>
    %1463 = arith.addf %1462, %1454 : vector<8x2xf32>
    %1464 = arith.addf %1438, %1454 : vector<8x2xf32>
    %c4_i32_663 = arith.constant 4 : i32
    %1465 = arith.addf %1441, %1460 : vector<8x2xf32>
    %cst_664 = arith.constant 0.904837429 : f32
    %1466 = vector.broadcast %cst_664 : f32 to vector<8x2xf32>
    %1467 = arith.mulf %1466, %1465 : vector<8x2xf32>
    %1468 = arith.addf %1444, %1463 : vector<8x2xf32>
    %cst_665 = arith.constant 0.36787945 : f32
    %1469 = vector.broadcast %cst_665 : f32 to vector<8x2xf32>
    %1470 = arith.mulf %1469, %1468 : vector<8x2xf32>
    %cst_666 = arith.constant 0.271828175 : f32
    %1471 = vector.broadcast %cst_666 : f32 to vector<8x2xf32>
    %1472 = arith.mulf %1471, %1467 : vector<8x2xf32>
    %cst_667 = arith.constant -54.3656349 : f32
    %1473 = vector.broadcast %cst_667 : f32 to vector<8x2xf32>
    %1474 = arith.mulf %1473, %1470 : vector<8x2xf32>
    %1475 = arith.addf %1472, %1474 : vector<8x2xf32>
    %cst_668 = arith.constant 1.000000e+01 : f32
    %1476 = vector.broadcast %cst_668 : f32 to vector<8x2xf32>
    %1477 = arith.cmpf oge, %1475, %1476 : vector<8x2xf32>
    %cst_669 = arith.constant 1.000000e+00 : f32
    %cst_670 = arith.constant 0.000000e+00 : f32
    %1478 = vector.broadcast %cst_669 : f32 to vector<8x2xf32>
    %1479 = vector.broadcast %cst_670 : f32 to vector<8x2xf32>
    %1480 = arith.select %1477, %1478, %1479 : vector<8x2xi1>, vector<8x2xf32>
    %c8_i32_671 = arith.constant 8 : i32
    %1481 = arith.muli %c4_i32_663, %c8_i32_671 : i32
    %cst_672 = arith.constant 0.904837429 : f32
    %1482 = vector.broadcast %cst_672 : f32 to vector<8x2xf32>
    %1483 = arith.mulf %1482, %1460 : vector<8x2xf32>
    %1484 = arith.index_cast %1481 : i32 to index
    %c0_673 = arith.constant 0 : index
    %1485 = vector.load %arg7[%1484, %c0_673] : memref<400x2xf32, #tpu.memory_space<vmem>>, vector<8x2xf32>
    %1486 = arith.addf %1483, %1485 : vector<8x2xf32>
    %cst_674 = arith.constant 0.36787945 : f32
    %1487 = vector.broadcast %cst_674 : f32 to vector<8x2xf32>
    %1488 = arith.mulf %1487, %1463 : vector<8x2xf32>
    %1489 = arith.addf %1488, %1480 : vector<8x2xf32>
    %1490 = arith.addf %1464, %1480 : vector<8x2xf32>
    %c5_i32_675 = arith.constant 5 : i32
    %1491 = arith.addf %1467, %1486 : vector<8x2xf32>
    %cst_676 = arith.constant 0.904837429 : f32
    %1492 = vector.broadcast %cst_676 : f32 to vector<8x2xf32>
    %1493 = arith.mulf %1492, %1491 : vector<8x2xf32>
    %1494 = arith.addf %1470, %1489 : vector<8x2xf32>
    %cst_677 = arith.constant 0.36787945 : f32
    %1495 = vector.broadcast %cst_677 : f32 to vector<8x2xf32>
    %1496 = arith.mulf %1495, %1494 : vector<8x2xf32>
    %cst_678 = arith.constant 0.271828175 : f32
    %1497 = vector.broadcast %cst_678 : f32 to vector<8x2xf32>
    %1498 = arith.mulf %1497, %1493 : vector<8x2xf32>
    %cst_679 = arith.constant -54.3656349 : f32
    %1499 = vector.broadcast %cst_679 : f32 to vector<8x2xf32>
    %1500 = arith.mulf %1499, %1496 : vector<8x2xf32>
    %1501 = arith.addf %1498, %1500 : vector<8x2xf32>
    %cst_680 = arith.constant 1.000000e+01 : f32
    %1502 = vector.broadcast %cst_680 : f32 to vector<8x2xf32>
    %1503 = arith.cmpf oge, %1501, %1502 : vector<8x2xf32>
    %cst_681 = arith.constant 1.000000e+00 : f32
    %cst_682 = arith.constant 0.000000e+00 : f32
    %1504 = vector.broadcast %cst_681 : f32 to vector<8x2xf32>
    %1505 = vector.broadcast %cst_682 : f32 to vector<8x2xf32>
    %1506 = arith.select %1503, %1504, %1505 : vector<8x2xi1>, vector<8x2xf32>
    %c8_i32_683 = arith.constant 8 : i32
    %1507 = arith.muli %c5_i32_675, %c8_i32_683 : i32
    %cst_684 = arith.constant 0.904837429 : f32
    %1508 = vector.broadcast %cst_684 : f32 to vector<8x2xf32>
    %1509 = arith.mulf %1508, %1486 : vector<8x2xf32>
    %1510 = arith.index_cast %1507 : i32 to index
    %c0_685 = arith.constant 0 : index
    %1511 = vector.load %arg7[%1510, %c0_685] : memref<400x2xf32, #tpu.memory_space<vmem>>, vector<8x2xf32>
    %1512 = arith.addf %1509, %1511 : vector<8x2xf32>
    %cst_686 = arith.constant 0.36787945 : f32
    %1513 = vector.broadcast %cst_686 : f32 to vector<8x2xf32>
    %1514 = arith.mulf %1513, %1489 : vector<8x2xf32>
    %1515 = arith.addf %1514, %1506 : vector<8x2xf32>
    %1516 = arith.addf %1490, %1506 : vector<8x2xf32>
    %c6_i32_687 = arith.constant 6 : i32
    %1517 = arith.addf %1493, %1512 : vector<8x2xf32>
    %cst_688 = arith.constant 0.904837429 : f32
    %1518 = vector.broadcast %cst_688 : f32 to vector<8x2xf32>
    %1519 = arith.mulf %1518, %1517 : vector<8x2xf32>
    %1520 = arith.addf %1496, %1515 : vector<8x2xf32>
    %cst_689 = arith.constant 0.36787945 : f32
    %1521 = vector.broadcast %cst_689 : f32 to vector<8x2xf32>
    %1522 = arith.mulf %1521, %1520 : vector<8x2xf32>
    %cst_690 = arith.constant 0.271828175 : f32
    %1523 = vector.broadcast %cst_690 : f32 to vector<8x2xf32>
    %1524 = arith.mulf %1523, %1519 : vector<8x2xf32>
    %cst_691 = arith.constant -54.3656349 : f32
    %1525 = vector.broadcast %cst_691 : f32 to vector<8x2xf32>
    %1526 = arith.mulf %1525, %1522 : vector<8x2xf32>
    %1527 = arith.addf %1524, %1526 : vector<8x2xf32>
    %cst_692 = arith.constant 1.000000e+01 : f32
    %1528 = vector.broadcast %cst_692 : f32 to vector<8x2xf32>
    %1529 = arith.cmpf oge, %1527, %1528 : vector<8x2xf32>
    %cst_693 = arith.constant 1.000000e+00 : f32
    %cst_694 = arith.constant 0.000000e+00 : f32
    %1530 = vector.broadcast %cst_693 : f32 to vector<8x2xf32>
    %1531 = vector.broadcast %cst_694 : f32 to vector<8x2xf32>
    %1532 = arith.select %1529, %1530, %1531 : vector<8x2xi1>, vector<8x2xf32>
    %c8_i32_695 = arith.constant 8 : i32
    %1533 = arith.muli %c6_i32_687, %c8_i32_695 : i32
    %cst_696 = arith.constant 0.904837429 : f32
    %1534 = vector.broadcast %cst_696 : f32 to vector<8x2xf32>
    %1535 = arith.mulf %1534, %1512 : vector<8x2xf32>
    %1536 = arith.index_cast %1533 : i32 to index
    %c0_697 = arith.constant 0 : index
    %1537 = vector.load %arg7[%1536, %c0_697] : memref<400x2xf32, #tpu.memory_space<vmem>>, vector<8x2xf32>
    %1538 = arith.addf %1535, %1537 : vector<8x2xf32>
    %cst_698 = arith.constant 0.36787945 : f32
    %1539 = vector.broadcast %cst_698 : f32 to vector<8x2xf32>
    %1540 = arith.mulf %1539, %1515 : vector<8x2xf32>
    %1541 = arith.addf %1540, %1532 : vector<8x2xf32>
    %1542 = arith.addf %1516, %1532 : vector<8x2xf32>
    %c7_i32_699 = arith.constant 7 : i32
    %1543 = arith.addf %1519, %1538 : vector<8x2xf32>
    %cst_700 = arith.constant 0.904837429 : f32
    %1544 = vector.broadcast %cst_700 : f32 to vector<8x2xf32>
    %1545 = arith.mulf %1544, %1543 : vector<8x2xf32>
    %1546 = arith.addf %1522, %1541 : vector<8x2xf32>
    %cst_701 = arith.constant 0.36787945 : f32
    %1547 = vector.broadcast %cst_701 : f32 to vector<8x2xf32>
    %1548 = arith.mulf %1547, %1546 : vector<8x2xf32>
    %cst_702 = arith.constant 0.271828175 : f32
    %1549 = vector.broadcast %cst_702 : f32 to vector<8x2xf32>
    %1550 = arith.mulf %1549, %1545 : vector<8x2xf32>
    %cst_703 = arith.constant -54.3656349 : f32
    %1551 = vector.broadcast %cst_703 : f32 to vector<8x2xf32>
    %1552 = arith.mulf %1551, %1548 : vector<8x2xf32>
    %1553 = arith.addf %1550, %1552 : vector<8x2xf32>
    %cst_704 = arith.constant 1.000000e+01 : f32
    %1554 = vector.broadcast %cst_704 : f32 to vector<8x2xf32>
    %1555 = arith.cmpf oge, %1553, %1554 : vector<8x2xf32>
    %cst_705 = arith.constant 1.000000e+00 : f32
    %cst_706 = arith.constant 0.000000e+00 : f32
    %1556 = vector.broadcast %cst_705 : f32 to vector<8x2xf32>
    %1557 = vector.broadcast %cst_706 : f32 to vector<8x2xf32>
    %1558 = arith.select %1555, %1556, %1557 : vector<8x2xi1>, vector<8x2xf32>
    %c8_i32_707 = arith.constant 8 : i32
    %1559 = arith.muli %c7_i32_699, %c8_i32_707 : i32
    %cst_708 = arith.constant 0.904837429 : f32
    %1560 = vector.broadcast %cst_708 : f32 to vector<8x2xf32>
    %1561 = arith.mulf %1560, %1538 : vector<8x2xf32>
    %1562 = arith.index_cast %1559 : i32 to index
    %c0_709 = arith.constant 0 : index
    %1563 = vector.load %arg7[%1562, %c0_709] : memref<400x2xf32, #tpu.memory_space<vmem>>, vector<8x2xf32>
    %1564 = arith.addf %1561, %1563 : vector<8x2xf32>
    %cst_710 = arith.constant 0.36787945 : f32
    %1565 = vector.broadcast %cst_710 : f32 to vector<8x2xf32>
    %1566 = arith.mulf %1565, %1541 : vector<8x2xf32>
    %1567 = arith.addf %1566, %1558 : vector<8x2xf32>
    %1568 = arith.addf %1542, %1558 : vector<8x2xf32>
    %c8_i32_711 = arith.constant 8 : i32
    %1569 = arith.addf %1545, %1564 : vector<8x2xf32>
    %cst_712 = arith.constant 0.904837429 : f32
    %1570 = vector.broadcast %cst_712 : f32 to vector<8x2xf32>
    %1571 = arith.mulf %1570, %1569 : vector<8x2xf32>
    %1572 = arith.addf %1548, %1567 : vector<8x2xf32>
    %cst_713 = arith.constant 0.36787945 : f32
    %1573 = vector.broadcast %cst_713 : f32 to vector<8x2xf32>
    %1574 = arith.mulf %1573, %1572 : vector<8x2xf32>
    %cst_714 = arith.constant 0.271828175 : f32
    %1575 = vector.broadcast %cst_714 : f32 to vector<8x2xf32>
    %1576 = arith.mulf %1575, %1571 : vector<8x2xf32>
    %cst_715 = arith.constant -54.3656349 : f32
    %1577 = vector.broadcast %cst_715 : f32 to vector<8x2xf32>
    %1578 = arith.mulf %1577, %1574 : vector<8x2xf32>
    %1579 = arith.addf %1576, %1578 : vector<8x2xf32>
    %cst_716 = arith.constant 1.000000e+01 : f32
    %1580 = vector.broadcast %cst_716 : f32 to vector<8x2xf32>
    %1581 = arith.cmpf oge, %1579, %1580 : vector<8x2xf32>
    %cst_717 = arith.constant 1.000000e+00 : f32
    %cst_718 = arith.constant 0.000000e+00 : f32
    %1582 = vector.broadcast %cst_717 : f32 to vector<8x2xf32>
    %1583 = vector.broadcast %cst_718 : f32 to vector<8x2xf32>
    %1584 = arith.select %1581, %1582, %1583 : vector<8x2xi1>, vector<8x2xf32>
    %c8_i32_719 = arith.constant 8 : i32
    %1585 = arith.muli %c8_i32_711, %c8_i32_719 : i32
    %cst_720 = arith.constant 0.904837429 : f32
    %1586 = vector.broadcast %cst_720 : f32 to vector<8x2xf32>
    %1587 = arith.mulf %1586, %1564 : vector<8x2xf32>
    %1588 = arith.index_cast %1585 : i32 to index
    %c0_721 = arith.constant 0 : index
    %1589 = vector.load %arg7[%1588, %c0_721] : memref<400x2xf32, #tpu.memory_space<vmem>>, vector<8x2xf32>
    %1590 = arith.addf %1587, %1589 : vector<8x2xf32>
    %cst_722 = arith.constant 0.36787945 : f32
    %1591 = vector.broadcast %cst_722 : f32 to vector<8x2xf32>
    %1592 = arith.mulf %1591, %1567 : vector<8x2xf32>
    %1593 = arith.addf %1592, %1584 : vector<8x2xf32>
    %1594 = arith.addf %1568, %1584 : vector<8x2xf32>
    %c9_i32_723 = arith.constant 9 : i32
    %1595 = arith.addf %1571, %1590 : vector<8x2xf32>
    %cst_724 = arith.constant 0.904837429 : f32
    %1596 = vector.broadcast %cst_724 : f32 to vector<8x2xf32>
    %1597 = arith.mulf %1596, %1595 : vector<8x2xf32>
    %1598 = arith.addf %1574, %1593 : vector<8x2xf32>
    %cst_725 = arith.constant 0.36787945 : f32
    %1599 = vector.broadcast %cst_725 : f32 to vector<8x2xf32>
    %1600 = arith.mulf %1599, %1598 : vector<8x2xf32>
    %cst_726 = arith.constant 0.271828175 : f32
    %1601 = vector.broadcast %cst_726 : f32 to vector<8x2xf32>
    %1602 = arith.mulf %1601, %1597 : vector<8x2xf32>
    %cst_727 = arith.constant -54.3656349 : f32
    %1603 = vector.broadcast %cst_727 : f32 to vector<8x2xf32>
    %1604 = arith.mulf %1603, %1600 : vector<8x2xf32>
    %1605 = arith.addf %1602, %1604 : vector<8x2xf32>
    %cst_728 = arith.constant 1.000000e+01 : f32
    %1606 = vector.broadcast %cst_728 : f32 to vector<8x2xf32>
    %1607 = arith.cmpf oge, %1605, %1606 : vector<8x2xf32>
    %cst_729 = arith.constant 1.000000e+00 : f32
    %cst_730 = arith.constant 0.000000e+00 : f32
    %1608 = vector.broadcast %cst_729 : f32 to vector<8x2xf32>
    %1609 = vector.broadcast %cst_730 : f32 to vector<8x2xf32>
    %1610 = arith.select %1607, %1608, %1609 : vector<8x2xi1>, vector<8x2xf32>
    %c8_i32_731 = arith.constant 8 : i32
    %1611 = arith.muli %c9_i32_723, %c8_i32_731 : i32
    %cst_732 = arith.constant 0.904837429 : f32
    %1612 = vector.broadcast %cst_732 : f32 to vector<8x2xf32>
    %1613 = arith.mulf %1612, %1590 : vector<8x2xf32>
    %1614 = arith.index_cast %1611 : i32 to index
    %c0_733 = arith.constant 0 : index
    %1615 = vector.load %arg7[%1614, %c0_733] : memref<400x2xf32, #tpu.memory_space<vmem>>, vector<8x2xf32>
    %1616 = arith.addf %1613, %1615 : vector<8x2xf32>
    %cst_734 = arith.constant 0.36787945 : f32
    %1617 = vector.broadcast %cst_734 : f32 to vector<8x2xf32>
    %1618 = arith.mulf %1617, %1593 : vector<8x2xf32>
    %1619 = arith.addf %1618, %1610 : vector<8x2xf32>
    %1620 = arith.addf %1594, %1610 : vector<8x2xf32>
    %c10_i32_735 = arith.constant 10 : i32
    %1621 = arith.addf %1597, %1616 : vector<8x2xf32>
    %cst_736 = arith.constant 0.904837429 : f32
    %1622 = vector.broadcast %cst_736 : f32 to vector<8x2xf32>
    %1623 = arith.mulf %1622, %1621 : vector<8x2xf32>
    %1624 = arith.addf %1600, %1619 : vector<8x2xf32>
    %cst_737 = arith.constant 0.36787945 : f32
    %1625 = vector.broadcast %cst_737 : f32 to vector<8x2xf32>
    %1626 = arith.mulf %1625, %1624 : vector<8x2xf32>
    %cst_738 = arith.constant 0.271828175 : f32
    %1627 = vector.broadcast %cst_738 : f32 to vector<8x2xf32>
    %1628 = arith.mulf %1627, %1623 : vector<8x2xf32>
    %cst_739 = arith.constant -54.3656349 : f32
    %1629 = vector.broadcast %cst_739 : f32 to vector<8x2xf32>
    %1630 = arith.mulf %1629, %1626 : vector<8x2xf32>
    %1631 = arith.addf %1628, %1630 : vector<8x2xf32>
    %cst_740 = arith.constant 1.000000e+01 : f32
    %1632 = vector.broadcast %cst_740 : f32 to vector<8x2xf32>
    %1633 = arith.cmpf oge, %1631, %1632 : vector<8x2xf32>
    %cst_741 = arith.constant 1.000000e+00 : f32
    %cst_742 = arith.constant 0.000000e+00 : f32
    %1634 = vector.broadcast %cst_741 : f32 to vector<8x2xf32>
    %1635 = vector.broadcast %cst_742 : f32 to vector<8x2xf32>
    %1636 = arith.select %1633, %1634, %1635 : vector<8x2xi1>, vector<8x2xf32>
    %c8_i32_743 = arith.constant 8 : i32
    %1637 = arith.muli %c10_i32_735, %c8_i32_743 : i32
    %cst_744 = arith.constant 0.904837429 : f32
    %1638 = vector.broadcast %cst_744 : f32 to vector<8x2xf32>
    %1639 = arith.mulf %1638, %1616 : vector<8x2xf32>
    %1640 = arith.index_cast %1637 : i32 to index
    %c0_745 = arith.constant 0 : index
    %1641 = vector.load %arg7[%1640, %c0_745] : memref<400x2xf32, #tpu.memory_space<vmem>>, vector<8x2xf32>
    %1642 = arith.addf %1639, %1641 : vector<8x2xf32>
    %cst_746 = arith.constant 0.36787945 : f32
    %1643 = vector.broadcast %cst_746 : f32 to vector<8x2xf32>
    %1644 = arith.mulf %1643, %1619 : vector<8x2xf32>
    %1645 = arith.addf %1644, %1636 : vector<8x2xf32>
    %1646 = arith.addf %1620, %1636 : vector<8x2xf32>
    %c11_i32_747 = arith.constant 11 : i32
    %1647 = arith.addf %1623, %1642 : vector<8x2xf32>
    %cst_748 = arith.constant 0.904837429 : f32
    %1648 = vector.broadcast %cst_748 : f32 to vector<8x2xf32>
    %1649 = arith.mulf %1648, %1647 : vector<8x2xf32>
    %1650 = arith.addf %1626, %1645 : vector<8x2xf32>
    %cst_749 = arith.constant 0.36787945 : f32
    %1651 = vector.broadcast %cst_749 : f32 to vector<8x2xf32>
    %1652 = arith.mulf %1651, %1650 : vector<8x2xf32>
    %cst_750 = arith.constant 0.271828175 : f32
    %1653 = vector.broadcast %cst_750 : f32 to vector<8x2xf32>
    %1654 = arith.mulf %1653, %1649 : vector<8x2xf32>
    %cst_751 = arith.constant -54.3656349 : f32
    %1655 = vector.broadcast %cst_751 : f32 to vector<8x2xf32>
    %1656 = arith.mulf %1655, %1652 : vector<8x2xf32>
    %1657 = arith.addf %1654, %1656 : vector<8x2xf32>
    %cst_752 = arith.constant 1.000000e+01 : f32
    %1658 = vector.broadcast %cst_752 : f32 to vector<8x2xf32>
    %1659 = arith.cmpf oge, %1657, %1658 : vector<8x2xf32>
    %cst_753 = arith.constant 1.000000e+00 : f32
    %cst_754 = arith.constant 0.000000e+00 : f32
    %1660 = vector.broadcast %cst_753 : f32 to vector<8x2xf32>
    %1661 = vector.broadcast %cst_754 : f32 to vector<8x2xf32>
    %1662 = arith.select %1659, %1660, %1661 : vector<8x2xi1>, vector<8x2xf32>
    %c8_i32_755 = arith.constant 8 : i32
    %1663 = arith.muli %c11_i32_747, %c8_i32_755 : i32
    %cst_756 = arith.constant 0.904837429 : f32
    %1664 = vector.broadcast %cst_756 : f32 to vector<8x2xf32>
    %1665 = arith.mulf %1664, %1642 : vector<8x2xf32>
    %1666 = arith.index_cast %1663 : i32 to index
    %c0_757 = arith.constant 0 : index
    %1667 = vector.load %arg7[%1666, %c0_757] : memref<400x2xf32, #tpu.memory_space<vmem>>, vector<8x2xf32>
    %1668 = arith.addf %1665, %1667 : vector<8x2xf32>
    %cst_758 = arith.constant 0.36787945 : f32
    %1669 = vector.broadcast %cst_758 : f32 to vector<8x2xf32>
    %1670 = arith.mulf %1669, %1645 : vector<8x2xf32>
    %1671 = arith.addf %1670, %1662 : vector<8x2xf32>
    %1672 = arith.addf %1646, %1662 : vector<8x2xf32>
    %c12_i32_759 = arith.constant 12 : i32
    %1673 = arith.addf %1649, %1668 : vector<8x2xf32>
    %cst_760 = arith.constant 0.904837429 : f32
    %1674 = vector.broadcast %cst_760 : f32 to vector<8x2xf32>
    %1675 = arith.mulf %1674, %1673 : vector<8x2xf32>
    %1676 = arith.addf %1652, %1671 : vector<8x2xf32>
    %cst_761 = arith.constant 0.36787945 : f32
    %1677 = vector.broadcast %cst_761 : f32 to vector<8x2xf32>
    %1678 = arith.mulf %1677, %1676 : vector<8x2xf32>
    %cst_762 = arith.constant 0.271828175 : f32
    %1679 = vector.broadcast %cst_762 : f32 to vector<8x2xf32>
    %1680 = arith.mulf %1679, %1675 : vector<8x2xf32>
    %cst_763 = arith.constant -54.3656349 : f32
    %1681 = vector.broadcast %cst_763 : f32 to vector<8x2xf32>
    %1682 = arith.mulf %1681, %1678 : vector<8x2xf32>
    %1683 = arith.addf %1680, %1682 : vector<8x2xf32>
    %cst_764 = arith.constant 1.000000e+01 : f32
    %1684 = vector.broadcast %cst_764 : f32 to vector<8x2xf32>
    %1685 = arith.cmpf oge, %1683, %1684 : vector<8x2xf32>
    %cst_765 = arith.constant 1.000000e+00 : f32
    %cst_766 = arith.constant 0.000000e+00 : f32
    %1686 = vector.broadcast %cst_765 : f32 to vector<8x2xf32>
    %1687 = vector.broadcast %cst_766 : f32 to vector<8x2xf32>
    %1688 = arith.select %1685, %1686, %1687 : vector<8x2xi1>, vector<8x2xf32>
    %c8_i32_767 = arith.constant 8 : i32
    %1689 = arith.muli %c12_i32_759, %c8_i32_767 : i32
    %cst_768 = arith.constant 0.904837429 : f32
    %1690 = vector.broadcast %cst_768 : f32 to vector<8x2xf32>
    %1691 = arith.mulf %1690, %1668 : vector<8x2xf32>
    %1692 = arith.index_cast %1689 : i32 to index
    %c0_769 = arith.constant 0 : index
    %1693 = vector.load %arg7[%1692, %c0_769] : memref<400x2xf32, #tpu.memory_space<vmem>>, vector<8x2xf32>
    %1694 = arith.addf %1691, %1693 : vector<8x2xf32>
    %cst_770 = arith.constant 0.36787945 : f32
    %1695 = vector.broadcast %cst_770 : f32 to vector<8x2xf32>
    %1696 = arith.mulf %1695, %1671 : vector<8x2xf32>
    %1697 = arith.addf %1696, %1688 : vector<8x2xf32>
    %1698 = arith.addf %1672, %1688 : vector<8x2xf32>
    %c13_i32_771 = arith.constant 13 : i32
    %1699 = arith.addf %1675, %1694 : vector<8x2xf32>
    %cst_772 = arith.constant 0.904837429 : f32
    %1700 = vector.broadcast %cst_772 : f32 to vector<8x2xf32>
    %1701 = arith.mulf %1700, %1699 : vector<8x2xf32>
    %1702 = arith.addf %1678, %1697 : vector<8x2xf32>
    %cst_773 = arith.constant 0.36787945 : f32
    %1703 = vector.broadcast %cst_773 : f32 to vector<8x2xf32>
    %1704 = arith.mulf %1703, %1702 : vector<8x2xf32>
    %cst_774 = arith.constant 0.271828175 : f32
    %1705 = vector.broadcast %cst_774 : f32 to vector<8x2xf32>
    %1706 = arith.mulf %1705, %1701 : vector<8x2xf32>
    %cst_775 = arith.constant -54.3656349 : f32
    %1707 = vector.broadcast %cst_775 : f32 to vector<8x2xf32>
    %1708 = arith.mulf %1707, %1704 : vector<8x2xf32>
    %1709 = arith.addf %1706, %1708 : vector<8x2xf32>
    %cst_776 = arith.constant 1.000000e+01 : f32
    %1710 = vector.broadcast %cst_776 : f32 to vector<8x2xf32>
    %1711 = arith.cmpf oge, %1709, %1710 : vector<8x2xf32>
    %cst_777 = arith.constant 1.000000e+00 : f32
    %cst_778 = arith.constant 0.000000e+00 : f32
    %1712 = vector.broadcast %cst_777 : f32 to vector<8x2xf32>
    %1713 = vector.broadcast %cst_778 : f32 to vector<8x2xf32>
    %1714 = arith.select %1711, %1712, %1713 : vector<8x2xi1>, vector<8x2xf32>
    %c8_i32_779 = arith.constant 8 : i32
    %1715 = arith.muli %c13_i32_771, %c8_i32_779 : i32
    %cst_780 = arith.constant 0.904837429 : f32
    %1716 = vector.broadcast %cst_780 : f32 to vector<8x2xf32>
    %1717 = arith.mulf %1716, %1694 : vector<8x2xf32>
    %1718 = arith.index_cast %1715 : i32 to index
    %c0_781 = arith.constant 0 : index
    %1719 = vector.load %arg7[%1718, %c0_781] : memref<400x2xf32, #tpu.memory_space<vmem>>, vector<8x2xf32>
    %1720 = arith.addf %1717, %1719 : vector<8x2xf32>
    %cst_782 = arith.constant 0.36787945 : f32
    %1721 = vector.broadcast %cst_782 : f32 to vector<8x2xf32>
    %1722 = arith.mulf %1721, %1697 : vector<8x2xf32>
    %1723 = arith.addf %1722, %1714 : vector<8x2xf32>
    %1724 = arith.addf %1698, %1714 : vector<8x2xf32>
    %c14_i32_783 = arith.constant 14 : i32
    %1725 = arith.addf %1701, %1720 : vector<8x2xf32>
    %cst_784 = arith.constant 0.904837429 : f32
    %1726 = vector.broadcast %cst_784 : f32 to vector<8x2xf32>
    %1727 = arith.mulf %1726, %1725 : vector<8x2xf32>
    %1728 = arith.addf %1704, %1723 : vector<8x2xf32>
    %cst_785 = arith.constant 0.36787945 : f32
    %1729 = vector.broadcast %cst_785 : f32 to vector<8x2xf32>
    %1730 = arith.mulf %1729, %1728 : vector<8x2xf32>
    %cst_786 = arith.constant 0.271828175 : f32
    %1731 = vector.broadcast %cst_786 : f32 to vector<8x2xf32>
    %1732 = arith.mulf %1731, %1727 : vector<8x2xf32>
    %cst_787 = arith.constant -54.3656349 : f32
    %1733 = vector.broadcast %cst_787 : f32 to vector<8x2xf32>
    %1734 = arith.mulf %1733, %1730 : vector<8x2xf32>
    %1735 = arith.addf %1732, %1734 : vector<8x2xf32>
    %cst_788 = arith.constant 1.000000e+01 : f32
    %1736 = vector.broadcast %cst_788 : f32 to vector<8x2xf32>
    %1737 = arith.cmpf oge, %1735, %1736 : vector<8x2xf32>
    %cst_789 = arith.constant 1.000000e+00 : f32
    %cst_790 = arith.constant 0.000000e+00 : f32
    %1738 = vector.broadcast %cst_789 : f32 to vector<8x2xf32>
    %1739 = vector.broadcast %cst_790 : f32 to vector<8x2xf32>
    %1740 = arith.select %1737, %1738, %1739 : vector<8x2xi1>, vector<8x2xf32>
    %c8_i32_791 = arith.constant 8 : i32
    %1741 = arith.muli %c14_i32_783, %c8_i32_791 : i32
    %cst_792 = arith.constant 0.904837429 : f32
    %1742 = vector.broadcast %cst_792 : f32 to vector<8x2xf32>
    %1743 = arith.mulf %1742, %1720 : vector<8x2xf32>
    %1744 = arith.index_cast %1741 : i32 to index
    %c0_793 = arith.constant 0 : index
    %1745 = vector.load %arg7[%1744, %c0_793] : memref<400x2xf32, #tpu.memory_space<vmem>>, vector<8x2xf32>
    %1746 = arith.addf %1743, %1745 : vector<8x2xf32>
    %cst_794 = arith.constant 0.36787945 : f32
    %1747 = vector.broadcast %cst_794 : f32 to vector<8x2xf32>
    %1748 = arith.mulf %1747, %1723 : vector<8x2xf32>
    %1749 = arith.addf %1748, %1740 : vector<8x2xf32>
    %1750 = arith.addf %1724, %1740 : vector<8x2xf32>
    %c15_i32_795 = arith.constant 15 : i32
    %1751 = arith.addf %1727, %1746 : vector<8x2xf32>
    %cst_796 = arith.constant 0.904837429 : f32
    %1752 = vector.broadcast %cst_796 : f32 to vector<8x2xf32>
    %1753 = arith.mulf %1752, %1751 : vector<8x2xf32>
    %1754 = arith.addf %1730, %1749 : vector<8x2xf32>
    %cst_797 = arith.constant 0.36787945 : f32
    %1755 = vector.broadcast %cst_797 : f32 to vector<8x2xf32>
    %1756 = arith.mulf %1755, %1754 : vector<8x2xf32>
    %cst_798 = arith.constant 0.271828175 : f32
    %1757 = vector.broadcast %cst_798 : f32 to vector<8x2xf32>
    %1758 = arith.mulf %1757, %1753 : vector<8x2xf32>
    %cst_799 = arith.constant -54.3656349 : f32
    %1759 = vector.broadcast %cst_799 : f32 to vector<8x2xf32>
    %1760 = arith.mulf %1759, %1756 : vector<8x2xf32>
    %1761 = arith.addf %1758, %1760 : vector<8x2xf32>
    %cst_800 = arith.constant 1.000000e+01 : f32
    %1762 = vector.broadcast %cst_800 : f32 to vector<8x2xf32>
    %1763 = arith.cmpf oge, %1761, %1762 : vector<8x2xf32>
    %cst_801 = arith.constant 1.000000e+00 : f32
    %cst_802 = arith.constant 0.000000e+00 : f32
    %1764 = vector.broadcast %cst_801 : f32 to vector<8x2xf32>
    %1765 = vector.broadcast %cst_802 : f32 to vector<8x2xf32>
    %1766 = arith.select %1763, %1764, %1765 : vector<8x2xi1>, vector<8x2xf32>
    %c8_i32_803 = arith.constant 8 : i32
    %1767 = arith.muli %c15_i32_795, %c8_i32_803 : i32
    %cst_804 = arith.constant 0.904837429 : f32
    %1768 = vector.broadcast %cst_804 : f32 to vector<8x2xf32>
    %1769 = arith.mulf %1768, %1746 : vector<8x2xf32>
    %1770 = arith.index_cast %1767 : i32 to index
    %c0_805 = arith.constant 0 : index
    %1771 = vector.load %arg7[%1770, %c0_805] : memref<400x2xf32, #tpu.memory_space<vmem>>, vector<8x2xf32>
    %1772 = arith.addf %1769, %1771 : vector<8x2xf32>
    %cst_806 = arith.constant 0.36787945 : f32
    %1773 = vector.broadcast %cst_806 : f32 to vector<8x2xf32>
    %1774 = arith.mulf %1773, %1749 : vector<8x2xf32>
    %1775 = arith.addf %1774, %1766 : vector<8x2xf32>
    %1776 = arith.addf %1750, %1766 : vector<8x2xf32>
    %c16_i32_807 = arith.constant 16 : i32
    %1777 = arith.addf %1753, %1772 : vector<8x2xf32>
    %cst_808 = arith.constant 0.904837429 : f32
    %1778 = vector.broadcast %cst_808 : f32 to vector<8x2xf32>
    %1779 = arith.mulf %1778, %1777 : vector<8x2xf32>
    %1780 = arith.addf %1756, %1775 : vector<8x2xf32>
    %cst_809 = arith.constant 0.36787945 : f32
    %1781 = vector.broadcast %cst_809 : f32 to vector<8x2xf32>
    %1782 = arith.mulf %1781, %1780 : vector<8x2xf32>
    %cst_810 = arith.constant 0.271828175 : f32
    %1783 = vector.broadcast %cst_810 : f32 to vector<8x2xf32>
    %1784 = arith.mulf %1783, %1779 : vector<8x2xf32>
    %cst_811 = arith.constant -54.3656349 : f32
    %1785 = vector.broadcast %cst_811 : f32 to vector<8x2xf32>
    %1786 = arith.mulf %1785, %1782 : vector<8x2xf32>
    %1787 = arith.addf %1784, %1786 : vector<8x2xf32>
    %cst_812 = arith.constant 1.000000e+01 : f32
    %1788 = vector.broadcast %cst_812 : f32 to vector<8x2xf32>
    %1789 = arith.cmpf oge, %1787, %1788 : vector<8x2xf32>
    %cst_813 = arith.constant 1.000000e+00 : f32
    %cst_814 = arith.constant 0.000000e+00 : f32
    %1790 = vector.broadcast %cst_813 : f32 to vector<8x2xf32>
    %1791 = vector.broadcast %cst_814 : f32 to vector<8x2xf32>
    %1792 = arith.select %1789, %1790, %1791 : vector<8x2xi1>, vector<8x2xf32>
    %c8_i32_815 = arith.constant 8 : i32
    %1793 = arith.muli %c16_i32_807, %c8_i32_815 : i32
    %cst_816 = arith.constant 0.904837429 : f32
    %1794 = vector.broadcast %cst_816 : f32 to vector<8x2xf32>
    %1795 = arith.mulf %1794, %1772 : vector<8x2xf32>
    %1796 = arith.index_cast %1793 : i32 to index
    %c0_817 = arith.constant 0 : index
    %1797 = vector.load %arg7[%1796, %c0_817] : memref<400x2xf32, #tpu.memory_space<vmem>>, vector<8x2xf32>
    %1798 = arith.addf %1795, %1797 : vector<8x2xf32>
    %cst_818 = arith.constant 0.36787945 : f32
    %1799 = vector.broadcast %cst_818 : f32 to vector<8x2xf32>
    %1800 = arith.mulf %1799, %1775 : vector<8x2xf32>
    %1801 = arith.addf %1800, %1792 : vector<8x2xf32>
    %1802 = arith.addf %1776, %1792 : vector<8x2xf32>
    %c17_i32_819 = arith.constant 17 : i32
    %1803 = arith.addf %1779, %1798 : vector<8x2xf32>
    %cst_820 = arith.constant 0.904837429 : f32
    %1804 = vector.broadcast %cst_820 : f32 to vector<8x2xf32>
    %1805 = arith.mulf %1804, %1803 : vector<8x2xf32>
    %1806 = arith.addf %1782, %1801 : vector<8x2xf32>
    %cst_821 = arith.constant 0.36787945 : f32
    %1807 = vector.broadcast %cst_821 : f32 to vector<8x2xf32>
    %1808 = arith.mulf %1807, %1806 : vector<8x2xf32>
    %cst_822 = arith.constant 0.271828175 : f32
    %1809 = vector.broadcast %cst_822 : f32 to vector<8x2xf32>
    %1810 = arith.mulf %1809, %1805 : vector<8x2xf32>
    %cst_823 = arith.constant -54.3656349 : f32
    %1811 = vector.broadcast %cst_823 : f32 to vector<8x2xf32>
    %1812 = arith.mulf %1811, %1808 : vector<8x2xf32>
    %1813 = arith.addf %1810, %1812 : vector<8x2xf32>
    %cst_824 = arith.constant 1.000000e+01 : f32
    %1814 = vector.broadcast %cst_824 : f32 to vector<8x2xf32>
    %1815 = arith.cmpf oge, %1813, %1814 : vector<8x2xf32>
    %cst_825 = arith.constant 1.000000e+00 : f32
    %cst_826 = arith.constant 0.000000e+00 : f32
    %1816 = vector.broadcast %cst_825 : f32 to vector<8x2xf32>
    %1817 = vector.broadcast %cst_826 : f32 to vector<8x2xf32>
    %1818 = arith.select %1815, %1816, %1817 : vector<8x2xi1>, vector<8x2xf32>
    %c8_i32_827 = arith.constant 8 : i32
    %1819 = arith.muli %c17_i32_819, %c8_i32_827 : i32
    %cst_828 = arith.constant 0.904837429 : f32
    %1820 = vector.broadcast %cst_828 : f32 to vector<8x2xf32>
    %1821 = arith.mulf %1820, %1798 : vector<8x2xf32>
    %1822 = arith.index_cast %1819 : i32 to index
    %c0_829 = arith.constant 0 : index
    %1823 = vector.load %arg7[%1822, %c0_829] : memref<400x2xf32, #tpu.memory_space<vmem>>, vector<8x2xf32>
    %1824 = arith.addf %1821, %1823 : vector<8x2xf32>
    %cst_830 = arith.constant 0.36787945 : f32
    %1825 = vector.broadcast %cst_830 : f32 to vector<8x2xf32>
    %1826 = arith.mulf %1825, %1801 : vector<8x2xf32>
    %1827 = arith.addf %1826, %1818 : vector<8x2xf32>
    %1828 = arith.addf %1802, %1818 : vector<8x2xf32>
    %c18_i32_831 = arith.constant 18 : i32
    %1829 = arith.addf %1805, %1824 : vector<8x2xf32>
    %cst_832 = arith.constant 0.904837429 : f32
    %1830 = vector.broadcast %cst_832 : f32 to vector<8x2xf32>
    %1831 = arith.mulf %1830, %1829 : vector<8x2xf32>
    %1832 = arith.addf %1808, %1827 : vector<8x2xf32>
    %cst_833 = arith.constant 0.36787945 : f32
    %1833 = vector.broadcast %cst_833 : f32 to vector<8x2xf32>
    %1834 = arith.mulf %1833, %1832 : vector<8x2xf32>
    %cst_834 = arith.constant 0.271828175 : f32
    %1835 = vector.broadcast %cst_834 : f32 to vector<8x2xf32>
    %1836 = arith.mulf %1835, %1831 : vector<8x2xf32>
    %cst_835 = arith.constant -54.3656349 : f32
    %1837 = vector.broadcast %cst_835 : f32 to vector<8x2xf32>
    %1838 = arith.mulf %1837, %1834 : vector<8x2xf32>
    %1839 = arith.addf %1836, %1838 : vector<8x2xf32>
    %cst_836 = arith.constant 1.000000e+01 : f32
    %1840 = vector.broadcast %cst_836 : f32 to vector<8x2xf32>
    %1841 = arith.cmpf oge, %1839, %1840 : vector<8x2xf32>
    %cst_837 = arith.constant 1.000000e+00 : f32
    %cst_838 = arith.constant 0.000000e+00 : f32
    %1842 = vector.broadcast %cst_837 : f32 to vector<8x2xf32>
    %1843 = vector.broadcast %cst_838 : f32 to vector<8x2xf32>
    %1844 = arith.select %1841, %1842, %1843 : vector<8x2xi1>, vector<8x2xf32>
    %c8_i32_839 = arith.constant 8 : i32
    %1845 = arith.muli %c18_i32_831, %c8_i32_839 : i32
    %cst_840 = arith.constant 0.904837429 : f32
    %1846 = vector.broadcast %cst_840 : f32 to vector<8x2xf32>
    %1847 = arith.mulf %1846, %1824 : vector<8x2xf32>
    %1848 = arith.index_cast %1845 : i32 to index
    %c0_841 = arith.constant 0 : index
    %1849 = vector.load %arg7[%1848, %c0_841] : memref<400x2xf32, #tpu.memory_space<vmem>>, vector<8x2xf32>
    %1850 = arith.addf %1847, %1849 : vector<8x2xf32>
    %cst_842 = arith.constant 0.36787945 : f32
    %1851 = vector.broadcast %cst_842 : f32 to vector<8x2xf32>
    %1852 = arith.mulf %1851, %1827 : vector<8x2xf32>
    %1853 = arith.addf %1852, %1844 : vector<8x2xf32>
    %1854 = arith.addf %1828, %1844 : vector<8x2xf32>
    %c19_i32_843 = arith.constant 19 : i32
    %1855 = arith.addf %1831, %1850 : vector<8x2xf32>
    %cst_844 = arith.constant 0.904837429 : f32
    %1856 = vector.broadcast %cst_844 : f32 to vector<8x2xf32>
    %1857 = arith.mulf %1856, %1855 : vector<8x2xf32>
    %1858 = arith.addf %1834, %1853 : vector<8x2xf32>
    %cst_845 = arith.constant 0.36787945 : f32
    %1859 = vector.broadcast %cst_845 : f32 to vector<8x2xf32>
    %1860 = arith.mulf %1859, %1858 : vector<8x2xf32>
    %cst_846 = arith.constant 0.271828175 : f32
    %1861 = vector.broadcast %cst_846 : f32 to vector<8x2xf32>
    %1862 = arith.mulf %1861, %1857 : vector<8x2xf32>
    %cst_847 = arith.constant -54.3656349 : f32
    %1863 = vector.broadcast %cst_847 : f32 to vector<8x2xf32>
    %1864 = arith.mulf %1863, %1860 : vector<8x2xf32>
    %1865 = arith.addf %1862, %1864 : vector<8x2xf32>
    %cst_848 = arith.constant 1.000000e+01 : f32
    %1866 = vector.broadcast %cst_848 : f32 to vector<8x2xf32>
    %1867 = arith.cmpf oge, %1865, %1866 : vector<8x2xf32>
    %cst_849 = arith.constant 1.000000e+00 : f32
    %cst_850 = arith.constant 0.000000e+00 : f32
    %1868 = vector.broadcast %cst_849 : f32 to vector<8x2xf32>
    %1869 = vector.broadcast %cst_850 : f32 to vector<8x2xf32>
    %1870 = arith.select %1867, %1868, %1869 : vector<8x2xi1>, vector<8x2xf32>
    %c8_i32_851 = arith.constant 8 : i32
    %1871 = arith.muli %c19_i32_843, %c8_i32_851 : i32
    %cst_852 = arith.constant 0.904837429 : f32
    %1872 = vector.broadcast %cst_852 : f32 to vector<8x2xf32>
    %1873 = arith.mulf %1872, %1850 : vector<8x2xf32>
    %1874 = arith.index_cast %1871 : i32 to index
    %c0_853 = arith.constant 0 : index
    %1875 = vector.load %arg7[%1874, %c0_853] : memref<400x2xf32, #tpu.memory_space<vmem>>, vector<8x2xf32>
    %1876 = arith.addf %1873, %1875 : vector<8x2xf32>
    %cst_854 = arith.constant 0.36787945 : f32
    %1877 = vector.broadcast %cst_854 : f32 to vector<8x2xf32>
    %1878 = arith.mulf %1877, %1853 : vector<8x2xf32>
    %1879 = arith.addf %1878, %1870 : vector<8x2xf32>
    %1880 = arith.addf %1854, %1870 : vector<8x2xf32>
    %c20_i32_855 = arith.constant 20 : i32
    %1881 = arith.addf %1857, %1876 : vector<8x2xf32>
    %cst_856 = arith.constant 0.904837429 : f32
    %1882 = vector.broadcast %cst_856 : f32 to vector<8x2xf32>
    %1883 = arith.mulf %1882, %1881 : vector<8x2xf32>
    %1884 = arith.addf %1860, %1879 : vector<8x2xf32>
    %cst_857 = arith.constant 0.36787945 : f32
    %1885 = vector.broadcast %cst_857 : f32 to vector<8x2xf32>
    %1886 = arith.mulf %1885, %1884 : vector<8x2xf32>
    %cst_858 = arith.constant 0.271828175 : f32
    %1887 = vector.broadcast %cst_858 : f32 to vector<8x2xf32>
    %1888 = arith.mulf %1887, %1883 : vector<8x2xf32>
    %cst_859 = arith.constant -54.3656349 : f32
    %1889 = vector.broadcast %cst_859 : f32 to vector<8x2xf32>
    %1890 = arith.mulf %1889, %1886 : vector<8x2xf32>
    %1891 = arith.addf %1888, %1890 : vector<8x2xf32>
    %cst_860 = arith.constant 1.000000e+01 : f32
    %1892 = vector.broadcast %cst_860 : f32 to vector<8x2xf32>
    %1893 = arith.cmpf oge, %1891, %1892 : vector<8x2xf32>
    %cst_861 = arith.constant 1.000000e+00 : f32
    %cst_862 = arith.constant 0.000000e+00 : f32
    %1894 = vector.broadcast %cst_861 : f32 to vector<8x2xf32>
    %1895 = vector.broadcast %cst_862 : f32 to vector<8x2xf32>
    %1896 = arith.select %1893, %1894, %1895 : vector<8x2xi1>, vector<8x2xf32>
    %c8_i32_863 = arith.constant 8 : i32
    %1897 = arith.muli %c20_i32_855, %c8_i32_863 : i32
    %cst_864 = arith.constant 0.904837429 : f32
    %1898 = vector.broadcast %cst_864 : f32 to vector<8x2xf32>
    %1899 = arith.mulf %1898, %1876 : vector<8x2xf32>
    %1900 = arith.index_cast %1897 : i32 to index
    %c0_865 = arith.constant 0 : index
    %1901 = vector.load %arg7[%1900, %c0_865] : memref<400x2xf32, #tpu.memory_space<vmem>>, vector<8x2xf32>
    %1902 = arith.addf %1899, %1901 : vector<8x2xf32>
    %cst_866 = arith.constant 0.36787945 : f32
    %1903 = vector.broadcast %cst_866 : f32 to vector<8x2xf32>
    %1904 = arith.mulf %1903, %1879 : vector<8x2xf32>
    %1905 = arith.addf %1904, %1896 : vector<8x2xf32>
    %1906 = arith.addf %1880, %1896 : vector<8x2xf32>
    %c21_i32_867 = arith.constant 21 : i32
    %1907 = arith.addf %1883, %1902 : vector<8x2xf32>
    %cst_868 = arith.constant 0.904837429 : f32
    %1908 = vector.broadcast %cst_868 : f32 to vector<8x2xf32>
    %1909 = arith.mulf %1908, %1907 : vector<8x2xf32>
    %1910 = arith.addf %1886, %1905 : vector<8x2xf32>
    %cst_869 = arith.constant 0.36787945 : f32
    %1911 = vector.broadcast %cst_869 : f32 to vector<8x2xf32>
    %1912 = arith.mulf %1911, %1910 : vector<8x2xf32>
    %cst_870 = arith.constant 0.271828175 : f32
    %1913 = vector.broadcast %cst_870 : f32 to vector<8x2xf32>
    %1914 = arith.mulf %1913, %1909 : vector<8x2xf32>
    %cst_871 = arith.constant -54.3656349 : f32
    %1915 = vector.broadcast %cst_871 : f32 to vector<8x2xf32>
    %1916 = arith.mulf %1915, %1912 : vector<8x2xf32>
    %1917 = arith.addf %1914, %1916 : vector<8x2xf32>
    %cst_872 = arith.constant 1.000000e+01 : f32
    %1918 = vector.broadcast %cst_872 : f32 to vector<8x2xf32>
    %1919 = arith.cmpf oge, %1917, %1918 : vector<8x2xf32>
    %cst_873 = arith.constant 1.000000e+00 : f32
    %cst_874 = arith.constant 0.000000e+00 : f32
    %1920 = vector.broadcast %cst_873 : f32 to vector<8x2xf32>
    %1921 = vector.broadcast %cst_874 : f32 to vector<8x2xf32>
    %1922 = arith.select %1919, %1920, %1921 : vector<8x2xi1>, vector<8x2xf32>
    %c8_i32_875 = arith.constant 8 : i32
    %1923 = arith.muli %c21_i32_867, %c8_i32_875 : i32
    %cst_876 = arith.constant 0.904837429 : f32
    %1924 = vector.broadcast %cst_876 : f32 to vector<8x2xf32>
    %1925 = arith.mulf %1924, %1902 : vector<8x2xf32>
    %1926 = arith.index_cast %1923 : i32 to index
    %c0_877 = arith.constant 0 : index
    %1927 = vector.load %arg7[%1926, %c0_877] : memref<400x2xf32, #tpu.memory_space<vmem>>, vector<8x2xf32>
    %1928 = arith.addf %1925, %1927 : vector<8x2xf32>
    %cst_878 = arith.constant 0.36787945 : f32
    %1929 = vector.broadcast %cst_878 : f32 to vector<8x2xf32>
    %1930 = arith.mulf %1929, %1905 : vector<8x2xf32>
    %1931 = arith.addf %1930, %1922 : vector<8x2xf32>
    %1932 = arith.addf %1906, %1922 : vector<8x2xf32>
    %c22_i32_879 = arith.constant 22 : i32
    %1933 = arith.addf %1909, %1928 : vector<8x2xf32>
    %cst_880 = arith.constant 0.904837429 : f32
    %1934 = vector.broadcast %cst_880 : f32 to vector<8x2xf32>
    %1935 = arith.mulf %1934, %1933 : vector<8x2xf32>
    %1936 = arith.addf %1912, %1931 : vector<8x2xf32>
    %cst_881 = arith.constant 0.36787945 : f32
    %1937 = vector.broadcast %cst_881 : f32 to vector<8x2xf32>
    %1938 = arith.mulf %1937, %1936 : vector<8x2xf32>
    %cst_882 = arith.constant 0.271828175 : f32
    %1939 = vector.broadcast %cst_882 : f32 to vector<8x2xf32>
    %1940 = arith.mulf %1939, %1935 : vector<8x2xf32>
    %cst_883 = arith.constant -54.3656349 : f32
    %1941 = vector.broadcast %cst_883 : f32 to vector<8x2xf32>
    %1942 = arith.mulf %1941, %1938 : vector<8x2xf32>
    %1943 = arith.addf %1940, %1942 : vector<8x2xf32>
    %cst_884 = arith.constant 1.000000e+01 : f32
    %1944 = vector.broadcast %cst_884 : f32 to vector<8x2xf32>
    %1945 = arith.cmpf oge, %1943, %1944 : vector<8x2xf32>
    %cst_885 = arith.constant 1.000000e+00 : f32
    %cst_886 = arith.constant 0.000000e+00 : f32
    %1946 = vector.broadcast %cst_885 : f32 to vector<8x2xf32>
    %1947 = vector.broadcast %cst_886 : f32 to vector<8x2xf32>
    %1948 = arith.select %1945, %1946, %1947 : vector<8x2xi1>, vector<8x2xf32>
    %c8_i32_887 = arith.constant 8 : i32
    %1949 = arith.muli %c22_i32_879, %c8_i32_887 : i32
    %cst_888 = arith.constant 0.904837429 : f32
    %1950 = vector.broadcast %cst_888 : f32 to vector<8x2xf32>
    %1951 = arith.mulf %1950, %1928 : vector<8x2xf32>
    %1952 = arith.index_cast %1949 : i32 to index
    %c0_889 = arith.constant 0 : index
    %1953 = vector.load %arg7[%1952, %c0_889] : memref<400x2xf32, #tpu.memory_space<vmem>>, vector<8x2xf32>
    %1954 = arith.addf %1951, %1953 : vector<8x2xf32>
    %cst_890 = arith.constant 0.36787945 : f32
    %1955 = vector.broadcast %cst_890 : f32 to vector<8x2xf32>
    %1956 = arith.mulf %1955, %1931 : vector<8x2xf32>
    %1957 = arith.addf %1956, %1948 : vector<8x2xf32>
    %1958 = arith.addf %1932, %1948 : vector<8x2xf32>
    %c23_i32_891 = arith.constant 23 : i32
    %1959 = arith.addf %1935, %1954 : vector<8x2xf32>
    %cst_892 = arith.constant 0.904837429 : f32
    %1960 = vector.broadcast %cst_892 : f32 to vector<8x2xf32>
    %1961 = arith.mulf %1960, %1959 : vector<8x2xf32>
    %1962 = arith.addf %1938, %1957 : vector<8x2xf32>
    %cst_893 = arith.constant 0.36787945 : f32
    %1963 = vector.broadcast %cst_893 : f32 to vector<8x2xf32>
    %1964 = arith.mulf %1963, %1962 : vector<8x2xf32>
    %cst_894 = arith.constant 0.271828175 : f32
    %1965 = vector.broadcast %cst_894 : f32 to vector<8x2xf32>
    %1966 = arith.mulf %1965, %1961 : vector<8x2xf32>
    %cst_895 = arith.constant -54.3656349 : f32
    %1967 = vector.broadcast %cst_895 : f32 to vector<8x2xf32>
    %1968 = arith.mulf %1967, %1964 : vector<8x2xf32>
    %1969 = arith.addf %1966, %1968 : vector<8x2xf32>
    %cst_896 = arith.constant 1.000000e+01 : f32
    %1970 = vector.broadcast %cst_896 : f32 to vector<8x2xf32>
    %1971 = arith.cmpf oge, %1969, %1970 : vector<8x2xf32>
    %cst_897 = arith.constant 1.000000e+00 : f32
    %cst_898 = arith.constant 0.000000e+00 : f32
    %1972 = vector.broadcast %cst_897 : f32 to vector<8x2xf32>
    %1973 = vector.broadcast %cst_898 : f32 to vector<8x2xf32>
    %1974 = arith.select %1971, %1972, %1973 : vector<8x2xi1>, vector<8x2xf32>
    %c8_i32_899 = arith.constant 8 : i32
    %1975 = arith.muli %c23_i32_891, %c8_i32_899 : i32
    %cst_900 = arith.constant 0.904837429 : f32
    %1976 = vector.broadcast %cst_900 : f32 to vector<8x2xf32>
    %1977 = arith.mulf %1976, %1954 : vector<8x2xf32>
    %1978 = arith.index_cast %1975 : i32 to index
    %c0_901 = arith.constant 0 : index
    %1979 = vector.load %arg7[%1978, %c0_901] : memref<400x2xf32, #tpu.memory_space<vmem>>, vector<8x2xf32>
    %1980 = arith.addf %1977, %1979 : vector<8x2xf32>
    %cst_902 = arith.constant 0.36787945 : f32
    %1981 = vector.broadcast %cst_902 : f32 to vector<8x2xf32>
    %1982 = arith.mulf %1981, %1957 : vector<8x2xf32>
    %1983 = arith.addf %1982, %1974 : vector<8x2xf32>
    %1984 = arith.addf %1958, %1974 : vector<8x2xf32>
    %c24_i32_903 = arith.constant 24 : i32
    %1985 = arith.addf %1961, %1980 : vector<8x2xf32>
    %cst_904 = arith.constant 0.904837429 : f32
    %1986 = vector.broadcast %cst_904 : f32 to vector<8x2xf32>
    %1987 = arith.mulf %1986, %1985 : vector<8x2xf32>
    %1988 = arith.addf %1964, %1983 : vector<8x2xf32>
    %cst_905 = arith.constant 0.36787945 : f32
    %1989 = vector.broadcast %cst_905 : f32 to vector<8x2xf32>
    %1990 = arith.mulf %1989, %1988 : vector<8x2xf32>
    %cst_906 = arith.constant 0.271828175 : f32
    %1991 = vector.broadcast %cst_906 : f32 to vector<8x2xf32>
    %1992 = arith.mulf %1991, %1987 : vector<8x2xf32>
    %cst_907 = arith.constant -54.3656349 : f32
    %1993 = vector.broadcast %cst_907 : f32 to vector<8x2xf32>
    %1994 = arith.mulf %1993, %1990 : vector<8x2xf32>
    %1995 = arith.addf %1992, %1994 : vector<8x2xf32>
    %cst_908 = arith.constant 1.000000e+01 : f32
    %1996 = vector.broadcast %cst_908 : f32 to vector<8x2xf32>
    %1997 = arith.cmpf oge, %1995, %1996 : vector<8x2xf32>
    %cst_909 = arith.constant 1.000000e+00 : f32
    %cst_910 = arith.constant 0.000000e+00 : f32
    %1998 = vector.broadcast %cst_909 : f32 to vector<8x2xf32>
    %1999 = vector.broadcast %cst_910 : f32 to vector<8x2xf32>
    %2000 = arith.select %1997, %1998, %1999 : vector<8x2xi1>, vector<8x2xf32>
    %c8_i32_911 = arith.constant 8 : i32
    %2001 = arith.muli %c24_i32_903, %c8_i32_911 : i32
    %cst_912 = arith.constant 0.904837429 : f32
    %2002 = vector.broadcast %cst_912 : f32 to vector<8x2xf32>
    %2003 = arith.mulf %2002, %1980 : vector<8x2xf32>
    %2004 = arith.index_cast %2001 : i32 to index
    %c0_913 = arith.constant 0 : index
    %2005 = vector.load %arg7[%2004, %c0_913] : memref<400x2xf32, #tpu.memory_space<vmem>>, vector<8x2xf32>
    %2006 = arith.addf %2003, %2005 : vector<8x2xf32>
    %cst_914 = arith.constant 0.36787945 : f32
    %2007 = vector.broadcast %cst_914 : f32 to vector<8x2xf32>
    %2008 = arith.mulf %2007, %1983 : vector<8x2xf32>
    %2009 = arith.addf %2008, %2000 : vector<8x2xf32>
    %2010 = arith.addf %1984, %2000 : vector<8x2xf32>
    %c25_i32_915 = arith.constant 25 : i32
    %2011 = arith.addf %1987, %2006 : vector<8x2xf32>
    %cst_916 = arith.constant 0.904837429 : f32
    %2012 = vector.broadcast %cst_916 : f32 to vector<8x2xf32>
    %2013 = arith.mulf %2012, %2011 : vector<8x2xf32>
    %2014 = arith.addf %1990, %2009 : vector<8x2xf32>
    %cst_917 = arith.constant 0.36787945 : f32
    %2015 = vector.broadcast %cst_917 : f32 to vector<8x2xf32>
    %2016 = arith.mulf %2015, %2014 : vector<8x2xf32>
    %cst_918 = arith.constant 0.271828175 : f32
    %2017 = vector.broadcast %cst_918 : f32 to vector<8x2xf32>
    %2018 = arith.mulf %2017, %2013 : vector<8x2xf32>
    %cst_919 = arith.constant -54.3656349 : f32
    %2019 = vector.broadcast %cst_919 : f32 to vector<8x2xf32>
    %2020 = arith.mulf %2019, %2016 : vector<8x2xf32>
    %2021 = arith.addf %2018, %2020 : vector<8x2xf32>
    %cst_920 = arith.constant 1.000000e+01 : f32
    %2022 = vector.broadcast %cst_920 : f32 to vector<8x2xf32>
    %2023 = arith.cmpf oge, %2021, %2022 : vector<8x2xf32>
    %cst_921 = arith.constant 1.000000e+00 : f32
    %cst_922 = arith.constant 0.000000e+00 : f32
    %2024 = vector.broadcast %cst_921 : f32 to vector<8x2xf32>
    %2025 = vector.broadcast %cst_922 : f32 to vector<8x2xf32>
    %2026 = arith.select %2023, %2024, %2025 : vector<8x2xi1>, vector<8x2xf32>
    %c8_i32_923 = arith.constant 8 : i32
    %2027 = arith.muli %c25_i32_915, %c8_i32_923 : i32
    %cst_924 = arith.constant 0.904837429 : f32
    %2028 = vector.broadcast %cst_924 : f32 to vector<8x2xf32>
    %2029 = arith.mulf %2028, %2006 : vector<8x2xf32>
    %2030 = arith.index_cast %2027 : i32 to index
    %c0_925 = arith.constant 0 : index
    %2031 = vector.load %arg7[%2030, %c0_925] : memref<400x2xf32, #tpu.memory_space<vmem>>, vector<8x2xf32>
    %2032 = arith.addf %2029, %2031 : vector<8x2xf32>
    %cst_926 = arith.constant 0.36787945 : f32
    %2033 = vector.broadcast %cst_926 : f32 to vector<8x2xf32>
    %2034 = arith.mulf %2033, %2009 : vector<8x2xf32>
    %2035 = arith.addf %2034, %2026 : vector<8x2xf32>
    %2036 = arith.addf %2010, %2026 : vector<8x2xf32>
    %c26_i32_927 = arith.constant 26 : i32
    %2037 = arith.addf %2013, %2032 : vector<8x2xf32>
    %cst_928 = arith.constant 0.904837429 : f32
    %2038 = vector.broadcast %cst_928 : f32 to vector<8x2xf32>
    %2039 = arith.mulf %2038, %2037 : vector<8x2xf32>
    %2040 = arith.addf %2016, %2035 : vector<8x2xf32>
    %cst_929 = arith.constant 0.36787945 : f32
    %2041 = vector.broadcast %cst_929 : f32 to vector<8x2xf32>
    %2042 = arith.mulf %2041, %2040 : vector<8x2xf32>
    %cst_930 = arith.constant 0.271828175 : f32
    %2043 = vector.broadcast %cst_930 : f32 to vector<8x2xf32>
    %2044 = arith.mulf %2043, %2039 : vector<8x2xf32>
    %cst_931 = arith.constant -54.3656349 : f32
    %2045 = vector.broadcast %cst_931 : f32 to vector<8x2xf32>
    %2046 = arith.mulf %2045, %2042 : vector<8x2xf32>
    %2047 = arith.addf %2044, %2046 : vector<8x2xf32>
    %cst_932 = arith.constant 1.000000e+01 : f32
    %2048 = vector.broadcast %cst_932 : f32 to vector<8x2xf32>
    %2049 = arith.cmpf oge, %2047, %2048 : vector<8x2xf32>
    %cst_933 = arith.constant 1.000000e+00 : f32
    %cst_934 = arith.constant 0.000000e+00 : f32
    %2050 = vector.broadcast %cst_933 : f32 to vector<8x2xf32>
    %2051 = vector.broadcast %cst_934 : f32 to vector<8x2xf32>
    %2052 = arith.select %2049, %2050, %2051 : vector<8x2xi1>, vector<8x2xf32>
    %c8_i32_935 = arith.constant 8 : i32
    %2053 = arith.muli %c26_i32_927, %c8_i32_935 : i32
    %cst_936 = arith.constant 0.904837429 : f32
    %2054 = vector.broadcast %cst_936 : f32 to vector<8x2xf32>
    %2055 = arith.mulf %2054, %2032 : vector<8x2xf32>
    %2056 = arith.index_cast %2053 : i32 to index
    %c0_937 = arith.constant 0 : index
    %2057 = vector.load %arg7[%2056, %c0_937] : memref<400x2xf32, #tpu.memory_space<vmem>>, vector<8x2xf32>
    %2058 = arith.addf %2055, %2057 : vector<8x2xf32>
    %cst_938 = arith.constant 0.36787945 : f32
    %2059 = vector.broadcast %cst_938 : f32 to vector<8x2xf32>
    %2060 = arith.mulf %2059, %2035 : vector<8x2xf32>
    %2061 = arith.addf %2060, %2052 : vector<8x2xf32>
    %2062 = arith.addf %2036, %2052 : vector<8x2xf32>
    %c27_i32_939 = arith.constant 27 : i32
    %2063 = arith.addf %2039, %2058 : vector<8x2xf32>
    %cst_940 = arith.constant 0.904837429 : f32
    %2064 = vector.broadcast %cst_940 : f32 to vector<8x2xf32>
    %2065 = arith.mulf %2064, %2063 : vector<8x2xf32>
    %2066 = arith.addf %2042, %2061 : vector<8x2xf32>
    %cst_941 = arith.constant 0.36787945 : f32
    %2067 = vector.broadcast %cst_941 : f32 to vector<8x2xf32>
    %2068 = arith.mulf %2067, %2066 : vector<8x2xf32>
    %cst_942 = arith.constant 0.271828175 : f32
    %2069 = vector.broadcast %cst_942 : f32 to vector<8x2xf32>
    %2070 = arith.mulf %2069, %2065 : vector<8x2xf32>
    %cst_943 = arith.constant -54.3656349 : f32
    %2071 = vector.broadcast %cst_943 : f32 to vector<8x2xf32>
    %2072 = arith.mulf %2071, %2068 : vector<8x2xf32>
    %2073 = arith.addf %2070, %2072 : vector<8x2xf32>
    %cst_944 = arith.constant 1.000000e+01 : f32
    %2074 = vector.broadcast %cst_944 : f32 to vector<8x2xf32>
    %2075 = arith.cmpf oge, %2073, %2074 : vector<8x2xf32>
    %cst_945 = arith.constant 1.000000e+00 : f32
    %cst_946 = arith.constant 0.000000e+00 : f32
    %2076 = vector.broadcast %cst_945 : f32 to vector<8x2xf32>
    %2077 = vector.broadcast %cst_946 : f32 to vector<8x2xf32>
    %2078 = arith.select %2075, %2076, %2077 : vector<8x2xi1>, vector<8x2xf32>
    %c8_i32_947 = arith.constant 8 : i32
    %2079 = arith.muli %c27_i32_939, %c8_i32_947 : i32
    %cst_948 = arith.constant 0.904837429 : f32
    %2080 = vector.broadcast %cst_948 : f32 to vector<8x2xf32>
    %2081 = arith.mulf %2080, %2058 : vector<8x2xf32>
    %2082 = arith.index_cast %2079 : i32 to index
    %c0_949 = arith.constant 0 : index
    %2083 = vector.load %arg7[%2082, %c0_949] : memref<400x2xf32, #tpu.memory_space<vmem>>, vector<8x2xf32>
    %2084 = arith.addf %2081, %2083 : vector<8x2xf32>
    %cst_950 = arith.constant 0.36787945 : f32
    %2085 = vector.broadcast %cst_950 : f32 to vector<8x2xf32>
    %2086 = arith.mulf %2085, %2061 : vector<8x2xf32>
    %2087 = arith.addf %2086, %2078 : vector<8x2xf32>
    %2088 = arith.addf %2062, %2078 : vector<8x2xf32>
    %c28_i32_951 = arith.constant 28 : i32
    %2089 = arith.addf %2065, %2084 : vector<8x2xf32>
    %cst_952 = arith.constant 0.904837429 : f32
    %2090 = vector.broadcast %cst_952 : f32 to vector<8x2xf32>
    %2091 = arith.mulf %2090, %2089 : vector<8x2xf32>
    %2092 = arith.addf %2068, %2087 : vector<8x2xf32>
    %cst_953 = arith.constant 0.36787945 : f32
    %2093 = vector.broadcast %cst_953 : f32 to vector<8x2xf32>
    %2094 = arith.mulf %2093, %2092 : vector<8x2xf32>
    %cst_954 = arith.constant 0.271828175 : f32
    %2095 = vector.broadcast %cst_954 : f32 to vector<8x2xf32>
    %2096 = arith.mulf %2095, %2091 : vector<8x2xf32>
    %cst_955 = arith.constant -54.3656349 : f32
    %2097 = vector.broadcast %cst_955 : f32 to vector<8x2xf32>
    %2098 = arith.mulf %2097, %2094 : vector<8x2xf32>
    %2099 = arith.addf %2096, %2098 : vector<8x2xf32>
    %cst_956 = arith.constant 1.000000e+01 : f32
    %2100 = vector.broadcast %cst_956 : f32 to vector<8x2xf32>
    %2101 = arith.cmpf oge, %2099, %2100 : vector<8x2xf32>
    %cst_957 = arith.constant 1.000000e+00 : f32
    %cst_958 = arith.constant 0.000000e+00 : f32
    %2102 = vector.broadcast %cst_957 : f32 to vector<8x2xf32>
    %2103 = vector.broadcast %cst_958 : f32 to vector<8x2xf32>
    %2104 = arith.select %2101, %2102, %2103 : vector<8x2xi1>, vector<8x2xf32>
    %c8_i32_959 = arith.constant 8 : i32
    %2105 = arith.muli %c28_i32_951, %c8_i32_959 : i32
    %cst_960 = arith.constant 0.904837429 : f32
    %2106 = vector.broadcast %cst_960 : f32 to vector<8x2xf32>
    %2107 = arith.mulf %2106, %2084 : vector<8x2xf32>
    %2108 = arith.index_cast %2105 : i32 to index
    %c0_961 = arith.constant 0 : index
    %2109 = vector.load %arg7[%2108, %c0_961] : memref<400x2xf32, #tpu.memory_space<vmem>>, vector<8x2xf32>
    %2110 = arith.addf %2107, %2109 : vector<8x2xf32>
    %cst_962 = arith.constant 0.36787945 : f32
    %2111 = vector.broadcast %cst_962 : f32 to vector<8x2xf32>
    %2112 = arith.mulf %2111, %2087 : vector<8x2xf32>
    %2113 = arith.addf %2112, %2104 : vector<8x2xf32>
    %2114 = arith.addf %2088, %2104 : vector<8x2xf32>
    %c29_i32_963 = arith.constant 29 : i32
    %2115 = arith.addf %2091, %2110 : vector<8x2xf32>
    %cst_964 = arith.constant 0.904837429 : f32
    %2116 = vector.broadcast %cst_964 : f32 to vector<8x2xf32>
    %2117 = arith.mulf %2116, %2115 : vector<8x2xf32>
    %2118 = arith.addf %2094, %2113 : vector<8x2xf32>
    %cst_965 = arith.constant 0.36787945 : f32
    %2119 = vector.broadcast %cst_965 : f32 to vector<8x2xf32>
    %2120 = arith.mulf %2119, %2118 : vector<8x2xf32>
    %cst_966 = arith.constant 0.271828175 : f32
    %2121 = vector.broadcast %cst_966 : f32 to vector<8x2xf32>
    %2122 = arith.mulf %2121, %2117 : vector<8x2xf32>
    %cst_967 = arith.constant -54.3656349 : f32
    %2123 = vector.broadcast %cst_967 : f32 to vector<8x2xf32>
    %2124 = arith.mulf %2123, %2120 : vector<8x2xf32>
    %2125 = arith.addf %2122, %2124 : vector<8x2xf32>
    %cst_968 = arith.constant 1.000000e+01 : f32
    %2126 = vector.broadcast %cst_968 : f32 to vector<8x2xf32>
    %2127 = arith.cmpf oge, %2125, %2126 : vector<8x2xf32>
    %cst_969 = arith.constant 1.000000e+00 : f32
    %cst_970 = arith.constant 0.000000e+00 : f32
    %2128 = vector.broadcast %cst_969 : f32 to vector<8x2xf32>
    %2129 = vector.broadcast %cst_970 : f32 to vector<8x2xf32>
    %2130 = arith.select %2127, %2128, %2129 : vector<8x2xi1>, vector<8x2xf32>
    %c8_i32_971 = arith.constant 8 : i32
    %2131 = arith.muli %c29_i32_963, %c8_i32_971 : i32
    %cst_972 = arith.constant 0.904837429 : f32
    %2132 = vector.broadcast %cst_972 : f32 to vector<8x2xf32>
    %2133 = arith.mulf %2132, %2110 : vector<8x2xf32>
    %2134 = arith.index_cast %2131 : i32 to index
    %c0_973 = arith.constant 0 : index
    %2135 = vector.load %arg7[%2134, %c0_973] : memref<400x2xf32, #tpu.memory_space<vmem>>, vector<8x2xf32>
    %2136 = arith.addf %2133, %2135 : vector<8x2xf32>
    %cst_974 = arith.constant 0.36787945 : f32
    %2137 = vector.broadcast %cst_974 : f32 to vector<8x2xf32>
    %2138 = arith.mulf %2137, %2113 : vector<8x2xf32>
    %2139 = arith.addf %2138, %2130 : vector<8x2xf32>
    %2140 = arith.addf %2114, %2130 : vector<8x2xf32>
    %c30_i32_975 = arith.constant 30 : i32
    %2141 = arith.addf %2117, %2136 : vector<8x2xf32>
    %cst_976 = arith.constant 0.904837429 : f32
    %2142 = vector.broadcast %cst_976 : f32 to vector<8x2xf32>
    %2143 = arith.mulf %2142, %2141 : vector<8x2xf32>
    %2144 = arith.addf %2120, %2139 : vector<8x2xf32>
    %cst_977 = arith.constant 0.36787945 : f32
    %2145 = vector.broadcast %cst_977 : f32 to vector<8x2xf32>
    %2146 = arith.mulf %2145, %2144 : vector<8x2xf32>
    %cst_978 = arith.constant 0.271828175 : f32
    %2147 = vector.broadcast %cst_978 : f32 to vector<8x2xf32>
    %2148 = arith.mulf %2147, %2143 : vector<8x2xf32>
    %cst_979 = arith.constant -54.3656349 : f32
    %2149 = vector.broadcast %cst_979 : f32 to vector<8x2xf32>
    %2150 = arith.mulf %2149, %2146 : vector<8x2xf32>
    %2151 = arith.addf %2148, %2150 : vector<8x2xf32>
    %cst_980 = arith.constant 1.000000e+01 : f32
    %2152 = vector.broadcast %cst_980 : f32 to vector<8x2xf32>
    %2153 = arith.cmpf oge, %2151, %2152 : vector<8x2xf32>
    %cst_981 = arith.constant 1.000000e+00 : f32
    %cst_982 = arith.constant 0.000000e+00 : f32
    %2154 = vector.broadcast %cst_981 : f32 to vector<8x2xf32>
    %2155 = vector.broadcast %cst_982 : f32 to vector<8x2xf32>
    %2156 = arith.select %2153, %2154, %2155 : vector<8x2xi1>, vector<8x2xf32>
    %c8_i32_983 = arith.constant 8 : i32
    %2157 = arith.muli %c30_i32_975, %c8_i32_983 : i32
    %cst_984 = arith.constant 0.904837429 : f32
    %2158 = vector.broadcast %cst_984 : f32 to vector<8x2xf32>
    %2159 = arith.mulf %2158, %2136 : vector<8x2xf32>
    %2160 = arith.index_cast %2157 : i32 to index
    %c0_985 = arith.constant 0 : index
    %2161 = vector.load %arg7[%2160, %c0_985] : memref<400x2xf32, #tpu.memory_space<vmem>>, vector<8x2xf32>
    %2162 = arith.addf %2159, %2161 : vector<8x2xf32>
    %cst_986 = arith.constant 0.36787945 : f32
    %2163 = vector.broadcast %cst_986 : f32 to vector<8x2xf32>
    %2164 = arith.mulf %2163, %2139 : vector<8x2xf32>
    %2165 = arith.addf %2164, %2156 : vector<8x2xf32>
    %2166 = arith.addf %2140, %2156 : vector<8x2xf32>
    %c31_i32_987 = arith.constant 31 : i32
    %2167 = arith.addf %2143, %2162 : vector<8x2xf32>
    %cst_988 = arith.constant 0.904837429 : f32
    %2168 = vector.broadcast %cst_988 : f32 to vector<8x2xf32>
    %2169 = arith.mulf %2168, %2167 : vector<8x2xf32>
    %2170 = arith.addf %2146, %2165 : vector<8x2xf32>
    %cst_989 = arith.constant 0.36787945 : f32
    %2171 = vector.broadcast %cst_989 : f32 to vector<8x2xf32>
    %2172 = arith.mulf %2171, %2170 : vector<8x2xf32>
    %cst_990 = arith.constant 0.271828175 : f32
    %2173 = vector.broadcast %cst_990 : f32 to vector<8x2xf32>
    %2174 = arith.mulf %2173, %2169 : vector<8x2xf32>
    %cst_991 = arith.constant -54.3656349 : f32
    %2175 = vector.broadcast %cst_991 : f32 to vector<8x2xf32>
    %2176 = arith.mulf %2175, %2172 : vector<8x2xf32>
    %2177 = arith.addf %2174, %2176 : vector<8x2xf32>
    %cst_992 = arith.constant 1.000000e+01 : f32
    %2178 = vector.broadcast %cst_992 : f32 to vector<8x2xf32>
    %2179 = arith.cmpf oge, %2177, %2178 : vector<8x2xf32>
    %cst_993 = arith.constant 1.000000e+00 : f32
    %cst_994 = arith.constant 0.000000e+00 : f32
    %2180 = vector.broadcast %cst_993 : f32 to vector<8x2xf32>
    %2181 = vector.broadcast %cst_994 : f32 to vector<8x2xf32>
    %2182 = arith.select %2179, %2180, %2181 : vector<8x2xi1>, vector<8x2xf32>
    %c8_i32_995 = arith.constant 8 : i32
    %2183 = arith.muli %c31_i32_987, %c8_i32_995 : i32
    %cst_996 = arith.constant 0.904837429 : f32
    %2184 = vector.broadcast %cst_996 : f32 to vector<8x2xf32>
    %2185 = arith.mulf %2184, %2162 : vector<8x2xf32>
    %2186 = arith.index_cast %2183 : i32 to index
    %c0_997 = arith.constant 0 : index
    %2187 = vector.load %arg7[%2186, %c0_997] : memref<400x2xf32, #tpu.memory_space<vmem>>, vector<8x2xf32>
    %2188 = arith.addf %2185, %2187 : vector<8x2xf32>
    %cst_998 = arith.constant 0.36787945 : f32
    %2189 = vector.broadcast %cst_998 : f32 to vector<8x2xf32>
    %2190 = arith.mulf %2189, %2165 : vector<8x2xf32>
    %2191 = arith.addf %2190, %2182 : vector<8x2xf32>
    %2192 = arith.addf %2166, %2182 : vector<8x2xf32>
    %c32_i32_999 = arith.constant 32 : i32
    %2193 = arith.addf %2169, %2188 : vector<8x2xf32>
    %cst_1000 = arith.constant 0.904837429 : f32
    %2194 = vector.broadcast %cst_1000 : f32 to vector<8x2xf32>
    %2195 = arith.mulf %2194, %2193 : vector<8x2xf32>
    %2196 = arith.addf %2172, %2191 : vector<8x2xf32>
    %cst_1001 = arith.constant 0.36787945 : f32
    %2197 = vector.broadcast %cst_1001 : f32 to vector<8x2xf32>
    %2198 = arith.mulf %2197, %2196 : vector<8x2xf32>
    %cst_1002 = arith.constant 0.271828175 : f32
    %2199 = vector.broadcast %cst_1002 : f32 to vector<8x2xf32>
    %2200 = arith.mulf %2199, %2195 : vector<8x2xf32>
    %cst_1003 = arith.constant -54.3656349 : f32
    %2201 = vector.broadcast %cst_1003 : f32 to vector<8x2xf32>
    %2202 = arith.mulf %2201, %2198 : vector<8x2xf32>
    %2203 = arith.addf %2200, %2202 : vector<8x2xf32>
    %cst_1004 = arith.constant 1.000000e+01 : f32
    %2204 = vector.broadcast %cst_1004 : f32 to vector<8x2xf32>
    %2205 = arith.cmpf oge, %2203, %2204 : vector<8x2xf32>
    %cst_1005 = arith.constant 1.000000e+00 : f32
    %cst_1006 = arith.constant 0.000000e+00 : f32
    %2206 = vector.broadcast %cst_1005 : f32 to vector<8x2xf32>
    %2207 = vector.broadcast %cst_1006 : f32 to vector<8x2xf32>
    %2208 = arith.select %2205, %2206, %2207 : vector<8x2xi1>, vector<8x2xf32>
    %c8_i32_1007 = arith.constant 8 : i32
    %2209 = arith.muli %c32_i32_999, %c8_i32_1007 : i32
    %cst_1008 = arith.constant 0.904837429 : f32
    %2210 = vector.broadcast %cst_1008 : f32 to vector<8x2xf32>
    %2211 = arith.mulf %2210, %2188 : vector<8x2xf32>
    %2212 = arith.index_cast %2209 : i32 to index
    %c0_1009 = arith.constant 0 : index
    %2213 = vector.load %arg7[%2212, %c0_1009] : memref<400x2xf32, #tpu.memory_space<vmem>>, vector<8x2xf32>
    %2214 = arith.addf %2211, %2213 : vector<8x2xf32>
    %cst_1010 = arith.constant 0.36787945 : f32
    %2215 = vector.broadcast %cst_1010 : f32 to vector<8x2xf32>
    %2216 = arith.mulf %2215, %2191 : vector<8x2xf32>
    %2217 = arith.addf %2216, %2208 : vector<8x2xf32>
    %2218 = arith.addf %2192, %2208 : vector<8x2xf32>
    %c33_i32_1011 = arith.constant 33 : i32
    %2219 = arith.addf %2195, %2214 : vector<8x2xf32>
    %cst_1012 = arith.constant 0.904837429 : f32
    %2220 = vector.broadcast %cst_1012 : f32 to vector<8x2xf32>
    %2221 = arith.mulf %2220, %2219 : vector<8x2xf32>
    %2222 = arith.addf %2198, %2217 : vector<8x2xf32>
    %cst_1013 = arith.constant 0.36787945 : f32
    %2223 = vector.broadcast %cst_1013 : f32 to vector<8x2xf32>
    %2224 = arith.mulf %2223, %2222 : vector<8x2xf32>
    %cst_1014 = arith.constant 0.271828175 : f32
    %2225 = vector.broadcast %cst_1014 : f32 to vector<8x2xf32>
    %2226 = arith.mulf %2225, %2221 : vector<8x2xf32>
    %cst_1015 = arith.constant -54.3656349 : f32
    %2227 = vector.broadcast %cst_1015 : f32 to vector<8x2xf32>
    %2228 = arith.mulf %2227, %2224 : vector<8x2xf32>
    %2229 = arith.addf %2226, %2228 : vector<8x2xf32>
    %cst_1016 = arith.constant 1.000000e+01 : f32
    %2230 = vector.broadcast %cst_1016 : f32 to vector<8x2xf32>
    %2231 = arith.cmpf oge, %2229, %2230 : vector<8x2xf32>
    %cst_1017 = arith.constant 1.000000e+00 : f32
    %cst_1018 = arith.constant 0.000000e+00 : f32
    %2232 = vector.broadcast %cst_1017 : f32 to vector<8x2xf32>
    %2233 = vector.broadcast %cst_1018 : f32 to vector<8x2xf32>
    %2234 = arith.select %2231, %2232, %2233 : vector<8x2xi1>, vector<8x2xf32>
    %c8_i32_1019 = arith.constant 8 : i32
    %2235 = arith.muli %c33_i32_1011, %c8_i32_1019 : i32
    %cst_1020 = arith.constant 0.904837429 : f32
    %2236 = vector.broadcast %cst_1020 : f32 to vector<8x2xf32>
    %2237 = arith.mulf %2236, %2214 : vector<8x2xf32>
    %2238 = arith.index_cast %2235 : i32 to index
    %c0_1021 = arith.constant 0 : index
    %2239 = vector.load %arg7[%2238, %c0_1021] : memref<400x2xf32, #tpu.memory_space<vmem>>, vector<8x2xf32>
    %2240 = arith.addf %2237, %2239 : vector<8x2xf32>
    %cst_1022 = arith.constant 0.36787945 : f32
    %2241 = vector.broadcast %cst_1022 : f32 to vector<8x2xf32>
    %2242 = arith.mulf %2241, %2217 : vector<8x2xf32>
    %2243 = arith.addf %2242, %2234 : vector<8x2xf32>
    %2244 = arith.addf %2218, %2234 : vector<8x2xf32>
    %c34_i32_1023 = arith.constant 34 : i32
    %2245 = arith.addf %2221, %2240 : vector<8x2xf32>
    %cst_1024 = arith.constant 0.904837429 : f32
    %2246 = vector.broadcast %cst_1024 : f32 to vector<8x2xf32>
    %2247 = arith.mulf %2246, %2245 : vector<8x2xf32>
    %2248 = arith.addf %2224, %2243 : vector<8x2xf32>
    %cst_1025 = arith.constant 0.36787945 : f32
    %2249 = vector.broadcast %cst_1025 : f32 to vector<8x2xf32>
    %2250 = arith.mulf %2249, %2248 : vector<8x2xf32>
    %cst_1026 = arith.constant 0.271828175 : f32
    %2251 = vector.broadcast %cst_1026 : f32 to vector<8x2xf32>
    %2252 = arith.mulf %2251, %2247 : vector<8x2xf32>
    %cst_1027 = arith.constant -54.3656349 : f32
    %2253 = vector.broadcast %cst_1027 : f32 to vector<8x2xf32>
    %2254 = arith.mulf %2253, %2250 : vector<8x2xf32>
    %2255 = arith.addf %2252, %2254 : vector<8x2xf32>
    %cst_1028 = arith.constant 1.000000e+01 : f32
    %2256 = vector.broadcast %cst_1028 : f32 to vector<8x2xf32>
    %2257 = arith.cmpf oge, %2255, %2256 : vector<8x2xf32>
    %cst_1029 = arith.constant 1.000000e+00 : f32
    %cst_1030 = arith.constant 0.000000e+00 : f32
    %2258 = vector.broadcast %cst_1029 : f32 to vector<8x2xf32>
    %2259 = vector.broadcast %cst_1030 : f32 to vector<8x2xf32>
    %2260 = arith.select %2257, %2258, %2259 : vector<8x2xi1>, vector<8x2xf32>
    %c8_i32_1031 = arith.constant 8 : i32
    %2261 = arith.muli %c34_i32_1023, %c8_i32_1031 : i32
    %cst_1032 = arith.constant 0.904837429 : f32
    %2262 = vector.broadcast %cst_1032 : f32 to vector<8x2xf32>
    %2263 = arith.mulf %2262, %2240 : vector<8x2xf32>
    %2264 = arith.index_cast %2261 : i32 to index
    %c0_1033 = arith.constant 0 : index
    %2265 = vector.load %arg7[%2264, %c0_1033] : memref<400x2xf32, #tpu.memory_space<vmem>>, vector<8x2xf32>
    %2266 = arith.addf %2263, %2265 : vector<8x2xf32>
    %cst_1034 = arith.constant 0.36787945 : f32
    %2267 = vector.broadcast %cst_1034 : f32 to vector<8x2xf32>
    %2268 = arith.mulf %2267, %2243 : vector<8x2xf32>
    %2269 = arith.addf %2268, %2260 : vector<8x2xf32>
    %2270 = arith.addf %2244, %2260 : vector<8x2xf32>
    %c35_i32_1035 = arith.constant 35 : i32
    %2271 = arith.addf %2247, %2266 : vector<8x2xf32>
    %cst_1036 = arith.constant 0.904837429 : f32
    %2272 = vector.broadcast %cst_1036 : f32 to vector<8x2xf32>
    %2273 = arith.mulf %2272, %2271 : vector<8x2xf32>
    %2274 = arith.addf %2250, %2269 : vector<8x2xf32>
    %cst_1037 = arith.constant 0.36787945 : f32
    %2275 = vector.broadcast %cst_1037 : f32 to vector<8x2xf32>
    %2276 = arith.mulf %2275, %2274 : vector<8x2xf32>
    %cst_1038 = arith.constant 0.271828175 : f32
    %2277 = vector.broadcast %cst_1038 : f32 to vector<8x2xf32>
    %2278 = arith.mulf %2277, %2273 : vector<8x2xf32>
    %cst_1039 = arith.constant -54.3656349 : f32
    %2279 = vector.broadcast %cst_1039 : f32 to vector<8x2xf32>
    %2280 = arith.mulf %2279, %2276 : vector<8x2xf32>
    %2281 = arith.addf %2278, %2280 : vector<8x2xf32>
    %cst_1040 = arith.constant 1.000000e+01 : f32
    %2282 = vector.broadcast %cst_1040 : f32 to vector<8x2xf32>
    %2283 = arith.cmpf oge, %2281, %2282 : vector<8x2xf32>
    %cst_1041 = arith.constant 1.000000e+00 : f32
    %cst_1042 = arith.constant 0.000000e+00 : f32
    %2284 = vector.broadcast %cst_1041 : f32 to vector<8x2xf32>
    %2285 = vector.broadcast %cst_1042 : f32 to vector<8x2xf32>
    %2286 = arith.select %2283, %2284, %2285 : vector<8x2xi1>, vector<8x2xf32>
    %c8_i32_1043 = arith.constant 8 : i32
    %2287 = arith.muli %c35_i32_1035, %c8_i32_1043 : i32
    %cst_1044 = arith.constant 0.904837429 : f32
    %2288 = vector.broadcast %cst_1044 : f32 to vector<8x2xf32>
    %2289 = arith.mulf %2288, %2266 : vector<8x2xf32>
    %2290 = arith.index_cast %2287 : i32 to index
    %c0_1045 = arith.constant 0 : index
    %2291 = vector.load %arg7[%2290, %c0_1045] : memref<400x2xf32, #tpu.memory_space<vmem>>, vector<8x2xf32>
    %2292 = arith.addf %2289, %2291 : vector<8x2xf32>
    %cst_1046 = arith.constant 0.36787945 : f32
    %2293 = vector.broadcast %cst_1046 : f32 to vector<8x2xf32>
    %2294 = arith.mulf %2293, %2269 : vector<8x2xf32>
    %2295 = arith.addf %2294, %2286 : vector<8x2xf32>
    %2296 = arith.addf %2270, %2286 : vector<8x2xf32>
    %c36_i32_1047 = arith.constant 36 : i32
    %2297 = arith.addf %2273, %2292 : vector<8x2xf32>
    %cst_1048 = arith.constant 0.904837429 : f32
    %2298 = vector.broadcast %cst_1048 : f32 to vector<8x2xf32>
    %2299 = arith.mulf %2298, %2297 : vector<8x2xf32>
    %2300 = arith.addf %2276, %2295 : vector<8x2xf32>
    %cst_1049 = arith.constant 0.36787945 : f32
    %2301 = vector.broadcast %cst_1049 : f32 to vector<8x2xf32>
    %2302 = arith.mulf %2301, %2300 : vector<8x2xf32>
    %cst_1050 = arith.constant 0.271828175 : f32
    %2303 = vector.broadcast %cst_1050 : f32 to vector<8x2xf32>
    %2304 = arith.mulf %2303, %2299 : vector<8x2xf32>
    %cst_1051 = arith.constant -54.3656349 : f32
    %2305 = vector.broadcast %cst_1051 : f32 to vector<8x2xf32>
    %2306 = arith.mulf %2305, %2302 : vector<8x2xf32>
    %2307 = arith.addf %2304, %2306 : vector<8x2xf32>
    %cst_1052 = arith.constant 1.000000e+01 : f32
    %2308 = vector.broadcast %cst_1052 : f32 to vector<8x2xf32>
    %2309 = arith.cmpf oge, %2307, %2308 : vector<8x2xf32>
    %cst_1053 = arith.constant 1.000000e+00 : f32
    %cst_1054 = arith.constant 0.000000e+00 : f32
    %2310 = vector.broadcast %cst_1053 : f32 to vector<8x2xf32>
    %2311 = vector.broadcast %cst_1054 : f32 to vector<8x2xf32>
    %2312 = arith.select %2309, %2310, %2311 : vector<8x2xi1>, vector<8x2xf32>
    %c8_i32_1055 = arith.constant 8 : i32
    %2313 = arith.muli %c36_i32_1047, %c8_i32_1055 : i32
    %cst_1056 = arith.constant 0.904837429 : f32
    %2314 = vector.broadcast %cst_1056 : f32 to vector<8x2xf32>
    %2315 = arith.mulf %2314, %2292 : vector<8x2xf32>
    %2316 = arith.index_cast %2313 : i32 to index
    %c0_1057 = arith.constant 0 : index
    %2317 = vector.load %arg7[%2316, %c0_1057] : memref<400x2xf32, #tpu.memory_space<vmem>>, vector<8x2xf32>
    %2318 = arith.addf %2315, %2317 : vector<8x2xf32>
    %cst_1058 = arith.constant 0.36787945 : f32
    %2319 = vector.broadcast %cst_1058 : f32 to vector<8x2xf32>
    %2320 = arith.mulf %2319, %2295 : vector<8x2xf32>
    %2321 = arith.addf %2320, %2312 : vector<8x2xf32>
    %2322 = arith.addf %2296, %2312 : vector<8x2xf32>
    %c37_i32_1059 = arith.constant 37 : i32
    %2323 = arith.addf %2299, %2318 : vector<8x2xf32>
    %cst_1060 = arith.constant 0.904837429 : f32
    %2324 = vector.broadcast %cst_1060 : f32 to vector<8x2xf32>
    %2325 = arith.mulf %2324, %2323 : vector<8x2xf32>
    %2326 = arith.addf %2302, %2321 : vector<8x2xf32>
    %cst_1061 = arith.constant 0.36787945 : f32
    %2327 = vector.broadcast %cst_1061 : f32 to vector<8x2xf32>
    %2328 = arith.mulf %2327, %2326 : vector<8x2xf32>
    %cst_1062 = arith.constant 0.271828175 : f32
    %2329 = vector.broadcast %cst_1062 : f32 to vector<8x2xf32>
    %2330 = arith.mulf %2329, %2325 : vector<8x2xf32>
    %cst_1063 = arith.constant -54.3656349 : f32
    %2331 = vector.broadcast %cst_1063 : f32 to vector<8x2xf32>
    %2332 = arith.mulf %2331, %2328 : vector<8x2xf32>
    %2333 = arith.addf %2330, %2332 : vector<8x2xf32>
    %cst_1064 = arith.constant 1.000000e+01 : f32
    %2334 = vector.broadcast %cst_1064 : f32 to vector<8x2xf32>
    %2335 = arith.cmpf oge, %2333, %2334 : vector<8x2xf32>
    %cst_1065 = arith.constant 1.000000e+00 : f32
    %cst_1066 = arith.constant 0.000000e+00 : f32
    %2336 = vector.broadcast %cst_1065 : f32 to vector<8x2xf32>
    %2337 = vector.broadcast %cst_1066 : f32 to vector<8x2xf32>
    %2338 = arith.select %2335, %2336, %2337 : vector<8x2xi1>, vector<8x2xf32>
    %c8_i32_1067 = arith.constant 8 : i32
    %2339 = arith.muli %c37_i32_1059, %c8_i32_1067 : i32
    %cst_1068 = arith.constant 0.904837429 : f32
    %2340 = vector.broadcast %cst_1068 : f32 to vector<8x2xf32>
    %2341 = arith.mulf %2340, %2318 : vector<8x2xf32>
    %2342 = arith.index_cast %2339 : i32 to index
    %c0_1069 = arith.constant 0 : index
    %2343 = vector.load %arg7[%2342, %c0_1069] : memref<400x2xf32, #tpu.memory_space<vmem>>, vector<8x2xf32>
    %2344 = arith.addf %2341, %2343 : vector<8x2xf32>
    %cst_1070 = arith.constant 0.36787945 : f32
    %2345 = vector.broadcast %cst_1070 : f32 to vector<8x2xf32>
    %2346 = arith.mulf %2345, %2321 : vector<8x2xf32>
    %2347 = arith.addf %2346, %2338 : vector<8x2xf32>
    %2348 = arith.addf %2322, %2338 : vector<8x2xf32>
    %c38_i32_1071 = arith.constant 38 : i32
    %2349 = arith.addf %2325, %2344 : vector<8x2xf32>
    %cst_1072 = arith.constant 0.904837429 : f32
    %2350 = vector.broadcast %cst_1072 : f32 to vector<8x2xf32>
    %2351 = arith.mulf %2350, %2349 : vector<8x2xf32>
    %2352 = arith.addf %2328, %2347 : vector<8x2xf32>
    %cst_1073 = arith.constant 0.36787945 : f32
    %2353 = vector.broadcast %cst_1073 : f32 to vector<8x2xf32>
    %2354 = arith.mulf %2353, %2352 : vector<8x2xf32>
    %cst_1074 = arith.constant 0.271828175 : f32
    %2355 = vector.broadcast %cst_1074 : f32 to vector<8x2xf32>
    %2356 = arith.mulf %2355, %2351 : vector<8x2xf32>
    %cst_1075 = arith.constant -54.3656349 : f32
    %2357 = vector.broadcast %cst_1075 : f32 to vector<8x2xf32>
    %2358 = arith.mulf %2357, %2354 : vector<8x2xf32>
    %2359 = arith.addf %2356, %2358 : vector<8x2xf32>
    %cst_1076 = arith.constant 1.000000e+01 : f32
    %2360 = vector.broadcast %cst_1076 : f32 to vector<8x2xf32>
    %2361 = arith.cmpf oge, %2359, %2360 : vector<8x2xf32>
    %cst_1077 = arith.constant 1.000000e+00 : f32
    %cst_1078 = arith.constant 0.000000e+00 : f32
    %2362 = vector.broadcast %cst_1077 : f32 to vector<8x2xf32>
    %2363 = vector.broadcast %cst_1078 : f32 to vector<8x2xf32>
    %2364 = arith.select %2361, %2362, %2363 : vector<8x2xi1>, vector<8x2xf32>
    %c8_i32_1079 = arith.constant 8 : i32
    %2365 = arith.muli %c38_i32_1071, %c8_i32_1079 : i32
    %cst_1080 = arith.constant 0.904837429 : f32
    %2366 = vector.broadcast %cst_1080 : f32 to vector<8x2xf32>
    %2367 = arith.mulf %2366, %2344 : vector<8x2xf32>
    %2368 = arith.index_cast %2365 : i32 to index
    %c0_1081 = arith.constant 0 : index
    %2369 = vector.load %arg7[%2368, %c0_1081] : memref<400x2xf32, #tpu.memory_space<vmem>>, vector<8x2xf32>
    %2370 = arith.addf %2367, %2369 : vector<8x2xf32>
    %cst_1082 = arith.constant 0.36787945 : f32
    %2371 = vector.broadcast %cst_1082 : f32 to vector<8x2xf32>
    %2372 = arith.mulf %2371, %2347 : vector<8x2xf32>
    %2373 = arith.addf %2372, %2364 : vector<8x2xf32>
    %2374 = arith.addf %2348, %2364 : vector<8x2xf32>
    %c39_i32_1083 = arith.constant 39 : i32
    %2375 = arith.addf %2351, %2370 : vector<8x2xf32>
    %cst_1084 = arith.constant 0.904837429 : f32
    %2376 = vector.broadcast %cst_1084 : f32 to vector<8x2xf32>
    %2377 = arith.mulf %2376, %2375 : vector<8x2xf32>
    %2378 = arith.addf %2354, %2373 : vector<8x2xf32>
    %cst_1085 = arith.constant 0.36787945 : f32
    %2379 = vector.broadcast %cst_1085 : f32 to vector<8x2xf32>
    %2380 = arith.mulf %2379, %2378 : vector<8x2xf32>
    %cst_1086 = arith.constant 0.271828175 : f32
    %2381 = vector.broadcast %cst_1086 : f32 to vector<8x2xf32>
    %2382 = arith.mulf %2381, %2377 : vector<8x2xf32>
    %cst_1087 = arith.constant -54.3656349 : f32
    %2383 = vector.broadcast %cst_1087 : f32 to vector<8x2xf32>
    %2384 = arith.mulf %2383, %2380 : vector<8x2xf32>
    %2385 = arith.addf %2382, %2384 : vector<8x2xf32>
    %cst_1088 = arith.constant 1.000000e+01 : f32
    %2386 = vector.broadcast %cst_1088 : f32 to vector<8x2xf32>
    %2387 = arith.cmpf oge, %2385, %2386 : vector<8x2xf32>
    %cst_1089 = arith.constant 1.000000e+00 : f32
    %cst_1090 = arith.constant 0.000000e+00 : f32
    %2388 = vector.broadcast %cst_1089 : f32 to vector<8x2xf32>
    %2389 = vector.broadcast %cst_1090 : f32 to vector<8x2xf32>
    %2390 = arith.select %2387, %2388, %2389 : vector<8x2xi1>, vector<8x2xf32>
    %c8_i32_1091 = arith.constant 8 : i32
    %2391 = arith.muli %c39_i32_1083, %c8_i32_1091 : i32
    %cst_1092 = arith.constant 0.904837429 : f32
    %2392 = vector.broadcast %cst_1092 : f32 to vector<8x2xf32>
    %2393 = arith.mulf %2392, %2370 : vector<8x2xf32>
    %2394 = arith.index_cast %2391 : i32 to index
    %c0_1093 = arith.constant 0 : index
    %2395 = vector.load %arg7[%2394, %c0_1093] : memref<400x2xf32, #tpu.memory_space<vmem>>, vector<8x2xf32>
    %2396 = arith.addf %2393, %2395 : vector<8x2xf32>
    %cst_1094 = arith.constant 0.36787945 : f32
    %2397 = vector.broadcast %cst_1094 : f32 to vector<8x2xf32>
    %2398 = arith.mulf %2397, %2373 : vector<8x2xf32>
    %2399 = arith.addf %2398, %2390 : vector<8x2xf32>
    %2400 = arith.addf %2374, %2390 : vector<8x2xf32>
    %c40_i32_1095 = arith.constant 40 : i32
    %2401 = arith.addf %2377, %2396 : vector<8x2xf32>
    %cst_1096 = arith.constant 0.904837429 : f32
    %2402 = vector.broadcast %cst_1096 : f32 to vector<8x2xf32>
    %2403 = arith.mulf %2402, %2401 : vector<8x2xf32>
    %2404 = arith.addf %2380, %2399 : vector<8x2xf32>
    %cst_1097 = arith.constant 0.36787945 : f32
    %2405 = vector.broadcast %cst_1097 : f32 to vector<8x2xf32>
    %2406 = arith.mulf %2405, %2404 : vector<8x2xf32>
    %cst_1098 = arith.constant 0.271828175 : f32
    %2407 = vector.broadcast %cst_1098 : f32 to vector<8x2xf32>
    %2408 = arith.mulf %2407, %2403 : vector<8x2xf32>
    %cst_1099 = arith.constant -54.3656349 : f32
    %2409 = vector.broadcast %cst_1099 : f32 to vector<8x2xf32>
    %2410 = arith.mulf %2409, %2406 : vector<8x2xf32>
    %2411 = arith.addf %2408, %2410 : vector<8x2xf32>
    %cst_1100 = arith.constant 1.000000e+01 : f32
    %2412 = vector.broadcast %cst_1100 : f32 to vector<8x2xf32>
    %2413 = arith.cmpf oge, %2411, %2412 : vector<8x2xf32>
    %cst_1101 = arith.constant 1.000000e+00 : f32
    %cst_1102 = arith.constant 0.000000e+00 : f32
    %2414 = vector.broadcast %cst_1101 : f32 to vector<8x2xf32>
    %2415 = vector.broadcast %cst_1102 : f32 to vector<8x2xf32>
    %2416 = arith.select %2413, %2414, %2415 : vector<8x2xi1>, vector<8x2xf32>
    %c8_i32_1103 = arith.constant 8 : i32
    %2417 = arith.muli %c40_i32_1095, %c8_i32_1103 : i32
    %cst_1104 = arith.constant 0.904837429 : f32
    %2418 = vector.broadcast %cst_1104 : f32 to vector<8x2xf32>
    %2419 = arith.mulf %2418, %2396 : vector<8x2xf32>
    %2420 = arith.index_cast %2417 : i32 to index
    %c0_1105 = arith.constant 0 : index
    %2421 = vector.load %arg7[%2420, %c0_1105] : memref<400x2xf32, #tpu.memory_space<vmem>>, vector<8x2xf32>
    %2422 = arith.addf %2419, %2421 : vector<8x2xf32>
    %cst_1106 = arith.constant 0.36787945 : f32
    %2423 = vector.broadcast %cst_1106 : f32 to vector<8x2xf32>
    %2424 = arith.mulf %2423, %2399 : vector<8x2xf32>
    %2425 = arith.addf %2424, %2416 : vector<8x2xf32>
    %2426 = arith.addf %2400, %2416 : vector<8x2xf32>
    %c41_i32_1107 = arith.constant 41 : i32
    %2427 = arith.addf %2403, %2422 : vector<8x2xf32>
    %cst_1108 = arith.constant 0.904837429 : f32
    %2428 = vector.broadcast %cst_1108 : f32 to vector<8x2xf32>
    %2429 = arith.mulf %2428, %2427 : vector<8x2xf32>
    %2430 = arith.addf %2406, %2425 : vector<8x2xf32>
    %cst_1109 = arith.constant 0.36787945 : f32
    %2431 = vector.broadcast %cst_1109 : f32 to vector<8x2xf32>
    %2432 = arith.mulf %2431, %2430 : vector<8x2xf32>
    %cst_1110 = arith.constant 0.271828175 : f32
    %2433 = vector.broadcast %cst_1110 : f32 to vector<8x2xf32>
    %2434 = arith.mulf %2433, %2429 : vector<8x2xf32>
    %cst_1111 = arith.constant -54.3656349 : f32
    %2435 = vector.broadcast %cst_1111 : f32 to vector<8x2xf32>
    %2436 = arith.mulf %2435, %2432 : vector<8x2xf32>
    %2437 = arith.addf %2434, %2436 : vector<8x2xf32>
    %cst_1112 = arith.constant 1.000000e+01 : f32
    %2438 = vector.broadcast %cst_1112 : f32 to vector<8x2xf32>
    %2439 = arith.cmpf oge, %2437, %2438 : vector<8x2xf32>
    %cst_1113 = arith.constant 1.000000e+00 : f32
    %cst_1114 = arith.constant 0.000000e+00 : f32
    %2440 = vector.broadcast %cst_1113 : f32 to vector<8x2xf32>
    %2441 = vector.broadcast %cst_1114 : f32 to vector<8x2xf32>
    %2442 = arith.select %2439, %2440, %2441 : vector<8x2xi1>, vector<8x2xf32>
    %c8_i32_1115 = arith.constant 8 : i32
    %2443 = arith.muli %c41_i32_1107, %c8_i32_1115 : i32
    %cst_1116 = arith.constant 0.904837429 : f32
    %2444 = vector.broadcast %cst_1116 : f32 to vector<8x2xf32>
    %2445 = arith.mulf %2444, %2422 : vector<8x2xf32>
    %2446 = arith.index_cast %2443 : i32 to index
    %c0_1117 = arith.constant 0 : index
    %2447 = vector.load %arg7[%2446, %c0_1117] : memref<400x2xf32, #tpu.memory_space<vmem>>, vector<8x2xf32>
    %2448 = arith.addf %2445, %2447 : vector<8x2xf32>
    %cst_1118 = arith.constant 0.36787945 : f32
    %2449 = vector.broadcast %cst_1118 : f32 to vector<8x2xf32>
    %2450 = arith.mulf %2449, %2425 : vector<8x2xf32>
    %2451 = arith.addf %2450, %2442 : vector<8x2xf32>
    %2452 = arith.addf %2426, %2442 : vector<8x2xf32>
    %c42_i32_1119 = arith.constant 42 : i32
    %2453 = arith.addf %2429, %2448 : vector<8x2xf32>
    %cst_1120 = arith.constant 0.904837429 : f32
    %2454 = vector.broadcast %cst_1120 : f32 to vector<8x2xf32>
    %2455 = arith.mulf %2454, %2453 : vector<8x2xf32>
    %2456 = arith.addf %2432, %2451 : vector<8x2xf32>
    %cst_1121 = arith.constant 0.36787945 : f32
    %2457 = vector.broadcast %cst_1121 : f32 to vector<8x2xf32>
    %2458 = arith.mulf %2457, %2456 : vector<8x2xf32>
    %cst_1122 = arith.constant 0.271828175 : f32
    %2459 = vector.broadcast %cst_1122 : f32 to vector<8x2xf32>
    %2460 = arith.mulf %2459, %2455 : vector<8x2xf32>
    %cst_1123 = arith.constant -54.3656349 : f32
    %2461 = vector.broadcast %cst_1123 : f32 to vector<8x2xf32>
    %2462 = arith.mulf %2461, %2458 : vector<8x2xf32>
    %2463 = arith.addf %2460, %2462 : vector<8x2xf32>
    %cst_1124 = arith.constant 1.000000e+01 : f32
    %2464 = vector.broadcast %cst_1124 : f32 to vector<8x2xf32>
    %2465 = arith.cmpf oge, %2463, %2464 : vector<8x2xf32>
    %cst_1125 = arith.constant 1.000000e+00 : f32
    %cst_1126 = arith.constant 0.000000e+00 : f32
    %2466 = vector.broadcast %cst_1125 : f32 to vector<8x2xf32>
    %2467 = vector.broadcast %cst_1126 : f32 to vector<8x2xf32>
    %2468 = arith.select %2465, %2466, %2467 : vector<8x2xi1>, vector<8x2xf32>
    %c8_i32_1127 = arith.constant 8 : i32
    %2469 = arith.muli %c42_i32_1119, %c8_i32_1127 : i32
    %cst_1128 = arith.constant 0.904837429 : f32
    %2470 = vector.broadcast %cst_1128 : f32 to vector<8x2xf32>
    %2471 = arith.mulf %2470, %2448 : vector<8x2xf32>
    %2472 = arith.index_cast %2469 : i32 to index
    %c0_1129 = arith.constant 0 : index
    %2473 = vector.load %arg7[%2472, %c0_1129] : memref<400x2xf32, #tpu.memory_space<vmem>>, vector<8x2xf32>
    %2474 = arith.addf %2471, %2473 : vector<8x2xf32>
    %cst_1130 = arith.constant 0.36787945 : f32
    %2475 = vector.broadcast %cst_1130 : f32 to vector<8x2xf32>
    %2476 = arith.mulf %2475, %2451 : vector<8x2xf32>
    %2477 = arith.addf %2476, %2468 : vector<8x2xf32>
    %2478 = arith.addf %2452, %2468 : vector<8x2xf32>
    %c43_i32_1131 = arith.constant 43 : i32
    %2479 = arith.addf %2455, %2474 : vector<8x2xf32>
    %cst_1132 = arith.constant 0.904837429 : f32
    %2480 = vector.broadcast %cst_1132 : f32 to vector<8x2xf32>
    %2481 = arith.mulf %2480, %2479 : vector<8x2xf32>
    %2482 = arith.addf %2458, %2477 : vector<8x2xf32>
    %cst_1133 = arith.constant 0.36787945 : f32
    %2483 = vector.broadcast %cst_1133 : f32 to vector<8x2xf32>
    %2484 = arith.mulf %2483, %2482 : vector<8x2xf32>
    %cst_1134 = arith.constant 0.271828175 : f32
    %2485 = vector.broadcast %cst_1134 : f32 to vector<8x2xf32>
    %2486 = arith.mulf %2485, %2481 : vector<8x2xf32>
    %cst_1135 = arith.constant -54.3656349 : f32
    %2487 = vector.broadcast %cst_1135 : f32 to vector<8x2xf32>
    %2488 = arith.mulf %2487, %2484 : vector<8x2xf32>
    %2489 = arith.addf %2486, %2488 : vector<8x2xf32>
    %cst_1136 = arith.constant 1.000000e+01 : f32
    %2490 = vector.broadcast %cst_1136 : f32 to vector<8x2xf32>
    %2491 = arith.cmpf oge, %2489, %2490 : vector<8x2xf32>
    %cst_1137 = arith.constant 1.000000e+00 : f32
    %cst_1138 = arith.constant 0.000000e+00 : f32
    %2492 = vector.broadcast %cst_1137 : f32 to vector<8x2xf32>
    %2493 = vector.broadcast %cst_1138 : f32 to vector<8x2xf32>
    %2494 = arith.select %2491, %2492, %2493 : vector<8x2xi1>, vector<8x2xf32>
    %c8_i32_1139 = arith.constant 8 : i32
    %2495 = arith.muli %c43_i32_1131, %c8_i32_1139 : i32
    %cst_1140 = arith.constant 0.904837429 : f32
    %2496 = vector.broadcast %cst_1140 : f32 to vector<8x2xf32>
    %2497 = arith.mulf %2496, %2474 : vector<8x2xf32>
    %2498 = arith.index_cast %2495 : i32 to index
    %c0_1141 = arith.constant 0 : index
    %2499 = vector.load %arg7[%2498, %c0_1141] : memref<400x2xf32, #tpu.memory_space<vmem>>, vector<8x2xf32>
    %2500 = arith.addf %2497, %2499 : vector<8x2xf32>
    %cst_1142 = arith.constant 0.36787945 : f32
    %2501 = vector.broadcast %cst_1142 : f32 to vector<8x2xf32>
    %2502 = arith.mulf %2501, %2477 : vector<8x2xf32>
    %2503 = arith.addf %2502, %2494 : vector<8x2xf32>
    %2504 = arith.addf %2478, %2494 : vector<8x2xf32>
    %c44_i32_1143 = arith.constant 44 : i32
    %2505 = arith.addf %2481, %2500 : vector<8x2xf32>
    %cst_1144 = arith.constant 0.904837429 : f32
    %2506 = vector.broadcast %cst_1144 : f32 to vector<8x2xf32>
    %2507 = arith.mulf %2506, %2505 : vector<8x2xf32>
    %2508 = arith.addf %2484, %2503 : vector<8x2xf32>
    %cst_1145 = arith.constant 0.36787945 : f32
    %2509 = vector.broadcast %cst_1145 : f32 to vector<8x2xf32>
    %2510 = arith.mulf %2509, %2508 : vector<8x2xf32>
    %cst_1146 = arith.constant 0.271828175 : f32
    %2511 = vector.broadcast %cst_1146 : f32 to vector<8x2xf32>
    %2512 = arith.mulf %2511, %2507 : vector<8x2xf32>
    %cst_1147 = arith.constant -54.3656349 : f32
    %2513 = vector.broadcast %cst_1147 : f32 to vector<8x2xf32>
    %2514 = arith.mulf %2513, %2510 : vector<8x2xf32>
    %2515 = arith.addf %2512, %2514 : vector<8x2xf32>
    %cst_1148 = arith.constant 1.000000e+01 : f32
    %2516 = vector.broadcast %cst_1148 : f32 to vector<8x2xf32>
    %2517 = arith.cmpf oge, %2515, %2516 : vector<8x2xf32>
    %cst_1149 = arith.constant 1.000000e+00 : f32
    %cst_1150 = arith.constant 0.000000e+00 : f32
    %2518 = vector.broadcast %cst_1149 : f32 to vector<8x2xf32>
    %2519 = vector.broadcast %cst_1150 : f32 to vector<8x2xf32>
    %2520 = arith.select %2517, %2518, %2519 : vector<8x2xi1>, vector<8x2xf32>
    %c8_i32_1151 = arith.constant 8 : i32
    %2521 = arith.muli %c44_i32_1143, %c8_i32_1151 : i32
    %cst_1152 = arith.constant 0.904837429 : f32
    %2522 = vector.broadcast %cst_1152 : f32 to vector<8x2xf32>
    %2523 = arith.mulf %2522, %2500 : vector<8x2xf32>
    %2524 = arith.index_cast %2521 : i32 to index
    %c0_1153 = arith.constant 0 : index
    %2525 = vector.load %arg7[%2524, %c0_1153] : memref<400x2xf32, #tpu.memory_space<vmem>>, vector<8x2xf32>
    %2526 = arith.addf %2523, %2525 : vector<8x2xf32>
    %cst_1154 = arith.constant 0.36787945 : f32
    %2527 = vector.broadcast %cst_1154 : f32 to vector<8x2xf32>
    %2528 = arith.mulf %2527, %2503 : vector<8x2xf32>
    %2529 = arith.addf %2528, %2520 : vector<8x2xf32>
    %2530 = arith.addf %2504, %2520 : vector<8x2xf32>
    %c45_i32_1155 = arith.constant 45 : i32
    %2531 = arith.addf %2507, %2526 : vector<8x2xf32>
    %cst_1156 = arith.constant 0.904837429 : f32
    %2532 = vector.broadcast %cst_1156 : f32 to vector<8x2xf32>
    %2533 = arith.mulf %2532, %2531 : vector<8x2xf32>
    %2534 = arith.addf %2510, %2529 : vector<8x2xf32>
    %cst_1157 = arith.constant 0.36787945 : f32
    %2535 = vector.broadcast %cst_1157 : f32 to vector<8x2xf32>
    %2536 = arith.mulf %2535, %2534 : vector<8x2xf32>
    %cst_1158 = arith.constant 0.271828175 : f32
    %2537 = vector.broadcast %cst_1158 : f32 to vector<8x2xf32>
    %2538 = arith.mulf %2537, %2533 : vector<8x2xf32>
    %cst_1159 = arith.constant -54.3656349 : f32
    %2539 = vector.broadcast %cst_1159 : f32 to vector<8x2xf32>
    %2540 = arith.mulf %2539, %2536 : vector<8x2xf32>
    %2541 = arith.addf %2538, %2540 : vector<8x2xf32>
    %cst_1160 = arith.constant 1.000000e+01 : f32
    %2542 = vector.broadcast %cst_1160 : f32 to vector<8x2xf32>
    %2543 = arith.cmpf oge, %2541, %2542 : vector<8x2xf32>
    %cst_1161 = arith.constant 1.000000e+00 : f32
    %cst_1162 = arith.constant 0.000000e+00 : f32
    %2544 = vector.broadcast %cst_1161 : f32 to vector<8x2xf32>
    %2545 = vector.broadcast %cst_1162 : f32 to vector<8x2xf32>
    %2546 = arith.select %2543, %2544, %2545 : vector<8x2xi1>, vector<8x2xf32>
    %c8_i32_1163 = arith.constant 8 : i32
    %2547 = arith.muli %c45_i32_1155, %c8_i32_1163 : i32
    %cst_1164 = arith.constant 0.904837429 : f32
    %2548 = vector.broadcast %cst_1164 : f32 to vector<8x2xf32>
    %2549 = arith.mulf %2548, %2526 : vector<8x2xf32>
    %2550 = arith.index_cast %2547 : i32 to index
    %c0_1165 = arith.constant 0 : index
    %2551 = vector.load %arg7[%2550, %c0_1165] : memref<400x2xf32, #tpu.memory_space<vmem>>, vector<8x2xf32>
    %2552 = arith.addf %2549, %2551 : vector<8x2xf32>
    %cst_1166 = arith.constant 0.36787945 : f32
    %2553 = vector.broadcast %cst_1166 : f32 to vector<8x2xf32>
    %2554 = arith.mulf %2553, %2529 : vector<8x2xf32>
    %2555 = arith.addf %2554, %2546 : vector<8x2xf32>
    %2556 = arith.addf %2530, %2546 : vector<8x2xf32>
    %c46_i32_1167 = arith.constant 46 : i32
    %2557 = arith.addf %2533, %2552 : vector<8x2xf32>
    %cst_1168 = arith.constant 0.904837429 : f32
    %2558 = vector.broadcast %cst_1168 : f32 to vector<8x2xf32>
    %2559 = arith.mulf %2558, %2557 : vector<8x2xf32>
    %2560 = arith.addf %2536, %2555 : vector<8x2xf32>
    %cst_1169 = arith.constant 0.36787945 : f32
    %2561 = vector.broadcast %cst_1169 : f32 to vector<8x2xf32>
    %2562 = arith.mulf %2561, %2560 : vector<8x2xf32>
    %cst_1170 = arith.constant 0.271828175 : f32
    %2563 = vector.broadcast %cst_1170 : f32 to vector<8x2xf32>
    %2564 = arith.mulf %2563, %2559 : vector<8x2xf32>
    %cst_1171 = arith.constant -54.3656349 : f32
    %2565 = vector.broadcast %cst_1171 : f32 to vector<8x2xf32>
    %2566 = arith.mulf %2565, %2562 : vector<8x2xf32>
    %2567 = arith.addf %2564, %2566 : vector<8x2xf32>
    %cst_1172 = arith.constant 1.000000e+01 : f32
    %2568 = vector.broadcast %cst_1172 : f32 to vector<8x2xf32>
    %2569 = arith.cmpf oge, %2567, %2568 : vector<8x2xf32>
    %cst_1173 = arith.constant 1.000000e+00 : f32
    %cst_1174 = arith.constant 0.000000e+00 : f32
    %2570 = vector.broadcast %cst_1173 : f32 to vector<8x2xf32>
    %2571 = vector.broadcast %cst_1174 : f32 to vector<8x2xf32>
    %2572 = arith.select %2569, %2570, %2571 : vector<8x2xi1>, vector<8x2xf32>
    %c8_i32_1175 = arith.constant 8 : i32
    %2573 = arith.muli %c46_i32_1167, %c8_i32_1175 : i32
    %cst_1176 = arith.constant 0.904837429 : f32
    %2574 = vector.broadcast %cst_1176 : f32 to vector<8x2xf32>
    %2575 = arith.mulf %2574, %2552 : vector<8x2xf32>
    %2576 = arith.index_cast %2573 : i32 to index
    %c0_1177 = arith.constant 0 : index
    %2577 = vector.load %arg7[%2576, %c0_1177] : memref<400x2xf32, #tpu.memory_space<vmem>>, vector<8x2xf32>
    %2578 = arith.addf %2575, %2577 : vector<8x2xf32>
    %cst_1178 = arith.constant 0.36787945 : f32
    %2579 = vector.broadcast %cst_1178 : f32 to vector<8x2xf32>
    %2580 = arith.mulf %2579, %2555 : vector<8x2xf32>
    %2581 = arith.addf %2580, %2572 : vector<8x2xf32>
    %2582 = arith.addf %2556, %2572 : vector<8x2xf32>
    %c47_i32_1179 = arith.constant 47 : i32
    %2583 = arith.addf %2559, %2578 : vector<8x2xf32>
    %cst_1180 = arith.constant 0.904837429 : f32
    %2584 = vector.broadcast %cst_1180 : f32 to vector<8x2xf32>
    %2585 = arith.mulf %2584, %2583 : vector<8x2xf32>
    %2586 = arith.addf %2562, %2581 : vector<8x2xf32>
    %cst_1181 = arith.constant 0.36787945 : f32
    %2587 = vector.broadcast %cst_1181 : f32 to vector<8x2xf32>
    %2588 = arith.mulf %2587, %2586 : vector<8x2xf32>
    %cst_1182 = arith.constant 0.271828175 : f32
    %2589 = vector.broadcast %cst_1182 : f32 to vector<8x2xf32>
    %2590 = arith.mulf %2589, %2585 : vector<8x2xf32>
    %cst_1183 = arith.constant -54.3656349 : f32
    %2591 = vector.broadcast %cst_1183 : f32 to vector<8x2xf32>
    %2592 = arith.mulf %2591, %2588 : vector<8x2xf32>
    %2593 = arith.addf %2590, %2592 : vector<8x2xf32>
    %cst_1184 = arith.constant 1.000000e+01 : f32
    %2594 = vector.broadcast %cst_1184 : f32 to vector<8x2xf32>
    %2595 = arith.cmpf oge, %2593, %2594 : vector<8x2xf32>
    %cst_1185 = arith.constant 1.000000e+00 : f32
    %cst_1186 = arith.constant 0.000000e+00 : f32
    %2596 = vector.broadcast %cst_1185 : f32 to vector<8x2xf32>
    %2597 = vector.broadcast %cst_1186 : f32 to vector<8x2xf32>
    %2598 = arith.select %2595, %2596, %2597 : vector<8x2xi1>, vector<8x2xf32>
    %c8_i32_1187 = arith.constant 8 : i32
    %2599 = arith.muli %c47_i32_1179, %c8_i32_1187 : i32
    %cst_1188 = arith.constant 0.904837429 : f32
    %2600 = vector.broadcast %cst_1188 : f32 to vector<8x2xf32>
    %2601 = arith.mulf %2600, %2578 : vector<8x2xf32>
    %2602 = arith.index_cast %2599 : i32 to index
    %c0_1189 = arith.constant 0 : index
    %2603 = vector.load %arg7[%2602, %c0_1189] : memref<400x2xf32, #tpu.memory_space<vmem>>, vector<8x2xf32>
    %2604 = arith.addf %2601, %2603 : vector<8x2xf32>
    %cst_1190 = arith.constant 0.36787945 : f32
    %2605 = vector.broadcast %cst_1190 : f32 to vector<8x2xf32>
    %2606 = arith.mulf %2605, %2581 : vector<8x2xf32>
    %2607 = arith.addf %2606, %2598 : vector<8x2xf32>
    %2608 = arith.addf %2582, %2598 : vector<8x2xf32>
    %c48_i32_1191 = arith.constant 48 : i32
    %2609 = arith.addf %2585, %2604 : vector<8x2xf32>
    %cst_1192 = arith.constant 0.904837429 : f32
    %2610 = vector.broadcast %cst_1192 : f32 to vector<8x2xf32>
    %2611 = arith.mulf %2610, %2609 : vector<8x2xf32>
    %2612 = arith.addf %2588, %2607 : vector<8x2xf32>
    %cst_1193 = arith.constant 0.36787945 : f32
    %2613 = vector.broadcast %cst_1193 : f32 to vector<8x2xf32>
    %2614 = arith.mulf %2613, %2612 : vector<8x2xf32>
    %cst_1194 = arith.constant 0.271828175 : f32
    %2615 = vector.broadcast %cst_1194 : f32 to vector<8x2xf32>
    %2616 = arith.mulf %2615, %2611 : vector<8x2xf32>
    %cst_1195 = arith.constant -54.3656349 : f32
    %2617 = vector.broadcast %cst_1195 : f32 to vector<8x2xf32>
    %2618 = arith.mulf %2617, %2614 : vector<8x2xf32>
    %2619 = arith.addf %2616, %2618 : vector<8x2xf32>
    %cst_1196 = arith.constant 1.000000e+01 : f32
    %2620 = vector.broadcast %cst_1196 : f32 to vector<8x2xf32>
    %2621 = arith.cmpf oge, %2619, %2620 : vector<8x2xf32>
    %cst_1197 = arith.constant 1.000000e+00 : f32
    %cst_1198 = arith.constant 0.000000e+00 : f32
    %2622 = vector.broadcast %cst_1197 : f32 to vector<8x2xf32>
    %2623 = vector.broadcast %cst_1198 : f32 to vector<8x2xf32>
    %2624 = arith.select %2621, %2622, %2623 : vector<8x2xi1>, vector<8x2xf32>
    %c8_i32_1199 = arith.constant 8 : i32
    %2625 = arith.muli %c48_i32_1191, %c8_i32_1199 : i32
    %cst_1200 = arith.constant 0.904837429 : f32
    %2626 = vector.broadcast %cst_1200 : f32 to vector<8x2xf32>
    %2627 = arith.mulf %2626, %2604 : vector<8x2xf32>
    %2628 = arith.index_cast %2625 : i32 to index
    %c0_1201 = arith.constant 0 : index
    %2629 = vector.load %arg7[%2628, %c0_1201] : memref<400x2xf32, #tpu.memory_space<vmem>>, vector<8x2xf32>
    %2630 = arith.addf %2627, %2629 : vector<8x2xf32>
    %cst_1202 = arith.constant 0.36787945 : f32
    %2631 = vector.broadcast %cst_1202 : f32 to vector<8x2xf32>
    %2632 = arith.mulf %2631, %2607 : vector<8x2xf32>
    %2633 = arith.addf %2632, %2624 : vector<8x2xf32>
    %2634 = arith.addf %2608, %2624 : vector<8x2xf32>
    %c49_i32_1203 = arith.constant 49 : i32
    %2635 = arith.addf %2611, %2630 : vector<8x2xf32>
    %cst_1204 = arith.constant 0.904837429 : f32
    %2636 = vector.broadcast %cst_1204 : f32 to vector<8x2xf32>
    %2637 = arith.mulf %2636, %2635 : vector<8x2xf32>
    %2638 = arith.addf %2614, %2633 : vector<8x2xf32>
    %cst_1205 = arith.constant 0.36787945 : f32
    %2639 = vector.broadcast %cst_1205 : f32 to vector<8x2xf32>
    %2640 = arith.mulf %2639, %2638 : vector<8x2xf32>
    %cst_1206 = arith.constant 0.271828175 : f32
    %2641 = vector.broadcast %cst_1206 : f32 to vector<8x2xf32>
    %2642 = arith.mulf %2641, %2637 : vector<8x2xf32>
    %cst_1207 = arith.constant -54.3656349 : f32
    %2643 = vector.broadcast %cst_1207 : f32 to vector<8x2xf32>
    %2644 = arith.mulf %2643, %2640 : vector<8x2xf32>
    %2645 = arith.addf %2642, %2644 : vector<8x2xf32>
    %cst_1208 = arith.constant 1.000000e+01 : f32
    %2646 = vector.broadcast %cst_1208 : f32 to vector<8x2xf32>
    %2647 = arith.cmpf oge, %2645, %2646 : vector<8x2xf32>
    %cst_1209 = arith.constant 1.000000e+00 : f32
    %cst_1210 = arith.constant 0.000000e+00 : f32
    %2648 = vector.broadcast %cst_1209 : f32 to vector<8x2xf32>
    %2649 = vector.broadcast %cst_1210 : f32 to vector<8x2xf32>
    %2650 = arith.select %2647, %2648, %2649 : vector<8x2xi1>, vector<8x2xf32>
    %c8_i32_1211 = arith.constant 8 : i32
    %2651 = arith.muli %c49_i32_1203, %c8_i32_1211 : i32
    %cst_1212 = arith.constant 0.904837429 : f32
    %2652 = vector.broadcast %cst_1212 : f32 to vector<8x2xf32>
    %2653 = arith.mulf %2652, %2630 : vector<8x2xf32>
    %2654 = arith.index_cast %2651 : i32 to index
    %c0_1213 = arith.constant 0 : index
    %2655 = vector.load %arg7[%2654, %c0_1213] : memref<400x2xf32, #tpu.memory_space<vmem>>, vector<8x2xf32>
    %2656 = arith.addf %2653, %2655 : vector<8x2xf32>
    %cst_1214 = arith.constant 0.36787945 : f32
    %2657 = vector.broadcast %cst_1214 : f32 to vector<8x2xf32>
    %2658 = arith.mulf %2657, %2633 : vector<8x2xf32>
    %2659 = arith.addf %2658, %2650 : vector<8x2xf32>
    %2660 = arith.addf %2634, %2650 : vector<8x2xf32>
    %c50_i32_1215 = arith.constant 50 : i32
    %c0_1216 = arith.constant 0 : index
    %c0_1217 = arith.constant 0 : index
    %2661 = vector.load %arg4[%c0_1216, %c0_1217] : memref<8x2xf32, #tpu.memory_space<vmem>>, vector<8x2xf32>
    tpu.vector_store %arg4[%c0_1216, %c0_1217], %2660 {strides = array<i32>} : memref<8x2xf32, #tpu.memory_space<vmem>>, vector<8x2xf32>,
    return
  }
  func.func @transform_0(%arg0: i32) -> (i32, i32, i32) {
    %c0_i32 = arith.constant 0 : i32
    %c0_i32_0 = arith.constant 0 : i32
    %c0_i32_1 = arith.constant 0 : i32
    return %arg0, %c0_i32, %c0_i32_0 : i32, i32, i32
  }
  func.func @transform_1(%arg0: i32) -> (i32, i32) {
    %c0_i32 = arith.constant 0 : i32
    %c0_i32_0 = arith.constant 0 : i32
    %c0_i32_1 = arith.constant 0 : i32
    return %c0_i32, %c0_i32_0 : i32, i32
  }
  func.func @transform_2(%arg0: i32) -> (i32, i32) {
    %c0_i32 = arith.constant 0 : i32
    %c0_i32_0 = arith.constant 0 : i32
    %c0_i32_1 = arith.constant 0 : i32
    return %c0_i32, %c0_i32_0 : i32, i32
  }
  func.func @transform_3(%arg0: i32) -> (i32, i32) {
    %c0_i32 = arith.constant 0 : i32
    %c0_i32_0 = arith.constant 0 : i32
    return %arg0, %c0_i32 : i32, i32
  }
}

</mosaic_0001>

<llo_original>
// kernel: tpu_custom_call.1
$region0: #{tpu_custom_call.1}
  #allocation0 [shape = 'u32[]', space=smem, size = 0x4, offset = 0x4, fixed_abs, tag = 'smem constant byte address 0x4 - core index']
  #allocation1 [shape = 'u32[144,128]{1,0:T(1,128)}', space=vmem, size = 0x12000, scoped, tag = 'internal scratch']
  #allocation2 [shape = 'f32[400,50]{1,0:T(8,128)}', space=vmem, size = 0x32000, scoped, tag = 'scratch operand']
  #allocation3 [shape = 'f32[400,50]{1,0:T(8,128)}', space=vmem, size = 0x32000, scoped, tag = 'scratch operand']
  #allocation4 [shape = 'f32[400,2]{1,0:T(8,128)}', space=vmem, size = 0x32000, scoped, tag = 'scratch operand']
  %s0 = inlined_call_operand.hbm [shape: bf16[2,400,768], index: 0, kind: input, shape index: {}]
  %s1 = inlined_call_operand.vmem [shape: bf16[768,50], index: 1, kind: input, shape index: {}]
  %s2 = inlined_call_operand.vmem [shape: f32[50,2], index: 2, kind: input, shape index: {}]
  %s3 = inlined_call_operand.vmem [shape: f32[16,2], index: 3, kind: output, shape index: {}]
  %s4 = sld [smem:[#allocation0]]
  $region49: #{tpu_custom_call.1} parent=0
    _
  %s6 = ssub.s32 1, %s4
  %s7 = scalar_select 0, %s6, %s4
  $region1: #{tpu_custom_call.1} parent=0
    #allocation5 [shape = 'u8[1228800]{0}', space=vmem, size = 0x12c000, scoped, tag = 'input window, operand 0']
    #allocation6 [shape = 's32[2]{0}', space=sflag, size = 0x8, scoped, tag = 'scoped memory for tpu_custom_call.1']
    %8 = vsyncpa [#allocation6], 0
    %s9 = scalar_lea.sflag [#allocation6], 1
    %10 = vsyncpa %s9, 0
    loop: start=0, step=1, limit=4
    $region2: #{tpu_custom_call.1} parent=1 // loop_pre_header
      _
    $region3: #{tpu_custom_call.1} parent=1 // loop_header
      %s12 = sphi 0, %s16
      %p13 = scmp.ge.s32.totalorder %s12, 4
      %s22 = sphi 0, %s24
      %s25 = sphi 0, %s22
      %s26 = sphi 0, %s25
      %s42 = sphi 0, %s26
      %s46 = sphi 0, %s46
      %s48 = sphi 0, %s46
      %s49 = sphi 0, %s48
      %s63 = sphi 0, %s49
      %s67 = sphi 0, %s67
      %s69 = sphi 0, %s67
      %s70 = sphi 0, %s69
      %s84 = sphi 0, %s70
      %s90 = sphi 0, %s92
      %s93 = sphi 0, %s90
      %s94 = sphi 0, %s93
      %s110 = sphi 0, %s94
    $region4: #{tpu_custom_call.1} parent=1 // loop_header_branch
      %15 = sbr.rel (%p13) target = $region8
    $region5: #{tpu_custom_call.1} parent=1 // loop_body
      %s17 = ssub.s32 %s12, 1
      %s18 = ssub.s32 %s12, 2
      %s19 = sadd.s32 %s12, 1
      %s20 = ssub.s32 %s12, %s19
      %p21 = scmp.eq.s32.totalorder %s20, 0
      %s23 = sadd.s32 %s22, 1
      %s24 = scalar_select %p21, %s22, %s23
      %p27 = pneg %p21
      %p28 = scmp.eq.s32.totalorder %s12, 1
      %p29 = por %p27, %p28
      %p30 = scmp.ne.s32.totalorder %s22, %s25
      %p31 = scmp.eq.s32.totalorder %s12, 0
      %p32 = por %p30, %p31
      %p33 = scmp.ne.s32.totalorder %s22, %s25
      %p34 = scmp.eq.s32.totalorder %s17, 1
      %p35 = por %p33, %p34
      %p36 = scmp.ne.s32.totalorder %s25, %s26
      %p37 = scmp.eq.s32.totalorder %s17, 0
      %p38 = por %p36, %p37
      %p39 = scmp.ne.s32.totalorder %s25, %s26
      %p40 = scmp.eq.s32.totalorder %s18, 1
      %p41 = por %p39, %p40
      %p43 = scmp.ne.s32.totalorder %s26, %s42
      %p44 = scmp.eq.s32.totalorder %s18, 0
      %p45 = por %p43, %p44
      %s47 = sadd.s32 %s46, 1
      %p50 = scmp.eq.s32.totalorder %s12, 1
      %p51 = scmp.ne.s32.totalorder %s46, %s48
      %p52 = scmp.eq.s32.totalorder %s12, 0
      %p53 = por %p51, %p52
      %p54 = scmp.ne.s32.totalorder %s46, %s48
      %p55 = scmp.eq.s32.totalorder %s17, 1
      %p56 = por %p54, %p55
      %p57 = scmp.ne.s32.totalorder %s48, %s49
      %p58 = scmp.eq.s32.totalorder %s17, 0
      %p59 = por %p57, %p58
      %p60 = scmp.ne.s32.totalorder %s48, %s49
      %p61 = scmp.eq.s32.totalorder %s18, 1
      %p62 = por %p60, %p61
      %p64 = scmp.ne.s32.totalorder %s49, %s63
      %p65 = scmp.eq.s32.totalorder %s18, 0
      %p66 = por %p64, %p65
      %s68 = sadd.s32 %s67, 1
      %p71 = scmp.eq.s32.totalorder %s12, 1
      %p72 = scmp.ne.s32.totalorder %s67, %s69
      %p73 = scmp.eq.s32.totalorder %s12, 0
      %p74 = por %p72, %p73
      %p75 = scmp.ne.s32.totalorder %s67, %s69
      %p76 = scmp.eq.s32.totalorder %s17, 1
      %p77 = por %p75, %p76
      %p78 = scmp.ne.s32.totalorder %s69, %s70
      %p79 = scmp.eq.s32.totalorder %s17, 0
      %p80 = por %p78, %p79
      %p81 = scmp.ne.s32.totalorder %s69, %s70
      %p82 = scmp.eq.s32.totalorder %s18, 1
      %p83 = por %p81, %p82
      %p85 = scmp.ne.s32.totalorder %s70, %s84
      %p86 = scmp.eq.s32.totalorder %s18, 0
      %p87 = por %p85, %p86
      %s88 = ssub.s32 %s12, %s19
      %p89 = scmp.eq.s32.totalorder %s88, 0
      %s91 = sadd.s32 %s90, 1
      %s92 = scalar_select %p89, %s90, %s91
      %p95 = pneg %p89
      %p96 = scmp.eq.s32.totalorder %s12, 1
      %p97 = por %p95, %p96
      %p98 = scmp.ne.s32.totalorder %s90, %s93
      %p99 = scmp.eq.s32.totalorder %s12, 0
      %p100 = por %p98, %p99
      %p101 = scmp.ne.s32.totalorder %s90, %s93
      %p102 = scmp.eq.s32.totalorder %s17, 1
      %p103 = por %p101, %p102
      %p104 = scmp.ne.s32.totalorder %s93, %s94
      %p105 = scmp.eq.s32.totalorder %s17, 0
      %p106 = por %p104, %p105
      %p107 = scmp.ne.s32.totalorder %s93, %s94
      %p108 = scmp.eq.s32.totalorder %s18, 1
      %p109 = por %p107, %p108
      %p111 = scmp.ne.s32.totalorder %s94, %s110
      %p112 = scmp.eq.s32.totalorder %s18, 0
      %p113 = por %p111, %p112
      %p114 = scmp.le.s32.totalorder 1, %s12
      %p115 = scmp.lt.s32.totalorder %s12, 3
      %p116 = pnand %p114, %p115
      %p117 = pneg %p116
      // Predicated region
      $region9: #{tpu_custom_call.1} parent=5 // pred_check
        _
      $region10: #{tpu_custom_call.1} parent=5 // pred_check_branch
        %119 = sbr.rel (%p116) target = $region12
      $region11: #{tpu_custom_call.1} parent=5 // pred_region
        %s120 = ssub.s32 %s12, 1
        // Predicated region
        $region13: #{tpu_custom_call.1} parent=11 // pred_check
          %p121 = pneg %p59
        $region14: #{tpu_custom_call.1} parent=11 // pred_check_branch
          %123 = sbr.rel (%p121) target = $region16
        $region15: #{tpu_custom_call.1} parent=11 // pred_region
          _
        $region16: #{tpu_custom_call.1} parent=11 // pred_fallthru
          _
        // Predicated region
        $region17: #{tpu_custom_call.1} parent=11 // pred_check
          %p124 = pneg %p80
        $region18: #{tpu_custom_call.1} parent=11 // pred_check_branch
          %126 = sbr.rel (%p124) target = $region20
        $region19: #{tpu_custom_call.1} parent=11 // pred_region
          _
        $region20: #{tpu_custom_call.1} parent=11 // pred_fallthru
          _
      $region12: #{tpu_custom_call.1} parent=5 // pred_fallthru
        _
      %p127 = scmp.lt.s32.totalorder %s12, 2
      // Predicated region
      $region21: #{tpu_custom_call.1} parent=5 // pred_check
        %p128 = pneg %p127
      $region22: #{tpu_custom_call.1} parent=5 // pred_check_branch
        %130 = sbr.rel (%p128) target = $region24
      $region23: #{tpu_custom_call.1} parent=5 // pred_region
        // Predicated region
        $region25: #{tpu_custom_call.1} parent=23 // pred_check
          %p131 = pneg %p32
        $region26: #{tpu_custom_call.1} parent=23 // pred_check_branch
          %133 = sbr.rel (%p131) target = $region28
        $region27: #{tpu_custom_call.1} parent=23 // pred_region
          %s134 = sand.u32 %s22, 1
          %s135 = scalar_lea.sflag [#allocation6], %s134
          %s136 = sand.u32 %s22, 1
          %s137 = smul.addr %s136, 1200
          %s138 = scalar_lea.vmem [#allocation5], %s137
          %s140 = ssub.s32 19200, 19200
          %141 = vsyncadd %s135, %s140
          %s142 = smul.addr %s12, 300
          %s143 = smul.addr %s142, 64
          %s144 = scalar_lea.hbm %s0, %s143
          %s145 = sshll.u32 %s138, 4
          %s146 = int_to_ptr.vmem [resolvable:$true] %s145
          %151 = dma.hbm_to_vmem [thread:$0]  %s144, 19200, %s146, %s135, 384, 384, 24
        $region28: #{tpu_custom_call.1} parent=23 // pred_fallthru
          _
      $region24: #{tpu_custom_call.1} parent=5 // pred_fallthru
        _
      %p152 = scmp.le.s32.totalorder 1, %s12
      %p153 = scmp.lt.s32.totalorder %s12, 3
      %p154 = pnand %p152, %p153
      %p155 = pneg %p154
      // Predicated region
      $region29: #{tpu_custom_call.1} parent=5 // pred_check
        _
      $region30: #{tpu_custom_call.1} parent=5 // pred_check_branch
        %157 = sbr.rel (%p154) target = $region32
      $region31: #{tpu_custom_call.1} parent=5 // pred_region
        %s158 = ssub.s32 %s12, 1
        %s159 = sand.u32 %s25, 1
        %s160 = scalar_lea.sflag [#allocation6], %s159
        %s161 = sand.u32 %s25, 1
        %s162 = smul.addr %s161, 1200
        %s163 = scalar_lea.vmem [#allocation5], %s162
        // Predicated region
        $region33: #{tpu_custom_call.1} parent=31 // pred_check
          %p164 = pneg %p38
        $region34: #{tpu_custom_call.1} parent=31 // pred_check_branch
          %166 = sbr.rel (%p164) target = $region36
        $region35: #{tpu_custom_call.1} parent=31 // pred_region
          %167 = dma.done %s160, 19200
        $region36: #{tpu_custom_call.1} parent=31 // pred_fallthru
          _
        %s168 = sand.u32 %s25, 1
        %s169 = scalar_lea.sflag [#allocation6], %s168
        %s170 = sand.u32 %s25, 1
        %s171 = smul.addr %s170, 1200
        %s172 = scalar_lea.vmem [#allocation5], %s171
        %p173 = pneg %p38
        %p174 = pneg %p35
        %p175 = pneg %p59
        %p176 = pneg %p56
        %p177 = pneg %p80
        %p178 = pneg %p77
        %p179 = pneg %p106
        %p180 = pneg %p103
        %p181 = scmp.lt.s32.totalorder %s17, 1
        %s182 = scalar_select %p181, %s17, 1
        %s183 = smul.addr %s182, 8
        %s184 = scalar_lea.vmem %s3, %s183
        %p185 = scmp.lt.s32.totalorder %s17, 1
        %s186 = scalar_select %p185, %s17, 1
        %s187 = smul.addr %s186, 8
        %s188 = scalar_lea.vmem %s3, %s187
        %v190 = vld [vmem:[%s163] sm:$0xff]
        %v191 = vld [vmem:[%s163 + $0x8] sm:$0xff]
        %v192 = vld [vmem:[%s163 + $0x10] sm:$0xff]
        %v193 = vld [vmem:[%s163 + $0x18] sm:$0xff]
        %v194 = vld [vmem:[%s163 + $0x20] sm:$0xff]
        %v195 = vld [vmem:[%s163 + $0x28] sm:$0xff]
        %v196 = vld [vmem:[%s163 + $0x30] sm:$0xff]
        %v197 = vld [vmem:[%s163 + $0x38] sm:$0xff]
        %v198 = vld [vmem:[%s163 + $0x40] sm:$0xff]
        %v199 = vld [vmem:[%s163 + $0x48] sm:$0xff]
        %v200 = vld [vmem:[%s163 + $0x50] sm:$0xff]
        %v201 = vld [vmem:[%s163 + $0x58] sm:$0xff]
        %v202 = vld [vmem:[%s163 + $0x60] sm:$0xff]
        %v203 = vld [vmem:[%s163 + $0x68] sm:$0xff]
        %v204 = vld [vmem:[%s163 + $0x70] sm:$0xff]
        %v205 = vld [vmem:[%s163 + $0x78] sm:$0xff]
        %v206 = vld [vmem:[%s163 + $0x80] sm:$0xff]
        %v207 = vld [vmem:[%s163 + $0x88] sm:$0xff]
        %v208 = vld [vmem:[%s163 + $0x90] sm:$0xff]
        %v209 = vld [vmem:[%s163 + $0x98] sm:$0xff]
        %v210 = vld [vmem:[%s163 + $0xa0] sm:$0xff]
        %v211 = vld [vmem:[%s163 + $0xa8] sm:$0xff]
        %v212 = vld [vmem:[%s163 + $0xb0] sm:$0xff]
        %v213 = vld [vmem:[%s163 + $0xb8] sm:$0xff]
        %v214 = vld [vmem:[%s163 + $0xc0] sm:$0xff]
        %v215 = vld [vmem:[%s163 + $0xc8] sm:$0xff]
        %v216 = vld [vmem:[%s163 + $0xd0] sm:$0xff]
        %v217 = vld [vmem:[%s163 + $0xd8] sm:$0xff]
        %v218 = vld [vmem:[%s163 + $0xe0] sm:$0xff]
        %v219 = vld [vmem:[%s163 + $0xe8] sm:$0xff]
        %v220 = vld [vmem:[%s163 + $0xf0] sm:$0xff]
        %v221 = vld [vmem:[%s163 + $0xf8] sm:$0xff]
        %v222 = vld [vmem:[%s163 + $0x100] sm:$0xff]
        %v223 = vld [vmem:[%s163 + $0x108] sm:$0xff]
        %v224 = vld [vmem:[%s163 + $0x110] sm:$0xff]
        %v225 = vld [vmem:[%s163 + $0x118] sm:$0xff]
        %v226 = vld [vmem:[%s163 + $0x120] sm:$0xff]
        %v227 = vld [vmem:[%s163 + $0x128] sm:$0xff]
        %v228 = vld [vmem:[%s163 + $0x130] sm:$0xff]
        %v229 = vld [vmem:[%s163 + $0x138] sm:$0xff]
        %v230 = vld [vmem:[%s163 + $0x140] sm:$0xff]
        %v231 = vld [vmem:[%s163 + $0x148] sm:$0xff]
        %v232 = vld [vmem:[%s163 + $0x150] sm:$0xff]
        %v233 = vld [vmem:[%s163 + $0x158] sm:$0xff]
        %v234 = vld [vmem:[%s163 + $0x160] sm:$0xff]
        %v235 = vld [vmem:[%s163 + $0x168] sm:$0xff]
        %v236 = vld [vmem:[%s163 + $0x170] sm:$0xff]
        %v237 = vld [vmem:[%s163 + $0x178] sm:$0xff]
        %v238 = vld [vmem:[%s163 + $0x180] sm:$0xff]
        %v239 = vld [vmem:[%s163 + $0x188] sm:$0xff]
        %v240 = vld [vmem:[%s163 + $0x190] sm:$0xff]
        %v241 = vld [vmem:[%s163 + $0x198] sm:$0xff]
        %v242 = vld [vmem:[%s163 + $0x1a0] sm:$0xff]
        %v243 = vld [vmem:[%s163 + $0x1a8] sm:$0xff]
        %v244 = vld [vmem:[%s163 + $0x1b0] sm:$0xff]
        %v245 = vld [vmem:[%s163 + $0x1b8] sm:$0xff]
        %v246 = vld [vmem:[%s163 + $0x1c0] sm:$0xff]
        %v247 = vld [vmem:[%s163 + $0x1c8] sm:$0xff]
        %v248 = vld [vmem:[%s163 + $0x1d0] sm:$0xff]
        %v249 = vld [vmem:[%s163 + $0x1d8] sm:$0xff]
        %v250 = vld [vmem:[%s163 + $0x1e0] sm:$0xff]
        %v251 = vld [vmem:[%s163 + $0x1e8] sm:$0xff]
        %v252 = vld [vmem:[%s163 + $0x1f0] sm:$0xff]
        %v253 = vld [vmem:[%s163 + $0x1f8] sm:$0xff]
        %v254 = vld [vmem:[%s163 + $0x200] sm:$0xff]
        %v255 = vld [vmem:[%s163 + $0x208] sm:$0xff]
        %v256 = vld [vmem:[%s163 + $0x210] sm:$0xff]
        %v257 = vld [vmem:[%s163 + $0x218] sm:$0xff]
        %v258 = vld [vmem:[%s163 + $0x220] sm:$0xff]
        %v259 = vld [vmem:[%s163 + $0x228] sm:$0xff]
        %v260 = vld [vmem:[%s163 + $0x230] sm:$0xff]
        %v261 = vld [vmem:[%s163 + $0x238] sm:$0xff]
        %v262 = vld [vmem:[%s163 + $0x240] sm:$0xff]
        %v263 = vld [vmem:[%s163 + $0x248] sm:$0xff]
        %v264 = vld [vmem:[%s163 + $0x250] sm:$0xff]
        %v265 = vld [vmem:[%s163 + $0x258] sm:$0xff]
        %v266 = vld [vmem:[%s163 + $0x260] sm:$0xff]
        %v267 = vld [vmem:[%s163 + $0x268] sm:$0xff]
        %v268 = vld [vmem:[%s163 + $0x270] sm:$0xff]
        %v269 = vld [vmem:[%s163 + $0x278] sm:$0xff]
        %v270 = vld [vmem:[%s163 + $0x280] sm:$0xff]
        %v271 = vld [vmem:[%s163 + $0x288] sm:$0xff]
        %v272 = vld [vmem:[%s163 + $0x290] sm:$0xff]
        %v273 = vld [vmem:[%s163 + $0x298] sm:$0xff]
        %v274 = vld [vmem:[%s163 + $0x2a0] sm:$0xff]
        %v275 = vld [vmem:[%s163 + $0x2a8] sm:$0xff]
        %v276 = vld [vmem:[%s163 + $0x2b0] sm:$0xff]
        %v277 = vld [vmem:[%s163 + $0x2b8] sm:$0xff]
        %v278 = vld [vmem:[%s163 + $0x2c0] sm:$0xff]
        %v279 = vld [vmem:[%s163 + $0x2c8] sm:$0xff]
        %v280 = vld [vmem:[%s163 + $0x2d0] sm:$0xff]
        %v281 = vld [vmem:[%s163 + $0x2d8] sm:$0xff]
        %v282 = vld [vmem:[%s163 + $0x2e0] sm:$0xff]
        %v283 = vld [vmem:[%s163 + $0x2e8] sm:$0xff]
        %v284 = vld [vmem:[%s163 + $0x2f0] sm:$0xff]
        %v285 = vld [vmem:[%s163 + $0x2f8] sm:$0xff]
        %v286 = vld [vmem:[%s163 + $0x300] sm:$0xff]
        %v287 = vld [vmem:[%s163 + $0x308] sm:$0xff]
        %v288 = vld [vmem:[%s163 + $0x310] sm:$0xff]
        %v289 = vld [vmem:[%s163 + $0x318] sm:$0xff]
        %v290 = vld [vmem:[%s163 + $0x320] sm:$0xff]
        %v291 = vld [vmem:[%s163 + $0x328] sm:$0xff]
        %v292 = vld [vmem:[%s163 + $0x330] sm:$0xff]
        %v293 = vld [vmem:[%s163 + $0x338] sm:$0xff]
        %v294 = vld [vmem:[%s163 + $0x340] sm:$0xff]
        %v295 = vld [vmem:[%s163 + $0x348] sm:$0xff]
        %v296 = vld [vmem:[%s163 + $0x350] sm:$0xff]
        %v297 = vld [vmem:[%s163 + $0x358] sm:$0xff]
        %v298 = vld [vmem:[%s163 + $0x360] sm:$0xff]
        %v299 = vld [vmem:[%s163 + $0x368] sm:$0xff]
        %v300 = vld [vmem:[%s163 + $0x370] sm:$0xff]
        %v301 = vld [vmem:[%s163 + $0x378] sm:$0xff]
        %v302 = vld [vmem:[%s163 + $0x380] sm:$0xff]
        %v303 = vld [vmem:[%s163 + $0x388] sm:$0xff]
        %v304 = vld [vmem:[%s163 + $0x390] sm:$0xff]
        %v305 = vld [vmem:[%s163 + $0x398] sm:$0xff]
        %v306 = vld [vmem:[%s163 + $0x3a0] sm:$0xff]
        %v307 = vld [vmem:[%s163 + $0x3a8] sm:$0xff]
        %v308 = vld [vmem:[%s163 + $0x3b0] sm:$0xff]
        %v309 = vld [vmem:[%s163 + $0x3b8] sm:$0xff]
        %v310 = vld [vmem:[%s163 + $0x3c0] sm:$0xff]
        %v311 = vld [vmem:[%s163 + $0x3c8] sm:$0xff]
        %v312 = vld [vmem:[%s163 + $0x3d0] sm:$0xff]
        %v313 = vld [vmem:[%s163 + $0x3d8] sm:$0xff]
        %v314 = vld [vmem:[%s163 + $0x3e0] sm:$0xff]
        %v315 = vld [vmem:[%s163 + $0x3e8] sm:$0xff]
        %v316 = vld [vmem:[%s163 + $0x3f0] sm:$0xff]
        %v317 = vld [vmem:[%s163 + $0x3f8] sm:$0xff]
        %v318 = vld [vmem:[%s163 + $0x400] sm:$0xff]
        %v319 = vld [vmem:[%s163 + $0x408] sm:$0xff]
        %v320 = vld [vmem:[%s163 + $0x410] sm:$0xff]
        %v321 = vld [vmem:[%s163 + $0x418] sm:$0xff]
        %v322 = vld [vmem:[%s163 + $0x420] sm:$0xff]
        %v323 = vld [vmem:[%s163 + $0x428] sm:$0xff]
        %v324 = vld [vmem:[%s163 + $0x430] sm:$0xff]
        %v325 = vld [vmem:[%s163 + $0x438] sm:$0xff]
        %v326 = vld [vmem:[%s163 + $0x440] sm:$0xff]
        %v327 = vld [vmem:[%s163 + $0x448] sm:$0xff]
        %v328 = vld [vmem:[%s163 + $0x450] sm:$0xff]
        %v329 = vld [vmem:[%s163 + $0x458] sm:$0xff]
        %v330 = vld [vmem:[%s163 + $0x460] sm:$0xff]
        %v331 = vld [vmem:[%s163 + $0x468] sm:$0xff]
        %v332 = vld [vmem:[%s163 + $0x470] sm:$0xff]
        %v333 = vld [vmem:[%s163 + $0x478] sm:$0xff]
        %v334 = vld [vmem:[%s163 + $0x480] sm:$0xff]
        %v335 = vld [vmem:[%s163 + $0x488] sm:$0xff]
        %v336 = vld [vmem:[%s163 + $0x490] sm:$0xff]
        %v337 = vld [vmem:[%s163 + $0x498] sm:$0xff]
        %v338 = vld [vmem:[%s163 + $0x4a0] sm:$0xff]
        %v339 = vld [vmem:[%s163 + $0x4a8] sm:$0xff]
        %v340 = vld [vmem:[%s1] sm:$0xf]
        %v341 = vld [vmem:[%s1 + $0x4] sm:$0xf]
        %v342 = vld [vmem:[%s1 + $0x8] sm:$0xf]
        %v343 = vld [vmem:[%s1 + $0xc] sm:$0xf]
        %v344 = vld [vmem:[%s1 + $0x10] sm:$0xf]
        %v345 = vld [vmem:[%s1 + $0x14] sm:$0xf]
        %v346 = vld [vmem:[%s1 + $0x18] sm:$0xf]
        %v347 = vld [vmem:[%s1 + $0x1c] sm:$0xf]
        %v348 = vld [vmem:[%s1 + $0x20] sm:$0xf]
        %v349 = vld [vmem:[%s1 + $0x24] sm:$0xf]
        %v350 = vld [vmem:[%s1 + $0x28] sm:$0xf]
        %v351 = vld [vmem:[%s1 + $0x2c] sm:$0xf]
        %v352 = vld [vmem:[%s1 + $0x30] sm:$0xf]
        %v353 = vld [vmem:[%s1 + $0x34] sm:$0xf]
        %v354 = vld [vmem:[%s1 + $0x38] sm:$0xf]
        %v355 = vld [vmem:[%s1 + $0x3c] sm:$0xf]
        %v356 = vld [vmem:[%s1 + $0x40] sm:$0xf]
        %v357 = vld [vmem:[%s1 + $0x44] sm:$0xf]
        %v358 = vld [vmem:[%s1 + $0x48] sm:$0xf]
        %v359 = vld [vmem:[%s1 + $0x4c] sm:$0xf]
        %v360 = vld [vmem:[%s1 + $0x50] sm:$0xf]
        %v361 = vld [vmem:[%s1 + $0x54] sm:$0xf]
        %v362 = vld [vmem:[%s1 + $0x58] sm:$0xf]
        %v363 = vld [vmem:[%s1 + $0x5c] sm:$0xf]
        %v364 = vld [vmem:[%s1 + $0x60] sm:$0xf]
        %v365 = vld [vmem:[%s1 + $0x64] sm:$0xf]
        %v366 = vld [vmem:[%s1 + $0x68] sm:$0xf]
        %v367 = vld [vmem:[%s1 + $0x6c] sm:$0xf]
        %v368 = vld [vmem:[%s1 + $0x70] sm:$0xf]
        %v369 = vld [vmem:[%s1 + $0x74] sm:$0xf]
        %v370 = vld [vmem:[%s1 + $0x78] sm:$0xf]
        %v371 = vld [vmem:[%s1 + $0x7c] sm:$0xf]
        %v372 = vld [vmem:[%s1 + $0x80] sm:$0xf]
        %v373 = vld [vmem:[%s1 + $0x84] sm:$0xf]
        %v374 = vld [vmem:[%s1 + $0x88] sm:$0xf]
        %v375 = vld [vmem:[%s1 + $0x8c] sm:$0xf]
        %v376 = vld [vmem:[%s1 + $0x90] sm:$0xf]
        %v377 = vld [vmem:[%s1 + $0x94] sm:$0xf]
        %v378 = vld [vmem:[%s1 + $0x98] sm:$0xf]
        %v379 = vld [vmem:[%s1 + $0x9c] sm:$0xf]
        %v380 = vld [vmem:[%s1 + $0xa0] sm:$0xf]
        %v381 = vld [vmem:[%s1 + $0xa4] sm:$0xf]
        %v382 = vld [vmem:[%s1 + $0xa8] sm:$0xf]
        %v383 = vld [vmem:[%s1 + $0xac] sm:$0xf]
        %v384 = vld [vmem:[%s1 + $0xb0] sm:$0xf]
        %v385 = vld [vmem:[%s1 + $0xb4] sm:$0xf]
        %v386 = vld [vmem:[%s1 + $0xb8] sm:$0xf]
        %v387 = vld [vmem:[%s1 + $0xbc] sm:$0xf]
        %v388 = vld [vmem:[%s1 + $0xc0] sm:$0xf]
        %v389 = vld [vmem:[%s1 + $0xc4] sm:$0xf]
        %v390 = vld [vmem:[%s1 + $0xc8] sm:$0xf]
        %v391 = vld [vmem:[%s1 + $0xcc] sm:$0xf]
        %v392 = vld [vmem:[%s1 + $0xd0] sm:$0xf]
        %v393 = vld [vmem:[%s1 + $0xd4] sm:$0xf]
        %v394 = vld [vmem:[%s1 + $0xd8] sm:$0xf]
        %v395 = vld [vmem:[%s1 + $0xdc] sm:$0xf]
        %v396 = vld [vmem:[%s1 + $0xe0] sm:$0xf]
        %v397 = vld [vmem:[%s1 + $0xe4] sm:$0xf]
        %v398 = vld [vmem:[%s1 + $0xe8] sm:$0xf]
        %v399 = vld [vmem:[%s1 + $0xec] sm:$0xf]
        %v400 = vld [vmem:[%s1 + $0xf0] sm:$0xf]
        %v401 = vld [vmem:[%s1 + $0xf4] sm:$0xf]
        %v402 = vld [vmem:[%s1 + $0xf8] sm:$0xf]
        %v403 = vld [vmem:[%s1 + $0xfc] sm:$0xf]
        %v404 = vld [vmem:[%s1 + $0x100] sm:$0xf]
        %v405 = vld [vmem:[%s1 + $0x104] sm:$0xf]
        %v406 = vld [vmem:[%s1 + $0x108] sm:$0xf]
        %v407 = vld [vmem:[%s1 + $0x10c] sm:$0xf]
        %v408 = vld [vmem:[%s1 + $0x110] sm:$0xf]
        %v409 = vld [vmem:[%s1 + $0x114] sm:$0xf]
        %v410 = vld [vmem:[%s1 + $0x118] sm:$0xf]
        %v411 = vld [vmem:[%s1 + $0x11c] sm:$0xf]
        %v412 = vld [vmem:[%s1 + $0x120] sm:$0xf]
        %v413 = vld [vmem:[%s1 + $0x124] sm:$0xf]
        %v414 = vld [vmem:[%s1 + $0x128] sm:$0xf]
        %v415 = vld [vmem:[%s1 + $0x12c] sm:$0xf]
        %v416 = vld [vmem:[%s1 + $0x130] sm:$0xf]
        %v417 = vld [vmem:[%s1 + $0x134] sm:$0xf]
        %v418 = vld [vmem:[%s1 + $0x138] sm:$0xf]
        %v419 = vld [vmem:[%s1 + $0x13c] sm:$0xf]
        %v420 = vld [vmem:[%s1 + $0x140] sm:$0xf]
        %v421 = vld [vmem:[%s1 + $0x144] sm:$0xf]
        %v422 = vld [vmem:[%s1 + $0x148] sm:$0xf]
        %v423 = vld [vmem:[%s1 + $0x14c] sm:$0xf]
        %v424 = vld [vmem:[%s1 + $0x150] sm:$0xf]
        %v425 = vld [vmem:[%s1 + $0x154] sm:$0xf]
        %v426 = vld [vmem:[%s1 + $0x158] sm:$0xf]
        %v427 = vld [vmem:[%s1 + $0x15c] sm:$0xf]
        %v428 = vld [vmem:[%s1 + $0x160] sm:$0xf]
        %v429 = vld [vmem:[%s1 + $0x164] sm:$0xf]
        %v430 = vld [vmem:[%s1 + $0x168] sm:$0xf]
        %v431 = vld [vmem:[%s1 + $0x16c] sm:$0xf]
        %v432 = vld [vmem:[%s1 + $0x170] sm:$0xf]
        %v433 = vld [vmem:[%s1 + $0x174] sm:$0xf]
        %v434 = vld [vmem:[%s1 + $0x178] sm:$0xf]
        %v435 = vld [vmem:[%s1 + $0x17c] sm:$0xf]
        %v586 = vunpack.c.l.b16 %v190
        %v587 = vunpack.c.h.b16 %v190
        %v588 = vunpack.c.l.b16 %v191
        %v589 = vunpack.c.h.b16 %v191
        %v590 = vunpack.c.l.b16 %v192
        %v591 = vunpack.c.h.b16 %v192
        %v592 = vunpack.c.l.b16 %v193
        %v593 = vunpack.c.h.b16 %v193
        %v594 = vunpack.c.l.b16 %v194
        %v595 = vunpack.c.h.b16 %v194
        %v596 = vunpack.c.l.b16 %v195
        %v597 = vunpack.c.h.b16 %v195
        %v598 = vunpack.c.l.b16 %v196
        %v599 = vunpack.c.h.b16 %v196
        %v600 = vunpack.c.l.b16 %v197
        %v601 = vunpack.c.h.b16 %v197
        %v602 = vunpack.c.l.b16 %v198
        %v603 = vunpack.c.h.b16 %v198
        %v604 = vunpack.c.l.b16 %v199
        %v605 = vunpack.c.h.b16 %v199
        %v606 = vunpack.c.l.b16 %v200
        %v607 = vunpack.c.h.b16 %v200
        %v608 = vunpack.c.l.b16 %v201
        %v609 = vunpack.c.h.b16 %v201
        %v610 = vunpack.c.l.b16 %v202
        %v611 = vunpack.c.h.b16 %v202
        %v612 = vunpack.c.l.b16 %v203
        %v613 = vunpack.c.h.b16 %v203
        %v614 = vunpack.c.l.b16 %v204
        %v615 = vunpack.c.h.b16 %v204
        %v616 = vunpack.c.l.b16 %v205
        %v617 = vunpack.c.h.b16 %v205
        %v618 = vunpack.c.l.b16 %v206
        %v619 = vunpack.c.h.b16 %v206
        %v620 = vunpack.c.l.b16 %v207
        %v621 = vunpack.c.h.b16 %v207
        %v622 = vunpack.c.l.b16 %v208
        %v623 = vunpack.c.h.b16 %v208
        %v624 = vunpack.c.l.b16 %v209
        %v625 = vunpack.c.h.b16 %v209
        %v626 = vunpack.c.l.b16 %v210
        %v627 = vunpack.c.h.b16 %v210
        %v628 = vunpack.c.l.b16 %v211
        %v629 = vunpack.c.h.b16 %v211
        %v630 = vunpack.c.l.b16 %v212
        %v631 = vunpack.c.h.b16 %v212
        %v632 = vunpack.c.l.b16 %v213
        %v633 = vunpack.c.h.b16 %v213
        %v634 = vunpack.c.l.b16 %v214
        %v635 = vunpack.c.h.b16 %v214
        %v636 = vunpack.c.l.b16 %v215
        %v637 = vunpack.c.h.b16 %v215
        %v638 = vunpack.c.l.b16 %v216
        %v639 = vunpack.c.h.b16 %v216
        %v640 = vunpack.c.l.b16 %v217
        %v641 = vunpack.c.h.b16 %v217
        %v642 = vunpack.c.l.b16 %v218
        %v643 = vunpack.c.h.b16 %v218
        %v644 = vunpack.c.l.b16 %v219
        %v645 = vunpack.c.h.b16 %v219
        %v646 = vunpack.c.l.b16 %v220
        %v647 = vunpack.c.h.b16 %v220
        %v648 = vunpack.c.l.b16 %v221
        %v649 = vunpack.c.h.b16 %v221
        %v650 = vunpack.c.l.b16 %v222
        %v651 = vunpack.c.h.b16 %v222
        %v652 = vunpack.c.l.b16 %v223
        %v653 = vunpack.c.h.b16 %v223
        %v654 = vunpack.c.l.b16 %v224
        %v655 = vunpack.c.h.b16 %v224
        %v656 = vunpack.c.l.b16 %v225
        %v657 = vunpack.c.h.b16 %v225
        %v658 = vunpack.c.l.b16 %v226
        %v659 = vunpack.c.h.b16 %v226
        %v660 = vunpack.c.l.b16 %v227
        %v661 = vunpack.c.h.b16 %v227
        %v662 = vunpack.c.l.b16 %v228
        %v663 = vunpack.c.h.b16 %v228
        %v664 = vunpack.c.l.b16 %v229
        %v665 = vunpack.c.h.b16 %v229
        %v666 = vunpack.c.l.b16 %v230
        %v667 = vunpack.c.h.b16 %v230
        %v668 = vunpack.c.l.b16 %v231
        %v669 = vunpack.c.h.b16 %v231
        %v670 = vunpack.c.l.b16 %v232
        %v671 = vunpack.c.h.b16 %v232
        %v672 = vunpack.c.l.b16 %v233
        %v673 = vunpack.c.h.b16 %v233
        %v674 = vunpack.c.l.b16 %v234
        %v675 = vunpack.c.h.b16 %v234
        %v676 = vunpack.c.l.b16 %v235
        %v677 = vunpack.c.h.b16 %v235
        %v678 = vunpack.c.l.b16 %v236
        %v679 = vunpack.c.h.b16 %v236
        %v680 = vunpack.c.l.b16 %v237
        %v681 = vunpack.c.h.b16 %v237
        %v682 = vunpack.c.l.b16 %v238
        %v683 = vunpack.c.h.b16 %v238
        %v684 = vunpack.c.l.b16 %v239
        %v685 = vunpack.c.h.b16 %v239
        %v686 = vunpack.c.l.b16 %v240
        %v687 = vunpack.c.h.b16 %v240
        %v688 = vunpack.c.l.b16 %v241
        %v689 = vunpack.c.h.b16 %v241
        %v690 = vunpack.c.l.b16 %v242
        %v691 = vunpack.c.h.b16 %v242
        %v692 = vunpack.c.l.b16 %v243
        %v693 = vunpack.c.h.b16 %v243
        %v694 = vunpack.c.l.b16 %v244
        %v695 = vunpack.c.h.b16 %v244
        %v696 = vunpack.c.l.b16 %v245
        %v697 = vunpack.c.h.b16 %v245
        %v698 = vunpack.c.l.b16 %v246
        %v699 = vunpack.c.h.b16 %v246
        %v700 = vunpack.c.l.b16 %v247
        %v701 = vunpack.c.h.b16 %v247
        %v702 = vunpack.c.l.b16 %v248
        %v703 = vunpack.c.h.b16 %v248
        %v704 = vunpack.c.l.b16 %v249
        %v705 = vunpack.c.h.b16 %v249
        %v706 = vunpack.c.l.b16 %v250
        %v707 = vunpack.c.h.b16 %v250
        %v708 = vunpack.c.l.b16 %v251
        %v709 = vunpack.c.h.b16 %v251
        %v710 = vunpack.c.l.b16 %v252
        %v711 = vunpack.c.h.b16 %v252
        %v712 = vunpack.c.l.b16 %v253
        %v713 = vunpack.c.h.b16 %v253
        %v714 = vunpack.c.l.b16 %v254
        %v715 = vunpack.c.h.b16 %v254
        %v716 = vunpack.c.l.b16 %v255
        %v717 = vunpack.c.h.b16 %v255
        %v718 = vunpack.c.l.b16 %v256
        %v719 = vunpack.c.h.b16 %v256
        %v720 = vunpack.c.l.b16 %v257
        %v721 = vunpack.c.h.b16 %v257
        %v722 = vunpack.c.l.b16 %v258
        %v723 = vunpack.c.h.b16 %v258
        %v724 = vunpack.c.l.b16 %v259
        %v725 = vunpack.c.h.b16 %v259
        %v726 = vunpack.c.l.b16 %v260
        %v727 = vunpack.c.h.b16 %v260
        %v728 = vunpack.c.l.b16 %v261
        %v729 = vunpack.c.h.b16 %v261
        %v730 = vunpack.c.l.b16 %v262
        %v731 = vunpack.c.h.b16 %v262
        %v732 = vunpack.c.l.b16 %v263
        %v733 = vunpack.c.h.b16 %v263
        %v734 = vunpack.c.l.b16 %v264
        %v735 = vunpack.c.h.b16 %v264
        %v736 = vunpack.c.l.b16 %v265
        %v737 = vunpack.c.h.b16 %v265
        %v738 = vunpack.c.l.b16 %v266
        %v739 = vunpack.c.h.b16 %v266
        %v740 = vunpack.c.l.b16 %v267
        %v741 = vunpack.c.h.b16 %v267
        %v742 = vunpack.c.l.b16 %v268
        %v743 = vunpack.c.h.b16 %v268
        %v744 = vunpack.c.l.b16 %v269
        %v745 = vunpack.c.h.b16 %v269
        %v746 = vunpack.c.l.b16 %v270
        %v747 = vunpack.c.h.b16 %v270
        %v748 = vunpack.c.l.b16 %v271
        %v749 = vunpack.c.h.b16 %v271
        %v750 = vunpack.c.l.b16 %v272
        %v751 = vunpack.c.h.b16 %v272
        %v752 = vunpack.c.l.b16 %v273
        %v753 = vunpack.c.h.b16 %v273
        %v754 = vunpack.c.l.b16 %v274
        %v755 = vunpack.c.h.b16 %v274
        %v756 = vunpack.c.l.b16 %v275
        %v757 = vunpack.c.h.b16 %v275
        %v758 = vunpack.c.l.b16 %v276
        %v759 = vunpack.c.h.b16 %v276
        %v760 = vunpack.c.l.b16 %v277
        %v761 = vunpack.c.h.b16 %v277
        %v762 = vunpack.c.l.b16 %v278
        %v763 = vunpack.c.h.b16 %v278
        %v764 = vunpack.c.l.b16 %v279
        %v765 = vunpack.c.h.b16 %v279
        %v766 = vunpack.c.l.b16 %v280
        %v767 = vunpack.c.h.b16 %v280
        %v768 = vunpack.c.l.b16 %v281
        %v769 = vunpack.c.h.b16 %v281
        %v770 = vunpack.c.l.b16 %v282
        %v771 = vunpack.c.h.b16 %v282
        %v772 = vunpack.c.l.b16 %v283
        %v773 = vunpack.c.h.b16 %v283
        %v774 = vunpack.c.l.b16 %v284
        %v775 = vunpack.c.h.b16 %v284
        %v776 = vunpack.c.l.b16 %v285
        %v777 = vunpack.c.h.b16 %v285
        %v778 = vunpack.c.l.b16 %v286
        %v779 = vunpack.c.h.b16 %v286
        %v780 = vunpack.c.l.b16 %v287
        %v781 = vunpack.c.h.b16 %v287
        %v782 = vunpack.c.l.b16 %v288
        %v783 = vunpack.c.h.b16 %v288
        %v784 = vunpack.c.l.b16 %v289
        %v785 = vunpack.c.h.b16 %v289
        %v786 = vunpack.c.l.b16 %v290
        %v787 = vunpack.c.h.b16 %v290
        %v788 = vunpack.c.l.b16 %v291
        %v789 = vunpack.c.h.b16 %v291
        %v790 = vunpack.c.l.b16 %v292
        %v791 = vunpack.c.h.b16 %v292
        %v792 = vunpack.c.l.b16 %v293
        %v793 = vunpack.c.h.b16 %v293
        %v794 = vunpack.c.l.b16 %v294
        %v795 = vunpack.c.h.b16 %v294
        %v796 = vunpack.c.l.b16 %v295
        %v797 = vunpack.c.h.b16 %v295
        %v798 = vunpack.c.l.b16 %v296
        %v799 = vunpack.c.h.b16 %v296
        %v800 = vunpack.c.l.b16 %v297
        %v801 = vunpack.c.h.b16 %v297
        %v802 = vunpack.c.l.b16 %v298
        %v803 = vunpack.c.h.b16 %v298
        %v804 = vunpack.c.l.b16 %v299
        %v805 = vunpack.c.h.b16 %v299
        %v806 = vunpack.c.l.b16 %v300
        %v807 = vunpack.c.h.b16 %v300
        %v808 = vunpack.c.l.b16 %v301
        %v809 = vunpack.c.h.b16 %v301
        %v810 = vunpack.c.l.b16 %v302
        %v811 = vunpack.c.h.b16 %v302
        %v812 = vunpack.c.l.b16 %v303
        %v813 = vunpack.c.h.b16 %v303
        %v814 = vunpack.c.l.b16 %v304
        %v815 = vunpack.c.h.b16 %v304
        %v816 = vunpack.c.l.b16 %v305
        %v817 = vunpack.c.h.b16 %v305
        %v818 = vunpack.c.l.b16 %v306
        %v819 = vunpack.c.h.b16 %v306
        %v820 = vunpack.c.l.b16 %v307
        %v821 = vunpack.c.h.b16 %v307
        %v822 = vunpack.c.l.b16 %v308
        %v823 = vunpack.c.h.b16 %v308
        %v824 = vunpack.c.l.b16 %v309
        %v825 = vunpack.c.h.b16 %v309
        %v826 = vunpack.c.l.b16 %v310
        %v827 = vunpack.c.h.b16 %v310
        %v828 = vunpack.c.l.b16 %v311
        %v829 = vunpack.c.h.b16 %v311
        %v830 = vunpack.c.l.b16 %v312
        %v831 = vunpack.c.h.b16 %v312
        %v832 = vunpack.c.l.b16 %v313
        %v833 = vunpack.c.h.b16 %v313
        %v834 = vunpack.c.l.b16 %v314
        %v835 = vunpack.c.h.b16 %v314
        %v836 = vunpack.c.l.b16 %v315
        %v837 = vunpack.c.h.b16 %v315
        %v838 = vunpack.c.l.b16 %v316
        %v839 = vunpack.c.h.b16 %v316
        %v840 = vunpack.c.l.b16 %v317
        %v841 = vunpack.c.h.b16 %v317
        %v842 = vunpack.c.l.b16 %v318
        %v843 = vunpack.c.h.b16 %v318
        %v844 = vunpack.c.l.b16 %v319
        %v845 = vunpack.c.h.b16 %v319
        %v846 = vunpack.c.l.b16 %v320
        %v847 = vunpack.c.h.b16 %v320
        %v848 = vunpack.c.l.b16 %v321
        %v849 = vunpack.c.h.b16 %v321
        %v850 = vunpack.c.l.b16 %v322
        %v851 = vunpack.c.h.b16 %v322
        %v852 = vunpack.c.l.b16 %v323
        %v853 = vunpack.c.h.b16 %v323
        %v854 = vunpack.c.l.b16 %v324
        %v855 = vunpack.c.h.b16 %v324
        %v856 = vunpack.c.l.b16 %v325
        %v857 = vunpack.c.h.b16 %v325
        %v858 = vunpack.c.l.b16 %v326
        %v859 = vunpack.c.h.b16 %v326
        %v860 = vunpack.c.l.b16 %v327
        %v861 = vunpack.c.h.b16 %v327
        %v862 = vunpack.c.l.b16 %v328
        %v863 = vunpack.c.h.b16 %v328
        %v864 = vunpack.c.l.b16 %v329
        %v865 = vunpack.c.h.b16 %v329
        %v866 = vunpack.c.l.b16 %v330
        %v867 = vunpack.c.h.b16 %v330
        %v868 = vunpack.c.l.b16 %v331
        %v869 = vunpack.c.h.b16 %v331
        %v870 = vunpack.c.l.b16 %v332
        %v871 = vunpack.c.h.b16 %v332
        %v872 = vunpack.c.l.b16 %v333
        %v873 = vunpack.c.h.b16 %v333
        %v874 = vunpack.c.l.b16 %v334
        %v875 = vunpack.c.h.b16 %v334
        %v876 = vunpack.c.l.b16 %v335
        %v877 = vunpack.c.h.b16 %v335
        %v878 = vunpack.c.l.b16 %v336
        %v879 = vunpack.c.h.b16 %v336
        %v880 = vunpack.c.l.b16 %v337
        %v881 = vunpack.c.h.b16 %v337
        %v882 = vunpack.c.l.b16 %v338
        %v883 = vunpack.c.h.b16 %v338
        %v884 = vunpack.c.l.b16 %v339
        %v885 = vunpack.c.h.b16 %v339
        %v886 = vpack.c.b16 %v592, %v586
        %v887 = vpack.c.b16 %v593, %v587
        %v888 = vpack.c.b16 %v594, %v588
        %v889 = vpack.c.b16 %v595, %v589
        %v890 = vpack.c.b16 %v596, %v590
        %v891 = vpack.c.b16 %v597, %v591
        %v892 = vpack.c.b16 %v604, %v598
        %v893 = vpack.c.b16 %v605, %v599
        %v894 = vpack.c.b16 %v606, %v600
        %v895 = vpack.c.b16 %v607, %v601
        %v896 = vpack.c.b16 %v608, %v602
        %v897 = vpack.c.b16 %v609, %v603
        %v898 = vpack.c.b16 %v616, %v610
        %v899 = vpack.c.b16 %v617, %v611
        %v900 = vpack.c.b16 %v618, %v612
        %v901 = vpack.c.b16 %v619, %v613
        %v902 = vpack.c.b16 %v620, %v614
        %v903 = vpack.c.b16 %v621, %v615
        %v904 = vpack.c.b16 %v628, %v622
        %v905 = vpack.c.b16 %v629, %v623
        %v906 = vpack.c.b16 %v630, %v624
        %v907 = vpack.c.b16 %v631, %v625
        %v908 = vpack.c.b16 %v632, %v626
        %v909 = vpack.c.b16 %v633, %v627
        %v910 = vpack.c.b16 %v640, %v634
        %v911 = vpack.c.b16 %v641, %v635
        %v912 = vpack.c.b16 %v642, %v636
        %v913 = vpack.c.b16 %v643, %v637
        %v914 = vpack.c.b16 %v644, %v638
        %v915 = vpack.c.b16 %v645, %v639
        %v916 = vpack.c.b16 %v652, %v646
        %v917 = vpack.c.b16 %v653, %v647
        %v918 = vpack.c.b16 %v654, %v648
        %v919 = vpack.c.b16 %v655, %v649
        %v920 = vpack.c.b16 %v656, %v650
        %v921 = vpack.c.b16 %v657, %v651
        %v922 = vpack.c.b16 %v664, %v658
        %v923 = vpack.c.b16 %v665, %v659
        %v924 = vpack.c.b16 %v666, %v660
        %v925 = vpack.c.b16 %v667, %v661
        %v926 = vpack.c.b16 %v668, %v662
        %v927 = vpack.c.b16 %v669, %v663
        %v928 = vpack.c.b16 %v676, %v670
        %v929 = vpack.c.b16 %v677, %v671
        %v930 = vpack.c.b16 %v678, %v672
        %v931 = vpack.c.b16 %v679, %v673
        %v932 = vpack.c.b16 %v680, %v674
        %v933 = vpack.c.b16 %v681, %v675
        %v934 = vpack.c.b16 %v688, %v682
        %v935 = vpack.c.b16 %v689, %v683
        %v936 = vpack.c.b16 %v690, %v684
        %v937 = vpack.c.b16 %v691, %v685
        %v938 = vpack.c.b16 %v692, %v686
        %v939 = vpack.c.b16 %v693, %v687
        %v940 = vpack.c.b16 %v700, %v694
        %v941 = vpack.c.b16 %v701, %v695
        %v942 = vpack.c.b16 %v702, %v696
        %v943 = vpack.c.b16 %v703, %v697
        %v944 = vpack.c.b16 %v704, %v698
        %v945 = vpack.c.b16 %v705, %v699
        %v946 = vpack.c.b16 %v712, %v706
        %v947 = vpack.c.b16 %v713, %v707
        %v948 = vpack.c.b16 %v714, %v708
        %v949 = vpack.c.b16 %v715, %v709
        %v950 = vpack.c.b16 %v716, %v710
        %v951 = vpack.c.b16 %v717, %v711
        %v952 = vpack.c.b16 %v724, %v718
        %v953 = vpack.c.b16 %v725, %v719
        %v954 = vpack.c.b16 %v726, %v720
        %v955 = vpack.c.b16 %v727, %v721
        %v956 = vpack.c.b16 %v728, %v722
        %v957 = vpack.c.b16 %v729, %v723
        %v958 = vpack.c.b16 %v736, %v730
        %v959 = vpack.c.b16 %v737, %v731
        %v960 = vpack.c.b16 %v738, %v732
        %v961 = vpack.c.b16 %v739, %v733
        %v962 = vpack.c.b16 %v740, %v734
        %v963 = vpack.c.b16 %v741, %v735
        %v964 = vpack.c.b16 %v748, %v742
        %v965 = vpack.c.b16 %v749, %v743
        %v966 = vpack.c.b16 %v750, %v744
        %v967 = vpack.c.b16 %v751, %v745
        %v968 = vpack.c.b16 %v752, %v746
        %v969 = vpack.c.b16 %v753, %v747
        %v970 = vpack.c.b16 %v760, %v754
        %v971 = vpack.c.b16 %v761, %v755
        %v972 = vpack.c.b16 %v762, %v756
        %v973 = vpack.c.b16 %v763, %v757
        %v974 = vpack.c.b16 %v764, %v758
        %v975 = vpack.c.b16 %v765, %v759
        %v976 = vpack.c.b16 %v772, %v766
        %v977 = vpack.c.b16 %v773, %v767
        %v978 = vpack.c.b16 %v774, %v768
        %v979 = vpack.c.b16 %v775, %v769
        %v980 = vpack.c.b16 %v776, %v770
        %v981 = vpack.c.b16 %v777, %v771
        %v982 = vpack.c.b16 %v784, %v778
        %v983 = vpack.c.b16 %v785, %v779
        %v984 = vpack.c.b16 %v786, %v780
        %v985 = vpack.c.b16 %v787, %v781
        %v986 = vpack.c.b16 %v788, %v782
        %v987 = vpack.c.b16 %v789, %v783
        %v988 = vpack.c.b16 %v796, %v790
        %v989 = vpack.c.b16 %v797, %v791
        %v990 = vpack.c.b16 %v798, %v792
        %v991 = vpack.c.b16 %v799, %v793
        %v992 = vpack.c.b16 %v800, %v794
        %v993 = vpack.c.b16 %v801, %v795
        %v994 = vpack.c.b16 %v808, %v802
        %v995 = vpack.c.b16 %v809, %v803
        %v996 = vpack.c.b16 %v810, %v804
        %v997 = vpack.c.b16 %v811, %v805
        %v998 = vpack.c.b16 %v812, %v806
        %v999 = vpack.c.b16 %v813, %v807
        %v1000 = vpack.c.b16 %v820, %v814
        %v1001 = vpack.c.b16 %v821, %v815
        %v1002 = vpack.c.b16 %v822, %v816
        %v1003 = vpack.c.b16 %v823, %v817
        %v1004 = vpack.c.b16 %v824, %v818
        %v1005 = vpack.c.b16 %v825, %v819
        %v1006 = vpack.c.b16 %v832, %v826
        %v1007 = vpack.c.b16 %v833, %v827
        %v1008 = vpack.c.b16 %v834, %v828
        %v1009 = vpack.c.b16 %v835, %v829
        %v1010 = vpack.c.b16 %v836, %v830
        %v1011 = vpack.c.b16 %v837, %v831
        %v1012 = vpack.c.b16 %v844, %v838
        %v1013 = vpack.c.b16 %v845, %v839
        %v1014 = vpack.c.b16 %v846, %v840
        %v1015 = vpack.c.b16 %v847, %v841
        %v1016 = vpack.c.b16 %v848, %v842
        %v1017 = vpack.c.b16 %v849, %v843
        %v1018 = vpack.c.b16 %v856, %v850
        %v1019 = vpack.c.b16 %v857, %v851
        %v1020 = vpack.c.b16 %v858, %v852
        %v1021 = vpack.c.b16 %v859, %v853
        %v1022 = vpack.c.b16 %v860, %v854
        %v1023 = vpack.c.b16 %v861, %v855
        %v1024 = vpack.c.b16 %v868, %v862
        %v1025 = vpack.c.b16 %v869, %v863
        %v1026 = vpack.c.b16 %v870, %v864
        %v1027 = vpack.c.b16 %v871, %v865
        %v1028 = vpack.c.b16 %v872, %v866
        %v1029 = vpack.c.b16 %v873, %v867
        %v1030 = vpack.c.b16 %v880, %v874
        %v1031 = vpack.c.b16 %v881, %v875
        %v1032 = vpack.c.b16 %v882, %v876
        %v1033 = vpack.c.b16 %v883, %v877
        %v1034 = vpack.c.b16 %v884, %v878
        %v1035 = vpack.c.b16 %v885, %v879
        %v1282 = vunpack.c.l.b16 %v340
        %v1283 = vunpack.c.l.b16 %v341
        %v1284 = vunpack.c.l.b16 %v342
        %v1285 = vunpack.c.l.b16 %v343
        %v1286 = vunpack.c.l.b16 %v344
        %v1287 = vunpack.c.l.b16 %v345
        %v1288 = vunpack.c.l.b16 %v346
        %v1289 = vunpack.c.l.b16 %v347
        %v1290 = vunpack.c.l.b16 %v348
        %v1291 = vunpack.c.l.b16 %v349
        %v1292 = vunpack.c.l.b16 %v350
        %v1293 = vunpack.c.l.b16 %v351
        %v1294 = vunpack.c.l.b16 %v352
        %v1295 = vunpack.c.l.b16 %v353
        %v1296 = vunpack.c.l.b16 %v354
        %v1297 = vunpack.c.l.b16 %v355
        %v1298 = vunpack.c.l.b16 %v356
        %v1299 = vunpack.c.l.b16 %v357
        %v1300 = vunpack.c.l.b16 %v358
        %v1301 = vunpack.c.l.b16 %v359
        %v1302 = vunpack.c.l.b16 %v360
        %v1303 = vunpack.c.l.b16 %v361
        %v1304 = vunpack.c.l.b16 %v362
        %v1305 = vunpack.c.l.b16 %v363
        %v1306 = vunpack.c.l.b16 %v364
        %v1307 = vunpack.c.l.b16 %v365
        %v1308 = vunpack.c.l.b16 %v366
        %v1309 = vunpack.c.l.b16 %v367
        %v1310 = vunpack.c.l.b16 %v368
        %v1311 = vunpack.c.l.b16 %v369
        %v1312 = vunpack.c.l.b16 %v370
        %v1313 = vunpack.c.l.b16 %v371
        %v1314 = vunpack.c.l.b16 %v372
        %v1315 = vunpack.c.l.b16 %v373
        %v1316 = vunpack.c.l.b16 %v374
        %v1317 = vunpack.c.l.b16 %v375
        %v1318 = vunpack.c.l.b16 %v376
        %v1319 = vunpack.c.l.b16 %v377
        %v1320 = vunpack.c.l.b16 %v378
        %v1321 = vunpack.c.l.b16 %v379
        %v1322 = vunpack.c.l.b16 %v380
        %v1323 = vunpack.c.l.b16 %v381
        %v1324 = vunpack.c.l.b16 %v382
        %v1325 = vunpack.c.l.b16 %v383
        %v1326 = vunpack.c.l.b16 %v384
        %v1327 = vunpack.c.l.b16 %v385
        %v1328 = vunpack.c.l.b16 %v386
        %v1329 = vunpack.c.l.b16 %v387
        %v1330 = vunpack.c.l.b16 %v388
        %v1331 = vunpack.c.l.b16 %v389
        %v1332 = vunpack.c.l.b16 %v390
        %v1333 = vunpack.c.l.b16 %v391
        %v1334 = vunpack.c.l.b16 %v392
        %v1335 = vunpack.c.l.b16 %v393
        %v1336 = vunpack.c.l.b16 %v394
        %v1337 = vunpack.c.l.b16 %v395
        %v1338 = vunpack.c.l.b16 %v396
        %v1339 = vunpack.c.l.b16 %v397
        %v1340 = vunpack.c.l.b16 %v398
        %v1341 = vunpack.c.l.b16 %v399
        %v1342 = vunpack.c.l.b16 %v400
        %v1343 = vunpack.c.l.b16 %v401
        %v1344 = vunpack.c.l.b16 %v402
        %v1345 = vunpack.c.l.b16 %v403
        %v1346 = vunpack.c.l.b16 %v404
        %v1347 = vunpack.c.l.b16 %v405
        %v1348 = vunpack.c.l.b16 %v406
        %v1349 = vunpack.c.l.b16 %v407
        %v1350 = vunpack.c.l.b16 %v408
        %v1351 = vunpack.c.l.b16 %v409
        %v1352 = vunpack.c.l.b16 %v410
        %v1353 = vunpack.c.l.b16 %v411
        %v1354 = vunpack.c.l.b16 %v412
        %v1355 = vunpack.c.l.b16 %v413
        %v1356 = vunpack.c.l.b16 %v414
        %v1357 = vunpack.c.l.b16 %v415
        %v1358 = vunpack.c.l.b16 %v416
        %v1359 = vunpack.c.l.b16 %v417
        %v1360 = vunpack.c.l.b16 %v418
        %v1361 = vunpack.c.l.b16 %v419
        %v1362 = vunpack.c.l.b16 %v420
        %v1363 = vunpack.c.l.b16 %v421
        %v1364 = vunpack.c.l.b16 %v422
        %v1365 = vunpack.c.l.b16 %v423
        %v1366 = vunpack.c.l.b16 %v424
        %v1367 = vunpack.c.l.b16 %v425
        %v1368 = vunpack.c.l.b16 %v426
        %v1369 = vunpack.c.l.b16 %v427
        %v1370 = vunpack.c.l.b16 %v428
        %v1371 = vunpack.c.l.b16 %v429
        %v1372 = vunpack.c.l.b16 %v430
        %v1373 = vunpack.c.l.b16 %v431
        %v1374 = vunpack.c.l.b16 %v432
        %v1375 = vunpack.c.l.b16 %v433
        %v1376 = vunpack.c.l.b16 %v434
        %v1377 = vunpack.c.l.b16 %v435
        %v1378 = vpack.c.b16 %v1283, %v1282
        %v1379 = vpack.c.b16 %v1285, %v1284
        %v1380 = vpack.c.b16 %v1287, %v1286
        %v1381 = vpack.c.b16 %v1289, %v1288
        %v1382 = vpack.c.b16 %v1291, %v1290
        %v1383 = vpack.c.b16 %v1293, %v1292
        %v1384 = vpack.c.b16 %v1295, %v1294
        %v1385 = vpack.c.b16 %v1297, %v1296
        %v1386 = vpack.c.b16 %v1299, %v1298
        %v1387 = vpack.c.b16 %v1301, %v1300
        %v1388 = vpack.c.b16 %v1303, %v1302
        %v1389 = vpack.c.b16 %v1305, %v1304
        %v1390 = vpack.c.b16 %v1307, %v1306
        %v1391 = vpack.c.b16 %v1309, %v1308
        %v1392 = vpack.c.b16 %v1311, %v1310
        %v1393 = vpack.c.b16 %v1313, %v1312
        %v1394 = vpack.c.b16 %v1315, %v1314
        %v1395 = vpack.c.b16 %v1317, %v1316
        %v1396 = vpack.c.b16 %v1319, %v1318
        %v1397 = vpack.c.b16 %v1321, %v1320
        %v1398 = vpack.c.b16 %v1323, %v1322
        %v1399 = vpack.c.b16 %v1325, %v1324
        %v1400 = vpack.c.b16 %v1327, %v1326
        %v1401 = vpack.c.b16 %v1329, %v1328
        %v1402 = vpack.c.b16 %v1331, %v1330
        %v1403 = vpack.c.b16 %v1333, %v1332
        %v1404 = vpack.c.b16 %v1335, %v1334
        %v1405 = vpack.c.b16 %v1337, %v1336
        %v1406 = vpack.c.b16 %v1339, %v1338
        %v1407 = vpack.c.b16 %v1341, %v1340
        %v1408 = vpack.c.b16 %v1343, %v1342
        %v1409 = vpack.c.b16 %v1345, %v1344
        %v1410 = vpack.c.b16 %v1347, %v1346
        %v1411 = vpack.c.b16 %v1349, %v1348
        %v1412 = vpack.c.b16 %v1351, %v1350
        %v1413 = vpack.c.b16 %v1353, %v1352
        %v1414 = vpack.c.b16 %v1355, %v1354
        %v1415 = vpack.c.b16 %v1357, %v1356
        %v1416 = vpack.c.b16 %v1359, %v1358
        %v1417 = vpack.c.b16 %v1361, %v1360
        %v1418 = vpack.c.b16 %v1363, %v1362
        %v1419 = vpack.c.b16 %v1365, %v1364
        %v1420 = vpack.c.b16 %v1367, %v1366
        %v1421 = vpack.c.b16 %v1369, %v1368
        %v1422 = vpack.c.b16 %v1371, %v1370
        %v1423 = vpack.c.b16 %v1373, %v1372
        %v1424 = vpack.c.b16 %v1375, %v1374
        %v1425 = vpack.c.b16 %v1377, %v1376
        %1474 = vmatprep.subr.bf16.mxu0 0
        %1475 = vmatpush1.bf16.msra.mxu0 %v1385
        %1476 = vmatprep.subr.bf16.mxu0 0
        %1477 = vmatpush1.bf16.msra.mxu0 %v1384
        %1478 = vmatprep.subr.bf16.mxu0 0
        %1479 = vmatpush1.bf16.msra.mxu0 %v1383
        %1480 = vmatprep.subr.bf16.mxu0 0
        %1481 = vmatpush1.bf16.msra.mxu0 %v1382
        %1482 = vmatprep.subr.bf16.mxu0 0
        %1483 = vmatpush1.bf16.msra.mxu0 %v1381
        %1484 = vmatprep.subr.bf16.mxu0 0
        %1485 = vmatpush1.bf16.msra.mxu0 %v1380
        %1486 = vmatprep.subr.bf16.mxu0 0
        %1487 = vmatpush1.bf16.msra.mxu0 %v1379
        %1488 = vmatprep.subr.bf16.mxu0 0
        %1489 = vmatpush1.bf16.msra.mxu0 %v1378
        %1490 = vmatprep.subr.bf16.mxu0 0
        %1491 = vmatpush2.bf16.msra.mxu0 %v1393
        %1492 = vmatprep.subr.bf16.mxu0 0
        %1493 = vmatpush2.bf16.msra.mxu0 %v1392
        %1494 = vmatprep.subr.bf16.mxu0 0
        %1495 = vmatpush2.bf16.msra.mxu0 %v1391
        %1496 = vmatprep.subr.bf16.mxu0 0
        %1497 = vmatpush2.bf16.msra.mxu0 %v1390
        %1498 = vmatprep.subr.bf16.mxu0 0
        %1499 = vmatpush2.bf16.msra.mxu0 %v1389
        %1500 = vmatprep.subr.bf16.mxu0 0
        %1501 = vmatpush2.bf16.msra.mxu0 %v1388
        %1502 = vmatprep.subr.bf16.mxu0 0
        %1503 = vmatpush2.bf16.msra.mxu0 %v1387
        %1504 = vmatprep.subr.bf16.mxu0 0
        %1505 = vmatpush2.bf16.msra.mxu0 %v1386
        %1506 = vmatprep.mubr.bf16.mxu0 %v887
        %1507 = vmatmul.mubr.bf16.gmra.mxu0 %v886
        %v1508 = vpop.f32.mrf.mxu0
        %v1509 = vadd.f32 0.0, %v1508
        %v1510 = vpop.f32.mrf.mxu0
        %v1511 = vpop.f32.mrf.mxu0
        %v1512 = vadd.f32 0.0, %v1511
        %v1513 = vpop.f32.mrf.mxu0
        %1514 = vmatprep.mubr.bf16.mxu0 %v893
        %1515 = vmatmul.mubr.bf16.gmra.mxu0 %v892
        %v1516 = vpop.f32.mrf.mxu0
        %v1517 = vadd.f32 0.0, %v1516
        %v1518 = vpop.f32.mrf.mxu0
        %v1519 = vpop.f32.mrf.mxu0
        %v1520 = vadd.f32 0.0, %v1519
        %v1521 = vpop.f32.mrf.mxu0
        %1522 = vmatprep.mubr.bf16.mxu0 %v899
        %1523 = vmatmul.mubr.bf16.gmra.mxu0 %v898
        %v1524 = vpop.f32.mrf.mxu0
        %v1525 = vadd.f32 0.0, %v1524
        %v1526 = vpop.f32.mrf.mxu0
        %v1527 = vpop.f32.mrf.mxu0
        %v1528 = vadd.f32 0.0, %v1527
        %v1529 = vpop.f32.mrf.mxu0
        %1530 = vmatprep.mubr.bf16.mxu0 %v905
        %1531 = vmatmul.mubr.bf16.gmra.mxu0 %v904
        %v1532 = vpop.f32.mrf.mxu0
        %v1533 = vadd.f32 0.0, %v1532
        %v1534 = vpop.f32.mrf.mxu0
        %v1535 = vpop.f32.mrf.mxu0
        %v1536 = vadd.f32 0.0, %v1535
        %v1537 = vpop.f32.mrf.mxu0
        %1538 = vmatprep.mubr.bf16.mxu0 %v911
        %1539 = vmatmul.mubr.bf16.gmra.mxu0 %v910
        %v1540 = vpop.f32.mrf.mxu0
        %v1541 = vadd.f32 0.0, %v1540
        %v1542 = vpop.f32.mrf.mxu0
        %v1543 = vpop.f32.mrf.mxu0
        %v1544 = vadd.f32 0.0, %v1543
        %v1545 = vpop.f32.mrf.mxu0
        %1546 = vmatprep.mubr.bf16.mxu0 %v917
        %1547 = vmatmul.mubr.bf16.gmra.mxu0 %v916
        %v1548 = vpop.f32.mrf.mxu0
        %v1549 = vadd.f32 0.0, %v1548
        %v1550 = vpop.f32.mrf.mxu0
        %v1551 = vpop.f32.mrf.mxu0
        %v1552 = vadd.f32 0.0, %v1551
        %v1553 = vpop.f32.mrf.mxu0
        %1554 = vmatprep.mubr.bf16.mxu0 %v923
        %1555 = vmatmul.mubr.bf16.gmra.mxu0 %v922
        %v1556 = vpop.f32.mrf.mxu0
        %v1557 = vadd.f32 0.0, %v1556
        %v1558 = vpop.f32.mrf.mxu0
        %v1559 = vpop.f32.mrf.mxu0
        %v1560 = vadd.f32 0.0, %v1559
        %v1561 = vpop.f32.mrf.mxu0
        %1562 = vmatprep.mubr.bf16.mxu0 %v929
        %1563 = vmatmul.mubr.bf16.gmra.mxu0 %v928
        %v1564 = vpop.f32.mrf.mxu0
        %v1565 = vadd.f32 0.0, %v1564
        %v1566 = vpop.f32.mrf.mxu0
        %v1567 = vpop.f32.mrf.mxu0
        %v1568 = vadd.f32 0.0, %v1567
        %v1569 = vpop.f32.mrf.mxu0
        %1570 = vmatprep.mubr.bf16.mxu0 %v935
        %1571 = vmatmul.mubr.bf16.gmra.mxu0 %v934
        %v1572 = vpop.f32.mrf.mxu0
        %v1573 = vadd.f32 0.0, %v1572
        %v1574 = vpop.f32.mrf.mxu0
        %v1575 = vpop.f32.mrf.mxu0
        %v1576 = vadd.f32 0.0, %v1575
        %v1577 = vpop.f32.mrf.mxu0
        %1578 = vmatprep.mubr.bf16.mxu0 %v941
        %1579 = vmatmul.mubr.bf16.gmra.mxu0 %v940
        %v1580 = vpop.f32.mrf.mxu0
        %v1581 = vadd.f32 0.0, %v1580
        %v1582 = vpop.f32.mrf.mxu0
        %v1583 = vpop.f32.mrf.mxu0
        %v1584 = vadd.f32 0.0, %v1583
        %v1585 = vpop.f32.mrf.mxu0
        %1586 = vmatprep.mubr.bf16.mxu0 %v947
        %1587 = vmatmul.mubr.bf16.gmra.mxu0 %v946
        %v1588 = vpop.f32.mrf.mxu0
        %v1589 = vadd.f32 0.0, %v1588
        %v1590 = vpop.f32.mrf.mxu0
        %v1591 = vpop.f32.mrf.mxu0
        %v1592 = vadd.f32 0.0, %v1591
        %v1593 = vpop.f32.mrf.mxu0
        %1594 = vmatprep.mubr.bf16.mxu0 %v953
        %1595 = vmatmul.mubr.bf16.gmra.mxu0 %v952
        %v1596 = vpop.f32.mrf.mxu0
        %v1597 = vadd.f32 0.0, %v1596
        %v1598 = vpop.f32.mrf.mxu0
        %v1599 = vpop.f32.mrf.mxu0
        %v1600 = vadd.f32 0.0, %v1599
        %v1601 = vpop.f32.mrf.mxu0
        %1602 = vmatprep.mubr.bf16.mxu0 %v959
        %1603 = vmatmul.mubr.bf16.gmra.mxu0 %v958
        %v1604 = vpop.f32.mrf.mxu0
        %v1605 = vadd.f32 0.0, %v1604
        %v1606 = vpop.f32.mrf.mxu0
        %v1607 = vpop.f32.mrf.mxu0
        %v1608 = vadd.f32 0.0, %v1607
        %v1609 = vpop.f32.mrf.mxu0
        %1610 = vmatprep.mubr.bf16.mxu0 %v965
        %1611 = vmatmul.mubr.bf16.gmra.mxu0 %v964
        %v1612 = vpop.f32.mrf.mxu0
        %v1613 = vadd.f32 0.0, %v1612
        %v1614 = vpop.f32.mrf.mxu0
        %v1615 = vpop.f32.mrf.mxu0
        %v1616 = vadd.f32 0.0, %v1615
        %v1617 = vpop.f32.mrf.mxu0
        %1618 = vmatprep.mubr.bf16.mxu0 %v971
        %1619 = vmatmul.mubr.bf16.gmra.mxu0 %v970
        %v1620 = vpop.f32.mrf.mxu0
        %v1621 = vadd.f32 0.0, %v1620
        %v1622 = vpop.f32.mrf.mxu0
        %v1623 = vpop.f32.mrf.mxu0
        %v1624 = vadd.f32 0.0, %v1623
        %v1625 = vpop.f32.mrf.mxu0
        %1626 = vmatprep.mubr.bf16.mxu0 %v977
        %1627 = vmatmul.mubr.bf16.gmra.mxu0 %v976
        %v1628 = vpop.f32.mrf.mxu0
        %v1629 = vadd.f32 0.0, %v1628
        %v1630 = vpop.f32.mrf.mxu0
        %v1631 = vpop.f32.mrf.mxu0
        %v1632 = vadd.f32 0.0, %v1631
        %v1633 = vpop.f32.mrf.mxu0
        %1634 = vmatprep.mubr.bf16.mxu0 %v983
        %1635 = vmatmul.mubr.bf16.gmra.mxu0 %v982
        %v1636 = vpop.f32.mrf.mxu0
        %v1637 = vadd.f32 0.0, %v1636
        %v1638 = vpop.f32.mrf.mxu0
        %v1639 = vpop.f32.mrf.mxu0
        %v1640 = vadd.f32 0.0, %v1639
        %v1641 = vpop.f32.mrf.mxu0
        %1642 = vmatprep.mubr.bf16.mxu0 %v989
        %1643 = vmatmul.mubr.bf16.gmra.mxu0 %v988
        %v1644 = vpop.f32.mrf.mxu0
        %v1645 = vadd.f32 0.0, %v1644
        %v1646 = vpop.f32.mrf.mxu0
        %v1647 = vpop.f32.mrf.mxu0
        %v1648 = vadd.f32 0.0, %v1647
        %v1649 = vpop.f32.mrf.mxu0
        %1650 = vmatprep.mubr.bf16.mxu0 %v995
        %1651 = vmatmul.mubr.bf16.gmra.mxu0 %v994
        %v1652 = vpop.f32.mrf.mxu0
        %v1653 = vadd.f32 0.0, %v1652
        %v1654 = vpop.f32.mrf.mxu0
        %v1655 = vpop.f32.mrf.mxu0
        %v1656 = vadd.f32 0.0, %v1655
        %v1657 = vpop.f32.mrf.mxu0
        %1658 = vmatprep.mubr.bf16.mxu0 %v1001
        %1659 = vmatmul.mubr.bf16.gmra.mxu0 %v1000
        %v1660 = vpop.f32.mrf.mxu0
        %v1661 = vadd.f32 0.0, %v1660
        %v1662 = vpop.f32.mrf.mxu0
        %v1663 = vpop.f32.mrf.mxu0
        %v1664 = vadd.f32 0.0, %v1663
        %v1665 = vpop.f32.mrf.mxu0
        %1666 = vmatprep.mubr.bf16.mxu0 %v1007
        %1667 = vmatmul.mubr.bf16.gmra.mxu0 %v1006
        %v1668 = vpop.f32.mrf.mxu0
        %v1669 = vadd.f32 0.0, %v1668
        %v1670 = vpop.f32.mrf.mxu0
        %v1671 = vpop.f32.mrf.mxu0
        %v1672 = vadd.f32 0.0, %v1671
        %v1673 = vpop.f32.mrf.mxu0
        %1674 = vmatprep.mubr.bf16.mxu0 %v1013
        %1675 = vmatmul.mubr.bf16.gmra.mxu0 %v1012
        %v1676 = vpop.f32.mrf.mxu0
        %v1677 = vadd.f32 0.0, %v1676
        %v1678 = vpop.f32.mrf.mxu0
        %v1679 = vpop.f32.mrf.mxu0
        %v1680 = vadd.f32 0.0, %v1679
        %v1681 = vpop.f32.mrf.mxu0
        %1682 = vmatprep.mubr.bf16.mxu0 %v1019
        %1683 = vmatmul.mubr.bf16.gmra.mxu0 %v1018
        %v1684 = vpop.f32.mrf.mxu0
        %v1685 = vadd.f32 0.0, %v1684
        %v1686 = vpop.f32.mrf.mxu0
        %v1687 = vpop.f32.mrf.mxu0
        %v1688 = vadd.f32 0.0, %v1687
        %v1689 = vpop.f32.mrf.mxu0
        %1690 = vmatprep.mubr.bf16.mxu0 %v1025
        %1691 = vmatmul.mubr.bf16.gmra.mxu0 %v1024
        %v1692 = vpop.f32.mrf.mxu0
        %v1693 = vadd.f32 0.0, %v1692
        %v1694 = vpop.f32.mrf.mxu0
        %v1695 = vpop.f32.mrf.mxu0
        %v1696 = vadd.f32 0.0, %v1695
        %v1697 = vpop.f32.mrf.mxu0
        %1698 = vmatprep.mubr.bf16.mxu0 %v1031
        %1699 = vmatmul.mubr.bf16.gmra.mxu0 %v1030
        %v1700 = vpop.f32.mrf.mxu0
        %v1701 = vadd.f32 0.0, %v1700
        %v1702 = vpop.f32.mrf.mxu0
        %v1703 = vpop.f32.mrf.mxu0
        %v1704 = vadd.f32 0.0, %v1703
        %v1705 = vpop.f32.mrf.mxu0
        %1706 = vdwg.mxu0
        %1707 = vmatprep.subr.bf16.mxu0 0
        %1708 = vmatpush1.bf16.msra.mxu0 %v1401
        %1709 = vmatprep.subr.bf16.mxu0 0
        %1710 = vmatpush1.bf16.msra.mxu0 %v1400
        %1711 = vmatprep.subr.bf16.mxu0 0
        %1712 = vmatpush1.bf16.msra.mxu0 %v1399
        %1713 = vmatprep.subr.bf16.mxu0 0
        %1714 = vmatpush1.bf16.msra.mxu0 %v1398
        %1715 = vmatprep.subr.bf16.mxu0 0
        %1716 = vmatpush1.bf16.msra.mxu0 %v1397
        %1717 = vmatprep.subr.bf16.mxu0 0
        %1718 = vmatpush1.bf16.msra.mxu0 %v1396
        %1719 = vmatprep.subr.bf16.mxu0 0
        %1720 = vmatpush1.bf16.msra.mxu0 %v1395
        %1721 = vmatprep.subr.bf16.mxu0 0
        %1722 = vmatpush1.bf16.msra.mxu0 %v1394
        %1723 = vmatprep.subr.bf16.mxu0 0
        %1724 = vmatpush2.bf16.msra.mxu0 %v1409
        %1725 = vmatprep.subr.bf16.mxu0 0
        %1726 = vmatpush2.bf16.msra.mxu0 %v1408
        %1727 = vmatprep.subr.bf16.mxu0 0
        %1728 = vmatpush2.bf16.msra.mxu0 %v1407
        %1729 = vmatprep.subr.bf16.mxu0 0
        %1730 = vmatpush2.bf16.msra.mxu0 %v1406
        %1731 = vmatprep.subr.bf16.mxu0 0
        %1732 = vmatpush2.bf16.msra.mxu0 %v1405
        %1733 = vmatprep.subr.bf16.mxu0 0
        %1734 = vmatpush2.bf16.msra.mxu0 %v1404
        %1735 = vmatprep.subr.bf16.mxu0 0
        %1736 = vmatpush2.bf16.msra.mxu0 %v1403
        %1737 = vmatprep.subr.bf16.mxu0 0
        %1738 = vmatpush2.bf16.msra.mxu0 %v1402
        %1739 = vmatprep.mubr.bf16.mxu0 %v889
        %1740 = vmatmul.mubr.bf16.gmra.mxu0 %v888
        %v1741 = vpop.f32.mrf.mxu0
        %v1742 = vadd.f32 %v1509, %v1741
        %v1743 = vpop.f32.mrf.mxu0
        %v1744 = vpop.f32.mrf.mxu0
        %v1745 = vadd.f32 %v1512, %v1744
        %v1746 = vpop.f32.mrf.mxu0
        %1747 = vmatprep.mubr.bf16.mxu0 %v895
        %1748 = vmatmul.mubr.bf16.gmra.mxu0 %v894
        %v1749 = vpop.f32.mrf.mxu0
        %v1750 = vadd.f32 %v1517, %v1749
        %v1751 = vpop.f32.mrf.mxu0
        %v1752 = vpop.f32.mrf.mxu0
        %v1753 = vadd.f32 %v1520, %v1752
        %v1754 = vpop.f32.mrf.mxu0
        %1755 = vmatprep.mubr.bf16.mxu0 %v901
        %1756 = vmatmul.mubr.bf16.gmra.mxu0 %v900
        %v1757 = vpop.f32.mrf.mxu0
        %v1758 = vadd.f32 %v1525, %v1757
        %v1759 = vpop.f32.mrf.mxu0
        %v1760 = vpop.f32.mrf.mxu0
        %v1761 = vadd.f32 %v1528, %v1760
        %v1762 = vpop.f32.mrf.mxu0
        %1763 = vmatprep.mubr.bf16.mxu0 %v907
        %1764 = vmatmul.mubr.bf16.gmra.mxu0 %v906
        %v1765 = vpop.f32.mrf.mxu0
        %v1766 = vadd.f32 %v1533, %v1765
        %v1767 = vpop.f32.mrf.mxu0
        %v1768 = vpop.f32.mrf.mxu0
        %v1769 = vadd.f32 %v1536, %v1768
        %v1770 = vpop.f32.mrf.mxu0
        %1771 = vmatprep.mubr.bf16.mxu0 %v913
        %1772 = vmatmul.mubr.bf16.gmra.mxu0 %v912
        %v1773 = vpop.f32.mrf.mxu0
        %v1774 = vadd.f32 %v1541, %v1773
        %v1775 = vpop.f32.mrf.mxu0
        %v1776 = vpop.f32.mrf.mxu0
        %v1777 = vadd.f32 %v1544, %v1776
        %v1778 = vpop.f32.mrf.mxu0
        %1779 = vmatprep.mubr.bf16.mxu0 %v919
        %1780 = vmatmul.mubr.bf16.gmra.mxu0 %v918
        %v1781 = vpop.f32.mrf.mxu0
        %v1782 = vadd.f32 %v1549, %v1781
        %v1783 = vpop.f32.mrf.mxu0
        %v1784 = vpop.f32.mrf.mxu0
        %v1785 = vadd.f32 %v1552, %v1784
        %v1786 = vpop.f32.mrf.mxu0
        %1787 = vmatprep.mubr.bf16.mxu0 %v925
        %1788 = vmatmul.mubr.bf16.gmra.mxu0 %v924
        %v1789 = vpop.f32.mrf.mxu0
        %v1790 = vadd.f32 %v1557, %v1789
        %v1791 = vpop.f32.mrf.mxu0
        %v1792 = vpop.f32.mrf.mxu0
        %v1793 = vadd.f32 %v1560, %v1792
        %v1794 = vpop.f32.mrf.mxu0
        %1795 = vmatprep.mubr.bf16.mxu0 %v931
        %1796 = vmatmul.mubr.bf16.gmra.mxu0 %v930
        %v1797 = vpop.f32.mrf.mxu0
        %v1798 = vadd.f32 %v1565, %v1797
        %v1799 = vpop.f32.mrf.mxu0
        %v1800 = vpop.f32.mrf.mxu0
        %v1801 = vadd.f32 %v1568, %v1800
        %v1802 = vpop.f32.mrf.mxu0
        %1803 = vmatprep.mubr.bf16.mxu0 %v937
        %1804 = vmatmul.mubr.bf16.gmra.mxu0 %v936
        %v1805 = vpop.f32.mrf.mxu0
        %v1806 = vadd.f32 %v1573, %v1805
        %v1807 = vpop.f32.mrf.mxu0
        %v1808 = vpop.f32.mrf.mxu0
        %v1809 = vadd.f32 %v1576, %v1808
        %v1810 = vpop.f32.mrf.mxu0
        %1811 = vmatprep.mubr.bf16.mxu0 %v943
        %1812 = vmatmul.mubr.bf16.gmra.mxu0 %v942
        %v1813 = vpop.f32.mrf.mxu0
        %v1814 = vadd.f32 %v1581, %v1813
        %v1815 = vpop.f32.mrf.mxu0
        %v1816 = vpop.f32.mrf.mxu0
        %v1817 = vadd.f32 %v1584, %v1816
        %v1818 = vpop.f32.mrf.mxu0
        %1819 = vmatprep.mubr.bf16.mxu0 %v949
        %1820 = vmatmul.mubr.bf16.gmra.mxu0 %v948
        %v1821 = vpop.f32.mrf.mxu0
        %v1822 = vadd.f32 %v1589, %v1821
        %v1823 = vpop.f32.mrf.mxu0
        %v1824 = vpop.f32.mrf.mxu0
        %v1825 = vadd.f32 %v1592, %v1824
        %v1826 = vpop.f32.mrf.mxu0
        %1827 = vmatprep.mubr.bf16.mxu0 %v955
        %1828 = vmatmul.mubr.bf16.gmra.mxu0 %v954
        %v1829 = vpop.f32.mrf.mxu0
        %v1830 = vadd.f32 %v1597, %v1829
        %v1831 = vpop.f32.mrf.mxu0
        %v1832 = vpop.f32.mrf.mxu0
        %v1833 = vadd.f32 %v1600, %v1832
        %v1834 = vpop.f32.mrf.mxu0
        %1835 = vmatprep.mubr.bf16.mxu0 %v961
        %1836 = vmatmul.mubr.bf16.gmra.mxu0 %v960
        %v1837 = vpop.f32.mrf.mxu0
        %v1838 = vadd.f32 %v1605, %v1837
        %v1839 = vpop.f32.mrf.mxu0
        %v1840 = vpop.f32.mrf.mxu0
        %v1841 = vadd.f32 %v1608, %v1840
        %v1842 = vpop.f32.mrf.mxu0
        %1843 = vmatprep.mubr.bf16.mxu0 %v967
        %1844 = vmatmul.mubr.bf16.gmra.mxu0 %v966
        %v1845 = vpop.f32.mrf.mxu0
        %v1846 = vadd.f32 %v1613, %v1845
        %v1847 = vpop.f32.mrf.mxu0
        %v1848 = vpop.f32.mrf.mxu0
        %v1849 = vadd.f32 %v1616, %v1848
        %v1850 = vpop.f32.mrf.mxu0
        %1851 = vmatprep.mubr.bf16.mxu0 %v973
        %1852 = vmatmul.mubr.bf16.gmra.mxu0 %v972
        %v1853 = vpop.f32.mrf.mxu0
        %v1854 = vadd.f32 %v1621, %v1853
        %v1855 = vpop.f32.mrf.mxu0
        %v1856 = vpop.f32.mrf.mxu0
        %v1857 = vadd.f32 %v1624, %v1856
        %v1858 = vpop.f32.mrf.mxu0
        %1859 = vmatprep.mubr.bf16.mxu0 %v979
        %1860 = vmatmul.mubr.bf16.gmra.mxu0 %v978
        %v1861 = vpop.f32.mrf.mxu0
        %v1862 = vadd.f32 %v1629, %v1861
        %v1863 = vpop.f32.mrf.mxu0
        %v1864 = vpop.f32.mrf.mxu0
        %v1865 = vadd.f32 %v1632, %v1864
        %v1866 = vpop.f32.mrf.mxu0
        %1867 = vmatprep.mubr.bf16.mxu0 %v985
        %1868 = vmatmul.mubr.bf16.gmra.mxu0 %v984
        %v1869 = vpop.f32.mrf.mxu0
        %v1870 = vadd.f32 %v1637, %v1869
        %v1871 = vpop.f32.mrf.mxu0
        %v1872 = vpop.f32.mrf.mxu0
        %v1873 = vadd.f32 %v1640, %v1872
        %v1874 = vpop.f32.mrf.mxu0
        %1875 = vmatprep.mubr.bf16.mxu0 %v991
        %1876 = vmatmul.mubr.bf16.gmra.mxu0 %v990
        %v1877 = vpop.f32.mrf.mxu0
        %v1878 = vadd.f32 %v1645, %v1877
        %v1879 = vpop.f32.mrf.mxu0
        %v1880 = vpop.f32.mrf.mxu0
        %v1881 = vadd.f32 %v1648, %v1880
        %v1882 = vpop.f32.mrf.mxu0
        %1883 = vmatprep.mubr.bf16.mxu0 %v997
        %1884 = vmatmul.mubr.bf16.gmra.mxu0 %v996
        %v1885 = vpop.f32.mrf.mxu0
        %v1886 = vadd.f32 %v1653, %v1885
        %v1887 = vpop.f32.mrf.mxu0
        %v1888 = vpop.f32.mrf.mxu0
        %v1889 = vadd.f32 %v1656, %v1888
        %v1890 = vpop.f32.mrf.mxu0
        %1891 = vmatprep.mubr.bf16.mxu0 %v1003
        %1892 = vmatmul.mubr.bf16.gmra.mxu0 %v1002
        %v1893 = vpop.f32.mrf.mxu0
        %v1894 = vadd.f32 %v1661, %v1893
        %v1895 = vpop.f32.mrf.mxu0
        %v1896 = vpop.f32.mrf.mxu0
        %v1897 = vadd.f32 %v1664, %v1896
        %v1898 = vpop.f32.mrf.mxu0
        %1899 = vmatprep.mubr.bf16.mxu0 %v1009
        %1900 = vmatmul.mubr.bf16.gmra.mxu0 %v1008
        %v1901 = vpop.f32.mrf.mxu0
        %v1902 = vadd.f32 %v1669, %v1901
        %v1903 = vpop.f32.mrf.mxu0
        %v1904 = vpop.f32.mrf.mxu0
        %v1905 = vadd.f32 %v1672, %v1904
        %v1906 = vpop.f32.mrf.mxu0
        %1907 = vmatprep.mubr.bf16.mxu0 %v1015
        %1908 = vmatmul.mubr.bf16.gmra.mxu0 %v1014
        %v1909 = vpop.f32.mrf.mxu0
        %v1910 = vadd.f32 %v1677, %v1909
        %v1911 = vpop.f32.mrf.mxu0
        %v1912 = vpop.f32.mrf.mxu0
        %v1913 = vadd.f32 %v1680, %v1912
        %v1914 = vpop.f32.mrf.mxu0
        %1915 = vmatprep.mubr.bf16.mxu0 %v1021
        %1916 = vmatmul.mubr.bf16.gmra.mxu0 %v1020
        %v1917 = vpop.f32.mrf.mxu0
        %v1918 = vadd.f32 %v1685, %v1917
        %v1919 = vpop.f32.mrf.mxu0
        %v1920 = vpop.f32.mrf.mxu0
        %v1921 = vadd.f32 %v1688, %v1920
        %v1922 = vpop.f32.mrf.mxu0
        %1923 = vmatprep.mubr.bf16.mxu0 %v1027
        %1924 = vmatmul.mubr.bf16.gmra.mxu0 %v1026
        %v1925 = vpop.f32.mrf.mxu0
        %v1926 = vadd.f32 %v1693, %v1925
        %v1927 = vpop.f32.mrf.mxu0
        %v1928 = vpop.f32.mrf.mxu0
        %v1929 = vadd.f32 %v1696, %v1928
        %v1930 = vpop.f32.mrf.mxu0
        %1931 = vmatprep.mubr.bf16.mxu0 %v1033
        %1932 = vmatmul.mubr.bf16.gmra.mxu0 %v1032
        %v1933 = vpop.f32.mrf.mxu0
        %v1934 = vadd.f32 %v1701, %v1933
        %v1935 = vpop.f32.mrf.mxu0
        %v1936 = vpop.f32.mrf.mxu0
        %v1937 = vadd.f32 %v1704, %v1936
        %v1938 = vpop.f32.mrf.mxu0
        %1939 = vdwg.mxu0
        %1940 = vmatprep.subr.bf16.mxu0 0
        %1941 = vmatpush1.bf16.msra.mxu0 %v1417
        %1942 = vmatprep.subr.bf16.mxu0 0
        %1943 = vmatpush1.bf16.msra.mxu0 %v1416
        %1944 = vmatprep.subr.bf16.mxu0 0
        %1945 = vmatpush1.bf16.msra.mxu0 %v1415
        %1946 = vmatprep.subr.bf16.mxu0 0
        %1947 = vmatpush1.bf16.msra.mxu0 %v1414
        %1948 = vmatprep.subr.bf16.mxu0 0
        %1949 = vmatpush1.bf16.msra.mxu0 %v1413
        %1950 = vmatprep.subr.bf16.mxu0 0
        %1951 = vmatpush1.bf16.msra.mxu0 %v1412
        %1952 = vmatprep.subr.bf16.mxu0 0
        %1953 = vmatpush1.bf16.msra.mxu0 %v1411
        %1954 = vmatprep.subr.bf16.mxu0 0
        %1955 = vmatpush1.bf16.msra.mxu0 %v1410
        %1956 = vmatprep.subr.bf16.mxu0 0
        %1957 = vmatpush2.bf16.msra.mxu0 %v1425
        %1958 = vmatprep.subr.bf16.mxu0 0
        %1959 = vmatpush2.bf16.msra.mxu0 %v1424
        %1960 = vmatprep.subr.bf16.mxu0 0
        %1961 = vmatpush2.bf16.msra.mxu0 %v1423
        %1962 = vmatprep.subr.bf16.mxu0 0
        %1963 = vmatpush2.bf16.msra.mxu0 %v1422
        %1964 = vmatprep.subr.bf16.mxu0 0
        %1965 = vmatpush2.bf16.msra.mxu0 %v1421
        %1966 = vmatprep.subr.bf16.mxu0 0
        %1967 = vmatpush2.bf16.msra.mxu0 %v1420
        %1968 = vmatprep.subr.bf16.mxu0 0
        %1969 = vmatpush2.bf16.msra.mxu0 %v1419
        %1970 = vmatprep.subr.bf16.mxu0 0
        %1971 = vmatpush2.bf16.msra.mxu0 %v1418
        %1972 = vmatprep.mubr.bf16.mxu0 %v891
        %1973 = vmatmul.mubr.bf16.gmra.mxu0 %v890
        %v1974 = vpop.f32.mrf.mxu0
        %v1975 = vadd.f32 %v1742, %v1974
        %v1976 = vpop.f32.mrf.mxu0
        %v1977 = vpop.f32.mrf.mxu0
        %v1978 = vadd.f32 %v1745, %v1977
        %v1979 = vpop.f32.mrf.mxu0
        %1980 = vmatprep.mubr.bf16.mxu0 %v897
        %1981 = vmatmul.mubr.bf16.gmra.mxu0 %v896
        %v1982 = vpop.f32.mrf.mxu0
        %v1983 = vadd.f32 %v1750, %v1982
        %v1984 = vpop.f32.mrf.mxu0
        %v1985 = vpop.f32.mrf.mxu0
        %v1986 = vadd.f32 %v1753, %v1985
        %v1987 = vpop.f32.mrf.mxu0
        %1988 = vmatprep.mubr.bf16.mxu0 %v903
        %1989 = vmatmul.mubr.bf16.gmra.mxu0 %v902
        %v1990 = vpop.f32.mrf.mxu0
        %v1991 = vadd.f32 %v1758, %v1990
        %v1992 = vpop.f32.mrf.mxu0
        %v1993 = vpop.f32.mrf.mxu0
        %v1994 = vadd.f32 %v1761, %v1993
        %v1995 = vpop.f32.mrf.mxu0
        %1996 = vmatprep.mubr.bf16.mxu0 %v909
        %1997 = vmatmul.mubr.bf16.gmra.mxu0 %v908
        %v1998 = vpop.f32.mrf.mxu0
        %v1999 = vadd.f32 %v1766, %v1998
        %v2000 = vpop.f32.mrf.mxu0
        %v2001 = vpop.f32.mrf.mxu0
        %v2002 = vadd.f32 %v1769, %v2001
        %v2003 = vpop.f32.mrf.mxu0
        %2004 = vmatprep.mubr.bf16.mxu0 %v915
        %2005 = vmatmul.mubr.bf16.gmra.mxu0 %v914
        %v2006 = vpop.f32.mrf.mxu0
        %v2007 = vadd.f32 %v1774, %v2006
        %v2008 = vpop.f32.mrf.mxu0
        %v2009 = vpop.f32.mrf.mxu0
        %v2010 = vadd.f32 %v1777, %v2009
        %v2011 = vpop.f32.mrf.mxu0
        %2012 = vmatprep.mubr.bf16.mxu0 %v921
        %2013 = vmatmul.mubr.bf16.gmra.mxu0 %v920
        %v2014 = vpop.f32.mrf.mxu0
        %v2015 = vadd.f32 %v1782, %v2014
        %v2016 = vpop.f32.mrf.mxu0
        %v2017 = vpop.f32.mrf.mxu0
        %v2018 = vadd.f32 %v1785, %v2017
        %v2019 = vpop.f32.mrf.mxu0
        %2020 = vmatprep.mubr.bf16.mxu0 %v927
        %2021 = vmatmul.mubr.bf16.gmra.mxu0 %v926
        %v2022 = vpop.f32.mrf.mxu0
        %v2023 = vadd.f32 %v1790, %v2022
        %v2024 = vpop.f32.mrf.mxu0
        %v2025 = vpop.f32.mrf.mxu0
        %v2026 = vadd.f32 %v1793, %v2025
        %v2027 = vpop.f32.mrf.mxu0
        %2028 = vmatprep.mubr.bf16.mxu0 %v933
        %2029 = vmatmul.mubr.bf16.gmra.mxu0 %v932
        %v2030 = vpop.f32.mrf.mxu0
        %v2031 = vadd.f32 %v1798, %v2030
        %v2032 = vpop.f32.mrf.mxu0
        %v2033 = vpop.f32.mrf.mxu0
        %v2034 = vadd.f32 %v1801, %v2033
        %v2035 = vpop.f32.mrf.mxu0
        %2036 = vmatprep.mubr.bf16.mxu0 %v939
        %2037 = vmatmul.mubr.bf16.gmra.mxu0 %v938
        %v2038 = vpop.f32.mrf.mxu0
        %v2039 = vadd.f32 %v1806, %v2038
        %v2040 = vpop.f32.mrf.mxu0
        %v2041 = vpop.f32.mrf.mxu0
        %v2042 = vadd.f32 %v1809, %v2041
        %v2043 = vpop.f32.mrf.mxu0
        %2044 = vmatprep.mubr.bf16.mxu0 %v945
        %2045 = vmatmul.mubr.bf16.gmra.mxu0 %v944
        %v2046 = vpop.f32.mrf.mxu0
        %v2047 = vadd.f32 %v1814, %v2046
        %v2048 = vpop.f32.mrf.mxu0
        %v2049 = vpop.f32.mrf.mxu0
        %v2050 = vadd.f32 %v1817, %v2049
        %v2051 = vpop.f32.mrf.mxu0
        %2052 = vmatprep.mubr.bf16.mxu0 %v951
        %2053 = vmatmul.mubr.bf16.gmra.mxu0 %v950
        %v2054 = vpop.f32.mrf.mxu0
        %v2055 = vadd.f32 %v1822, %v2054
        %v2056 = vpop.f32.mrf.mxu0
        %v2057 = vpop.f32.mrf.mxu0
        %v2058 = vadd.f32 %v1825, %v2057
        %v2059 = vpop.f32.mrf.mxu0
        %2060 = vmatprep.mubr.bf16.mxu0 %v957
        %2061 = vmatmul.mubr.bf16.gmra.mxu0 %v956
        %v2062 = vpop.f32.mrf.mxu0
        %v2063 = vadd.f32 %v1830, %v2062
        %v2064 = vpop.f32.mrf.mxu0
        %v2065 = vpop.f32.mrf.mxu0
        %v2066 = vadd.f32 %v1833, %v2065
        %v2067 = vpop.f32.mrf.mxu0
        %2068 = vmatprep.mubr.bf16.mxu0 %v963
        %2069 = vmatmul.mubr.bf16.gmra.mxu0 %v962
        %v2070 = vpop.f32.mrf.mxu0
        %v2071 = vadd.f32 %v1838, %v2070
        %v2072 = vpop.f32.mrf.mxu0
        %v2073 = vpop.f32.mrf.mxu0
        %v2074 = vadd.f32 %v1841, %v2073
        %v2075 = vpop.f32.mrf.mxu0
        %2076 = vmatprep.mubr.bf16.mxu0 %v969
        %2077 = vmatmul.mubr.bf16.gmra.mxu0 %v968
        %v2078 = vpop.f32.mrf.mxu0
        %v2079 = vadd.f32 %v1846, %v2078
        %v2080 = vpop.f32.mrf.mxu0
        %v2081 = vpop.f32.mrf.mxu0
        %v2082 = vadd.f32 %v1849, %v2081
        %v2083 = vpop.f32.mrf.mxu0
        %2084 = vmatprep.mubr.bf16.mxu0 %v975
        %2085 = vmatmul.mubr.bf16.gmra.mxu0 %v974
        %v2086 = vpop.f32.mrf.mxu0
        %v2087 = vadd.f32 %v1854, %v2086
        %v2088 = vpop.f32.mrf.mxu0
        %v2089 = vpop.f32.mrf.mxu0
        %v2090 = vadd.f32 %v1857, %v2089
        %v2091 = vpop.f32.mrf.mxu0
        %2092 = vmatprep.mubr.bf16.mxu0 %v981
        %2093 = vmatmul.mubr.bf16.gmra.mxu0 %v980
        %v2094 = vpop.f32.mrf.mxu0
        %v2095 = vadd.f32 %v1862, %v2094
        %v2096 = vpop.f32.mrf.mxu0
        %v2097 = vpop.f32.mrf.mxu0
        %v2098 = vadd.f32 %v1865, %v2097
        %v2099 = vpop.f32.mrf.mxu0
        %2100 = vmatprep.mubr.bf16.mxu0 %v987
        %2101 = vmatmul.mubr.bf16.gmra.mxu0 %v986
        %v2102 = vpop.f32.mrf.mxu0
        %v2103 = vadd.f32 %v1870, %v2102
        %v2104 = vpop.f32.mrf.mxu0
        %v2105 = vpop.f32.mrf.mxu0
        %v2106 = vadd.f32 %v1873, %v2105
        %v2107 = vpop.f32.mrf.mxu0
        %2108 = vmatprep.mubr.bf16.mxu0 %v993
        %2109 = vmatmul.mubr.bf16.gmra.mxu0 %v992
        %v2110 = vpop.f32.mrf.mxu0
        %v2111 = vadd.f32 %v1878, %v2110
        %v2112 = vpop.f32.mrf.mxu0
        %v2113 = vpop.f32.mrf.mxu0
        %v2114 = vadd.f32 %v1881, %v2113
        %v2115 = vpop.f32.mrf.mxu0
        %2116 = vmatprep.mubr.bf16.mxu0 %v999
        %2117 = vmatmul.mubr.bf16.gmra.mxu0 %v998
        %v2118 = vpop.f32.mrf.mxu0
        %v2119 = vadd.f32 %v1886, %v2118
        %v2120 = vpop.f32.mrf.mxu0
        %v2121 = vpop.f32.mrf.mxu0
        %v2122 = vadd.f32 %v1889, %v2121
        %v2123 = vpop.f32.mrf.mxu0
        %2124 = vmatprep.mubr.bf16.mxu0 %v1005
        %2125 = vmatmul.mubr.bf16.gmra.mxu0 %v1004
        %v2126 = vpop.f32.mrf.mxu0
        %v2127 = vadd.f32 %v1894, %v2126
        %v2128 = vpop.f32.mrf.mxu0
        %v2129 = vpop.f32.mrf.mxu0
        %v2130 = vadd.f32 %v1897, %v2129
        %v2131 = vpop.f32.mrf.mxu0
        %2132 = vmatprep.mubr.bf16.mxu0 %v1011
        %2133 = vmatmul.mubr.bf16.gmra.mxu0 %v1010
        %v2134 = vpop.f32.mrf.mxu0
        %v2135 = vadd.f32 %v1902, %v2134
        %v2136 = vpop.f32.mrf.mxu0
        %v2137 = vpop.f32.mrf.mxu0
        %v2138 = vadd.f32 %v1905, %v2137
        %v2139 = vpop.f32.mrf.mxu0
        %2140 = vmatprep.mubr.bf16.mxu0 %v1017
        %2141 = vmatmul.mubr.bf16.gmra.mxu0 %v1016
        %v2142 = vpop.f32.mrf.mxu0
        %v2143 = vadd.f32 %v1910, %v2142
        %v2144 = vpop.f32.mrf.mxu0
        %v2145 = vpop.f32.mrf.mxu0
        %v2146 = vadd.f32 %v1913, %v2145
        %v2147 = vpop.f32.mrf.mxu0
        %2148 = vmatprep.mubr.bf16.mxu0 %v1023
        %2149 = vmatmul.mubr.bf16.gmra.mxu0 %v1022
        %v2150 = vpop.f32.mrf.mxu0
        %v2151 = vadd.f32 %v1918, %v2150
        %v2152 = vpop.f32.mrf.mxu0
        %v2153 = vpop.f32.mrf.mxu0
        %v2154 = vadd.f32 %v1921, %v2153
        %v2155 = vpop.f32.mrf.mxu0
        %2156 = vmatprep.mubr.bf16.mxu0 %v1029
        %2157 = vmatmul.mubr.bf16.gmra.mxu0 %v1028
        %v2158 = vpop.f32.mrf.mxu0
        %v2159 = vadd.f32 %v1926, %v2158
        %v2160 = vpop.f32.mrf.mxu0
        %v2161 = vpop.f32.mrf.mxu0
        %v2162 = vadd.f32 %v1929, %v2161
        %v2163 = vpop.f32.mrf.mxu0
        %2164 = vmatprep.mubr.bf16.mxu0 %v1035
        %2165 = vmatmul.mubr.bf16.gmra.mxu0 %v1034
        %v2166 = vpop.f32.mrf.mxu0
        %v2167 = vadd.f32 %v1934, %v2166
        %v2168 = vpop.f32.mrf.mxu0
        %v2169 = vpop.f32.mrf.mxu0
        %v2170 = vadd.f32 %v1937, %v2169
        %v2171 = vpop.f32.mrf.mxu0
        %2172 = vdwg.mxu0
        %vm2173 = vcmask 408576
        %2174 = vst.msk [vmem:[#allocation2] sm:$0xff] %vm2173, %v1975
        %2175 = vst.msk [vmem:[#allocation2 + $0x8] sm:$0xff] %vm2173, %v1978
        %2176 = vst.msk [vmem:[#allocation2 + $0x10] sm:$0xff] %vm2173, %v1983
        %2177 = vst.msk [vmem:[#allocation2 + $0x18] sm:$0xff] %vm2173, %v1986
        %2178 = vst.msk [vmem:[#allocation2 + $0x20] sm:$0xff] %vm2173, %v1991
        %2179 = vst.msk [vmem:[#allocation2 + $0x28] sm:$0xff] %vm2173, %v1994
        %2180 = vst.msk [vmem:[#allocation2 + $0x30] sm:$0xff] %vm2173, %v1999
        %2181 = vst.msk [vmem:[#allocation2 + $0x38] sm:$0xff] %vm2173, %v2002
        %2182 = vst.msk [vmem:[#allocation2 + $0x40] sm:$0xff] %vm2173, %v2007
        %2183 = vst.msk [vmem:[#allocation2 + $0x48] sm:$0xff] %vm2173, %v2010
        %2184 = vst.msk [vmem:[#allocation2 + $0x50] sm:$0xff] %vm2173, %v2015
        %2185 = vst.msk [vmem:[#allocation2 + $0x58] sm:$0xff] %vm2173, %v2018
        %2186 = vst.msk [vmem:[#allocation2 + $0x60] sm:$0xff] %vm2173, %v2023
        %2187 = vst.msk [vmem:[#allocation2 + $0x68] sm:$0xff] %vm2173, %v2026
        %2188 = vst.msk [vmem:[#allocation2 + $0x70] sm:$0xff] %vm2173, %v2031
        %2189 = vst.msk [vmem:[#allocation2 + $0x78] sm:$0xff] %vm2173, %v2034
        %2190 = vst.msk [vmem:[#allocation2 + $0x80] sm:$0xff] %vm2173, %v2039
        %2191 = vst.msk [vmem:[#allocation2 + $0x88] sm:$0xff] %vm2173, %v2042
        %2192 = vst.msk [vmem:[#allocation2 + $0x90] sm:$0xff] %vm2173, %v2047
        %2193 = vst.msk [vmem:[#allocation2 + $0x98] sm:$0xff] %vm2173, %v2050
        %2194 = vst.msk [vmem:[#allocation2 + $0xa0] sm:$0xff] %vm2173, %v2055
        %2195 = vst.msk [vmem:[#allocation2 + $0xa8] sm:$0xff] %vm2173, %v2058
        %2196 = vst.msk [vmem:[#allocation2 + $0xb0] sm:$0xff] %vm2173, %v2063
        %2197 = vst.msk [vmem:[#allocation2 + $0xb8] sm:$0xff] %vm2173, %v2066
        %2198 = vst.msk [vmem:[#allocation2 + $0xc0] sm:$0xff] %vm2173, %v2071
        %2199 = vst.msk [vmem:[#allocation2 + $0xc8] sm:$0xff] %vm2173, %v2074
        %2200 = vst.msk [vmem:[#allocation2 + $0xd0] sm:$0xff] %vm2173, %v2079
        %2201 = vst.msk [vmem:[#allocation2 + $0xd8] sm:$0xff] %vm2173, %v2082
        %2202 = vst.msk [vmem:[#allocation2 + $0xe0] sm:$0xff] %vm2173, %v2087
        %2203 = vst.msk [vmem:[#allocation2 + $0xe8] sm:$0xff] %vm2173, %v2090
        %2204 = vst.msk [vmem:[#allocation2 + $0xf0] sm:$0xff] %vm2173, %v2095
        %2205 = vst.msk [vmem:[#allocation2 + $0xf8] sm:$0xff] %vm2173, %v2098
        %2206 = vst.msk [vmem:[#allocation2 + $0x100] sm:$0xff] %vm2173, %v2103
        %2207 = vst.msk [vmem:[#allocation2 + $0x108] sm:$0xff] %vm2173, %v2106
        %2208 = vst.msk [vmem:[#allocation2 + $0x110] sm:$0xff] %vm2173, %v2111
        %2209 = vst.msk [vmem:[#allocation2 + $0x118] sm:$0xff] %vm2173, %v2114
        %2210 = vst.msk [vmem:[#allocation2 + $0x120] sm:$0xff] %vm2173, %v2119
        %2211 = vst.msk [vmem:[#allocation2 + $0x128] sm:$0xff] %vm2173, %v2122
        %2212 = vst.msk [vmem:[#allocation2 + $0x130] sm:$0xff] %vm2173, %v2127
        %2213 = vst.msk [vmem:[#allocation2 + $0x138] sm:$0xff] %vm2173, %v2130
        %2214 = vst.msk [vmem:[#allocation2 + $0x140] sm:$0xff] %vm2173, %v2135
        %2215 = vst.msk [vmem:[#allocation2 + $0x148] sm:$0xff] %vm2173, %v2138
        %2216 = vst.msk [vmem:[#allocation2 + $0x150] sm:$0xff] %vm2173, %v2143
        %2217 = vst.msk [vmem:[#allocation2 + $0x158] sm:$0xff] %vm2173, %v2146
        %2218 = vst.msk [vmem:[#allocation2 + $0x160] sm:$0xff] %vm2173, %v2151
        %2219 = vst.msk [vmem:[#allocation2 + $0x168] sm:$0xff] %vm2173, %v2154
        %2220 = vst.msk [vmem:[#allocation2 + $0x170] sm:$0xff] %vm2173, %v2159
        %2221 = vst.msk [vmem:[#allocation2 + $0x178] sm:$0xff] %vm2173, %v2162
        %2222 = vst.msk [vmem:[#allocation2 + $0x180] sm:$0xff] %vm2173, %v2167
        %2223 = vst.msk [vmem:[#allocation2 + $0x188] sm:$0xff] %vm2173, %v2170
        %vm2224 = vcmp.ge.f32.partialorder 0.0, 10.0
        %v2225 = vsel %vm2224, 1.0, 0.0
        %2226 = vst.msk [vmem:[#allocation3] sm:$0xff] %vm2173, %v2225
        %v2227 = vld [vmem:[#allocation2] sm:$0xff]
        %v2228 = vadd.f32 %v2227, 0.0
        %v2229 = vadd.f32 %v2225, 0.0
        %v2230 = vadd.f32 %v2228, 0.0
        %v2231 = vmul.f32 %v2230, 0.9048374
        %v2232 = vadd.f32 %v2229, 0.0
        %v2233 = vmul.f32 %v2232, 0.36787945
        %v2234 = vmul.f32 %v2231, 0.27182817
        %v2235 = vmul.f32 %v2233, -54.365635
        %v2236 = vadd.f32 %v2234, %v2235
        %vm2237 = vcmp.ge.f32.partialorder %v2236, 10.0
        %v2238 = vsel %vm2237, 1.0, 0.0
        %2239 = vst.msk [vmem:[#allocation3 + $0x8] sm:$0xff] %vm2173, %v2238
        %v2240 = vmul.f32 %v2228, 0.9048374
        %v2241 = vld [vmem:[#allocation2 + $0x8] sm:$0xff]
        %v2242 = vadd.f32 %v2240, %v2241
        %v2243 = vmul.f32 %v2229, 0.36787945
        %v2244 = vadd.f32 %v2243, %v2238
        %v2245 = vadd.f32 %v2231, %v2242
        %v2246 = vmul.f32 %v2245, 0.9048374
        %v2247 = vadd.f32 %v2233, %v2244
        %v2248 = vmul.f32 %v2247, 0.36787945
        %v2249 = vmul.f32 %v2246, 0.27182817
        %v2250 = vmul.f32 %v2248, -54.365635
        %v2251 = vadd.f32 %v2249, %v2250
        %vm2252 = vcmp.ge.f32.partialorder %v2251, 10.0
        %v2253 = vsel %vm2252, 1.0, 0.0
        %2254 = vst.msk [vmem:[#allocation3 + $0x10] sm:$0xff] %vm2173, %v2253
        %v2255 = vmul.f32 %v2242, 0.9048374
        %v2256 = vld [vmem:[#allocation2 + $0x10] sm:$0xff]
        %v2257 = vadd.f32 %v2255, %v2256
        %v2258 = vmul.f32 %v2244, 0.36787945
        %v2259 = vadd.f32 %v2258, %v2253
        %v2260 = vadd.f32 %v2246, %v2257
        %v2261 = vmul.f32 %v2260, 0.9048374
        %v2262 = vadd.f32 %v2248, %v2259
        %v2263 = vmul.f32 %v2262, 0.36787945
        %v2264 = vmul.f32 %v2261, 0.27182817
        %v2265 = vmul.f32 %v2263, -54.365635
        %v2266 = vadd.f32 %v2264, %v2265
        %vm2267 = vcmp.ge.f32.partialorder %v2266, 10.0
        %v2268 = vsel %vm2267, 1.0, 0.0
        %2269 = vst.msk [vmem:[#allocation3 + $0x18] sm:$0xff] %vm2173, %v2268
        %v2270 = vmul.f32 %v2257, 0.9048374
        %v2271 = vld [vmem:[#allocation2 + $0x18] sm:$0xff]
        %v2272 = vadd.f32 %v2270, %v2271
        %v2273 = vmul.f32 %v2259, 0.36787945
        %v2274 = vadd.f32 %v2273, %v2268
        %v2275 = vadd.f32 %v2261, %v2272
        %v2276 = vmul.f32 %v2275, 0.9048374
        %v2277 = vadd.f32 %v2263, %v2274
        %v2278 = vmul.f32 %v2277, 0.36787945
        %v2279 = vmul.f32 %v2276, 0.27182817
        %v2280 = vmul.f32 %v2278, -54.365635
        %v2281 = vadd.f32 %v2279, %v2280
        %vm2282 = vcmp.ge.f32.partialorder %v2281, 10.0
        %v2283 = vsel %vm2282, 1.0, 0.0
        %2284 = vst.msk [vmem:[#allocation3 + $0x20] sm:$0xff] %vm2173, %v2283
        %v2285 = vmul.f32 %v2272, 0.9048374
        %v2286 = vld [vmem:[#allocation2 + $0x20] sm:$0xff]
        %v2287 = vadd.f32 %v2285, %v2286
        %v2288 = vmul.f32 %v2274, 0.36787945
        %v2289 = vadd.f32 %v2288, %v2283
        %v2290 = vadd.f32 %v2276, %v2287
        %v2291 = vmul.f32 %v2290, 0.9048374
        %v2292 = vadd.f32 %v2278, %v2289
        %v2293 = vmul.f32 %v2292, 0.36787945
        %v2294 = vmul.f32 %v2291, 0.27182817
        %v2295 = vmul.f32 %v2293, -54.365635
        %v2296 = vadd.f32 %v2294, %v2295
        %vm2297 = vcmp.ge.f32.partialorder %v2296, 10.0
        %v2298 = vsel %vm2297, 1.0, 0.0
        %2299 = vst.msk [vmem:[#allocation3 + $0x28] sm:$0xff] %vm2173, %v2298
        %v2300 = vmul.f32 %v2287, 0.9048374
        %v2301 = vld [vmem:[#allocation2 + $0x28] sm:$0xff]
        %v2302 = vadd.f32 %v2300, %v2301
        %v2303 = vmul.f32 %v2289, 0.36787945
        %v2304 = vadd.f32 %v2303, %v2298
        %v2305 = vadd.f32 %v2291, %v2302
        %v2306 = vmul.f32 %v2305, 0.9048374
        %v2307 = vadd.f32 %v2293, %v2304
        %v2308 = vmul.f32 %v2307, 0.36787945
        %v2309 = vmul.f32 %v2306, 0.27182817
        %v2310 = vmul.f32 %v2308, -54.365635
        %v2311 = vadd.f32 %v2309, %v2310
        %vm2312 = vcmp.ge.f32.partialorder %v2311, 10.0
        %v2313 = vsel %vm2312, 1.0, 0.0
        %2314 = vst.msk [vmem:[#allocation3 + $0x30] sm:$0xff] %vm2173, %v2313
        %v2315 = vmul.f32 %v2302, 0.9048374
        %v2316 = vld [vmem:[#allocation2 + $0x30] sm:$0xff]
        %v2317 = vadd.f32 %v2315, %v2316
        %v2318 = vmul.f32 %v2304, 0.36787945
        %v2319 = vadd.f32 %v2318, %v2313
        %v2320 = vadd.f32 %v2306, %v2317
        %v2321 = vmul.f32 %v2320, 0.9048374
        %v2322 = vadd.f32 %v2308, %v2319
        %v2323 = vmul.f32 %v2322, 0.36787945
        %v2324 = vmul.f32 %v2321, 0.27182817
        %v2325 = vmul.f32 %v2323, -54.365635
        %v2326 = vadd.f32 %v2324, %v2325
        %vm2327 = vcmp.ge.f32.partialorder %v2326, 10.0
        %v2328 = vsel %vm2327, 1.0, 0.0
        %2329 = vst.msk [vmem:[#allocation3 + $0x38] sm:$0xff] %vm2173, %v2328
        %v2330 = vmul.f32 %v2317, 0.9048374
        %v2331 = vld [vmem:[#allocation2 + $0x38] sm:$0xff]
        %v2332 = vadd.f32 %v2330, %v2331
        %v2333 = vmul.f32 %v2319, 0.36787945
        %v2334 = vadd.f32 %v2333, %v2328
        %v2335 = vadd.f32 %v2321, %v2332
        %v2336 = vmul.f32 %v2335, 0.9048374
        %v2337 = vadd.f32 %v2323, %v2334
        %v2338 = vmul.f32 %v2337, 0.36787945
        %v2339 = vmul.f32 %v2336, 0.27182817
        %v2340 = vmul.f32 %v2338, -54.365635
        %v2341 = vadd.f32 %v2339, %v2340
        %vm2342 = vcmp.ge.f32.partialorder %v2341, 10.0
        %v2343 = vsel %vm2342, 1.0, 0.0
        %2344 = vst.msk [vmem:[#allocation3 + $0x40] sm:$0xff] %vm2173, %v2343
        %v2345 = vmul.f32 %v2332, 0.9048374
        %v2346 = vld [vmem:[#allocation2 + $0x40] sm:$0xff]
        %v2347 = vadd.f32 %v2345, %v2346
        %v2348 = vmul.f32 %v2334, 0.36787945
        %v2349 = vadd.f32 %v2348, %v2343
        %v2350 = vadd.f32 %v2336, %v2347
        %v2351 = vmul.f32 %v2350, 0.9048374
        %v2352 = vadd.f32 %v2338, %v2349
        %v2353 = vmul.f32 %v2352, 0.36787945
        %v2354 = vmul.f32 %v2351, 0.27182817
        %v2355 = vmul.f32 %v2353, -54.365635
        %v2356 = vadd.f32 %v2354, %v2355
        %vm2357 = vcmp.ge.f32.partialorder %v2356, 10.0
        %v2358 = vsel %vm2357, 1.0, 0.0
        %2359 = vst.msk [vmem:[#allocation3 + $0x48] sm:$0xff] %vm2173, %v2358
        %v2360 = vmul.f32 %v2347, 0.9048374
        %v2361 = vld [vmem:[#allocation2 + $0x48] sm:$0xff]
        %v2362 = vadd.f32 %v2360, %v2361
        %v2363 = vmul.f32 %v2349, 0.36787945
        %v2364 = vadd.f32 %v2363, %v2358
        %v2365 = vadd.f32 %v2351, %v2362
        %v2366 = vmul.f32 %v2365, 0.9048374
        %v2367 = vadd.f32 %v2353, %v2364
        %v2368 = vmul.f32 %v2367, 0.36787945
        %v2369 = vmul.f32 %v2366, 0.27182817
        %v2370 = vmul.f32 %v2368, -54.365635
        %v2371 = vadd.f32 %v2369, %v2370
        %vm2372 = vcmp.ge.f32.partialorder %v2371, 10.0
        %v2373 = vsel %vm2372, 1.0, 0.0
        %2374 = vst.msk [vmem:[#allocation3 + $0x50] sm:$0xff] %vm2173, %v2373
        %v2375 = vmul.f32 %v2362, 0.9048374
        %v2376 = vld [vmem:[#allocation2 + $0x50] sm:$0xff]
        %v2377 = vadd.f32 %v2375, %v2376
        %v2378 = vmul.f32 %v2364, 0.36787945
        %v2379 = vadd.f32 %v2378, %v2373
        %v2380 = vadd.f32 %v2366, %v2377
        %v2381 = vmul.f32 %v2380, 0.9048374
        %v2382 = vadd.f32 %v2368, %v2379
        %v2383 = vmul.f32 %v2382, 0.36787945
        %v2384 = vmul.f32 %v2381, 0.27182817
        %v2385 = vmul.f32 %v2383, -54.365635
        %v2386 = vadd.f32 %v2384, %v2385
        %vm2387 = vcmp.ge.f32.partialorder %v2386, 10.0
        %v2388 = vsel %vm2387, 1.0, 0.0
        %2389 = vst.msk [vmem:[#allocation3 + $0x58] sm:$0xff] %vm2173, %v2388
        %v2390 = vmul.f32 %v2377, 0.9048374
        %v2391 = vld [vmem:[#allocation2 + $0x58] sm:$0xff]
        %v2392 = vadd.f32 %v2390, %v2391
        %v2393 = vmul.f32 %v2379, 0.36787945
        %v2394 = vadd.f32 %v2393, %v2388
        %v2395 = vadd.f32 %v2381, %v2392
        %v2396 = vmul.f32 %v2395, 0.9048374
        %v2397 = vadd.f32 %v2383, %v2394
        %v2398 = vmul.f32 %v2397, 0.36787945
        %v2399 = vmul.f32 %v2396, 0.27182817
        %v2400 = vmul.f32 %v2398, -54.365635
        %v2401 = vadd.f32 %v2399, %v2400
        %vm2402 = vcmp.ge.f32.partialorder %v2401, 10.0
        %v2403 = vsel %vm2402, 1.0, 0.0
        %2404 = vst.msk [vmem:[#allocation3 + $0x60] sm:$0xff] %vm2173, %v2403
        %v2405 = vmul.f32 %v2392, 0.9048374
        %v2406 = vld [vmem:[#allocation2 + $0x60] sm:$0xff]
        %v2407 = vadd.f32 %v2405, %v2406
        %v2408 = vmul.f32 %v2394, 0.36787945
        %v2409 = vadd.f32 %v2408, %v2403
        %v2410 = vadd.f32 %v2396, %v2407
        %v2411 = vmul.f32 %v2410, 0.9048374
        %v2412 = vadd.f32 %v2398, %v2409
        %v2413 = vmul.f32 %v2412, 0.36787945
        %v2414 = vmul.f32 %v2411, 0.27182817
        %v2415 = vmul.f32 %v2413, -54.365635
        %v2416 = vadd.f32 %v2414, %v2415
        %vm2417 = vcmp.ge.f32.partialorder %v2416, 10.0
        %v2418 = vsel %vm2417, 1.0, 0.0
        %2419 = vst.msk [vmem:[#allocation3 + $0x68] sm:$0xff] %vm2173, %v2418
        %v2420 = vmul.f32 %v2407, 0.9048374
        %v2421 = vld [vmem:[#allocation2 + $0x68] sm:$0xff]
        %v2422 = vadd.f32 %v2420, %v2421
        %v2423 = vmul.f32 %v2409, 0.36787945
        %v2424 = vadd.f32 %v2423, %v2418
        %v2425 = vadd.f32 %v2411, %v2422
        %v2426 = vmul.f32 %v2425, 0.9048374
        %v2427 = vadd.f32 %v2413, %v2424
        %v2428 = vmul.f32 %v2427, 0.36787945
        %v2429 = vmul.f32 %v2426, 0.27182817
        %v2430 = vmul.f32 %v2428, -54.365635
        %v2431 = vadd.f32 %v2429, %v2430
        %vm2432 = vcmp.ge.f32.partialorder %v2431, 10.0
        %v2433 = vsel %vm2432, 1.0, 0.0
        %2434 = vst.msk [vmem:[#allocation3 + $0x70] sm:$0xff] %vm2173, %v2433
        %v2435 = vmul.f32 %v2422, 0.9048374
        %v2436 = vld [vmem:[#allocation2 + $0x70] sm:$0xff]
        %v2437 = vadd.f32 %v2435, %v2436
        %v2438 = vmul.f32 %v2424, 0.36787945
        %v2439 = vadd.f32 %v2438, %v2433
        %v2440 = vadd.f32 %v2426, %v2437
        %v2441 = vmul.f32 %v2440, 0.9048374
        %v2442 = vadd.f32 %v2428, %v2439
        %v2443 = vmul.f32 %v2442, 0.36787945
        %v2444 = vmul.f32 %v2441, 0.27182817
        %v2445 = vmul.f32 %v2443, -54.365635
        %v2446 = vadd.f32 %v2444, %v2445
        %vm2447 = vcmp.ge.f32.partialorder %v2446, 10.0
        %v2448 = vsel %vm2447, 1.0, 0.0
        %2449 = vst.msk [vmem:[#allocation3 + $0x78] sm:$0xff] %vm2173, %v2448
        %v2450 = vmul.f32 %v2437, 0.9048374
        %v2451 = vld [vmem:[#allocation2 + $0x78] sm:$0xff]
        %v2452 = vadd.f32 %v2450, %v2451
        %v2453 = vmul.f32 %v2439, 0.36787945
        %v2454 = vadd.f32 %v2453, %v2448
        %v2455 = vadd.f32 %v2441, %v2452
        %v2456 = vmul.f32 %v2455, 0.9048374
        %v2457 = vadd.f32 %v2443, %v2454
        %v2458 = vmul.f32 %v2457, 0.36787945
        %v2459 = vmul.f32 %v2456, 0.27182817
        %v2460 = vmul.f32 %v2458, -54.365635
        %v2461 = vadd.f32 %v2459, %v2460
        %vm2462 = vcmp.ge.f32.partialorder %v2461, 10.0
        %v2463 = vsel %vm2462, 1.0, 0.0
        %2464 = vst.msk [vmem:[#allocation3 + $0x80] sm:$0xff] %vm2173, %v2463
        %v2465 = vmul.f32 %v2452, 0.9048374
        %v2466 = vld [vmem:[#allocation2 + $0x80] sm:$0xff]
        %v2467 = vadd.f32 %v2465, %v2466
        %v2468 = vmul.f32 %v2454, 0.36787945
        %v2469 = vadd.f32 %v2468, %v2463
        %v2470 = vadd.f32 %v2456, %v2467
        %v2471 = vmul.f32 %v2470, 0.9048374
        %v2472 = vadd.f32 %v2458, %v2469
        %v2473 = vmul.f32 %v2472, 0.36787945
        %v2474 = vmul.f32 %v2471, 0.27182817
        %v2475 = vmul.f32 %v2473, -54.365635
        %v2476 = vadd.f32 %v2474, %v2475
        %vm2477 = vcmp.ge.f32.partialorder %v2476, 10.0
        %v2478 = vsel %vm2477, 1.0, 0.0
        %2479 = vst.msk [vmem:[#allocation3 + $0x88] sm:$0xff] %vm2173, %v2478
        %v2480 = vmul.f32 %v2467, 0.9048374
        %v2481 = vld [vmem:[#allocation2 + $0x88] sm:$0xff]
        %v2482 = vadd.f32 %v2480, %v2481
        %v2483 = vmul.f32 %v2469, 0.36787945
        %v2484 = vadd.f32 %v2483, %v2478
        %v2485 = vadd.f32 %v2471, %v2482
        %v2486 = vmul.f32 %v2485, 0.9048374
        %v2487 = vadd.f32 %v2473, %v2484
        %v2488 = vmul.f32 %v2487, 0.36787945
        %v2489 = vmul.f32 %v2486, 0.27182817
        %v2490 = vmul.f32 %v2488, -54.365635
        %v2491 = vadd.f32 %v2489, %v2490
        %vm2492 = vcmp.ge.f32.partialorder %v2491, 10.0
        %v2493 = vsel %vm2492, 1.0, 0.0
        %2494 = vst.msk [vmem:[#allocation3 + $0x90] sm:$0xff] %vm2173, %v2493
        %v2495 = vmul.f32 %v2482, 0.9048374
        %v2496 = vld [vmem:[#allocation2 + $0x90] sm:$0xff]
        %v2497 = vadd.f32 %v2495, %v2496
        %v2498 = vmul.f32 %v2484, 0.36787945
        %v2499 = vadd.f32 %v2498, %v2493
        %v2500 = vadd.f32 %v2486, %v2497
        %v2501 = vmul.f32 %v2500, 0.9048374
        %v2502 = vadd.f32 %v2488, %v2499
        %v2503 = vmul.f32 %v2502, 0.36787945
        %v2504 = vmul.f32 %v2501, 0.27182817
        %v2505 = vmul.f32 %v2503, -54.365635
        %v2506 = vadd.f32 %v2504, %v2505
        %vm2507 = vcmp.ge.f32.partialorder %v2506, 10.0
        %v2508 = vsel %vm2507, 1.0, 0.0
        %2509 = vst.msk [vmem:[#allocation3 + $0x98] sm:$0xff] %vm2173, %v2508
        %v2510 = vmul.f32 %v2497, 0.9048374
        %v2511 = vld [vmem:[#allocation2 + $0x98] sm:$0xff]
        %v2512 = vadd.f32 %v2510, %v2511
        %v2513 = vmul.f32 %v2499, 0.36787945
        %v2514 = vadd.f32 %v2513, %v2508
        %v2515 = vadd.f32 %v2501, %v2512
        %v2516 = vmul.f32 %v2515, 0.9048374
        %v2517 = vadd.f32 %v2503, %v2514
        %v2518 = vmul.f32 %v2517, 0.36787945
        %v2519 = vmul.f32 %v2516, 0.27182817
        %v2520 = vmul.f32 %v2518, -54.365635
        %v2521 = vadd.f32 %v2519, %v2520
        %vm2522 = vcmp.ge.f32.partialorder %v2521, 10.0
        %v2523 = vsel %vm2522, 1.0, 0.0
        %2524 = vst.msk [vmem:[#allocation3 + $0xa0] sm:$0xff] %vm2173, %v2523
        %v2525 = vmul.f32 %v2512, 0.9048374
        %v2526 = vld [vmem:[#allocation2 + $0xa0] sm:$0xff]
        %v2527 = vadd.f32 %v2525, %v2526
        %v2528 = vmul.f32 %v2514, 0.36787945
        %v2529 = vadd.f32 %v2528, %v2523
        %v2530 = vadd.f32 %v2516, %v2527
        %v2531 = vmul.f32 %v2530, 0.9048374
        %v2532 = vadd.f32 %v2518, %v2529
        %v2533 = vmul.f32 %v2532, 0.36787945
        %v2534 = vmul.f32 %v2531, 0.27182817
        %v2535 = vmul.f32 %v2533, -54.365635
        %v2536 = vadd.f32 %v2534, %v2535
        %vm2537 = vcmp.ge.f32.partialorder %v2536, 10.0
        %v2538 = vsel %vm2537, 1.0, 0.0
        %2539 = vst.msk [vmem:[#allocation3 + $0xa8] sm:$0xff] %vm2173, %v2538
        %v2540 = vmul.f32 %v2527, 0.9048374
        %v2541 = vld [vmem:[#allocation2 + $0xa8] sm:$0xff]
        %v2542 = vadd.f32 %v2540, %v2541
        %v2543 = vmul.f32 %v2529, 0.36787945
        %v2544 = vadd.f32 %v2543, %v2538
        %v2545 = vadd.f32 %v2531, %v2542
        %v2546 = vmul.f32 %v2545, 0.9048374
        %v2547 = vadd.f32 %v2533, %v2544
        %v2548 = vmul.f32 %v2547, 0.36787945
        %v2549 = vmul.f32 %v2546, 0.27182817
        %v2550 = vmul.f32 %v2548, -54.365635
        %v2551 = vadd.f32 %v2549, %v2550
        %vm2552 = vcmp.ge.f32.partialorder %v2551, 10.0
        %v2553 = vsel %vm2552, 1.0, 0.0
        %2554 = vst.msk [vmem:[#allocation3 + $0xb0] sm:$0xff] %vm2173, %v2553
        %v2555 = vmul.f32 %v2542, 0.9048374
        %v2556 = vld [vmem:[#allocation2 + $0xb0] sm:$0xff]
        %v2557 = vadd.f32 %v2555, %v2556
        %v2558 = vmul.f32 %v2544, 0.36787945
        %v2559 = vadd.f32 %v2558, %v2553
        %v2560 = vadd.f32 %v2546, %v2557
        %v2561 = vmul.f32 %v2560, 0.9048374
        %v2562 = vadd.f32 %v2548, %v2559
        %v2563 = vmul.f32 %v2562, 0.36787945
        %v2564 = vmul.f32 %v2561, 0.27182817
        %v2565 = vmul.f32 %v2563, -54.365635
        %v2566 = vadd.f32 %v2564, %v2565
        %vm2567 = vcmp.ge.f32.partialorder %v2566, 10.0
        %v2568 = vsel %vm2567, 1.0, 0.0
        %2569 = vst.msk [vmem:[#allocation3 + $0xb8] sm:$0xff] %vm2173, %v2568
        %v2570 = vmul.f32 %v2557, 0.9048374
        %v2571 = vld [vmem:[#allocation2 + $0xb8] sm:$0xff]
        %v2572 = vadd.f32 %v2570, %v2571
        %v2573 = vmul.f32 %v2559, 0.36787945
        %v2574 = vadd.f32 %v2573, %v2568
        %v2575 = vadd.f32 %v2561, %v2572
        %v2576 = vmul.f32 %v2575, 0.9048374
        %v2577 = vadd.f32 %v2563, %v2574
        %v2578 = vmul.f32 %v2577, 0.36787945
        %v2579 = vmul.f32 %v2576, 0.27182817
        %v2580 = vmul.f32 %v2578, -54.365635
        %v2581 = vadd.f32 %v2579, %v2580
        %vm2582 = vcmp.ge.f32.partialorder %v2581, 10.0
        %v2583 = vsel %vm2582, 1.0, 0.0
        %2584 = vst.msk [vmem:[#allocation3 + $0xc0] sm:$0xff] %vm2173, %v2583
        %v2585 = vmul.f32 %v2572, 0.9048374
        %v2586 = vld [vmem:[#allocation2 + $0xc0] sm:$0xff]
        %v2587 = vadd.f32 %v2585, %v2586
        %v2588 = vmul.f32 %v2574, 0.36787945
        %v2589 = vadd.f32 %v2588, %v2583
        %v2590 = vadd.f32 %v2576, %v2587
        %v2591 = vmul.f32 %v2590, 0.9048374
        %v2592 = vadd.f32 %v2578, %v2589
        %v2593 = vmul.f32 %v2592, 0.36787945
        %v2594 = vmul.f32 %v2591, 0.27182817
        %v2595 = vmul.f32 %v2593, -54.365635
        %v2596 = vadd.f32 %v2594, %v2595
        %vm2597 = vcmp.ge.f32.partialorder %v2596, 10.0
        %v2598 = vsel %vm2597, 1.0, 0.0
        %2599 = vst.msk [vmem:[#allocation3 + $0xc8] sm:$0xff] %vm2173, %v2598
        %v2600 = vmul.f32 %v2587, 0.9048374
        %v2601 = vld [vmem:[#allocation2 + $0xc8] sm:$0xff]
        %v2602 = vadd.f32 %v2600, %v2601
        %v2603 = vmul.f32 %v2589, 0.36787945
        %v2604 = vadd.f32 %v2603, %v2598
        %v2605 = vadd.f32 %v2591, %v2602
        %v2606 = vmul.f32 %v2605, 0.9048374
        %v2607 = vadd.f32 %v2593, %v2604
        %v2608 = vmul.f32 %v2607, 0.36787945
        %v2609 = vmul.f32 %v2606, 0.27182817
        %v2610 = vmul.f32 %v2608, -54.365635
        %v2611 = vadd.f32 %v2609, %v2610
        %vm2612 = vcmp.ge.f32.partialorder %v2611, 10.0
        %v2613 = vsel %vm2612, 1.0, 0.0
        %2614 = vst.msk [vmem:[#allocation3 + $0xd0] sm:$0xff] %vm2173, %v2613
        %v2615 = vmul.f32 %v2602, 0.9048374
        %v2616 = vld [vmem:[#allocation2 + $0xd0] sm:$0xff]
        %v2617 = vadd.f32 %v2615, %v2616
        %v2618 = vmul.f32 %v2604, 0.36787945
        %v2619 = vadd.f32 %v2618, %v2613
        %v2620 = vadd.f32 %v2606, %v2617
        %v2621 = vmul.f32 %v2620, 0.9048374
        %v2622 = vadd.f32 %v2608, %v2619
        %v2623 = vmul.f32 %v2622, 0.36787945
        %v2624 = vmul.f32 %v2621, 0.27182817
        %v2625 = vmul.f32 %v2623, -54.365635
        %v2626 = vadd.f32 %v2624, %v2625
        %vm2627 = vcmp.ge.f32.partialorder %v2626, 10.0
        %v2628 = vsel %vm2627, 1.0, 0.0
        %2629 = vst.msk [vmem:[#allocation3 + $0xd8] sm:$0xff] %vm2173, %v2628
        %v2630 = vmul.f32 %v2617, 0.9048374
        %v2631 = vld [vmem:[#allocation2 + $0xd8] sm:$0xff]
        %v2632 = vadd.f32 %v2630, %v2631
        %v2633 = vmul.f32 %v2619, 0.36787945
        %v2634 = vadd.f32 %v2633, %v2628
        %v2635 = vadd.f32 %v2621, %v2632
        %v2636 = vmul.f32 %v2635, 0.9048374
        %v2637 = vadd.f32 %v2623, %v2634
        %v2638 = vmul.f32 %v2637, 0.36787945
        %v2639 = vmul.f32 %v2636, 0.27182817
        %v2640 = vmul.f32 %v2638, -54.365635
        %v2641 = vadd.f32 %v2639, %v2640
        %vm2642 = vcmp.ge.f32.partialorder %v2641, 10.0
        %v2643 = vsel %vm2642, 1.0, 0.0
        %2644 = vst.msk [vmem:[#allocation3 + $0xe0] sm:$0xff] %vm2173, %v2643
        %v2645 = vmul.f32 %v2632, 0.9048374
        %v2646 = vld [vmem:[#allocation2 + $0xe0] sm:$0xff]
        %v2647 = vadd.f32 %v2645, %v2646
        %v2648 = vmul.f32 %v2634, 0.36787945
        %v2649 = vadd.f32 %v2648, %v2643
        %v2650 = vadd.f32 %v2636, %v2647
        %v2651 = vmul.f32 %v2650, 0.9048374
        %v2652 = vadd.f32 %v2638, %v2649
        %v2653 = vmul.f32 %v2652, 0.36787945
        %v2654 = vmul.f32 %v2651, 0.27182817
        %v2655 = vmul.f32 %v2653, -54.365635
        %v2656 = vadd.f32 %v2654, %v2655
        %vm2657 = vcmp.ge.f32.partialorder %v2656, 10.0
        %v2658 = vsel %vm2657, 1.0, 0.0
        %2659 = vst.msk [vmem:[#allocation3 + $0xe8] sm:$0xff] %vm2173, %v2658
        %v2660 = vmul.f32 %v2647, 0.9048374
        %v2661 = vld [vmem:[#allocation2 + $0xe8] sm:$0xff]
        %v2662 = vadd.f32 %v2660, %v2661
        %v2663 = vmul.f32 %v2649, 0.36787945
        %v2664 = vadd.f32 %v2663, %v2658
        %v2665 = vadd.f32 %v2651, %v2662
        %v2666 = vmul.f32 %v2665, 0.9048374
        %v2667 = vadd.f32 %v2653, %v2664
        %v2668 = vmul.f32 %v2667, 0.36787945
        %v2669 = vmul.f32 %v2666, 0.27182817
        %v2670 = vmul.f32 %v2668, -54.365635
        %v2671 = vadd.f32 %v2669, %v2670
        %vm2672 = vcmp.ge.f32.partialorder %v2671, 10.0
        %v2673 = vsel %vm2672, 1.0, 0.0
        %2674 = vst.msk [vmem:[#allocation3 + $0xf0] sm:$0xff] %vm2173, %v2673
        %v2675 = vmul.f32 %v2662, 0.9048374
        %v2676 = vld [vmem:[#allocation2 + $0xf0] sm:$0xff]
        %v2677 = vadd.f32 %v2675, %v2676
        %v2678 = vmul.f32 %v2664, 0.36787945
        %v2679 = vadd.f32 %v2678, %v2673
        %v2680 = vadd.f32 %v2666, %v2677
        %v2681 = vmul.f32 %v2680, 0.9048374
        %v2682 = vadd.f32 %v2668, %v2679
        %v2683 = vmul.f32 %v2682, 0.36787945
        %v2684 = vmul.f32 %v2681, 0.27182817
        %v2685 = vmul.f32 %v2683, -54.365635
        %v2686 = vadd.f32 %v2684, %v2685
        %vm2687 = vcmp.ge.f32.partialorder %v2686, 10.0
        %v2688 = vsel %vm2687, 1.0, 0.0
        %2689 = vst.msk [vmem:[#allocation3 + $0xf8] sm:$0xff] %vm2173, %v2688
        %v2690 = vmul.f32 %v2677, 0.9048374
        %v2691 = vld [vmem:[#allocation2 + $0xf8] sm:$0xff]
        %v2692 = vadd.f32 %v2690, %v2691
        %v2693 = vmul.f32 %v2679, 0.36787945
        %v2694 = vadd.f32 %v2693, %v2688
        %v2695 = vadd.f32 %v2681, %v2692
        %v2696 = vmul.f32 %v2695, 0.9048374
        %v2697 = vadd.f32 %v2683, %v2694
        %v2698 = vmul.f32 %v2697, 0.36787945
        %v2699 = vmul.f32 %v2696, 0.27182817
        %v2700 = vmul.f32 %v2698, -54.365635
        %v2701 = vadd.f32 %v2699, %v2700
        %vm2702 = vcmp.ge.f32.partialorder %v2701, 10.0
        %v2703 = vsel %vm2702, 1.0, 0.0
        %2704 = vst.msk [vmem:[#allocation3 + $0x100] sm:$0xff] %vm2173, %v2703
        %v2705 = vmul.f32 %v2692, 0.9048374
        %v2706 = vld [vmem:[#allocation2 + $0x100] sm:$0xff]
        %v2707 = vadd.f32 %v2705, %v2706
        %v2708 = vmul.f32 %v2694, 0.36787945
        %v2709 = vadd.f32 %v2708, %v2703
        %v2710 = vadd.f32 %v2696, %v2707
        %v2711 = vmul.f32 %v2710, 0.9048374
        %v2712 = vadd.f32 %v2698, %v2709
        %v2713 = vmul.f32 %v2712, 0.36787945
        %v2714 = vmul.f32 %v2711, 0.27182817
        %v2715 = vmul.f32 %v2713, -54.365635
        %v2716 = vadd.f32 %v2714, %v2715
        %vm2717 = vcmp.ge.f32.partialorder %v2716, 10.0
        %v2718 = vsel %vm2717, 1.0, 0.0
        %2719 = vst.msk [vmem:[#allocation3 + $0x108] sm:$0xff] %vm2173, %v2718
        %v2720 = vmul.f32 %v2707, 0.9048374
        %v2721 = vld [vmem:[#allocation2 + $0x108] sm:$0xff]
        %v2722 = vadd.f32 %v2720, %v2721
        %v2723 = vmul.f32 %v2709, 0.36787945
        %v2724 = vadd.f32 %v2723, %v2718
        %v2725 = vadd.f32 %v2711, %v2722
        %v2726 = vmul.f32 %v2725, 0.9048374
        %v2727 = vadd.f32 %v2713, %v2724
        %v2728 = vmul.f32 %v2727, 0.36787945
        %v2729 = vmul.f32 %v2726, 0.27182817
        %v2730 = vmul.f32 %v2728, -54.365635
        %v2731 = vadd.f32 %v2729, %v2730
        %vm2732 = vcmp.ge.f32.partialorder %v2731, 10.0
        %v2733 = vsel %vm2732, 1.0, 0.0
        %2734 = vst.msk [vmem:[#allocation3 + $0x110] sm:$0xff] %vm2173, %v2733
        %v2735 = vmul.f32 %v2722, 0.9048374
        %v2736 = vld [vmem:[#allocation2 + $0x110] sm:$0xff]
        %v2737 = vadd.f32 %v2735, %v2736
        %v2738 = vmul.f32 %v2724, 0.36787945
        %v2739 = vadd.f32 %v2738, %v2733
        %v2740 = vadd.f32 %v2726, %v2737
        %v2741 = vmul.f32 %v2740, 0.9048374
        %v2742 = vadd.f32 %v2728, %v2739
        %v2743 = vmul.f32 %v2742, 0.36787945
        %v2744 = vmul.f32 %v2741, 0.27182817
        %v2745 = vmul.f32 %v2743, -54.365635
        %v2746 = vadd.f32 %v2744, %v2745
        %vm2747 = vcmp.ge.f32.partialorder %v2746, 10.0
        %v2748 = vsel %vm2747, 1.0, 0.0
        %2749 = vst.msk [vmem:[#allocation3 + $0x118] sm:$0xff] %vm2173, %v2748
        %v2750 = vmul.f32 %v2737, 0.9048374
        %v2751 = vld [vmem:[#allocation2 + $0x118] sm:$0xff]
        %v2752 = vadd.f32 %v2750, %v2751
        %v2753 = vmul.f32 %v2739, 0.36787945
        %v2754 = vadd.f32 %v2753, %v2748
        %v2755 = vadd.f32 %v2741, %v2752
        %v2756 = vmul.f32 %v2755, 0.9048374
        %v2757 = vadd.f32 %v2743, %v2754
        %v2758 = vmul.f32 %v2757, 0.36787945
        %v2759 = vmul.f32 %v2756, 0.27182817
        %v2760 = vmul.f32 %v2758, -54.365635
        %v2761 = vadd.f32 %v2759, %v2760
        %vm2762 = vcmp.ge.f32.partialorder %v2761, 10.0
        %v2763 = vsel %vm2762, 1.0, 0.0
        %2764 = vst.msk [vmem:[#allocation3 + $0x120] sm:$0xff] %vm2173, %v2763
        %v2765 = vmul.f32 %v2752, 0.9048374
        %v2766 = vld [vmem:[#allocation2 + $0x120] sm:$0xff]
        %v2767 = vadd.f32 %v2765, %v2766
        %v2768 = vmul.f32 %v2754, 0.36787945
        %v2769 = vadd.f32 %v2768, %v2763
        %v2770 = vadd.f32 %v2756, %v2767
        %v2771 = vmul.f32 %v2770, 0.9048374
        %v2772 = vadd.f32 %v2758, %v2769
        %v2773 = vmul.f32 %v2772, 0.36787945
        %v2774 = vmul.f32 %v2771, 0.27182817
        %v2775 = vmul.f32 %v2773, -54.365635
        %v2776 = vadd.f32 %v2774, %v2775
        %vm2777 = vcmp.ge.f32.partialorder %v2776, 10.0
        %v2778 = vsel %vm2777, 1.0, 0.0
        %2779 = vst.msk [vmem:[#allocation3 + $0x128] sm:$0xff] %vm2173, %v2778
        %v2780 = vmul.f32 %v2767, 0.9048374
        %v2781 = vld [vmem:[#allocation2 + $0x128] sm:$0xff]
        %v2782 = vadd.f32 %v2780, %v2781
        %v2783 = vmul.f32 %v2769, 0.36787945
        %v2784 = vadd.f32 %v2783, %v2778
        %v2785 = vadd.f32 %v2771, %v2782
        %v2786 = vmul.f32 %v2785, 0.9048374
        %v2787 = vadd.f32 %v2773, %v2784
        %v2788 = vmul.f32 %v2787, 0.36787945
        %v2789 = vmul.f32 %v2786, 0.27182817
        %v2790 = vmul.f32 %v2788, -54.365635
        %v2791 = vadd.f32 %v2789, %v2790
        %vm2792 = vcmp.ge.f32.partialorder %v2791, 10.0
        %v2793 = vsel %vm2792, 1.0, 0.0
        %2794 = vst.msk [vmem:[#allocation3 + $0x130] sm:$0xff] %vm2173, %v2793
        %v2795 = vmul.f32 %v2782, 0.9048374
        %v2796 = vld [vmem:[#allocation2 + $0x130] sm:$0xff]
        %v2797 = vadd.f32 %v2795, %v2796
        %v2798 = vmul.f32 %v2784, 0.36787945
        %v2799 = vadd.f32 %v2798, %v2793
        %v2800 = vadd.f32 %v2786, %v2797
        %v2801 = vmul.f32 %v2800, 0.9048374
        %v2802 = vadd.f32 %v2788, %v2799
        %v2803 = vmul.f32 %v2802, 0.36787945
        %v2804 = vmul.f32 %v2801, 0.27182817
        %v2805 = vmul.f32 %v2803, -54.365635
        %v2806 = vadd.f32 %v2804, %v2805
        %vm2807 = vcmp.ge.f32.partialorder %v2806, 10.0
        %v2808 = vsel %vm2807, 1.0, 0.0
        %2809 = vst.msk [vmem:[#allocation3 + $0x138] sm:$0xff] %vm2173, %v2808
        %v2810 = vmul.f32 %v2797, 0.9048374
        %v2811 = vld [vmem:[#allocation2 + $0x138] sm:$0xff]
        %v2812 = vadd.f32 %v2810, %v2811
        %v2813 = vmul.f32 %v2799, 0.36787945
        %v2814 = vadd.f32 %v2813, %v2808
        %v2815 = vadd.f32 %v2801, %v2812
        %v2816 = vmul.f32 %v2815, 0.9048374
        %v2817 = vadd.f32 %v2803, %v2814
        %v2818 = vmul.f32 %v2817, 0.36787945
        %v2819 = vmul.f32 %v2816, 0.27182817
        %v2820 = vmul.f32 %v2818, -54.365635
        %v2821 = vadd.f32 %v2819, %v2820
        %vm2822 = vcmp.ge.f32.partialorder %v2821, 10.0
        %v2823 = vsel %vm2822, 1.0, 0.0
        %2824 = vst.msk [vmem:[#allocation3 + $0x140] sm:$0xff] %vm2173, %v2823
        %v2825 = vmul.f32 %v2812, 0.9048374
        %v2826 = vld [vmem:[#allocation2 + $0x140] sm:$0xff]
        %v2827 = vadd.f32 %v2825, %v2826
        %v2828 = vmul.f32 %v2814, 0.36787945
        %v2829 = vadd.f32 %v2828, %v2823
        %v2830 = vadd.f32 %v2816, %v2827
        %v2831 = vmul.f32 %v2830, 0.9048374
        %v2832 = vadd.f32 %v2818, %v2829
        %v2833 = vmul.f32 %v2832, 0.36787945
        %v2834 = vmul.f32 %v2831, 0.27182817
        %v2835 = vmul.f32 %v2833, -54.365635
        %v2836 = vadd.f32 %v2834, %v2835
        %vm2837 = vcmp.ge.f32.partialorder %v2836, 10.0
        %v2838 = vsel %vm2837, 1.0, 0.0
        %2839 = vst.msk [vmem:[#allocation3 + $0x148] sm:$0xff] %vm2173, %v2838
        %v2840 = vmul.f32 %v2827, 0.9048374
        %v2841 = vld [vmem:[#allocation2 + $0x148] sm:$0xff]
        %v2842 = vadd.f32 %v2840, %v2841
        %v2843 = vmul.f32 %v2829, 0.36787945
        %v2844 = vadd.f32 %v2843, %v2838
        %v2845 = vadd.f32 %v2831, %v2842
        %v2846 = vmul.f32 %v2845, 0.9048374
        %v2847 = vadd.f32 %v2833, %v2844
        %v2848 = vmul.f32 %v2847, 0.36787945
        %v2849 = vmul.f32 %v2846, 0.27182817
        %v2850 = vmul.f32 %v2848, -54.365635
        %v2851 = vadd.f32 %v2849, %v2850
        %vm2852 = vcmp.ge.f32.partialorder %v2851, 10.0
        %v2853 = vsel %vm2852, 1.0, 0.0
        %2854 = vst.msk [vmem:[#allocation3 + $0x150] sm:$0xff] %vm2173, %v2853
        %v2855 = vmul.f32 %v2842, 0.9048374
        %v2856 = vld [vmem:[#allocation2 + $0x150] sm:$0xff]
        %v2857 = vadd.f32 %v2855, %v2856
        %v2858 = vmul.f32 %v2844, 0.36787945
        %v2859 = vadd.f32 %v2858, %v2853
        %v2860 = vadd.f32 %v2846, %v2857
        %v2861 = vmul.f32 %v2860, 0.9048374
        %v2862 = vadd.f32 %v2848, %v2859
        %v2863 = vmul.f32 %v2862, 0.36787945
        %v2864 = vmul.f32 %v2861, 0.27182817
        %v2865 = vmul.f32 %v2863, -54.365635
        %v2866 = vadd.f32 %v2864, %v2865
        %vm2867 = vcmp.ge.f32.partialorder %v2866, 10.0
        %v2868 = vsel %vm2867, 1.0, 0.0
        %2869 = vst.msk [vmem:[#allocation3 + $0x158] sm:$0xff] %vm2173, %v2868
        %v2870 = vmul.f32 %v2857, 0.9048374
        %v2871 = vld [vmem:[#allocation2 + $0x158] sm:$0xff]
        %v2872 = vadd.f32 %v2870, %v2871
        %v2873 = vmul.f32 %v2859, 0.36787945
        %v2874 = vadd.f32 %v2873, %v2868
        %v2875 = vadd.f32 %v2861, %v2872
        %v2876 = vmul.f32 %v2875, 0.9048374
        %v2877 = vadd.f32 %v2863, %v2874
        %v2878 = vmul.f32 %v2877, 0.36787945
        %v2879 = vmul.f32 %v2876, 0.27182817
        %v2880 = vmul.f32 %v2878, -54.365635
        %v2881 = vadd.f32 %v2879, %v2880
        %vm2882 = vcmp.ge.f32.partialorder %v2881, 10.0
        %v2883 = vsel %vm2882, 1.0, 0.0
        %2884 = vst.msk [vmem:[#allocation3 + $0x160] sm:$0xff] %vm2173, %v2883
        %v2885 = vmul.f32 %v2872, 0.9048374
        %v2886 = vld [vmem:[#allocation2 + $0x160] sm:$0xff]
        %v2887 = vadd.f32 %v2885, %v2886
        %v2888 = vmul.f32 %v2874, 0.36787945
        %v2889 = vadd.f32 %v2888, %v2883
        %v2890 = vadd.f32 %v2876, %v2887
        %v2891 = vmul.f32 %v2890, 0.9048374
        %v2892 = vadd.f32 %v2878, %v2889
        %v2893 = vmul.f32 %v2892, 0.36787945
        %v2894 = vmul.f32 %v2891, 0.27182817
        %v2895 = vmul.f32 %v2893, -54.365635
        %v2896 = vadd.f32 %v2894, %v2895
        %vm2897 = vcmp.ge.f32.partialorder %v2896, 10.0
        %v2898 = vsel %vm2897, 1.0, 0.0
        %2899 = vst.msk [vmem:[#allocation3 + $0x168] sm:$0xff] %vm2173, %v2898
        %v2900 = vmul.f32 %v2887, 0.9048374
        %v2901 = vld [vmem:[#allocation2 + $0x168] sm:$0xff]
        %v2902 = vadd.f32 %v2900, %v2901
        %v2903 = vmul.f32 %v2889, 0.36787945
        %v2904 = vadd.f32 %v2903, %v2898
        %v2905 = vadd.f32 %v2891, %v2902
        %v2906 = vmul.f32 %v2905, 0.9048374
        %v2907 = vadd.f32 %v2893, %v2904
        %v2908 = vmul.f32 %v2907, 0.36787945
        %v2909 = vmul.f32 %v2906, 0.27182817
        %v2910 = vmul.f32 %v2908, -54.365635
        %v2911 = vadd.f32 %v2909, %v2910
        %vm2912 = vcmp.ge.f32.partialorder %v2911, 10.0
        %v2913 = vsel %vm2912, 1.0, 0.0
        %2914 = vst.msk [vmem:[#allocation3 + $0x170] sm:$0xff] %vm2173, %v2913
        %v2915 = vmul.f32 %v2902, 0.9048374
        %v2916 = vld [vmem:[#allocation2 + $0x170] sm:$0xff]
        %v2917 = vadd.f32 %v2915, %v2916
        %v2918 = vmul.f32 %v2904, 0.36787945
        %v2919 = vadd.f32 %v2918, %v2913
        %v2920 = vadd.f32 %v2906, %v2917
        %v2921 = vmul.f32 %v2920, 0.9048374
        %v2922 = vadd.f32 %v2908, %v2919
        %v2923 = vmul.f32 %v2922, 0.36787945
        %v2924 = vmul.f32 %v2921, 0.27182817
        %v2925 = vmul.f32 %v2923, -54.365635
        %v2926 = vadd.f32 %v2924, %v2925
        %vm2927 = vcmp.ge.f32.partialorder %v2926, 10.0
        %v2928 = vsel %vm2927, 1.0, 0.0
        %2929 = vst.msk [vmem:[#allocation3 + $0x178] sm:$0xff] %vm2173, %v2928
        %v2930 = vmul.f32 %v2917, 0.9048374
        %v2931 = vld [vmem:[#allocation2 + $0x178] sm:$0xff]
        %v2932 = vadd.f32 %v2930, %v2931
        %v2933 = vmul.f32 %v2919, 0.36787945
        %v2934 = vadd.f32 %v2933, %v2928
        %v2935 = vadd.f32 %v2921, %v2932
        %v2936 = vmul.f32 %v2935, 0.9048374
        %v2937 = vadd.f32 %v2923, %v2934
        %v2938 = vmul.f32 %v2937, 0.36787945
        %v2939 = vmul.f32 %v2936, 0.27182817
        %v2940 = vmul.f32 %v2938, -54.365635
        %v2941 = vadd.f32 %v2939, %v2940
        %vm2942 = vcmp.ge.f32.partialorder %v2941, 10.0
        %v2943 = vsel %vm2942, 1.0, 0.0
        %2944 = vst.msk [vmem:[#allocation3 + $0x180] sm:$0xff] %vm2173, %v2943
        %v2945 = vmul.f32 %v2932, 0.9048374
        %v2946 = vld [vmem:[#allocation2 + $0x180] sm:$0xff]
        %v2947 = vadd.f32 %v2945, %v2946
        %v2948 = vmul.f32 %v2934, 0.36787945
        %v2949 = vadd.f32 %v2948, %v2943
        %v2950 = vadd.f32 %v2936, %v2947
        %v2951 = vmul.f32 %v2950, 0.9048374
        %v2952 = vadd.f32 %v2938, %v2949
        %v2953 = vmul.f32 %v2952, 0.36787945
        %v2954 = vmul.f32 %v2951, 0.27182817
        %v2955 = vmul.f32 %v2953, -54.365635
        %v2956 = vadd.f32 %v2954, %v2955
        %vm2957 = vcmp.ge.f32.partialorder %v2956, 10.0
        %v2958 = vsel %vm2957, 1.0, 0.0
        %2959 = vst.msk [vmem:[#allocation3 + $0x188] sm:$0xff] %vm2173, %v2958
        %v2960 = vld [vmem:[#allocation3] sm:$0xff]
        %v2961 = vld [vmem:[#allocation3 + $0x8] sm:$0xff]
        %v2962 = vld [vmem:[#allocation3 + $0x10] sm:$0xff]
        %v2963 = vld [vmem:[#allocation3 + $0x18] sm:$0xff]
        %v2964 = vld [vmem:[#allocation3 + $0x20] sm:$0xff]
        %v2965 = vld [vmem:[#allocation3 + $0x28] sm:$0xff]
        %v2966 = vld [vmem:[#allocation3 + $0x30] sm:$0xff]
        %v2967 = vld [vmem:[#allocation3 + $0x38] sm:$0xff]
        %v2968 = vld [vmem:[#allocation3 + $0x40] sm:$0xff]
        %v2969 = vld [vmem:[#allocation3 + $0x48] sm:$0xff]
        %v2970 = vld [vmem:[#allocation3 + $0x50] sm:$0xff]
        %v2971 = vld [vmem:[#allocation3 + $0x58] sm:$0xff]
        %v2972 = vld [vmem:[#allocation3 + $0x60] sm:$0xff]
        %v2973 = vld [vmem:[#allocation3 + $0x68] sm:$0xff]
        %v2974 = vld [vmem:[#allocation3 + $0x70] sm:$0xff]
        %v2975 = vld [vmem:[#allocation3 + $0x78] sm:$0xff]
        %v2976 = vld [vmem:[#allocation3 + $0x80] sm:$0xff]
        %v2977 = vld [vmem:[#allocation3 + $0x88] sm:$0xff]
        %v2978 = vld [vmem:[#allocation3 + $0x90] sm:$0xff]
        %v2979 = vld [vmem:[#allocation3 + $0x98] sm:$0xff]
        %v2980 = vld [vmem:[#allocation3 + $0xa0] sm:$0xff]
        %v2981 = vld [vmem:[#allocation3 + $0xa8] sm:$0xff]
        %v2982 = vld [vmem:[#allocation3 + $0xb0] sm:$0xff]
        %v2983 = vld [vmem:[#allocation3 + $0xb8] sm:$0xff]
        %v2984 = vld [vmem:[#allocation3 + $0xc0] sm:$0xff]
        %v2985 = vld [vmem:[#allocation3 + $0xc8] sm:$0xff]
        %v2986 = vld [vmem:[#allocation3 + $0xd0] sm:$0xff]
        %v2987 = vld [vmem:[#allocation3 + $0xd8] sm:$0xff]
        %v2988 = vld [vmem:[#allocation3 + $0xe0] sm:$0xff]
        %v2989 = vld [vmem:[#allocation3 + $0xe8] sm:$0xff]
        %v2990 = vld [vmem:[#allocation3 + $0xf0] sm:$0xff]
        %v2991 = vld [vmem:[#allocation3 + $0xf8] sm:$0xff]
        %v2992 = vld [vmem:[#allocation3 + $0x100] sm:$0xff]
        %v2993 = vld [vmem:[#allocation3 + $0x108] sm:$0xff]
        %v2994 = vld [vmem:[#allocation3 + $0x110] sm:$0xff]
        %v2995 = vld [vmem:[#allocation3 + $0x118] sm:$0xff]
        %v2996 = vld [vmem:[#allocation3 + $0x120] sm:$0xff]
        %v2997 = vld [vmem:[#allocation3 + $0x128] sm:$0xff]
        %v2998 = vld [vmem:[#allocation3 + $0x130] sm:$0xff]
        %v2999 = vld [vmem:[#allocation3 + $0x138] sm:$0xff]
        %v3000 = vld [vmem:[#allocation3 + $0x140] sm:$0xff]
        %v3001 = vld [vmem:[#allocation3 + $0x148] sm:$0xff]
        %v3002 = vld [vmem:[#allocation3 + $0x150] sm:$0xff]
        %v3003 = vld [vmem:[#allocation3 + $0x158] sm:$0xff]
        %v3004 = vld [vmem:[#allocation3 + $0x160] sm:$0xff]
        %v3005 = vld [vmem:[#allocation3 + $0x168] sm:$0xff]
        %v3006 = vld [vmem:[#allocation3 + $0x170] sm:$0xff]
        %v3007 = vld [vmem:[#allocation3 + $0x178] sm:$0xff]
        %v3008 = vld [vmem:[#allocation3 + $0x180] sm:$0xff]
        %v3009 = vld [vmem:[#allocation3 + $0x188] sm:$0xff]
        %v3010 = vld [vmem:[%s2] sm:$0xff]
        %v3011 = vld [vmem:[%s2 + $0x8] sm:$0xff]
        %v3012 = vld [vmem:[%s2 + $0x10] sm:$0xff]
        %v3013 = vld [vmem:[%s2 + $0x18] sm:$0xff]
        %v3014 = vld [vmem:[%s2 + $0x20] sm:$0xff]
        %v3015 = vld [vmem:[%s2 + $0x28] sm:$0xff]
        %v3016 = vld [vmem:[%s2 + $0x30] sm:$0x3]
        %v3018 = vsel %vm2173, %v2960, 0
        %v3021 = vsel %vm2173, %v2961, 0
        %v3024 = vsel %vm2173, %v2962, 0
        %v3027 = vsel %vm2173, %v2963, 0
        %v3030 = vsel %vm2173, %v2964, 0
        %v3033 = vsel %vm2173, %v2965, 0
        %v3036 = vsel %vm2173, %v2966, 0
        %v3039 = vsel %vm2173, %v2967, 0
        %v3042 = vsel %vm2173, %v2968, 0
        %v3045 = vsel %vm2173, %v2969, 0
        %v3048 = vsel %vm2173, %v2970, 0
        %v3051 = vsel %vm2173, %v2971, 0
        %v3054 = vsel %vm2173, %v2972, 0
        %v3057 = vsel %vm2173, %v2973, 0
        %v3060 = vsel %vm2173, %v2974, 0
        %v3063 = vsel %vm2173, %v2975, 0
        %v3066 = vsel %vm2173, %v2976, 0
        %v3069 = vsel %vm2173, %v2977, 0
        %v3072 = vsel %vm2173, %v2978, 0
        %v3075 = vsel %vm2173, %v2979, 0
        %v3078 = vsel %vm2173, %v2980, 0
        %v3081 = vsel %vm2173, %v2981, 0
        %v3084 = vsel %vm2173, %v2982, 0
        %v3087 = vsel %vm2173, %v2983, 0
        %v3090 = vsel %vm2173, %v2984, 0
        %v3093 = vsel %vm2173, %v2985, 0
        %v3096 = vsel %vm2173, %v2986, 0
        %v3099 = vsel %vm2173, %v2987, 0
        %v3102 = vsel %vm2173, %v2988, 0
        %v3105 = vsel %vm2173, %v2989, 0
        %v3108 = vsel %vm2173, %v2990, 0
        %v3111 = vsel %vm2173, %v2991, 0
        %v3114 = vsel %vm2173, %v2992, 0
        %v3117 = vsel %vm2173, %v2993, 0
        %v3120 = vsel %vm2173, %v2994, 0
        %v3123 = vsel %vm2173, %v2995, 0
        %v3126 = vsel %vm2173, %v2996, 0
        %v3129 = vsel %vm2173, %v2997, 0
        %v3132 = vsel %vm2173, %v2998, 0
        %v3135 = vsel %vm2173, %v2999, 0
        %v3138 = vsel %vm2173, %v3000, 0
        %v3141 = vsel %vm2173, %v3001, 0
        %v3144 = vsel %vm2173, %v3002, 0
        %v3147 = vsel %vm2173, %v3003, 0
        %v3150 = vsel %vm2173, %v3004, 0
        %v3153 = vsel %vm2173, %v3005, 0
        %v3156 = vsel %vm2173, %v3006, 0
        %v3159 = vsel %vm2173, %v3007, 0
        %v3162 = vsel %vm2173, %v3008, 0
        %v3165 = vsel %vm2173, %v3009, 0
        %vm3167 = vcmask 1041408
        %v3169 = vsel %vm3167, %v3016, 0
        %3171 = vmatprep.subr.mxu0 0.0
        %3172 = vmatpush1.msra.mxu0 0.0
        %3173 = vmatprep.subr.mxu0 0.0
        %3174 = vmatpush1.msra.mxu0 0.0
        %3175 = vmatprep.subr.mxu0 0.0
        %3176 = vmatpush1.msra.mxu0 0.0
        %3177 = vmatprep.subr.mxu0 0.0
        %3178 = vmatpush1.msra.mxu0 0.0
        %3179 = vmatprep.subr.mxu0 0.0
        %3180 = vmatpush1.msra.mxu0 0.0
        %3181 = vmatprep.subr.mxu0 0.0
        %3182 = vmatpush1.msra.mxu0 0.0
        %3183 = vmatprep.subr.mxu0 0.0
        %3184 = vmatpush1.msra.mxu0 0.0
        %3185 = vmatprep.subr.mxu0 0.0
        %3186 = vmatpush1.msra.mxu0 0.0
        %3187 = vmatprep.subr.mxu0 0.0
        %3188 = vmatpush1.msra.mxu0 0.0
        %3189 = vmatprep.subr.mxu0 0.0
        %3190 = vmatpush1.msra.mxu0 %v3169
        %3191 = vmatprep.subr.mxu0 0.0
        %3192 = vmatpush1.msra.mxu0 %v3015
        %3193 = vmatprep.subr.mxu0 0.0
        %3194 = vmatpush1.msra.mxu0 %v3014
        %3195 = vmatprep.subr.mxu0 0.0
        %3196 = vmatpush1.msra.mxu0 %v3013
        %3197 = vmatprep.subr.mxu0 0.0
        %3198 = vmatpush1.msra.mxu0 %v3012
        %3199 = vmatprep.subr.mxu0 0.0
        %3200 = vmatpush1.msra.mxu0 %v3011
        %3201 = vmatprep.subr.mxu0 0.0
        %3202 = vmatpush1.msra.mxu0 %v3010
        %3203 = vmatprep.subr.mxu0 0.0
        %3204 = vmatpush2.msra.mxu0 0.0
        %3205 = vmatprep.subr.mxu0 0.0
        %3206 = vmatpush2.msra.mxu0 0.0
        %3207 = vmatprep.subr.mxu0 0.0
        %3208 = vmatpush2.msra.mxu0 0.0
        %3209 = vmatprep.subr.mxu0 0.0
        %3210 = vmatpush2.msra.mxu0 0.0
        %3211 = vmatprep.subr.mxu0 0.0
        %3212 = vmatpush2.msra.mxu0 0.0
        %3213 = vmatprep.subr.mxu0 0.0
        %3214 = vmatpush2.msra.mxu0 0.0
        %3215 = vmatprep.subr.mxu0 0.0
        %3216 = vmatpush2.msra.mxu0 0.0
        %3217 = vmatprep.subr.mxu0 0.0
        %3218 = vmatpush2.msra.mxu0 0.0
        %3219 = vmatprep.subr.mxu0 0.0
        %3220 = vmatpush2.msra.mxu0 0.0
        %3221 = vmatprep.subr.mxu0 0.0
        %3222 = vmatpush2.msra.mxu0 0.0
        %3223 = vmatprep.subr.mxu0 0.0
        %3224 = vmatpush2.msra.mxu0 0.0
        %3225 = vmatprep.subr.mxu0 0.0
        %3226 = vmatpush2.msra.mxu0 0.0
        %3227 = vmatprep.subr.mxu0 0.0
        %3228 = vmatpush2.msra.mxu0 0.0
        %3229 = vmatprep.subr.mxu0 0.0
        %3230 = vmatpush2.msra.mxu0 0.0
        %3231 = vmatprep.subr.mxu0 0.0
        %3232 = vmatpush2.msra.mxu0 0.0
        %3233 = vmatprep.subr.mxu0 0.0
        %3234 = vmatpush2.msra.mxu0 0.0
        %3235 = vmatprep.mubr.f32.mxu0 0.0
        %3236 = vmatmul.mubr.f32.gmra.mxu0 %v3018
        %v3237 = vpop.f32.mrf.mxu0
        %v3238 = vadd.f32 0.0, %v3237
        %v3239 = vpop.f32.mrf.mxu0
        %3240 = vmatprep.mubr.f32.mxu0 0.0
        %3241 = vmatmul.mubr.f32.gmra.mxu0 %v3021
        %v3242 = vpop.f32.mrf.mxu0
        %v3243 = vadd.f32 0.0, %v3242
        %v3244 = vpop.f32.mrf.mxu0
        %3245 = vmatprep.mubr.f32.mxu0 0.0
        %3246 = vmatmul.mubr.f32.gmra.mxu0 %v3024
        %v3247 = vpop.f32.mrf.mxu0
        %v3248 = vadd.f32 0.0, %v3247
        %v3249 = vpop.f32.mrf.mxu0
        %3250 = vmatprep.mubr.f32.mxu0 0.0
        %3251 = vmatmul.mubr.f32.gmra.mxu0 %v3027
        %v3252 = vpop.f32.mrf.mxu0
        %v3253 = vadd.f32 0.0, %v3252
        %v3254 = vpop.f32.mrf.mxu0
        %3255 = vmatprep.mubr.f32.mxu0 0.0
        %3256 = vmatmul.mubr.f32.gmra.mxu0 %v3030
        %v3257 = vpop.f32.mrf.mxu0
        %v3258 = vadd.f32 0.0, %v3257
        %v3259 = vpop.f32.mrf.mxu0
        %3260 = vmatprep.mubr.f32.mxu0 0.0
        %3261 = vmatmul.mubr.f32.gmra.mxu0 %v3033
        %v3262 = vpop.f32.mrf.mxu0
        %v3263 = vadd.f32 0.0, %v3262
        %v3264 = vpop.f32.mrf.mxu0
        %3265 = vmatprep.mubr.f32.mxu0 0.0
        %3266 = vmatmul.mubr.f32.gmra.mxu0 %v3036
        %v3267 = vpop.f32.mrf.mxu0
        %v3268 = vadd.f32 0.0, %v3267
        %v3269 = vpop.f32.mrf.mxu0
        %3270 = vmatprep.mubr.f32.mxu0 0.0
        %3271 = vmatmul.mubr.f32.gmra.mxu0 %v3039
        %v3272 = vpop.f32.mrf.mxu0
        %v3273 = vadd.f32 0.0, %v3272
        %v3274 = vpop.f32.mrf.mxu0
        %3275 = vmatprep.mubr.f32.mxu0 0.0
        %3276 = vmatmul.mubr.f32.gmra.mxu0 %v3042
        %v3277 = vpop.f32.mrf.mxu0
        %v3278 = vadd.f32 0.0, %v3277
        %v3279 = vpop.f32.mrf.mxu0
        %3280 = vmatprep.mubr.f32.mxu0 0.0
        %3281 = vmatmul.mubr.f32.gmra.mxu0 %v3045
        %v3282 = vpop.f32.mrf.mxu0
        %v3283 = vadd.f32 0.0, %v3282
        %v3284 = vpop.f32.mrf.mxu0
        %3285 = vmatprep.mubr.f32.mxu0 0.0
        %3286 = vmatmul.mubr.f32.gmra.mxu0 %v3048
        %v3287 = vpop.f32.mrf.mxu0
        %v3288 = vadd.f32 0.0, %v3287
        %v3289 = vpop.f32.mrf.mxu0
        %3290 = vmatprep.mubr.f32.mxu0 0.0
        %3291 = vmatmul.mubr.f32.gmra.mxu0 %v3051
        %v3292 = vpop.f32.mrf.mxu0
        %v3293 = vadd.f32 0.0, %v3292
        %v3294 = vpop.f32.mrf.mxu0
        %3295 = vmatprep.mubr.f32.mxu0 0.0
        %3296 = vmatmul.mubr.f32.gmra.mxu0 %v3054
        %v3297 = vpop.f32.mrf.mxu0
        %v3298 = vadd.f32 0.0, %v3297
        %v3299 = vpop.f32.mrf.mxu0
        %3300 = vmatprep.mubr.f32.mxu0 0.0
        %3301 = vmatmul.mubr.f32.gmra.mxu0 %v3057
        %v3302 = vpop.f32.mrf.mxu0
        %v3303 = vadd.f32 0.0, %v3302
        %v3304 = vpop.f32.mrf.mxu0
        %3305 = vmatprep.mubr.f32.mxu0 0.0
        %3306 = vmatmul.mubr.f32.gmra.mxu0 %v3060
        %v3307 = vpop.f32.mrf.mxu0
        %v3308 = vadd.f32 0.0, %v3307
        %v3309 = vpop.f32.mrf.mxu0
        %3310 = vmatprep.mubr.f32.mxu0 0.0
        %3311 = vmatmul.mubr.f32.gmra.mxu0 %v3063
        %v3312 = vpop.f32.mrf.mxu0
        %v3313 = vadd.f32 0.0, %v3312
        %v3314 = vpop.f32.mrf.mxu0
        %3315 = vmatprep.mubr.f32.mxu0 0.0
        %3316 = vmatmul.mubr.f32.gmra.mxu0 %v3066
        %v3317 = vpop.f32.mrf.mxu0
        %v3318 = vadd.f32 0.0, %v3317
        %v3319 = vpop.f32.mrf.mxu0
        %3320 = vmatprep.mubr.f32.mxu0 0.0
        %3321 = vmatmul.mubr.f32.gmra.mxu0 %v3069
        %v3322 = vpop.f32.mrf.mxu0
        %v3323 = vadd.f32 0.0, %v3322
        %v3324 = vpop.f32.mrf.mxu0
        %3325 = vmatprep.mubr.f32.mxu0 0.0
        %3326 = vmatmul.mubr.f32.gmra.mxu0 %v3072
        %v3327 = vpop.f32.mrf.mxu0
        %v3328 = vadd.f32 0.0, %v3327
        %v3329 = vpop.f32.mrf.mxu0
        %3330 = vmatprep.mubr.f32.mxu0 0.0
        %3331 = vmatmul.mubr.f32.gmra.mxu0 %v3075
        %v3332 = vpop.f32.mrf.mxu0
        %v3333 = vadd.f32 0.0, %v3332
        %v3334 = vpop.f32.mrf.mxu0
        %3335 = vmatprep.mubr.f32.mxu0 0.0
        %3336 = vmatmul.mubr.f32.gmra.mxu0 %v3078
        %v3337 = vpop.f32.mrf.mxu0
        %v3338 = vadd.f32 0.0, %v3337
        %v3339 = vpop.f32.mrf.mxu0
        %3340 = vmatprep.mubr.f32.mxu0 0.0
        %3341 = vmatmul.mubr.f32.gmra.mxu0 %v3081
        %v3342 = vpop.f32.mrf.mxu0
        %v3343 = vadd.f32 0.0, %v3342
        %v3344 = vpop.f32.mrf.mxu0
        %3345 = vmatprep.mubr.f32.mxu0 0.0
        %3346 = vmatmul.mubr.f32.gmra.mxu0 %v3084
        %v3347 = vpop.f32.mrf.mxu0
        %v3348 = vadd.f32 0.0, %v3347
        %v3349 = vpop.f32.mrf.mxu0
        %3350 = vmatprep.mubr.f32.mxu0 0.0
        %3351 = vmatmul.mubr.f32.gmra.mxu0 %v3087
        %v3352 = vpop.f32.mrf.mxu0
        %v3353 = vadd.f32 0.0, %v3352
        %v3354 = vpop.f32.mrf.mxu0
        %3355 = vmatprep.mubr.f32.mxu0 0.0
        %3356 = vmatmul.mubr.f32.gmra.mxu0 %v3090
        %v3357 = vpop.f32.mrf.mxu0
        %v3358 = vadd.f32 0.0, %v3357
        %v3359 = vpop.f32.mrf.mxu0
        %3360 = vmatprep.mubr.f32.mxu0 0.0
        %3361 = vmatmul.mubr.f32.gmra.mxu0 %v3093
        %v3362 = vpop.f32.mrf.mxu0
        %v3363 = vadd.f32 0.0, %v3362
        %v3364 = vpop.f32.mrf.mxu0
        %3365 = vmatprep.mubr.f32.mxu0 0.0
        %3366 = vmatmul.mubr.f32.gmra.mxu0 %v3096
        %v3367 = vpop.f32.mrf.mxu0
        %v3368 = vadd.f32 0.0, %v3367
        %v3369 = vpop.f32.mrf.mxu0
        %3370 = vmatprep.mubr.f32.mxu0 0.0
        %3371 = vmatmul.mubr.f32.gmra.mxu0 %v3099
        %v3372 = vpop.f32.mrf.mxu0
        %v3373 = vadd.f32 0.0, %v3372
        %v3374 = vpop.f32.mrf.mxu0
        %3375 = vmatprep.mubr.f32.mxu0 0.0
        %3376 = vmatmul.mubr.f32.gmra.mxu0 %v3102
        %v3377 = vpop.f32.mrf.mxu0
        %v3378 = vadd.f32 0.0, %v3377
        %v3379 = vpop.f32.mrf.mxu0
        %3380 = vmatprep.mubr.f32.mxu0 0.0
        %3381 = vmatmul.mubr.f32.gmra.mxu0 %v3105
        %v3382 = vpop.f32.mrf.mxu0
        %v3383 = vadd.f32 0.0, %v3382
        %v3384 = vpop.f32.mrf.mxu0
        %3385 = vmatprep.mubr.f32.mxu0 0.0
        %3386 = vmatmul.mubr.f32.gmra.mxu0 %v3108
        %v3387 = vpop.f32.mrf.mxu0
        %v3388 = vadd.f32 0.0, %v3387
        %v3389 = vpop.f32.mrf.mxu0
        %3390 = vmatprep.mubr.f32.mxu0 0.0
        %3391 = vmatmul.mubr.f32.gmra.mxu0 %v3111
        %v3392 = vpop.f32.mrf.mxu0
        %v3393 = vadd.f32 0.0, %v3392
        %v3394 = vpop.f32.mrf.mxu0
        %3395 = vmatprep.mubr.f32.mxu0 0.0
        %3396 = vmatmul.mubr.f32.gmra.mxu0 %v3114
        %v3397 = vpop.f32.mrf.mxu0
        %v3398 = vadd.f32 0.0, %v3397
        %v3399 = vpop.f32.mrf.mxu0
        %3400 = vmatprep.mubr.f32.mxu0 0.0
        %3401 = vmatmul.mubr.f32.gmra.mxu0 %v3117
        %v3402 = vpop.f32.mrf.mxu0
        %v3403 = vadd.f32 0.0, %v3402
        %v3404 = vpop.f32.mrf.mxu0
        %3405 = vmatprep.mubr.f32.mxu0 0.0
        %3406 = vmatmul.mubr.f32.gmra.mxu0 %v3120
        %v3407 = vpop.f32.mrf.mxu0
        %v3408 = vadd.f32 0.0, %v3407
        %v3409 = vpop.f32.mrf.mxu0
        %3410 = vmatprep.mubr.f32.mxu0 0.0
        %3411 = vmatmul.mubr.f32.gmra.mxu0 %v3123
        %v3412 = vpop.f32.mrf.mxu0
        %v3413 = vadd.f32 0.0, %v3412
        %v3414 = vpop.f32.mrf.mxu0
        %3415 = vmatprep.mubr.f32.mxu0 0.0
        %3416 = vmatmul.mubr.f32.gmra.mxu0 %v3126
        %v3417 = vpop.f32.mrf.mxu0
        %v3418 = vadd.f32 0.0, %v3417
        %v3419 = vpop.f32.mrf.mxu0
        %3420 = vmatprep.mubr.f32.mxu0 0.0
        %3421 = vmatmul.mubr.f32.gmra.mxu0 %v3129
        %v3422 = vpop.f32.mrf.mxu0
        %v3423 = vadd.f32 0.0, %v3422
        %v3424 = vpop.f32.mrf.mxu0
        %3425 = vmatprep.mubr.f32.mxu0 0.0
        %3426 = vmatmul.mubr.f32.gmra.mxu0 %v3132
        %v3427 = vpop.f32.mrf.mxu0
        %v3428 = vadd.f32 0.0, %v3427
        %v3429 = vpop.f32.mrf.mxu0
        %3430 = vmatprep.mubr.f32.mxu0 0.0
        %3431 = vmatmul.mubr.f32.gmra.mxu0 %v3135
        %v3432 = vpop.f32.mrf.mxu0
        %v3433 = vadd.f32 0.0, %v3432
        %v3434 = vpop.f32.mrf.mxu0
        %3435 = vmatprep.mubr.f32.mxu0 0.0
        %3436 = vmatmul.mubr.f32.gmra.mxu0 %v3138
        %v3437 = vpop.f32.mrf.mxu0
        %v3438 = vadd.f32 0.0, %v3437
        %v3439 = vpop.f32.mrf.mxu0
        %3440 = vmatprep.mubr.f32.mxu0 0.0
        %3441 = vmatmul.mubr.f32.gmra.mxu0 %v3141
        %v3442 = vpop.f32.mrf.mxu0
        %v3443 = vadd.f32 0.0, %v3442
        %v3444 = vpop.f32.mrf.mxu0
        %3445 = vmatprep.mubr.f32.mxu0 0.0
        %3446 = vmatmul.mubr.f32.gmra.mxu0 %v3144
        %v3447 = vpop.f32.mrf.mxu0
        %v3448 = vadd.f32 0.0, %v3447
        %v3449 = vpop.f32.mrf.mxu0
        %3450 = vmatprep.mubr.f32.mxu0 0.0
        %3451 = vmatmul.mubr.f32.gmra.mxu0 %v3147
        %v3452 = vpop.f32.mrf.mxu0
        %v3453 = vadd.f32 0.0, %v3452
        %v3454 = vpop.f32.mrf.mxu0
        %3455 = vmatprep.mubr.f32.mxu0 0.0
        %3456 = vmatmul.mubr.f32.gmra.mxu0 %v3150
        %v3457 = vpop.f32.mrf.mxu0
        %v3458 = vadd.f32 0.0, %v3457
        %v3459 = vpop.f32.mrf.mxu0
        %3460 = vmatprep.mubr.f32.mxu0 0.0
        %3461 = vmatmul.mubr.f32.gmra.mxu0 %v3153
        %v3462 = vpop.f32.mrf.mxu0
        %v3463 = vadd.f32 0.0, %v3462
        %v3464 = vpop.f32.mrf.mxu0
        %3465 = vmatprep.mubr.f32.mxu0 0.0
        %3466 = vmatmul.mubr.f32.gmra.mxu0 %v3156
        %v3467 = vpop.f32.mrf.mxu0
        %v3468 = vadd.f32 0.0, %v3467
        %v3469 = vpop.f32.mrf.mxu0
        %3470 = vmatprep.mubr.f32.mxu0 0.0
        %3471 = vmatmul.mubr.f32.gmra.mxu0 %v3159
        %v3472 = vpop.f32.mrf.mxu0
        %v3473 = vadd.f32 0.0, %v3472
        %v3474 = vpop.f32.mrf.mxu0
        %3475 = vmatprep.mubr.f32.mxu0 0.0
        %3476 = vmatmul.mubr.f32.gmra.mxu0 %v3162
        %v3477 = vpop.f32.mrf.mxu0
        %v3478 = vadd.f32 0.0, %v3477
        %v3479 = vpop.f32.mrf.mxu0
        %3480 = vmatprep.mubr.f32.mxu0 0.0
        %3481 = vmatmul.mubr.f32.gmra.mxu0 %v3165
        %v3482 = vpop.f32.mrf.mxu0
        %v3483 = vadd.f32 0.0, %v3482
        %v3484 = vpop.f32.mrf.mxu0
        %3485 = vdwg.mxu0
        %vm3486 = vcmask 15360
        %3487 = vst.msk [vmem:[#allocation4] sm:$0xff] %vm3486, %v3238
        %3488 = vst.msk [vmem:[#allocation4 + $0x8] sm:$0xff] %vm3486, %v3243
        %3489 = vst.msk [vmem:[#allocation4 + $0x10] sm:$0xff] %vm3486, %v3248
        %3490 = vst.msk [vmem:[#allocation4 + $0x18] sm:$0xff] %vm3486, %v3253
        %3491 = vst.msk [vmem:[#allocation4 + $0x20] sm:$0xff] %vm3486, %v3258
        %3492 = vst.msk [vmem:[#allocation4 + $0x28] sm:$0xff] %vm3486, %v3263
        %3493 = vst.msk [vmem:[#allocation4 + $0x30] sm:$0xff] %vm3486, %v3268
        %3494 = vst.msk [vmem:[#allocation4 + $0x38] sm:$0xff] %vm3486, %v3273
        %3495 = vst.msk [vmem:[#allocation4 + $0x40] sm:$0xff] %vm3486, %v3278
        %3496 = vst.msk [vmem:[#allocation4 + $0x48] sm:$0xff] %vm3486, %v3283
        %3497 = vst.msk [vmem:[#allocation4 + $0x50] sm:$0xff] %vm3486, %v3288
        %3498 = vst.msk [vmem:[#allocation4 + $0x58] sm:$0xff] %vm3486, %v3293
        %3499 = vst.msk [vmem:[#allocation4 + $0x60] sm:$0xff] %vm3486, %v3298
        %3500 = vst.msk [vmem:[#allocation4 + $0x68] sm:$0xff] %vm3486, %v3303
        %3501 = vst.msk [vmem:[#allocation4 + $0x70] sm:$0xff] %vm3486, %v3308
        %3502 = vst.msk [vmem:[#allocation4 + $0x78] sm:$0xff] %vm3486, %v3313
        %3503 = vst.msk [vmem:[#allocation4 + $0x80] sm:$0xff] %vm3486, %v3318
        %3504 = vst.msk [vmem:[#allocation4 + $0x88] sm:$0xff] %vm3486, %v3323
        %3505 = vst.msk [vmem:[#allocation4 + $0x90] sm:$0xff] %vm3486, %v3328
        %3506 = vst.msk [vmem:[#allocation4 + $0x98] sm:$0xff] %vm3486, %v3333
        %3507 = vst.msk [vmem:[#allocation4 + $0xa0] sm:$0xff] %vm3486, %v3338
        %3508 = vst.msk [vmem:[#allocation4 + $0xa8] sm:$0xff] %vm3486, %v3343
        %3509 = vst.msk [vmem:[#allocation4 + $0xb0] sm:$0xff] %vm3486, %v3348
        %3510 = vst.msk [vmem:[#allocation4 + $0xb8] sm:$0xff] %vm3486, %v3353
        %3511 = vst.msk [vmem:[#allocation4 + $0xc0] sm:$0xff] %vm3486, %v3358
        %3512 = vst.msk [vmem:[#allocation4 + $0xc8] sm:$0xff] %vm3486, %v3363
        %3513 = vst.msk [vmem:[#allocation4 + $0xd0] sm:$0xff] %vm3486, %v3368
        %3514 = vst.msk [vmem:[#allocation4 + $0xd8] sm:$0xff] %vm3486, %v3373
        %3515 = vst.msk [vmem:[#allocation4 + $0xe0] sm:$0xff] %vm3486, %v3378
        %3516 = vst.msk [vmem:[#allocation4 + $0xe8] sm:$0xff] %vm3486, %v3383
        %3517 = vst.msk [vmem:[#allocation4 + $0xf0] sm:$0xff] %vm3486, %v3388
        %3518 = vst.msk [vmem:[#allocation4 + $0xf8] sm:$0xff] %vm3486, %v3393
        %3519 = vst.msk [vmem:[#allocation4 + $0x100] sm:$0xff] %vm3486, %v3398
        %3520 = vst.msk [vmem:[#allocation4 + $0x108] sm:$0xff] %vm3486, %v3403
        %3521 = vst.msk [vmem:[#allocation4 + $0x110] sm:$0xff] %vm3486, %v3408
        %3522 = vst.msk [vmem:[#allocation4 + $0x118] sm:$0xff] %vm3486, %v3413
        %3523 = vst.msk [vmem:[#allocation4 + $0x120] sm:$0xff] %vm3486, %v3418
        %3524 = vst.msk [vmem:[#allocation4 + $0x128] sm:$0xff] %vm3486, %v3423
        %3525 = vst.msk [vmem:[#allocation4 + $0x130] sm:$0xff] %vm3486, %v3428
        %3526 = vst.msk [vmem:[#allocation4 + $0x138] sm:$0xff] %vm3486, %v3433
        %3527 = vst.msk [vmem:[#allocation4 + $0x140] sm:$0xff] %vm3486, %v3438
        %3528 = vst.msk [vmem:[#allocation4 + $0x148] sm:$0xff] %vm3486, %v3443
        %3529 = vst.msk [vmem:[#allocation4 + $0x150] sm:$0xff] %vm3486, %v3448
        %3530 = vst.msk [vmem:[#allocation4 + $0x158] sm:$0xff] %vm3486, %v3453
        %3531 = vst.msk [vmem:[#allocation4 + $0x160] sm:$0xff] %vm3486, %v3458
        %3532 = vst.msk [vmem:[#allocation4 + $0x168] sm:$0xff] %vm3486, %v3463
        %3533 = vst.msk [vmem:[#allocation4 + $0x170] sm:$0xff] %vm3486, %v3468
        %3534 = vst.msk [vmem:[#allocation4 + $0x178] sm:$0xff] %vm3486, %v3473
        %3535 = vst.msk [vmem:[#allocation4 + $0x180] sm:$0xff] %vm3486, %v3478
        %3536 = vst.msk [vmem:[#allocation4 + $0x188] sm:$0xff] %vm3486, %v3483
        %v3537 = vld [vmem:[#allocation4] sm:$0xff]
        %v3538 = vadd.f32 %v3537, 0.0
        %v3539 = vadd.f32 %v3538, 0.0
        %v3540 = vmul.f32 %v3539, 0.9048374
        %v3541 = vmul.f32 %v3540, 0.27182817
        %v3542 = vadd.f32 %v3541, %v2235
        %vm3543 = vcmp.ge.f32.partialorder %v3542, 10.0
        %v3544 = vsel %vm3543, 1.0, 0.0
        %v3545 = vmul.f32 %v3538, 0.9048374
        %v3546 = vld [vmem:[#allocation4 + $0x8] sm:$0xff]
        %v3547 = vadd.f32 %v3545, %v3546
        %v3548 = vadd.f32 %v2243, %v3544
        %v3549 = vadd.f32 %v2229, %v3544
        %v3550 = vadd.f32 %v3540, %v3547
        %v3551 = vmul.f32 %v3550, 0.9048374
        %v3552 = vadd.f32 %v2233, %v3548
        %v3553 = vmul.f32 %v3552, 0.36787945
        %v3554 = vmul.f32 %v3551, 0.27182817
        %v3555 = vmul.f32 %v3553, -54.365635
        %v3556 = vadd.f32 %v3554, %v3555
        %vm3557 = vcmp.ge.f32.partialorder %v3556, 10.0
        %v3558 = vsel %vm3557, 1.0, 0.0
        %v3559 = vmul.f32 %v3547, 0.9048374
        %v3560 = vld [vmem:[#allocation4 + $0x10] sm:$0xff]
        %v3561 = vadd.f32 %v3559, %v3560
        %v3562 = vmul.f32 %v3548, 0.36787945
        %v3563 = vadd.f32 %v3562, %v3558
        %v3564 = vadd.f32 %v3549, %v3558
        %v3565 = vadd.f32 %v3551, %v3561
        %v3566 = vmul.f32 %v3565, 0.9048374
        %v3567 = vadd.f32 %v3553, %v3563
        %v3568 = vmul.f32 %v3567, 0.36787945
        %v3569 = vmul.f32 %v3566, 0.27182817
        %v3570 = vmul.f32 %v3568, -54.365635
        %v3571 = vadd.f32 %v3569, %v3570
        %vm3572 = vcmp.ge.f32.partialorder %v3571, 10.0
        %v3573 = vsel %vm3572, 1.0, 0.0
        %v3574 = vmul.f32 %v3561, 0.9048374
        %v3575 = vld [vmem:[#allocation4 + $0x18] sm:$0xff]
        %v3576 = vadd.f32 %v3574, %v3575
        %v3577 = vmul.f32 %v3563, 0.36787945
        %v3578 = vadd.f32 %v3577, %v3573
        %v3579 = vadd.f32 %v3564, %v3573
        %v3580 = vadd.f32 %v3566, %v3576
        %v3581 = vmul.f32 %v3580, 0.9048374
        %v3582 = vadd.f32 %v3568, %v3578
        %v3583 = vmul.f32 %v3582, 0.36787945
        %v3584 = vmul.f32 %v3581, 0.27182817
        %v3585 = vmul.f32 %v3583, -54.365635
        %v3586 = vadd.f32 %v3584, %v3585
        %vm3587 = vcmp.ge.f32.partialorder %v3586, 10.0
        %v3588 = vsel %vm3587, 1.0, 0.0
        %v3589 = vmul.f32 %v3576, 0.9048374
        %v3590 = vld [vmem:[#allocation4 + $0x20] sm:$0xff]
        %v3591 = vadd.f32 %v3589, %v3590
        %v3592 = vmul.f32 %v3578, 0.36787945
        %v3593 = vadd.f32 %v3592, %v3588
        %v3594 = vadd.f32 %v3579, %v3588
        %v3595 = vadd.f32 %v3581, %v3591
        %v3596 = vmul.f32 %v3595, 0.9048374
        %v3597 = vadd.f32 %v3583, %v3593
        %v3598 = vmul.f32 %v3597, 0.36787945
        %v3599 = vmul.f32 %v3596, 0.27182817
        %v3600 = vmul.f32 %v3598, -54.365635
        %v3601 = vadd.f32 %v3599, %v3600
        %vm3602 = vcmp.ge.f32.partialorder %v3601, 10.0
        %v3603 = vsel %vm3602, 1.0, 0.0
        %v3604 = vmul.f32 %v3591, 0.9048374
        %v3605 = vld [vmem:[#allocation4 + $0x28] sm:$0xff]
        %v3606 = vadd.f32 %v3604, %v3605
        %v3607 = vmul.f32 %v3593, 0.36787945
        %v3608 = vadd.f32 %v3607, %v3603
        %v3609 = vadd.f32 %v3594, %v3603
        %v3610 = vadd.f32 %v3596, %v3606
        %v3611 = vmul.f32 %v3610, 0.9048374
        %v3612 = vadd.f32 %v3598, %v3608
        %v3613 = vmul.f32 %v3612, 0.36787945
        %v3614 = vmul.f32 %v3611, 0.27182817
        %v3615 = vmul.f32 %v3613, -54.365635
        %v3616 = vadd.f32 %v3614, %v3615
        %vm3617 = vcmp.ge.f32.partialorder %v3616, 10.0
        %v3618 = vsel %vm3617, 1.0, 0.0
        %v3619 = vmul.f32 %v3606, 0.9048374
        %v3620 = vld [vmem:[#allocation4 + $0x30] sm:$0xff]
        %v3621 = vadd.f32 %v3619, %v3620
        %v3622 = vmul.f32 %v3608, 0.36787945
        %v3623 = vadd.f32 %v3622, %v3618
        %v3624 = vadd.f32 %v3609, %v3618
        %v3625 = vadd.f32 %v3611, %v3621
        %v3626 = vmul.f32 %v3625, 0.9048374
        %v3627 = vadd.f32 %v3613, %v3623
        %v3628 = vmul.f32 %v3627, 0.36787945
        %v3629 = vmul.f32 %v3626, 0.27182817
        %v3630 = vmul.f32 %v3628, -54.365635
        %v3631 = vadd.f32 %v3629, %v3630
        %vm3632 = vcmp.ge.f32.partialorder %v3631, 10.0
        %v3633 = vsel %vm3632, 1.0, 0.0
        %v3634 = vmul.f32 %v3621, 0.9048374
        %v3635 = vld [vmem:[#allocation4 + $0x38] sm:$0xff]
        %v3636 = vadd.f32 %v3634, %v3635
        %v3637 = vmul.f32 %v3623, 0.36787945
        %v3638 = vadd.f32 %v3637, %v3633
        %v3639 = vadd.f32 %v3624, %v3633
        %v3640 = vadd.f32 %v3626, %v3636
        %v3641 = vmul.f32 %v3640, 0.9048374
        %v3642 = vadd.f32 %v3628, %v3638
        %v3643 = vmul.f32 %v3642, 0.36787945
        %v3644 = vmul.f32 %v3641, 0.27182817
        %v3645 = vmul.f32 %v3643, -54.365635
        %v3646 = vadd.f32 %v3644, %v3645
        %vm3647 = vcmp.ge.f32.partialorder %v3646, 10.0
        %v3648 = vsel %vm3647, 1.0, 0.0
        %v3649 = vmul.f32 %v3636, 0.9048374
        %v3650 = vld [vmem:[#allocation4 + $0x40] sm:$0xff]
        %v3651 = vadd.f32 %v3649, %v3650
        %v3652 = vmul.f32 %v3638, 0.36787945
        %v3653 = vadd.f32 %v3652, %v3648
        %v3654 = vadd.f32 %v3639, %v3648
        %v3655 = vadd.f32 %v3641, %v3651
        %v3656 = vmul.f32 %v3655, 0.9048374
        %v3657 = vadd.f32 %v3643, %v3653
        %v3658 = vmul.f32 %v3657, 0.36787945
        %v3659 = vmul.f32 %v3656, 0.27182817
        %v3660 = vmul.f32 %v3658, -54.365635
        %v3661 = vadd.f32 %v3659, %v3660
        %vm3662 = vcmp.ge.f32.partialorder %v3661, 10.0
        %v3663 = vsel %vm3662, 1.0, 0.0
        %v3664 = vmul.f32 %v3651, 0.9048374
        %v3665 = vld [vmem:[#allocation4 + $0x48] sm:$0xff]
        %v3666 = vadd.f32 %v3664, %v3665
        %v3667 = vmul.f32 %v3653, 0.36787945
        %v3668 = vadd.f32 %v3667, %v3663
        %v3669 = vadd.f32 %v3654, %v3663
        %v3670 = vadd.f32 %v3656, %v3666
        %v3671 = vmul.f32 %v3670, 0.9048374
        %v3672 = vadd.f32 %v3658, %v3668
        %v3673 = vmul.f32 %v3672, 0.36787945
        %v3674 = vmul.f32 %v3671, 0.27182817
        %v3675 = vmul.f32 %v3673, -54.365635
        %v3676 = vadd.f32 %v3674, %v3675
        %vm3677 = vcmp.ge.f32.partialorder %v3676, 10.0
        %v3678 = vsel %vm3677, 1.0, 0.0
        %v3679 = vmul.f32 %v3666, 0.9048374
        %v3680 = vld [vmem:[#allocation4 + $0x50] sm:$0xff]
        %v3681 = vadd.f32 %v3679, %v3680
        %v3682 = vmul.f32 %v3668, 0.36787945
        %v3683 = vadd.f32 %v3682, %v3678
        %v3684 = vadd.f32 %v3669, %v3678
        %v3685 = vadd.f32 %v3671, %v3681
        %v3686 = vmul.f32 %v3685, 0.9048374
        %v3687 = vadd.f32 %v3673, %v3683
        %v3688 = vmul.f32 %v3687, 0.36787945
        %v3689 = vmul.f32 %v3686, 0.27182817
        %v3690 = vmul.f32 %v3688, -54.365635
        %v3691 = vadd.f32 %v3689, %v3690
        %vm3692 = vcmp.ge.f32.partialorder %v3691, 10.0
        %v3693 = vsel %vm3692, 1.0, 0.0
        %v3694 = vmul.f32 %v3681, 0.9048374
        %v3695 = vld [vmem:[#allocation4 + $0x58] sm:$0xff]
        %v3696 = vadd.f32 %v3694, %v3695
        %v3697 = vmul.f32 %v3683, 0.36787945
        %v3698 = vadd.f32 %v3697, %v3693
        %v3699 = vadd.f32 %v3684, %v3693
        %v3700 = vadd.f32 %v3686, %v3696
        %v3701 = vmul.f32 %v3700, 0.9048374
        %v3702 = vadd.f32 %v3688, %v3698
        %v3703 = vmul.f32 %v3702, 0.36787945
        %v3704 = vmul.f32 %v3701, 0.27182817
        %v3705 = vmul.f32 %v3703, -54.365635
        %v3706 = vadd.f32 %v3704, %v3705
        %vm3707 = vcmp.ge.f32.partialorder %v3706, 10.0
        %v3708 = vsel %vm3707, 1.0, 0.0
        %v3709 = vmul.f32 %v3696, 0.9048374
        %v3710 = vld [vmem:[#allocation4 + $0x60] sm:$0xff]
        %v3711 = vadd.f32 %v3709, %v3710
        %v3712 = vmul.f32 %v3698, 0.36787945
        %v3713 = vadd.f32 %v3712, %v3708
        %v3714 = vadd.f32 %v3699, %v3708
        %v3715 = vadd.f32 %v3701, %v3711
        %v3716 = vmul.f32 %v3715, 0.9048374
        %v3717 = vadd.f32 %v3703, %v3713
        %v3718 = vmul.f32 %v3717, 0.36787945
        %v3719 = vmul.f32 %v3716, 0.27182817
        %v3720 = vmul.f32 %v3718, -54.365635
        %v3721 = vadd.f32 %v3719, %v3720
        %vm3722 = vcmp.ge.f32.partialorder %v3721, 10.0
        %v3723 = vsel %vm3722, 1.0, 0.0
        %v3724 = vmul.f32 %v3711, 0.9048374
        %v3725 = vld [vmem:[#allocation4 + $0x68] sm:$0xff]
        %v3726 = vadd.f32 %v3724, %v3725
        %v3727 = vmul.f32 %v3713, 0.36787945
        %v3728 = vadd.f32 %v3727, %v3723
        %v3729 = vadd.f32 %v3714, %v3723
        %v3730 = vadd.f32 %v3716, %v3726
        %v3731 = vmul.f32 %v3730, 0.9048374
        %v3732 = vadd.f32 %v3718, %v3728
        %v3733 = vmul.f32 %v3732, 0.36787945
        %v3734 = vmul.f32 %v3731, 0.27182817
        %v3735 = vmul.f32 %v3733, -54.365635
        %v3736 = vadd.f32 %v3734, %v3735
        %vm3737 = vcmp.ge.f32.partialorder %v3736, 10.0
        %v3738 = vsel %vm3737, 1.0, 0.0
        %v3739 = vmul.f32 %v3726, 0.9048374
        %v3740 = vld [vmem:[#allocation4 + $0x70] sm:$0xff]
        %v3741 = vadd.f32 %v3739, %v3740
        %v3742 = vmul.f32 %v3728, 0.36787945
        %v3743 = vadd.f32 %v3742, %v3738
        %v3744 = vadd.f32 %v3729, %v3738
        %v3745 = vadd.f32 %v3731, %v3741
        %v3746 = vmul.f32 %v3745, 0.9048374
        %v3747 = vadd.f32 %v3733, %v3743
        %v3748 = vmul.f32 %v3747, 0.36787945
        %v3749 = vmul.f32 %v3746, 0.27182817
        %v3750 = vmul.f32 %v3748, -54.365635
        %v3751 = vadd.f32 %v3749, %v3750
        %vm3752 = vcmp.ge.f32.partialorder %v3751, 10.0
        %v3753 = vsel %vm3752, 1.0, 0.0
        %v3754 = vmul.f32 %v3741, 0.9048374
        %v3755 = vld [vmem:[#allocation4 + $0x78] sm:$0xff]
        %v3756 = vadd.f32 %v3754, %v3755
        %v3757 = vmul.f32 %v3743, 0.36787945
        %v3758 = vadd.f32 %v3757, %v3753
        %v3759 = vadd.f32 %v3744, %v3753
        %v3760 = vadd.f32 %v3746, %v3756
        %v3761 = vmul.f32 %v3760, 0.9048374
        %v3762 = vadd.f32 %v3748, %v3758
        %v3763 = vmul.f32 %v3762, 0.36787945
        %v3764 = vmul.f32 %v3761, 0.27182817
        %v3765 = vmul.f32 %v3763, -54.365635
        %v3766 = vadd.f32 %v3764, %v3765
        %vm3767 = vcmp.ge.f32.partialorder %v3766, 10.0
        %v3768 = vsel %vm3767, 1.0, 0.0
        %v3769 = vmul.f32 %v3756, 0.9048374
        %v3770 = vld [vmem:[#allocation4 + $0x80] sm:$0xff]
        %v3771 = vadd.f32 %v3769, %v3770
        %v3772 = vmul.f32 %v3758, 0.36787945
        %v3773 = vadd.f32 %v3772, %v3768
        %v3774 = vadd.f32 %v3759, %v3768
        %v3775 = vadd.f32 %v3761, %v3771
        %v3776 = vmul.f32 %v3775, 0.9048374
        %v3777 = vadd.f32 %v3763, %v3773
        %v3778 = vmul.f32 %v3777, 0.36787945
        %v3779 = vmul.f32 %v3776, 0.27182817
        %v3780 = vmul.f32 %v3778, -54.365635
        %v3781 = vadd.f32 %v3779, %v3780
        %vm3782 = vcmp.ge.f32.partialorder %v3781, 10.0
        %v3783 = vsel %vm3782, 1.0, 0.0
        %v3784 = vmul.f32 %v3771, 0.9048374
        %v3785 = vld [vmem:[#allocation4 + $0x88] sm:$0xff]
        %v3786 = vadd.f32 %v3784, %v3785
        %v3787 = vmul.f32 %v3773, 0.36787945
        %v3788 = vadd.f32 %v3787, %v3783
        %v3789 = vadd.f32 %v3774, %v3783
        %v3790 = vadd.f32 %v3776, %v3786
        %v3791 = vmul.f32 %v3790, 0.9048374
        %v3792 = vadd.f32 %v3778, %v3788
        %v3793 = vmul.f32 %v3792, 0.36787945
        %v3794 = vmul.f32 %v3791, 0.27182817
        %v3795 = vmul.f32 %v3793, -54.365635
        %v3796 = vadd.f32 %v3794, %v3795
        %vm3797 = vcmp.ge.f32.partialorder %v3796, 10.0
        %v3798 = vsel %vm3797, 1.0, 0.0
        %v3799 = vmul.f32 %v3786, 0.9048374
        %v3800 = vld [vmem:[#allocation4 + $0x90] sm:$0xff]
        %v3801 = vadd.f32 %v3799, %v3800
        %v3802 = vmul.f32 %v3788, 0.36787945
        %v3803 = vadd.f32 %v3802, %v3798
        %v3804 = vadd.f32 %v3789, %v3798
        %v3805 = vadd.f32 %v3791, %v3801
        %v3806 = vmul.f32 %v3805, 0.9048374
        %v3807 = vadd.f32 %v3793, %v3803
        %v3808 = vmul.f32 %v3807, 0.36787945
        %v3809 = vmul.f32 %v3806, 0.27182817
        %v3810 = vmul.f32 %v3808, -54.365635
        %v3811 = vadd.f32 %v3809, %v3810
        %vm3812 = vcmp.ge.f32.partialorder %v3811, 10.0
        %v3813 = vsel %vm3812, 1.0, 0.0
        %v3814 = vmul.f32 %v3801, 0.9048374
        %v3815 = vld [vmem:[#allocation4 + $0x98] sm:$0xff]
        %v3816 = vadd.f32 %v3814, %v3815
        %v3817 = vmul.f32 %v3803, 0.36787945
        %v3818 = vadd.f32 %v3817, %v3813
        %v3819 = vadd.f32 %v3804, %v3813
        %v3820 = vadd.f32 %v3806, %v3816
        %v3821 = vmul.f32 %v3820, 0.9048374
        %v3822 = vadd.f32 %v3808, %v3818
        %v3823 = vmul.f32 %v3822, 0.36787945
        %v3824 = vmul.f32 %v3821, 0.27182817
        %v3825 = vmul.f32 %v3823, -54.365635
        %v3826 = vadd.f32 %v3824, %v3825
        %vm3827 = vcmp.ge.f32.partialorder %v3826, 10.0
        %v3828 = vsel %vm3827, 1.0, 0.0
        %v3829 = vmul.f32 %v3816, 0.9048374
        %v3830 = vld [vmem:[#allocation4 + $0xa0] sm:$0xff]
        %v3831 = vadd.f32 %v3829, %v3830
        %v3832 = vmul.f32 %v3818, 0.36787945
        %v3833 = vadd.f32 %v3832, %v3828
        %v3834 = vadd.f32 %v3819, %v3828
        %v3835 = vadd.f32 %v3821, %v3831
        %v3836 = vmul.f32 %v3835, 0.9048374
        %v3837 = vadd.f32 %v3823, %v3833
        %v3838 = vmul.f32 %v3837, 0.36787945
        %v3839 = vmul.f32 %v3836, 0.27182817
        %v3840 = vmul.f32 %v3838, -54.365635
        %v3841 = vadd.f32 %v3839, %v3840
        %vm3842 = vcmp.ge.f32.partialorder %v3841, 10.0
        %v3843 = vsel %vm3842, 1.0, 0.0
        %v3844 = vmul.f32 %v3831, 0.9048374
        %v3845 = vld [vmem:[#allocation4 + $0xa8] sm:$0xff]
        %v3846 = vadd.f32 %v3844, %v3845
        %v3847 = vmul.f32 %v3833, 0.36787945
        %v3848 = vadd.f32 %v3847, %v3843
        %v3849 = vadd.f32 %v3834, %v3843
        %v3850 = vadd.f32 %v3836, %v3846
        %v3851 = vmul.f32 %v3850, 0.9048374
        %v3852 = vadd.f32 %v3838, %v3848
        %v3853 = vmul.f32 %v3852, 0.36787945
        %v3854 = vmul.f32 %v3851, 0.27182817
        %v3855 = vmul.f32 %v3853, -54.365635
        %v3856 = vadd.f32 %v3854, %v3855
        %vm3857 = vcmp.ge.f32.partialorder %v3856, 10.0
        %v3858 = vsel %vm3857, 1.0, 0.0
        %v3859 = vmul.f32 %v3846, 0.9048374
        %v3860 = vld [vmem:[#allocation4 + $0xb0] sm:$0xff]
        %v3861 = vadd.f32 %v3859, %v3860
        %v3862 = vmul.f32 %v3848, 0.36787945
        %v3863 = vadd.f32 %v3862, %v3858
        %v3864 = vadd.f32 %v3849, %v3858
        %v3865 = vadd.f32 %v3851, %v3861
        %v3866 = vmul.f32 %v3865, 0.9048374
        %v3867 = vadd.f32 %v3853, %v3863
        %v3868 = vmul.f32 %v3867, 0.36787945
        %v3869 = vmul.f32 %v3866, 0.27182817
        %v3870 = vmul.f32 %v3868, -54.365635
        %v3871 = vadd.f32 %v3869, %v3870
        %vm3872 = vcmp.ge.f32.partialorder %v3871, 10.0
        %v3873 = vsel %vm3872, 1.0, 0.0
        %v3874 = vmul.f32 %v3861, 0.9048374
        %v3875 = vld [vmem:[#allocation4 + $0xb8] sm:$0xff]
        %v3876 = vadd.f32 %v3874, %v3875
        %v3877 = vmul.f32 %v3863, 0.36787945
        %v3878 = vadd.f32 %v3877, %v3873
        %v3879 = vadd.f32 %v3864, %v3873
        %v3880 = vadd.f32 %v3866, %v3876
        %v3881 = vmul.f32 %v3880, 0.9048374
        %v3882 = vadd.f32 %v3868, %v3878
        %v3883 = vmul.f32 %v3882, 0.36787945
        %v3884 = vmul.f32 %v3881, 0.27182817
        %v3885 = vmul.f32 %v3883, -54.365635
        %v3886 = vadd.f32 %v3884, %v3885
        %vm3887 = vcmp.ge.f32.partialorder %v3886, 10.0
        %v3888 = vsel %vm3887, 1.0, 0.0
        %v3889 = vmul.f32 %v3876, 0.9048374
        %v3890 = vld [vmem:[#allocation4 + $0xc0] sm:$0xff]
        %v3891 = vadd.f32 %v3889, %v3890
        %v3892 = vmul.f32 %v3878, 0.36787945
        %v3893 = vadd.f32 %v3892, %v3888
        %v3894 = vadd.f32 %v3879, %v3888
        %v3895 = vadd.f32 %v3881, %v3891
        %v3896 = vmul.f32 %v3895, 0.9048374
        %v3897 = vadd.f32 %v3883, %v3893
        %v3898 = vmul.f32 %v3897, 0.36787945
        %v3899 = vmul.f32 %v3896, 0.27182817
        %v3900 = vmul.f32 %v3898, -54.365635
        %v3901 = vadd.f32 %v3899, %v3900
        %vm3902 = vcmp.ge.f32.partialorder %v3901, 10.0
        %v3903 = vsel %vm3902, 1.0, 0.0
        %v3904 = vmul.f32 %v3891, 0.9048374
        %v3905 = vld [vmem:[#allocation4 + $0xc8] sm:$0xff]
        %v3906 = vadd.f32 %v3904, %v3905
        %v3907 = vmul.f32 %v3893, 0.36787945
        %v3908 = vadd.f32 %v3907, %v3903
        %v3909 = vadd.f32 %v3894, %v3903
        %v3910 = vadd.f32 %v3896, %v3906
        %v3911 = vmul.f32 %v3910, 0.9048374
        %v3912 = vadd.f32 %v3898, %v3908
        %v3913 = vmul.f32 %v3912, 0.36787945
        %v3914 = vmul.f32 %v3911, 0.27182817
        %v3915 = vmul.f32 %v3913, -54.365635
        %v3916 = vadd.f32 %v3914, %v3915
        %vm3917 = vcmp.ge.f32.partialorder %v3916, 10.0
        %v3918 = vsel %vm3917, 1.0, 0.0
        %v3919 = vmul.f32 %v3906, 0.9048374
        %v3920 = vld [vmem:[#allocation4 + $0xd0] sm:$0xff]
        %v3921 = vadd.f32 %v3919, %v3920
        %v3922 = vmul.f32 %v3908, 0.36787945
        %v3923 = vadd.f32 %v3922, %v3918
        %v3924 = vadd.f32 %v3909, %v3918
        %v3925 = vadd.f32 %v3911, %v3921
        %v3926 = vmul.f32 %v3925, 0.9048374
        %v3927 = vadd.f32 %v3913, %v3923
        %v3928 = vmul.f32 %v3927, 0.36787945
        %v3929 = vmul.f32 %v3926, 0.27182817
        %v3930 = vmul.f32 %v3928, -54.365635
        %v3931 = vadd.f32 %v3929, %v3930
        %vm3932 = vcmp.ge.f32.partialorder %v3931, 10.0
        %v3933 = vsel %vm3932, 1.0, 0.0
        %v3934 = vmul.f32 %v3921, 0.9048374
        %v3935 = vld [vmem:[#allocation4 + $0xd8] sm:$0xff]
        %v3936 = vadd.f32 %v3934, %v3935
        %v3937 = vmul.f32 %v3923, 0.36787945
        %v3938 = vadd.f32 %v3937, %v3933
        %v3939 = vadd.f32 %v3924, %v3933
        %v3940 = vadd.f32 %v3926, %v3936
        %v3941 = vmul.f32 %v3940, 0.9048374
        %v3942 = vadd.f32 %v3928, %v3938
        %v3943 = vmul.f32 %v3942, 0.36787945
        %v3944 = vmul.f32 %v3941, 0.27182817
        %v3945 = vmul.f32 %v3943, -54.365635
        %v3946 = vadd.f32 %v3944, %v3945
        %vm3947 = vcmp.ge.f32.partialorder %v3946, 10.0
        %v3948 = vsel %vm3947, 1.0, 0.0
        %v3949 = vmul.f32 %v3936, 0.9048374
        %v3950 = vld [vmem:[#allocation4 + $0xe0] sm:$0xff]
        %v3951 = vadd.f32 %v3949, %v3950
        %v3952 = vmul.f32 %v3938, 0.36787945
        %v3953 = vadd.f32 %v3952, %v3948
        %v3954 = vadd.f32 %v3939, %v3948
        %v3955 = vadd.f32 %v3941, %v3951
        %v3956 = vmul.f32 %v3955, 0.9048374
        %v3957 = vadd.f32 %v3943, %v3953
        %v3958 = vmul.f32 %v3957, 0.36787945
        %v3959 = vmul.f32 %v3956, 0.27182817
        %v3960 = vmul.f32 %v3958, -54.365635
        %v3961 = vadd.f32 %v3959, %v3960
        %vm3962 = vcmp.ge.f32.partialorder %v3961, 10.0
        %v3963 = vsel %vm3962, 1.0, 0.0
        %v3964 = vmul.f32 %v3951, 0.9048374
        %v3965 = vld [vmem:[#allocation4 + $0xe8] sm:$0xff]
        %v3966 = vadd.f32 %v3964, %v3965
        %v3967 = vmul.f32 %v3953, 0.36787945
        %v3968 = vadd.f32 %v3967, %v3963
        %v3969 = vadd.f32 %v3954, %v3963
        %v3970 = vadd.f32 %v3956, %v3966
        %v3971 = vmul.f32 %v3970, 0.9048374
        %v3972 = vadd.f32 %v3958, %v3968
        %v3973 = vmul.f32 %v3972, 0.36787945
        %v3974 = vmul.f32 %v3971, 0.27182817
        %v3975 = vmul.f32 %v3973, -54.365635
        %v3976 = vadd.f32 %v3974, %v3975
        %vm3977 = vcmp.ge.f32.partialorder %v3976, 10.0
        %v3978 = vsel %vm3977, 1.0, 0.0
        %v3979 = vmul.f32 %v3966, 0.9048374
        %v3980 = vld [vmem:[#allocation4 + $0xf0] sm:$0xff]
        %v3981 = vadd.f32 %v3979, %v3980
        %v3982 = vmul.f32 %v3968, 0.36787945
        %v3983 = vadd.f32 %v3982, %v3978
        %v3984 = vadd.f32 %v3969, %v3978
        %v3985 = vadd.f32 %v3971, %v3981
        %v3986 = vmul.f32 %v3985, 0.9048374
        %v3987 = vadd.f32 %v3973, %v3983
        %v3988 = vmul.f32 %v3987, 0.36787945
        %v3989 = vmul.f32 %v3986, 0.27182817
        %v3990 = vmul.f32 %v3988, -54.365635
        %v3991 = vadd.f32 %v3989, %v3990
        %vm3992 = vcmp.ge.f32.partialorder %v3991, 10.0
        %v3993 = vsel %vm3992, 1.0, 0.0
        %v3994 = vmul.f32 %v3981, 0.9048374
        %v3995 = vld [vmem:[#allocation4 + $0xf8] sm:$0xff]
        %v3996 = vadd.f32 %v3994, %v3995
        %v3997 = vmul.f32 %v3983, 0.36787945
        %v3998 = vadd.f32 %v3997, %v3993
        %v3999 = vadd.f32 %v3984, %v3993
        %v4000 = vadd.f32 %v3986, %v3996
        %v4001 = vmul.f32 %v4000, 0.9048374
        %v4002 = vadd.f32 %v3988, %v3998
        %v4003 = vmul.f32 %v4002, 0.36787945
        %v4004 = vmul.f32 %v4001, 0.27182817
        %v4005 = vmul.f32 %v4003, -54.365635
        %v4006 = vadd.f32 %v4004, %v4005
        %vm4007 = vcmp.ge.f32.partialorder %v4006, 10.0
        %v4008 = vsel %vm4007, 1.0, 0.0
        %v4009 = vmul.f32 %v3996, 0.9048374
        %v4010 = vld [vmem:[#allocation4 + $0x100] sm:$0xff]
        %v4011 = vadd.f32 %v4009, %v4010
        %v4012 = vmul.f32 %v3998, 0.36787945
        %v4013 = vadd.f32 %v4012, %v4008
        %v4014 = vadd.f32 %v3999, %v4008
        %v4015 = vadd.f32 %v4001, %v4011
        %v4016 = vmul.f32 %v4015, 0.9048374
        %v4017 = vadd.f32 %v4003, %v4013
        %v4018 = vmul.f32 %v4017, 0.36787945
        %v4019 = vmul.f32 %v4016, 0.27182817
        %v4020 = vmul.f32 %v4018, -54.365635
        %v4021 = vadd.f32 %v4019, %v4020
        %vm4022 = vcmp.ge.f32.partialorder %v4021, 10.0
        %v4023 = vsel %vm4022, 1.0, 0.0
        %v4024 = vmul.f32 %v4011, 0.9048374
        %v4025 = vld [vmem:[#allocation4 + $0x108] sm:$0xff]
        %v4026 = vadd.f32 %v4024, %v4025
        %v4027 = vmul.f32 %v4013, 0.36787945
        %v4028 = vadd.f32 %v4027, %v4023
        %v4029 = vadd.f32 %v4014, %v4023
        %v4030 = vadd.f32 %v4016, %v4026
        %v4031 = vmul.f32 %v4030, 0.9048374
        %v4032 = vadd.f32 %v4018, %v4028
        %v4033 = vmul.f32 %v4032, 0.36787945
        %v4034 = vmul.f32 %v4031, 0.27182817
        %v4035 = vmul.f32 %v4033, -54.365635
        %v4036 = vadd.f32 %v4034, %v4035
        %vm4037 = vcmp.ge.f32.partialorder %v4036, 10.0
        %v4038 = vsel %vm4037, 1.0, 0.0
        %v4039 = vmul.f32 %v4026, 0.9048374
        %v4040 = vld [vmem:[#allocation4 + $0x110] sm:$0xff]
        %v4041 = vadd.f32 %v4039, %v4040
        %v4042 = vmul.f32 %v4028, 0.36787945
        %v4043 = vadd.f32 %v4042, %v4038
        %v4044 = vadd.f32 %v4029, %v4038
        %v4045 = vadd.f32 %v4031, %v4041
        %v4046 = vmul.f32 %v4045, 0.9048374
        %v4047 = vadd.f32 %v4033, %v4043
        %v4048 = vmul.f32 %v4047, 0.36787945
        %v4049 = vmul.f32 %v4046, 0.27182817
        %v4050 = vmul.f32 %v4048, -54.365635
        %v4051 = vadd.f32 %v4049, %v4050
        %vm4052 = vcmp.ge.f32.partialorder %v4051, 10.0
        %v4053 = vsel %vm4052, 1.0, 0.0
        %v4054 = vmul.f32 %v4041, 0.9048374
        %v4055 = vld [vmem:[#allocation4 + $0x118] sm:$0xff]
        %v4056 = vadd.f32 %v4054, %v4055
        %v4057 = vmul.f32 %v4043, 0.36787945
        %v4058 = vadd.f32 %v4057, %v4053
        %v4059 = vadd.f32 %v4044, %v4053
        %v4060 = vadd.f32 %v4046, %v4056
        %v4061 = vmul.f32 %v4060, 0.9048374
        %v4062 = vadd.f32 %v4048, %v4058
        %v4063 = vmul.f32 %v4062, 0.36787945
        %v4064 = vmul.f32 %v4061, 0.27182817
        %v4065 = vmul.f32 %v4063, -54.365635
        %v4066 = vadd.f32 %v4064, %v4065
        %vm4067 = vcmp.ge.f32.partialorder %v4066, 10.0
        %v4068 = vsel %vm4067, 1.0, 0.0
        %v4069 = vmul.f32 %v4056, 0.9048374
        %v4070 = vld [vmem:[#allocation4 + $0x120] sm:$0xff]
        %v4071 = vadd.f32 %v4069, %v4070
        %v4072 = vmul.f32 %v4058, 0.36787945
        %v4073 = vadd.f32 %v4072, %v4068
        %v4074 = vadd.f32 %v4059, %v4068
        %v4075 = vadd.f32 %v4061, %v4071
        %v4076 = vmul.f32 %v4075, 0.9048374
        %v4077 = vadd.f32 %v4063, %v4073
        %v4078 = vmul.f32 %v4077, 0.36787945
        %v4079 = vmul.f32 %v4076, 0.27182817
        %v4080 = vmul.f32 %v4078, -54.365635
        %v4081 = vadd.f32 %v4079, %v4080
        %vm4082 = vcmp.ge.f32.partialorder %v4081, 10.0
        %v4083 = vsel %vm4082, 1.0, 0.0
        %v4084 = vmul.f32 %v4071, 0.9048374
        %v4085 = vld [vmem:[#allocation4 + $0x128] sm:$0xff]
        %v4086 = vadd.f32 %v4084, %v4085
        %v4087 = vmul.f32 %v4073, 0.36787945
        %v4088 = vadd.f32 %v4087, %v4083
        %v4089 = vadd.f32 %v4074, %v4083
        %v4090 = vadd.f32 %v4076, %v4086
        %v4091 = vmul.f32 %v4090, 0.9048374
        %v4092 = vadd.f32 %v4078, %v4088
        %v4093 = vmul.f32 %v4092, 0.36787945
        %v4094 = vmul.f32 %v4091, 0.27182817
        %v4095 = vmul.f32 %v4093, -54.365635
        %v4096 = vadd.f32 %v4094, %v4095
        %vm4097 = vcmp.ge.f32.partialorder %v4096, 10.0
        %v4098 = vsel %vm4097, 1.0, 0.0
        %v4099 = vmul.f32 %v4086, 0.9048374
        %v4100 = vld [vmem:[#allocation4 + $0x130] sm:$0xff]
        %v4101 = vadd.f32 %v4099, %v4100
        %v4102 = vmul.f32 %v4088, 0.36787945
        %v4103 = vadd.f32 %v4102, %v4098
        %v4104 = vadd.f32 %v4089, %v4098
        %v4105 = vadd.f32 %v4091, %v4101
        %v4106 = vmul.f32 %v4105, 0.9048374
        %v4107 = vadd.f32 %v4093, %v4103
        %v4108 = vmul.f32 %v4107, 0.36787945
        %v4109 = vmul.f32 %v4106, 0.27182817
        %v4110 = vmul.f32 %v4108, -54.365635
        %v4111 = vadd.f32 %v4109, %v4110
        %vm4112 = vcmp.ge.f32.partialorder %v4111, 10.0
        %v4113 = vsel %vm4112, 1.0, 0.0
        %v4114 = vmul.f32 %v4101, 0.9048374
        %v4115 = vld [vmem:[#allocation4 + $0x138] sm:$0xff]
        %v4116 = vadd.f32 %v4114, %v4115
        %v4117 = vmul.f32 %v4103, 0.36787945
        %v4118 = vadd.f32 %v4117, %v4113
        %v4119 = vadd.f32 %v4104, %v4113
        %v4120 = vadd.f32 %v4106, %v4116
        %v4121 = vmul.f32 %v4120, 0.9048374
        %v4122 = vadd.f32 %v4108, %v4118
        %v4123 = vmul.f32 %v4122, 0.36787945
        %v4124 = vmul.f32 %v4121, 0.27182817
        %v4125 = vmul.f32 %v4123, -54.365635
        %v4126 = vadd.f32 %v4124, %v4125
        %vm4127 = vcmp.ge.f32.partialorder %v4126, 10.0
        %v4128 = vsel %vm4127, 1.0, 0.0
        %v4129 = vmul.f32 %v4116, 0.9048374
        %v4130 = vld [vmem:[#allocation4 + $0x140] sm:$0xff]
        %v4131 = vadd.f32 %v4129, %v4130
        %v4132 = vmul.f32 %v4118, 0.36787945
        %v4133 = vadd.f32 %v4132, %v4128
        %v4134 = vadd.f32 %v4119, %v4128
        %v4135 = vadd.f32 %v4121, %v4131
        %v4136 = vmul.f32 %v4135, 0.9048374
        %v4137 = vadd.f32 %v4123, %v4133
        %v4138 = vmul.f32 %v4137, 0.36787945
        %v4139 = vmul.f32 %v4136, 0.27182817
        %v4140 = vmul.f32 %v4138, -54.365635
        %v4141 = vadd.f32 %v4139, %v4140
        %vm4142 = vcmp.ge.f32.partialorder %v4141, 10.0
        %v4143 = vsel %vm4142, 1.0, 0.0
        %v4144 = vmul.f32 %v4131, 0.9048374
        %v4145 = vld [vmem:[#allocation4 + $0x148] sm:$0xff]
        %v4146 = vadd.f32 %v4144, %v4145
        %v4147 = vmul.f32 %v4133, 0.36787945
        %v4148 = vadd.f32 %v4147, %v4143
        %v4149 = vadd.f32 %v4134, %v4143
        %v4150 = vadd.f32 %v4136, %v4146
        %v4151 = vmul.f32 %v4150, 0.9048374
        %v4152 = vadd.f32 %v4138, %v4148
        %v4153 = vmul.f32 %v4152, 0.36787945
        %v4154 = vmul.f32 %v4151, 0.27182817
        %v4155 = vmul.f32 %v4153, -54.365635
        %v4156 = vadd.f32 %v4154, %v4155
        %vm4157 = vcmp.ge.f32.partialorder %v4156, 10.0
        %v4158 = vsel %vm4157, 1.0, 0.0
        %v4159 = vmul.f32 %v4146, 0.9048374
        %v4160 = vld [vmem:[#allocation4 + $0x150] sm:$0xff]
        %v4161 = vadd.f32 %v4159, %v4160
        %v4162 = vmul.f32 %v4148, 0.36787945
        %v4163 = vadd.f32 %v4162, %v4158
        %v4164 = vadd.f32 %v4149, %v4158
        %v4165 = vadd.f32 %v4151, %v4161
        %v4166 = vmul.f32 %v4165, 0.9048374
        %v4167 = vadd.f32 %v4153, %v4163
        %v4168 = vmul.f32 %v4167, 0.36787945
        %v4169 = vmul.f32 %v4166, 0.27182817
        %v4170 = vmul.f32 %v4168, -54.365635
        %v4171 = vadd.f32 %v4169, %v4170
        %vm4172 = vcmp.ge.f32.partialorder %v4171, 10.0
        %v4173 = vsel %vm4172, 1.0, 0.0
        %v4174 = vmul.f32 %v4161, 0.9048374
        %v4175 = vld [vmem:[#allocation4 + $0x158] sm:$0xff]
        %v4176 = vadd.f32 %v4174, %v4175
        %v4177 = vmul.f32 %v4163, 0.36787945
        %v4178 = vadd.f32 %v4177, %v4173
        %v4179 = vadd.f32 %v4164, %v4173
        %v4180 = vadd.f32 %v4166, %v4176
        %v4181 = vmul.f32 %v4180, 0.9048374
        %v4182 = vadd.f32 %v4168, %v4178
        %v4183 = vmul.f32 %v4182, 0.36787945
        %v4184 = vmul.f32 %v4181, 0.27182817
        %v4185 = vmul.f32 %v4183, -54.365635
        %v4186 = vadd.f32 %v4184, %v4185
        %vm4187 = vcmp.ge.f32.partialorder %v4186, 10.0
        %v4188 = vsel %vm4187, 1.0, 0.0
        %v4189 = vmul.f32 %v4176, 0.9048374
        %v4190 = vld [vmem:[#allocation4 + $0x160] sm:$0xff]
        %v4191 = vadd.f32 %v4189, %v4190
        %v4192 = vmul.f32 %v4178, 0.36787945
        %v4193 = vadd.f32 %v4192, %v4188
        %v4194 = vadd.f32 %v4179, %v4188
        %v4195 = vadd.f32 %v4181, %v4191
        %v4196 = vmul.f32 %v4195, 0.9048374
        %v4197 = vadd.f32 %v4183, %v4193
        %v4198 = vmul.f32 %v4197, 0.36787945
        %v4199 = vmul.f32 %v4196, 0.27182817
        %v4200 = vmul.f32 %v4198, -54.365635
        %v4201 = vadd.f32 %v4199, %v4200
        %vm4202 = vcmp.ge.f32.partialorder %v4201, 10.0
        %v4203 = vsel %vm4202, 1.0, 0.0
        %v4204 = vmul.f32 %v4191, 0.9048374
        %v4205 = vld [vmem:[#allocation4 + $0x168] sm:$0xff]
        %v4206 = vadd.f32 %v4204, %v4205
        %v4207 = vmul.f32 %v4193, 0.36787945
        %v4208 = vadd.f32 %v4207, %v4203
        %v4209 = vadd.f32 %v4194, %v4203
        %v4210 = vadd.f32 %v4196, %v4206
        %v4211 = vmul.f32 %v4210, 0.9048374
        %v4212 = vadd.f32 %v4198, %v4208
        %v4213 = vmul.f32 %v4212, 0.36787945
        %v4214 = vmul.f32 %v4211, 0.27182817
        %v4215 = vmul.f32 %v4213, -54.365635
        %v4216 = vadd.f32 %v4214, %v4215
        %vm4217 = vcmp.ge.f32.partialorder %v4216, 10.0
        %v4218 = vsel %vm4217, 1.0, 0.0
        %v4219 = vmul.f32 %v4206, 0.9048374
        %v4220 = vld [vmem:[#allocation4 + $0x170] sm:$0xff]
        %v4221 = vadd.f32 %v4219, %v4220
        %v4222 = vmul.f32 %v4208, 0.36787945
        %v4223 = vadd.f32 %v4222, %v4218
        %v4224 = vadd.f32 %v4209, %v4218
        %v4225 = vadd.f32 %v4211, %v4221
        %v4226 = vmul.f32 %v4225, 0.9048374
        %v4227 = vadd.f32 %v4213, %v4223
        %v4228 = vmul.f32 %v4227, 0.36787945
        %v4229 = vmul.f32 %v4226, 0.27182817
        %v4230 = vmul.f32 %v4228, -54.365635
        %v4231 = vadd.f32 %v4229, %v4230
        %vm4232 = vcmp.ge.f32.partialorder %v4231, 10.0
        %v4233 = vsel %vm4232, 1.0, 0.0
        %v4234 = vmul.f32 %v4221, 0.9048374
        %v4235 = vld [vmem:[#allocation4 + $0x178] sm:$0xff]
        %v4236 = vadd.f32 %v4234, %v4235
        %v4237 = vmul.f32 %v4223, 0.36787945
        %v4238 = vadd.f32 %v4237, %v4233
        %v4239 = vadd.f32 %v4224, %v4233
        %v4240 = vadd.f32 %v4226, %v4236
        %v4241 = vmul.f32 %v4240, 0.9048374
        %v4242 = vadd.f32 %v4228, %v4238
        %v4243 = vmul.f32 %v4242, 0.36787945
        %v4244 = vmul.f32 %v4241, 0.27182817
        %v4245 = vmul.f32 %v4243, -54.365635
        %v4246 = vadd.f32 %v4244, %v4245
        %vm4247 = vcmp.ge.f32.partialorder %v4246, 10.0
        %v4248 = vsel %vm4247, 1.0, 0.0
        %v4249 = vmul.f32 %v4236, 0.9048374
        %v4250 = vld [vmem:[#allocation4 + $0x180] sm:$0xff]
        %v4251 = vadd.f32 %v4249, %v4250
        %v4252 = vmul.f32 %v4238, 0.36787945
        %v4253 = vadd.f32 %v4252, %v4248
        %v4254 = vadd.f32 %v4239, %v4248
        %v4255 = vadd.f32 %v4241, %v4251
        %v4256 = vmul.f32 %v4255, 0.9048374
        %v4257 = vadd.f32 %v4243, %v4253
        %v4258 = vmul.f32 %v4257, 0.36787945
        %v4259 = vmul.f32 %v4256, 0.27182817
        %v4260 = vmul.f32 %v4258, -54.365635
        %v4261 = vadd.f32 %v4259, %v4260
        %vm4262 = vcmp.ge.f32.partialorder %v4261, 10.0
        %v4263 = vsel %vm4262, 1.0, 0.0
        %v4264 = vadd.f32 %v4254, %v4263
        %4265 = vst.msk [vmem:[%s188] sm:$0xff] %vm3486, %v4264
        %p4266 = scmp.lt.s32.totalorder %s17, 1
        %s4267 = scalar_select %p4266, %s17, 1
        %s4268 = smul.addr %s4267, 8
        %s4269 = scalar_lea.vmem %s3, %s4268
        // Predicated region
        $region37: #{tpu_custom_call.1} parent=31 // pred_check
          %p4270 = pneg %p103
        $region38: #{tpu_custom_call.1} parent=31 // pred_check_branch
          %4272 = sbr.rel (%p4270) target = $region40
        $region39: #{tpu_custom_call.1} parent=31 // pred_region
          _
        $region40: #{tpu_custom_call.1} parent=31 // pred_fallthru
          _
      $region32: #{tpu_custom_call.1} parent=5 // pred_fallthru
        _
      %p4273 = scmp.le.s32.totalorder 2, %s12
      // Predicated region
      $region41: #{tpu_custom_call.1} parent=5 // pred_check
        %p4274 = pneg %p4273
      $region42: #{tpu_custom_call.1} parent=5 // pred_check_branch
        %4276 = sbr.rel (%p4274) target = $region44
      $region43: #{tpu_custom_call.1} parent=5 // pred_region
        %s4277 = ssub.s32 %s12, 2
        // Predicated region
        $region45: #{tpu_custom_call.1} parent=43 // pred_check
          %p4278 = pneg %p109
        $region46: #{tpu_custom_call.1} parent=43 // pred_check_branch
          %4280 = sbr.rel (%p4278) target = $region48
        $region47: #{tpu_custom_call.1} parent=43 // pred_region
          %p4281 = scmp.lt.s32.totalorder %s18, 1
          %s4282 = scalar_select %p4281, %s18, 1
          %s4283 = smul.addr %s4282, 8
          %s4284 = scalar_lea.vmem %s3, %s4283
        $region48: #{tpu_custom_call.1} parent=43 // pred_fallthru
          _
      $region44: #{tpu_custom_call.1} parent=5 // pred_fallthru
        _
    $region6: #{tpu_custom_call.1} parent=1 // loop_footer
      %s16 = sadd.s32 1, %s12
    $region7: #{tpu_custom_call.1} parent=1 // loop_footer_branch
      %11 = sbr.rel target = $region3
    $region8: #{tpu_custom_call.1} parent=1 // loop_exit
      _
    %4285 = vsyncpa [#allocation6], 1
    %s4286 = scalar_lea.sflag [#allocation6], 1
    %4287 = vsyncpa %s4286, 1

</llo_original>
